<compile_context>
chip_gen: v6e
topology: v6e:2x2x1
jax: 0.10.0
libtpu: 0.0.40
codegen_flags: <defaults>
</compile_context>

<pallas_src>
import jax
import jax.numpy as jnp
from jax.experimental import pallas as pl
from jax.experimental.pallas import tpu as pltpu


CPAD = 128         # conv Cout padded to a full 128-lane tile -> unmasked stores
ROW_BLOCKS = 2     # >=2 parallel grid steps so both v7x TensorCores get work


# ----------------------------------------------------------------------------
# Kernels
# ----------------------------------------------------------------------------
def _conv_bn_relu_pool_kernel(p_ref, w_ref, scale_ref, bias_ref, o_ref):
    """Fused 3x3 conv (im2col matmul) + BN(eval) + ReLU + MaxPool2d(2,2).

    p_ref:  (4*MB, K)  im2col rows; the four MB-row groups are the four
            (h-parity, w-parity) conv positions of every 2x2 pool window,
            all batch images folded into the row dimension.
    w_ref:  (K, 128)   flattened conv weight, Cout zero-padded to 128 lanes.
    scale_ref, bias_ref: (1, 128) folded BN (+conv-bias) affine (0 on pad lanes).
    o_ref:  (MB, 128)  pooled output rows (row order = (n, oh, ow)).
    """
    mb = o_ref.shape[0]
    y = jnp.dot(p_ref[...], w_ref[...], preferred_element_type=jnp.float32)
    y = jnp.maximum(y * scale_ref[...] + bias_ref[...], 0.0)   # BN affine + ReLU
    o_ref[...] = jnp.maximum(
        jnp.maximum(y[0 * mb:1 * mb], y[1 * mb:2 * mb]),
        jnp.maximum(y[2 * mb:3 * mb], y[3 * mb:4 * mb]),
    ).astype(o_ref.dtype)


def conv_bn_relu_pool(p2d, w, scale, bias, *, mb, row_blocks=ROW_BLOCKS):
    k = p2d.shape[1]
    c = w.shape[1]
    return pl.pallas_call(
        _conv_bn_relu_pool_kernel,
        out_shape=jax.ShapeDtypeStruct((row_blocks * mb, c), jnp.float32),
        grid=(row_blocks,),
        in_specs=[
            pl.BlockSpec((4 * mb, k), lambda i: (i, 0)),
            pl.BlockSpec((k, c), lambda i: (0, 0)),
            pl.BlockSpec((1, c), lambda i: (0, 0)),
            pl.BlockSpec((1, c), lambda i: (0, 0)),
        ],
        out_specs=pl.BlockSpec((mb, c), lambda i: (i, 0)),
        compiler_params=pltpu.CompilerParams(
            dimension_semantics=("parallel",)),
    )(p2d, w, scale, bias)


def _fc3_kernel(x_ref, w1_ref, b1_ref, w2_ref, b2_ref, w3_ref, b3_ref, o_ref):
    """fc1 -> fc2 -> fc3 (no activations in-between, exactly as the module).
    bf16 weights / activations, f32 accumulation."""
    h = jnp.dot(x_ref[...], w1_ref[...],
                preferred_element_type=jnp.float32) + b1_ref[...]
    h = jnp.dot(h.astype(jnp.bfloat16), w2_ref[...],
                preferred_element_type=jnp.float32) + b2_ref[...]
    o_ref[...] = (jnp.dot(h.astype(jnp.bfloat16), w3_ref[...],
                          preferred_element_type=jnp.float32)
                  + b3_ref[...]).astype(o_ref.dtype)


def fc_stack(x, w1, b1, w2, b2, w3, b3):
    n = x.shape[0]
    vmem = pl.BlockSpec(memory_space=pltpu.MemorySpace.VMEM)
    return pl.pallas_call(
        _fc3_kernel,
        out_shape=jax.ShapeDtypeStruct((n, w3.shape[1]), jnp.float32),
        in_specs=[vmem] * 7,
        out_specs=vmem,
    )(x, w1, b1, w2, b2, w3, b3)


# ----------------------------------------------------------------------------
# Glue: im2col / pool-parity packing, BN folding, parameter setup
# ----------------------------------------------------------------------------
def _im2col(x, kh=3, kw=3):
    """x: (N, Hp, Wp, Cin) (already padded).  Returns (N, Hc, Wc, kh*kw*Cin)
    with the K axis ordered (kh, kw, cin), matching the flattened weight."""
    n, hp, wp, cin = x.shape
    hc, wc = hp - kh + 1, wp - kw + 1
    cols = [x[:, dh:dh + hc, dw:dw + wc, :]
            for dh in range(kh) for dw in range(kw)]
    return jnp.concatenate(cols, axis=-1), hc, wc


def _pool_parity_patches(patches, hc, wc, row_blocks=ROW_BLOCKS):
    """(N, Hc, Wc, K) -> single 2-D patch matrix (row_blocks*4*MB, K) laid out
    as [row-block, pool-parity, pooled-row-within-block].  Rows are padded so
    MB is a multiple of 8 (sublane-aligned slices inside the kernel)."""
    n = patches.shape[0]
    k = patches.shape[-1]
    hh, wh = hc // 2, wc // 2
    m = n * hh * wh
    p = patches.reshape(n, hh, 2, wh, 2, k)
    p = jnp.transpose(p, (2, 4, 0, 1, 3, 5)).reshape(4, m, k)   # (parity, m, K)
    mult = 8 * row_blocks
    mp = ((m + mult - 1) // mult) * mult
    if mp != m:
        p = jnp.pad(p, ((0, 0), (0, mp - m), (0, 0)))
    mb = mp // row_blocks
    p = p.reshape(4, row_blocks, mb, k)
    p = jnp.transpose(p, (1, 0, 2, 3)).reshape(row_blocks * 4 * mb, k)
    return p, hh, wh, m, mb


def _prep_conv(w_oihw, conv_b, gamma, beta, mean, var, cpad=CPAD, eps=1e-5):
    """PyTorch (Cout,Cin,KH,KW) -> (KH*KW*Cin, 128) weight + folded BN affine,
    output channels zero-padded to 128 lanes."""
    cout = w_oihw.shape[0]
    wmat = jnp.transpose(w_oihw, (2, 3, 1, 0)).reshape(-1, cout)
    s = gamma / jnp.sqrt(var + eps)
    b = (conv_b - mean) * s + beta
    wmat = jnp.pad(wmat, ((0, 0), (0, cpad - cout)))
    s = jnp.pad(s, (0, cpad - cout))[None, :]
    b = jnp.pad(b, (0, cpad - cout))[None, :]
    return wmat, s, b


def fashion_cnn3_forward(x_nchw, params):
    n = x_nchw.shape[0]
    x = jnp.transpose(x_nchw, (0, 2, 3, 1)).astype(jnp.float32)     # NHWC

    # ----- layer1: Conv2d(1, 32, 3, padding=1) + BN + ReLU + MaxPool(2, 2) -----
    xp = jnp.pad(x, ((0, 0), (1, 1), (1, 1), (0, 0)))
    patches, hc, wc = _im2col(xp)
    p2d, h1, w1s, m1, mb1 = _pool_parity_patches(patches, hc, wc)
    wm1, s1, b1 = _prep_conv(params["conv1_w"], params["conv1_b"],
                             params["bn1_gamma"], params["bn1_beta"],
                             params["bn1_mean"], params["bn1_var"])
    out1 = conv_bn_relu_pool(p2d, wm1, s1, b1, mb=mb1)
    out1 = out1[:m1, :32].reshape(n, h1, w1s, 32)                   # (N,14,14,32)

    # Dropout2d(0.25): identity in eval mode.
    # TODO(synk): training-mode Dropout2d (per-channel Bernoulli mask) not implemented.

    # ----- layer2: Conv2d(32, 64, 3) + BN + ReLU + MaxPool(2) -----
    patches, hc, wc = _im2col(out1)
    p2d, h2, w2s, m2, mb2 = _pool_parity_patches(patches, hc, wc)
    wm2, s2, b2 = _prep_conv(params["conv2_w"], params["conv2_b"],
                             params["bn2_gamma"], params["bn2_beta"],
                             params["bn2_mean"], params["bn2_var"])
    out2 = conv_bn_relu_pool(p2d, wm2, s2, b2, mb=mb2)
    out2 = out2[:m2, :64].reshape(n, h2, w2s, 64)                   # (N,6,6,64)

    # PyTorch flatten is over NCHW: transpose back before view(N, -1).
    feat = jnp.transpose(out2, (0, 3, 1, 2)).reshape(n, 64 * h2 * w2s)

    # ----- fc1 -> fc2 -> fc3 (bf16 weights, f32 accumulation) -----
    bf = jnp.bfloat16
    return fc_stack(feat.astype(bf),
                    params["fc1_w"].T.astype(bf), params["fc1_b"][None, :],
                    params["fc2_w"].T.astype(bf), params["fc2_b"][None, :],
                    params["fc3_w"].T.astype(bf), params["fc3_b"][None, :])


def init_params(key):
    """Deterministic synthetic parameters with the exact shapes of FashionCNN3."""
    ks = jax.random.split(key, 18)

    def nrm(k, shape, scale):
        return scale * jax.random.normal(k, shape, dtype=jnp.float32)

    return dict(
        conv1_w=nrm(ks[0], (32, 1, 3, 3), 0.2),
        conv1_b=nrm(ks[1], (32,), 0.1),
        bn1_gamma=1.0 + nrm(ks[2], (32,), 0.1),
        bn1_beta=nrm(ks[3], (32,), 0.1),
        bn1_mean=nrm(ks[4], (32,), 0.1),
        bn1_var=jax.random.uniform(ks[5], (32,), jnp.float32, 0.5, 1.5),
        conv2_w=nrm(ks[6], (64, 32, 3, 3), 0.05),
        conv2_b=nrm(ks[7], (64,), 0.1),
        bn2_gamma=1.0 + nrm(ks[8], (64,), 0.1),
        bn2_beta=nrm(ks[9], (64,), 0.1),
        bn2_mean=nrm(ks[10], (64,), 0.1),
        bn2_var=jax.random.uniform(ks[11], (64,), jnp.float32, 0.5, 1.5),
        fc1_w=nrm(ks[12], (600, 64 * 6 * 6), 0.02),
        fc1_b=nrm(ks[13], (600,), 0.02),
        fc2_w=nrm(ks[14], (120, 600), 0.05),
        fc2_b=nrm(ks[15], (120,), 0.05),
        fc3_w=nrm(ks[16], (10, 120), 0.1),
        fc3_b=nrm(ks[17], (10,), 0.1),
    )


if __name__ == "__main__":
    key = jax.random.PRNGKey(0)
    kx, kp = jax.random.split(key)
    # FashionMNIST-shaped input (N, C, H, W) = (2, 1, 28, 28): fc1's
    # in_features = 64*6*6 pins the spatial size to 28x28; batch kept small.
    x = jax.random.normal(kx, (2, 1, 28, 28), dtype=jnp.float32)
    params = init_params(kp)

    fwd = jax.jit(fashion_cnn3_forward)
    out = jax.block_until_ready(fwd(x, params))

    assert out.shape == (2, 10), out.shape
    assert bool(jnp.all(jnp.isfinite(out)))
    print("KERNEL_OK")
</pallas_src>

<mosaic_0001>
module attributes {stable_mosaic.version = 11 : i64} {
  func.func @_conv_bn_relu_pool_kernel(%arg0: i32, %arg1: memref<800x9xf32, #tpu.memory_space<vmem>>, %arg2: memref<9x128xf32, #tpu.memory_space<vmem>>, %arg3: memref<1x128xf32, #tpu.memory_space<vmem>>, %arg4: memref<1x128xf32, #tpu.memory_space<vmem>>, %arg5: memref<200x128xf32, #tpu.memory_space<vmem>>) attributes {dimension_semantics = [#tpu.dimension_semantics<parallel>], iteration_bounds = array<i64: 2>, scalar_prefetch = 0 : i64, scratch_operands = 0 : i64, tpu.core_type = #tpu.core_type<tc>, window_params = [{transform_indices = @transform_0, window_bounds = array<i64: 800, 9>}, {pipeline_mode = #tpu.pipeline_mode<synchronous>, transform_indices = @transform_1, window_bounds = array<i64: 9, 128>}, {pipeline_mode = #tpu.pipeline_mode<synchronous>, transform_indices = @transform_2, window_bounds = array<i64: 1, 128>}, {pipeline_mode = #tpu.pipeline_mode<synchronous>, transform_indices = @transform_3, window_bounds = array<i64: 1, 128>}, {transform_indices = @transform_4, window_bounds = array<i64: 200, 128>}]} {
    %c0 = arith.constant 0 : index
    %c0_0 = arith.constant 0 : index
    %0 = vector.load %arg1[%c0, %c0_0] : memref<800x9xf32, #tpu.memory_space<vmem>>, vector<800x9xf32>
    %c0_1 = arith.constant 0 : index
    %c0_2 = arith.constant 0 : index
    %1 = vector.load %arg2[%c0_1, %c0_2] : memref<9x128xf32, #tpu.memory_space<vmem>>, vector<9x128xf32>
    %cst = arith.constant dense<0.000000e+00> : vector<800x128xf32>
    %2 = tpu.matmul %0, %1, %cst {dimension_numbers = #tpu.dot_dimension_numbers<[1], [0], [0], [1], [0, 0, 1, 1], [], []>} : vector<800x9xf32>, vector<9x128xf32>, vector<800x128xf32> -> vector<800x128xf32>
    %c0_3 = arith.constant 0 : index
    %c0_4 = arith.constant 0 : index
    %3 = vector.load %arg3[%c0_3, %c0_4] : memref<1x128xf32, #tpu.memory_space<vmem>>, vector<1x128xf32>
    %4 = vector.broadcast %3 : vector<1x128xf32> to vector<800x128xf32>
    %5 = arith.mulf %2, %4 : vector<800x128xf32>
    %c0_5 = arith.constant 0 : index
    %c0_6 = arith.constant 0 : index
    %6 = vector.load %arg4[%c0_5, %c0_6] : memref<1x128xf32, #tpu.memory_space<vmem>>, vector<1x128xf32>
    %7 = vector.broadcast %6 : vector<1x128xf32> to vector<800x128xf32>
    %8 = arith.addf %5, %7 : vector<800x128xf32>
    %cst_7 = arith.constant 0.000000e+00 : f32
    %9 = vector.broadcast %cst_7 : f32 to vector<800x128xf32>
    %10 = arith.maximumf %8, %9 : vector<800x128xf32>
    %11 = vector.extract_strided_slice %10 {offsets = [0, 0], sizes = [200, 128], strides = [1, 1]} : vector<800x128xf32> to vector<200x128xf32>
    %12 = vector.extract_strided_slice %10 {offsets = [200, 0], sizes = [200, 128], strides = [1, 1]} : vector<800x128xf32> to vector<200x128xf32>
    %13 = arith.maximumf %11, %12 : vector<200x128xf32>
    %14 = vector.extract_strided_slice %10 {offsets = [400, 0], sizes = [200, 128], strides = [1, 1]} : vector<800x128xf32> to vector<200x128xf32>
    %15 = vector.extract_strided_slice %10 {offsets = [600, 0], sizes = [200, 128], strides = [1, 1]} : vector<800x128xf32> to vector<200x128xf32>
    %16 = arith.maximumf %14, %15 : vector<200x128xf32>
    %17 = arith.maximumf %13, %16 : vector<200x128xf32>
    %c0_8 = arith.constant 0 : index
    %c0_9 = arith.constant 0 : index
    %18 = vector.load %arg5[%c0_8, %c0_9] : memref<200x128xf32, #tpu.memory_space<vmem>>, vector<200x128xf32>
    tpu.vector_store %arg5[%c0_8, %c0_9], %17 {strides = array<i32>} : memref<200x128xf32, #tpu.memory_space<vmem>>, vector<200x128xf32>,
    return
  }
  func.func @transform_0(%arg0: i32) -> (i32, i32) {
    %c0_i32 = arith.constant 0 : i32
    %c0_i32_0 = arith.constant 0 : i32
    return %arg0, %c0_i32 : i32, i32
  }
  func.func @transform_1(%arg0: i32) -> (i32, i32) {
    %c0_i32 = arith.constant 0 : i32
    %c0_i32_0 = arith.constant 0 : i32
    %c0_i32_1 = arith.constant 0 : i32
    return %c0_i32, %c0_i32_0 : i32, i32
  }
  func.func @transform_2(%arg0: i32) -> (i32, i32) {
    %c0_i32 = arith.constant 0 : i32
    %c0_i32_0 = arith.constant 0 : i32
    %c0_i32_1 = arith.constant 0 : i32
    return %c0_i32, %c0_i32_0 : i32, i32
  }
  func.func @transform_3(%arg0: i32) -> (i32, i32) {
    %c0_i32 = arith.constant 0 : i32
    %c0_i32_0 = arith.constant 0 : i32
    %c0_i32_1 = arith.constant 0 : i32
    return %c0_i32, %c0_i32_0 : i32, i32
  }
  func.func @transform_4(%arg0: i32) -> (i32, i32) {
    %c0_i32 = arith.constant 0 : i32
    %c0_i32_0 = arith.constant 0 : i32
    return %arg0, %c0_i32 : i32, i32
  }
}

module attributes {stable_mosaic.version = 11 : i64} {
  func.func @_conv_bn_relu_pool_kernel(%arg0: i32, %arg1: memref<160x288xf32, #tpu.memory_space<vmem>>, %arg2: memref<288x128xf32, #tpu.memory_space<vmem>>, %arg3: memref<1x128xf32, #tpu.memory_space<vmem>>, %arg4: memref<1x128xf32, #tpu.memory_space<vmem>>, %arg5: memref<40x128xf32, #tpu.memory_space<vmem>>) attributes {dimension_semantics = [#tpu.dimension_semantics<parallel>], iteration_bounds = array<i64: 2>, scalar_prefetch = 0 : i64, scratch_operands = 0 : i64, tpu.core_type = #tpu.core_type<tc>, window_params = [{transform_indices = @transform_0, window_bounds = array<i64: 160, 288>}, {pipeline_mode = #tpu.pipeline_mode<synchronous>, transform_indices = @transform_1, window_bounds = array<i64: 288, 128>}, {pipeline_mode = #tpu.pipeline_mode<synchronous>, transform_indices = @transform_2, window_bounds = array<i64: 1, 128>}, {pipeline_mode = #tpu.pipeline_mode<synchronous>, transform_indices = @transform_3, window_bounds = array<i64: 1, 128>}, {transform_indices = @transform_4, window_bounds = array<i64: 40, 128>}]} {
    %c0 = arith.constant 0 : index
    %c0_0 = arith.constant 0 : index
    %0 = vector.load %arg1[%c0, %c0_0] : memref<160x288xf32, #tpu.memory_space<vmem>>, vector<160x288xf32>
    %c0_1 = arith.constant 0 : index
    %c0_2 = arith.constant 0 : index
    %1 = vector.load %arg2[%c0_1, %c0_2] : memref<288x128xf32, #tpu.memory_space<vmem>>, vector<288x128xf32>
    %cst = arith.constant dense<0.000000e+00> : vector<160x128xf32>
    %2 = tpu.matmul %0, %1, %cst {dimension_numbers = #tpu.dot_dimension_numbers<[1], [0], [0], [1], [0, 0, 1, 1], [], []>} : vector<160x288xf32>, vector<288x128xf32>, vector<160x128xf32> -> vector<160x128xf32>
    %c0_3 = arith.constant 0 : index
    %c0_4 = arith.constant 0 : index
    %3 = vector.load %arg3[%c0_3, %c0_4] : memref<1x128xf32, #tpu.memory_space<vmem>>, vector<1x128xf32>
    %4 = vector.broadcast %3 : vector<1x128xf32> to vector<160x128xf32>
    %5 = arith.mulf %2, %4 : vector<160x128xf32>
    %c0_5 = arith.constant 0 : index
    %c0_6 = arith.constant 0 : index
    %6 = vector.load %arg4[%c0_5, %c0_6] : memref<1x128xf32, #tpu.memory_space<vmem>>, vector<1x128xf32>
    %7 = vector.broadcast %6 : vector<1x128xf32> to vector<160x128xf32>
    %8 = arith.addf %5, %7 : vector<160x128xf32>
    %cst_7 = arith.constant 0.000000e+00 : f32
    %9 = vector.broadcast %cst_7 : f32 to vector<160x128xf32>
    %10 = arith.maximumf %8, %9 : vector<160x128xf32>
    %11 = vector.extract_strided_slice %10 {offsets = [0, 0], sizes = [40, 128], strides = [1, 1]} : vector<160x128xf32> to vector<40x128xf32>
    %12 = vector.extract_strided_slice %10 {offsets = [40, 0], sizes = [40, 128], strides = [1, 1]} : vector<160x128xf32> to vector<40x128xf32>
    %13 = arith.maximumf %11, %12 : vector<40x128xf32>
    %14 = vector.extract_strided_slice %10 {offsets = [80, 0], sizes = [40, 128], strides = [1, 1]} : vector<160x128xf32> to vector<40x128xf32>
    %15 = vector.extract_strided_slice %10 {offsets = [120, 0], sizes = [40, 128], strides = [1, 1]} : vector<160x128xf32> to vector<40x128xf32>
    %16 = arith.maximumf %14, %15 : vector<40x128xf32>
    %17 = arith.maximumf %13, %16 : vector<40x128xf32>
    %c0_8 = arith.constant 0 : index
    %c0_9 = arith.constant 0 : index
    %18 = vector.load %arg5[%c0_8, %c0_9] : memref<40x128xf32, #tpu.memory_space<vmem>>, vector<40x128xf32>
    tpu.vector_store %arg5[%c0_8, %c0_9], %17 {strides = array<i32>} : memref<40x128xf32, #tpu.memory_space<vmem>>, vector<40x128xf32>,
    return
  }
  func.func @transform_0(%arg0: i32) -> (i32, i32) {
    %c0_i32 = arith.constant 0 : i32
    %c0_i32_0 = arith.constant 0 : i32
    return %arg0, %c0_i32 : i32, i32
  }
  func.func @transform_1(%arg0: i32) -> (i32, i32) {
    %c0_i32 = arith.constant 0 : i32
    %c0_i32_0 = arith.constant 0 : i32
    %c0_i32_1 = arith.constant 0 : i32
    return %c0_i32, %c0_i32_0 : i32, i32
  }
  func.func @transform_2(%arg0: i32) -> (i32, i32) {
    %c0_i32 = arith.constant 0 : i32
    %c0_i32_0 = arith.constant 0 : i32
    %c0_i32_1 = arith.constant 0 : i32
    return %c0_i32, %c0_i32_0 : i32, i32
  }
  func.func @transform_3(%arg0: i32) -> (i32, i32) {
    %c0_i32 = arith.constant 0 : i32
    %c0_i32_0 = arith.constant 0 : i32
    %c0_i32_1 = arith.constant 0 : i32
    return %c0_i32, %c0_i32_0 : i32, i32
  }
  func.func @transform_4(%arg0: i32) -> (i32, i32) {
    %c0_i32 = arith.constant 0 : i32
    %c0_i32_0 = arith.constant 0 : i32
    return %arg0, %c0_i32 : i32, i32
  }
}

module attributes {stable_mosaic.version = 11 : i64} {
  func.func @_fc3_kernel(%arg0: memref<2x2304xbf16, #tpu.memory_space<vmem>>, %arg1: memref<2304x600xbf16, #tpu.memory_space<vmem>>, %arg2: memref<1x600xf32, #tpu.memory_space<vmem>>, %arg3: memref<600x120xbf16, #tpu.memory_space<vmem>>, %arg4: memref<1x120xf32, #tpu.memory_space<vmem>>, %arg5: memref<120x10xbf16, #tpu.memory_space<vmem>>, %arg6: memref<1x10xf32, #tpu.memory_space<vmem>>, %arg7: memref<2x10xf32, #tpu.memory_space<vmem>>) attributes {dimension_semantics = [], scalar_prefetch = 0 : i64, scratch_operands = 0 : i64, tpu.core_type = #tpu.core_type<tc>} {
    %c0 = arith.constant 0 : index
    %c0_0 = arith.constant 0 : index
    %0 = vector.load %arg0[%c0, %c0_0] : memref<2x2304xbf16, #tpu.memory_space<vmem>>, vector<2x2304xbf16>
    %c0_1 = arith.constant 0 : index
    %c0_2 = arith.constant 0 : index
    %1 = vector.load %arg1[%c0_1, %c0_2] : memref<2304x600xbf16, #tpu.memory_space<vmem>>, vector<2304x600xbf16>
    %cst = arith.constant dense<0.000000e+00> : vector<2x600xf32>
    %2 = tpu.matmul %0, %1, %cst {dimension_numbers = #tpu.dot_dimension_numbers<[1], [0], [0], [1], [0, 0, 1, 1], [], []>} : vector<2x2304xbf16>, vector<2304x600xbf16>, vector<2x600xf32> -> vector<2x600xf32>
    %c0_3 = arith.constant 0 : index
    %c0_4 = arith.constant 0 : index
    %3 = vector.load %arg2[%c0_3, %c0_4] : memref<1x600xf32, #tpu.memory_space<vmem>>, vector<1x600xf32>
    %4 = vector.broadcast %3 : vector<1x600xf32> to vector<2x600xf32>
    %5 = arith.addf %2, %4 : vector<2x600xf32>
    %6 = arith.truncf %5 : vector<2x600xf32> to vector<2x600xbf16>
    %c0_5 = arith.constant 0 : index
    %c0_6 = arith.constant 0 : index
    %7 = vector.load %arg3[%c0_5, %c0_6] : memref<600x120xbf16, #tpu.memory_space<vmem>>, vector<600x120xbf16>
    %cst_7 = arith.constant dense<0.000000e+00> : vector<2x120xf32>
    %8 = tpu.matmul %6, %7, %cst_7 {dimension_numbers = #tpu.dot_dimension_numbers<[1], [0], [0], [1], [0, 0, 1, 1], [], []>} : vector<2x600xbf16>, vector<600x120xbf16>, vector<2x120xf32> -> vector<2x120xf32>
    %c0_8 = arith.constant 0 : index
    %c0_9 = arith.constant 0 : index
    %9 = vector.load %arg4[%c0_8, %c0_9] : memref<1x120xf32, #tpu.memory_space<vmem>>, vector<1x120xf32>
    %10 = vector.broadcast %9 : vector<1x120xf32> to vector<2x120xf32>
    %11 = arith.addf %8, %10 : vector<2x120xf32>
    %12 = arith.truncf %11 : vector<2x120xf32> to vector<2x120xbf16>
    %c0_10 = arith.constant 0 : index
    %c0_11 = arith.constant 0 : index
    %13 = vector.load %arg5[%c0_10, %c0_11] : memref<120x10xbf16, #tpu.memory_space<vmem>>, vector<120x10xbf16>
    %cst_12 = arith.constant dense<0.000000e+00> : vector<2x10xf32>
    %14 = tpu.matmul %12, %13, %cst_12 {dimension_numbers = #tpu.dot_dimension_numbers<[1], [0], [0], [1], [0, 0, 1, 1], [], []>} : vector<2x120xbf16>, vector<120x10xbf16>, vector<2x10xf32> -> vector<2x10xf32>
    %c0_13 = arith.constant 0 : index
    %c0_14 = arith.constant 0 : index
    %15 = vector.load %arg6[%c0_13, %c0_14] : memref<1x10xf32, #tpu.memory_space<vmem>>, vector<1x10xf32>
    %16 = vector.broadcast %15 : vector<1x10xf32> to vector<2x10xf32>
    %17 = arith.addf %14, %16 : vector<2x10xf32>
    %c0_15 = arith.constant 0 : index
    %c0_16 = arith.constant 0 : index
    %18 = vector.load %arg7[%c0_15, %c0_16] : memref<2x10xf32, #tpu.memory_space<vmem>>, vector<2x10xf32>
    tpu.vector_store %arg7[%c0_15, %c0_16], %17 {strides = array<i32>} : memref<2x10xf32, #tpu.memory_space<vmem>>, vector<2x10xf32>,
    return
  }
}

</mosaic_0001>

<llo_original>
// kernel: fashion_cnn3_forward.3
$region0: #{fashion_cnn3_forward.3}
  #allocation0 [shape = 'u32[]', space=smem, size = 0x4, offset = 0x4, fixed_abs, tag = 'smem constant byte address 0x4 - core index']
  #allocation1 [shape = 'u32[144,128]{1,0:T(1,128)}', space=vmem, size = 0x12000, scoped, tag = 'internal scratch']
  %s0 = inlined_call_operand.vmem [shape: f32[1600,9], index: 0, kind: input, shape index: {}]
  %s1 = inlined_call_operand.vmem [shape: f32[9,128], index: 1, kind: input, shape index: {}]
  %s2 = inlined_call_operand.vmem [shape: f32[1,128], index: 2, kind: input, shape index: {}]
  %s3 = inlined_call_operand.vmem [shape: f32[1,128], index: 3, kind: input, shape index: {}]
  %s4 = inlined_call_operand.vmem [shape: f32[400,128], index: 4, kind: output, shape index: {}]
  %s5 = sld [smem:[#allocation0]]
  $region49: #{fashion_cnn3_forward.3} parent=0
    _
  %s7 = ssub.s32 1, %s5
  %s8 = scalar_select 0, %s7, %s5
  loop: start=0, step=1, limit=4
  $region2: #{fashion_cnn3_forward.3} parent=0 // loop_pre_header
    _
  $region3: #{fashion_cnn3_forward.3} parent=0 // loop_header
    %s10 = sphi 0, %s14
    %p11 = scmp.ge.s32.totalorder %s10, 4
    %s20 = sphi 0, %s22
    %s23 = sphi 0, %s20
    %s24 = sphi 0, %s23
    %s40 = sphi 0, %s24
    %s44 = sphi 0, %s44
    %s46 = sphi 0, %s44
    %s47 = sphi 0, %s46
    %s61 = sphi 0, %s47
    %s65 = sphi 0, %s65
    %s67 = sphi 0, %s65
    %s68 = sphi 0, %s67
    %s82 = sphi 0, %s68
    %s86 = sphi 0, %s86
    %s88 = sphi 0, %s86
    %s89 = sphi 0, %s88
    %s103 = sphi 0, %s89
    %s109 = sphi 0, %s111
    %s112 = sphi 0, %s109
    %s113 = sphi 0, %s112
    %s129 = sphi 0, %s113
  $region4: #{fashion_cnn3_forward.3} parent=0 // loop_header_branch
    %13 = sbr.rel (%p11) target = $region8
  $region5: #{fashion_cnn3_forward.3} parent=0 // loop_body
    %s15 = ssub.s32 %s10, 1
    %s16 = ssub.s32 %s10, 2
    %s17 = sadd.s32 %s10, 1
    %s18 = ssub.s32 %s10, %s17
    %p19 = scmp.eq.s32.totalorder %s18, 0
    %s21 = sadd.s32 %s20, 1
    %s22 = scalar_select %p19, %s20, %s21
    %p25 = pneg %p19
    %p26 = scmp.eq.s32.totalorder %s10, 1
    %p27 = por %p25, %p26
    %p28 = scmp.ne.s32.totalorder %s20, %s23
    %p29 = scmp.eq.s32.totalorder %s10, 0
    %p30 = por %p28, %p29
    %p31 = scmp.ne.s32.totalorder %s20, %s23
    %p32 = scmp.eq.s32.totalorder %s15, 1
    %p33 = por %p31, %p32
    %p34 = scmp.ne.s32.totalorder %s23, %s24
    %p35 = scmp.eq.s32.totalorder %s15, 0
    %p36 = por %p34, %p35
    %p37 = scmp.ne.s32.totalorder %s23, %s24
    %p38 = scmp.eq.s32.totalorder %s16, 1
    %p39 = por %p37, %p38
    %p41 = scmp.ne.s32.totalorder %s24, %s40
    %p42 = scmp.eq.s32.totalorder %s16, 0
    %p43 = por %p41, %p42
    %s45 = sadd.s32 %s44, 1
    %p48 = scmp.eq.s32.totalorder %s10, 1
    %p49 = scmp.ne.s32.totalorder %s44, %s46
    %p50 = scmp.eq.s32.totalorder %s10, 0
    %p51 = por %p49, %p50
    %p52 = scmp.ne.s32.totalorder %s44, %s46
    %p53 = scmp.eq.s32.totalorder %s15, 1
    %p54 = por %p52, %p53
    %p55 = scmp.ne.s32.totalorder %s46, %s47
    %p56 = scmp.eq.s32.totalorder %s15, 0
    %p57 = por %p55, %p56
    %p58 = scmp.ne.s32.totalorder %s46, %s47
    %p59 = scmp.eq.s32.totalorder %s16, 1
    %p60 = por %p58, %p59
    %p62 = scmp.ne.s32.totalorder %s47, %s61
    %p63 = scmp.eq.s32.totalorder %s16, 0
    %p64 = por %p62, %p63
    %s66 = sadd.s32 %s65, 1
    %p69 = scmp.eq.s32.totalorder %s10, 1
    %p70 = scmp.ne.s32.totalorder %s65, %s67
    %p71 = scmp.eq.s32.totalorder %s10, 0
    %p72 = por %p70, %p71
    %p73 = scmp.ne.s32.totalorder %s65, %s67
    %p74 = scmp.eq.s32.totalorder %s15, 1
    %p75 = por %p73, %p74
    %p76 = scmp.ne.s32.totalorder %s67, %s68
    %p77 = scmp.eq.s32.totalorder %s15, 0
    %p78 = por %p76, %p77
    %p79 = scmp.ne.s32.totalorder %s67, %s68
    %p80 = scmp.eq.s32.totalorder %s16, 1
    %p81 = por %p79, %p80
    %p83 = scmp.ne.s32.totalorder %s68, %s82
    %p84 = scmp.eq.s32.totalorder %s16, 0
    %p85 = por %p83, %p84
    %s87 = sadd.s32 %s86, 1
    %p90 = scmp.eq.s32.totalorder %s10, 1
    %p91 = scmp.ne.s32.totalorder %s86, %s88
    %p92 = scmp.eq.s32.totalorder %s10, 0
    %p93 = por %p91, %p92
    %p94 = scmp.ne.s32.totalorder %s86, %s88
    %p95 = scmp.eq.s32.totalorder %s15, 1
    %p96 = por %p94, %p95
    %p97 = scmp.ne.s32.totalorder %s88, %s89
    %p98 = scmp.eq.s32.totalorder %s15, 0
    %p99 = por %p97, %p98
    %p100 = scmp.ne.s32.totalorder %s88, %s89
    %p101 = scmp.eq.s32.totalorder %s16, 1
    %p102 = por %p100, %p101
    %p104 = scmp.ne.s32.totalorder %s89, %s103
    %p105 = scmp.eq.s32.totalorder %s16, 0
    %p106 = por %p104, %p105
    %s107 = ssub.s32 %s10, %s17
    %p108 = scmp.eq.s32.totalorder %s107, 0
    %s110 = sadd.s32 %s109, 1
    %s111 = scalar_select %p108, %s109, %s110
    %p114 = pneg %p108
    %p115 = scmp.eq.s32.totalorder %s10, 1
    %p116 = por %p114, %p115
    %p117 = scmp.ne.s32.totalorder %s109, %s112
    %p118 = scmp.eq.s32.totalorder %s10, 0
    %p119 = por %p117, %p118
    %p120 = scmp.ne.s32.totalorder %s109, %s112
    %p121 = scmp.eq.s32.totalorder %s15, 1
    %p122 = por %p120, %p121
    %p123 = scmp.ne.s32.totalorder %s112, %s113
    %p124 = scmp.eq.s32.totalorder %s15, 0
    %p125 = por %p123, %p124
    %p126 = scmp.ne.s32.totalorder %s112, %s113
    %p127 = scmp.eq.s32.totalorder %s16, 1
    %p128 = por %p126, %p127
    %p130 = scmp.ne.s32.totalorder %s113, %s129
    %p131 = scmp.eq.s32.totalorder %s16, 0
    %p132 = por %p130, %p131
    %p133 = scmp.le.s32.totalorder 1, %s10
    %p134 = scmp.lt.s32.totalorder %s10, 3
    %p135 = pnand %p133, %p134
    %p136 = pneg %p135
    // Predicated region
    $region9: #{fashion_cnn3_forward.3} parent=5 // pred_check
      _
    $region10: #{fashion_cnn3_forward.3} parent=5 // pred_check_branch
      %138 = sbr.rel (%p135) target = $region12
    $region11: #{fashion_cnn3_forward.3} parent=5 // pred_region
      %s139 = ssub.s32 %s10, 1
      // Predicated region
      $region13: #{fashion_cnn3_forward.3} parent=11 // pred_check
        %p140 = pneg %p57
      $region14: #{fashion_cnn3_forward.3} parent=11 // pred_check_branch
        %142 = sbr.rel (%p140) target = $region16
      $region15: #{fashion_cnn3_forward.3} parent=11 // pred_region
        _
      $region16: #{fashion_cnn3_forward.3} parent=11 // pred_fallthru
        _
      // Predicated region
      $region17: #{fashion_cnn3_forward.3} parent=11 // pred_check
        %p143 = pneg %p78
      $region18: #{fashion_cnn3_forward.3} parent=11 // pred_check_branch
        %145 = sbr.rel (%p143) target = $region20
      $region19: #{fashion_cnn3_forward.3} parent=11 // pred_region
        _
      $region20: #{fashion_cnn3_forward.3} parent=11 // pred_fallthru
        _
      // Predicated region
      $region21: #{fashion_cnn3_forward.3} parent=11 // pred_check
        %p146 = pneg %p99
      $region22: #{fashion_cnn3_forward.3} parent=11 // pred_check_branch
        %148 = sbr.rel (%p146) target = $region24
      $region23: #{fashion_cnn3_forward.3} parent=11 // pred_region
        _
      $region24: #{fashion_cnn3_forward.3} parent=11 // pred_fallthru
        _
    $region12: #{fashion_cnn3_forward.3} parent=5 // pred_fallthru
      _
    %p149 = scmp.lt.s32.totalorder %s10, 2
    // Predicated region
    $region25: #{fashion_cnn3_forward.3} parent=5 // pred_check
      %p150 = pneg %p149
    $region26: #{fashion_cnn3_forward.3} parent=5 // pred_check_branch
      %152 = sbr.rel (%p150) target = $region28
    $region27: #{fashion_cnn3_forward.3} parent=5 // pred_region
      // Predicated region
      $region29: #{fashion_cnn3_forward.3} parent=27 // pred_check
        %p153 = pneg %p30
      $region30: #{fashion_cnn3_forward.3} parent=27 // pred_check_branch
        %155 = sbr.rel (%p153) target = $region32
      $region31: #{fashion_cnn3_forward.3} parent=27 // pred_region
        %s156 = smul.u32 100, %s10
        %p157 = scmp.lt.s32.totalorder %s156, 199
        %s158 = scalar_select %p157, %s156, 199
        %s159 = smul.addr %s158, 8
        %s160 = scalar_lea.vmem %s0, %s159
        %s161 = smul.u32 100, %s10
      $region32: #{fashion_cnn3_forward.3} parent=27 // pred_fallthru
        _
    $region28: #{fashion_cnn3_forward.3} parent=5 // pred_fallthru
      _
    %p162 = scmp.le.s32.totalorder 1, %s10
    %p163 = scmp.lt.s32.totalorder %s10, 3
    %p164 = pnand %p162, %p163
    %p165 = pneg %p164
    // Predicated region
    $region33: #{fashion_cnn3_forward.3} parent=5 // pred_check
      _
    $region34: #{fashion_cnn3_forward.3} parent=5 // pred_check_branch
      %167 = sbr.rel (%p164) target = $region36
    $region35: #{fashion_cnn3_forward.3} parent=5 // pred_region
      %s168 = ssub.s32 %s10, 1
      %s169 = smul.u32 100, %s15
      %p170 = scmp.lt.s32.totalorder %s169, 199
      %s171 = scalar_select %p170, %s169, 199
      %s172 = smul.addr %s171, 8
      %s173 = scalar_lea.vmem %s0, %s172
      %p174 = pneg %p36
      %p175 = pneg %p33
      %p176 = pneg %p57
      %p177 = pneg %p54
      %p178 = pneg %p78
      %p179 = pneg %p75
      %p180 = pneg %p99
      %p181 = pneg %p96
      %p182 = pneg %p125
      %p183 = pneg %p122
      %s184 = smul.u32 25, %s15
      %p185 = scmp.lt.s32.totalorder %s184, 49
      %s186 = scalar_select %p185, %s184, 49
      %s187 = smul.addr %s186, 8
      %s188 = scalar_lea.vmem %s4, %s187
      %s189 = smul.u32 100, %s15
      %p190 = scmp.lt.s32.totalorder %s189, 199
      %s191 = scalar_select %p190, %s189, 199
      %s192 = smul.addr %s191, 8
      %s193 = scalar_lea.vmem %s0, %s192
      %s194 = smul.u32 100, %s15
      %s195 = smul.u32 25, %s15
      %p196 = scmp.lt.s32.totalorder %s195, 49
      %s197 = scalar_select %p196, %s195, 49
      %s198 = smul.addr %s197, 8
      %s199 = scalar_lea.vmem %s4, %s198
      %s200 = smul.u32 25, %s15
      %v201 = vld [vmem:[%s193] sm:$0xff]
      %v202 = vld [vmem:[%s193 + $0x8] sm:$0xff]
      %v203 = vld [vmem:[%s193 + $0x10] sm:$0xff]
      %v204 = vld [vmem:[%s193 + $0x18] sm:$0xff]
      %v205 = vld [vmem:[%s193 + $0x20] sm:$0xff]
      %v206 = vld [vmem:[%s193 + $0x28] sm:$0xff]
      %v207 = vld [vmem:[%s193 + $0x30] sm:$0xff]
      %v208 = vld [vmem:[%s193 + $0x38] sm:$0xff]
      %v209 = vld [vmem:[%s193 + $0x40] sm:$0xff]
      %v210 = vld [vmem:[%s193 + $0x48] sm:$0xff]
      %v211 = vld [vmem:[%s193 + $0x50] sm:$0xff]
      %v212 = vld [vmem:[%s193 + $0x58] sm:$0xff]
      %v213 = vld [vmem:[%s193 + $0x60] sm:$0xff]
      %v214 = vld [vmem:[%s193 + $0x68] sm:$0xff]
      %v215 = vld [vmem:[%s193 + $0x70] sm:$0xff]
      %v216 = vld [vmem:[%s193 + $0x78] sm:$0xff]
      %v217 = vld [vmem:[%s193 + $0x80] sm:$0xff]
      %v218 = vld [vmem:[%s193 + $0x88] sm:$0xff]
      %v219 = vld [vmem:[%s193 + $0x90] sm:$0xff]
      %v220 = vld [vmem:[%s193 + $0x98] sm:$0xff]
      %v221 = vld [vmem:[%s193 + $0xa0] sm:$0xff]
      %v222 = vld [vmem:[%s193 + $0xa8] sm:$0xff]
      %v223 = vld [vmem:[%s193 + $0xb0] sm:$0xff]
      %v224 = vld [vmem:[%s193 + $0xb8] sm:$0xff]
      %v225 = vld [vmem:[%s193 + $0xc0] sm:$0xff]
      %v226 = vld [vmem:[%s193 + $0xc8] sm:$0xff]
      %v227 = vld [vmem:[%s193 + $0xd0] sm:$0xff]
      %v228 = vld [vmem:[%s193 + $0xd8] sm:$0xff]
      %v229 = vld [vmem:[%s193 + $0xe0] sm:$0xff]
      %v230 = vld [vmem:[%s193 + $0xe8] sm:$0xff]
      %v231 = vld [vmem:[%s193 + $0xf0] sm:$0xff]
      %v232 = vld [vmem:[%s193 + $0xf8] sm:$0xff]
      %v233 = vld [vmem:[%s193 + $0x100] sm:$0xff]
      %v234 = vld [vmem:[%s193 + $0x108] sm:$0xff]
      %v235 = vld [vmem:[%s193 + $0x110] sm:$0xff]
      %v236 = vld [vmem:[%s193 + $0x118] sm:$0xff]
      %v237 = vld [vmem:[%s193 + $0x120] sm:$0xff]
      %v238 = vld [vmem:[%s193 + $0x128] sm:$0xff]
      %v239 = vld [vmem:[%s193 + $0x130] sm:$0xff]
      %v240 = vld [vmem:[%s193 + $0x138] sm:$0xff]
      %v241 = vld [vmem:[%s193 + $0x140] sm:$0xff]
      %v242 = vld [vmem:[%s193 + $0x148] sm:$0xff]
      %v243 = vld [vmem:[%s193 + $0x150] sm:$0xff]
      %v244 = vld [vmem:[%s193 + $0x158] sm:$0xff]
      %v245 = vld [vmem:[%s193 + $0x160] sm:$0xff]
      %v246 = vld [vmem:[%s193 + $0x168] sm:$0xff]
      %v247 = vld [vmem:[%s193 + $0x170] sm:$0xff]
      %v248 = vld [vmem:[%s193 + $0x178] sm:$0xff]
      %v249 = vld [vmem:[%s193 + $0x180] sm:$0xff]
      %v250 = vld [vmem:[%s193 + $0x188] sm:$0xff]
      %v251 = vld [vmem:[%s193 + $0x190] sm:$0xff]
      %v252 = vld [vmem:[%s193 + $0x198] sm:$0xff]
      %v253 = vld [vmem:[%s193 + $0x1a0] sm:$0xff]
      %v254 = vld [vmem:[%s193 + $0x1a8] sm:$0xff]
      %v255 = vld [vmem:[%s193 + $0x1b0] sm:$0xff]
      %v256 = vld [vmem:[%s193 + $0x1b8] sm:$0xff]
      %v257 = vld [vmem:[%s193 + $0x1c0] sm:$0xff]
      %v258 = vld [vmem:[%s193 + $0x1c8] sm:$0xff]
      %v259 = vld [vmem:[%s193 + $0x1d0] sm:$0xff]
      %v260 = vld [vmem:[%s193 + $0x1d8] sm:$0xff]
      %v261 = vld [vmem:[%s193 + $0x1e0] sm:$0xff]
      %v262 = vld [vmem:[%s193 + $0x1e8] sm:$0xff]
      %v263 = vld [vmem:[%s193 + $0x1f0] sm:$0xff]
      %v264 = vld [vmem:[%s193 + $0x1f8] sm:$0xff]
      %v265 = vld [vmem:[%s193 + $0x200] sm:$0xff]
      %v266 = vld [vmem:[%s193 + $0x208] sm:$0xff]
      %v267 = vld [vmem:[%s193 + $0x210] sm:$0xff]
      %v268 = vld [vmem:[%s193 + $0x218] sm:$0xff]
      %v269 = vld [vmem:[%s193 + $0x220] sm:$0xff]
      %v270 = vld [vmem:[%s193 + $0x228] sm:$0xff]
      %v271 = vld [vmem:[%s193 + $0x230] sm:$0xff]
      %v272 = vld [vmem:[%s193 + $0x238] sm:$0xff]
      %v273 = vld [vmem:[%s193 + $0x240] sm:$0xff]
      %v274 = vld [vmem:[%s193 + $0x248] sm:$0xff]
      %v275 = vld [vmem:[%s193 + $0x250] sm:$0xff]
      %v276 = vld [vmem:[%s193 + $0x258] sm:$0xff]
      %v277 = vld [vmem:[%s193 + $0x260] sm:$0xff]
      %v278 = vld [vmem:[%s193 + $0x268] sm:$0xff]
      %v279 = vld [vmem:[%s193 + $0x270] sm:$0xff]
      %v280 = vld [vmem:[%s193 + $0x278] sm:$0xff]
      %v281 = vld [vmem:[%s193 + $0x280] sm:$0xff]
      %v282 = vld [vmem:[%s193 + $0x288] sm:$0xff]
      %v283 = vld [vmem:[%s193 + $0x290] sm:$0xff]
      %v284 = vld [vmem:[%s193 + $0x298] sm:$0xff]
      %v285 = vld [vmem:[%s193 + $0x2a0] sm:$0xff]
      %v286 = vld [vmem:[%s193 + $0x2a8] sm:$0xff]
      %v287 = vld [vmem:[%s193 + $0x2b0] sm:$0xff]
      %v288 = vld [vmem:[%s193 + $0x2b8] sm:$0xff]
      %v289 = vld [vmem:[%s193 + $0x2c0] sm:$0xff]
      %v290 = vld [vmem:[%s193 + $0x2c8] sm:$0xff]
      %v291 = vld [vmem:[%s193 + $0x2d0] sm:$0xff]
      %v292 = vld [vmem:[%s193 + $0x2d8] sm:$0xff]
      %v293 = vld [vmem:[%s193 + $0x2e0] sm:$0xff]
      %v294 = vld [vmem:[%s193 + $0x2e8] sm:$0xff]
      %v295 = vld [vmem:[%s193 + $0x2f0] sm:$0xff]
      %v296 = vld [vmem:[%s193 + $0x2f8] sm:$0xff]
      %v297 = vld [vmem:[%s193 + $0x300] sm:$0xff]
      %v298 = vld [vmem:[%s193 + $0x308] sm:$0xff]
      %v299 = vld [vmem:[%s193 + $0x310] sm:$0xff]
      %v300 = vld [vmem:[%s193 + $0x318] sm:$0xff]
      %v301 = vld [vmem:[%s1] sm:$0xff]
      %v302 = vld [vmem:[%s1 + $0x8] sm:$0x1]
      %vm303 = vcmask 72704
      %v305 = vsel %vm303, %v201, 0
      %v308 = vsel %vm303, %v202, 0
      %v311 = vsel %vm303, %v203, 0
      %v314 = vsel %vm303, %v204, 0
      %v317 = vsel %vm303, %v205, 0
      %v320 = vsel %vm303, %v206, 0
      %v323 = vsel %vm303, %v207, 0
      %v326 = vsel %vm303, %v208, 0
      %v329 = vsel %vm303, %v209, 0
      %v332 = vsel %vm303, %v210, 0
      %v335 = vsel %vm303, %v211, 0
      %v338 = vsel %vm303, %v212, 0
      %v341 = vsel %vm303, %v213, 0
      %v344 = vsel %vm303, %v214, 0
      %v347 = vsel %vm303, %v215, 0
      %v350 = vsel %vm303, %v216, 0
      %v353 = vsel %vm303, %v217, 0
      %v356 = vsel %vm303, %v218, 0
      %v359 = vsel %vm303, %v219, 0
      %v362 = vsel %vm303, %v220, 0
      %v365 = vsel %vm303, %v221, 0
      %v368 = vsel %vm303, %v222, 0
      %v371 = vsel %vm303, %v223, 0
      %v374 = vsel %vm303, %v224, 0
      %v377 = vsel %vm303, %v225, 0
      %v380 = vsel %vm303, %v226, 0
      %v383 = vsel %vm303, %v227, 0
      %v386 = vsel %vm303, %v228, 0
      %v389 = vsel %vm303, %v229, 0
      %v392 = vsel %vm303, %v230, 0
      %v395 = vsel %vm303, %v231, 0
      %v398 = vsel %vm303, %v232, 0
      %v401 = vsel %vm303, %v233, 0
      %v404 = vsel %vm303, %v234, 0
      %v407 = vsel %vm303, %v235, 0
      %v410 = vsel %vm303, %v236, 0
      %v413 = vsel %vm303, %v237, 0
      %v416 = vsel %vm303, %v238, 0
      %v419 = vsel %vm303, %v239, 0
      %v422 = vsel %vm303, %v240, 0
      %v425 = vsel %vm303, %v241, 0
      %v428 = vsel %vm303, %v242, 0
      %v431 = vsel %vm303, %v243, 0
      %v434 = vsel %vm303, %v244, 0
      %v437 = vsel %vm303, %v245, 0
      %v440 = vsel %vm303, %v246, 0
      %v443 = vsel %vm303, %v247, 0
      %v446 = vsel %vm303, %v248, 0
      %v449 = vsel %vm303, %v249, 0
      %v452 = vsel %vm303, %v250, 0
      %v455 = vsel %vm303, %v251, 0
      %v458 = vsel %vm303, %v252, 0
      %v461 = vsel %vm303, %v253, 0
      %v464 = vsel %vm303, %v254, 0
      %v467 = vsel %vm303, %v255, 0
      %v470 = vsel %vm303, %v256, 0
      %v473 = vsel %vm303, %v257, 0
      %v476 = vsel %vm303, %v258, 0
      %v479 = vsel %vm303, %v259, 0
      %v482 = vsel %vm303, %v260, 0
      %v485 = vsel %vm303, %v261, 0
      %v488 = vsel %vm303, %v262, 0
      %v491 = vsel %vm303, %v263, 0
      %v494 = vsel %vm303, %v264, 0
      %v497 = vsel %vm303, %v265, 0
      %v500 = vsel %vm303, %v266, 0
      %v503 = vsel %vm303, %v267, 0
      %v506 = vsel %vm303, %v268, 0
      %v509 = vsel %vm303, %v269, 0
      %v512 = vsel %vm303, %v270, 0
      %v515 = vsel %vm303, %v271, 0
      %v518 = vsel %vm303, %v272, 0
      %v521 = vsel %vm303, %v273, 0
      %v524 = vsel %vm303, %v274, 0
      %v527 = vsel %vm303, %v275, 0
      %v530 = vsel %vm303, %v276, 0
      %v533 = vsel %vm303, %v277, 0
      %v536 = vsel %vm303, %v278, 0
      %v539 = vsel %vm303, %v279, 0
      %v542 = vsel %vm303, %v280, 0
      %v545 = vsel %vm303, %v281, 0
      %v548 = vsel %vm303, %v282, 0
      %v551 = vsel %vm303, %v283, 0
      %v554 = vsel %vm303, %v284, 0
      %v557 = vsel %vm303, %v285, 0
      %v560 = vsel %vm303, %v286, 0
      %v563 = vsel %vm303, %v287, 0
      %v566 = vsel %vm303, %v288, 0
      %v569 = vsel %vm303, %v289, 0
      %v572 = vsel %vm303, %v290, 0
      %v575 = vsel %vm303, %v291, 0
      %v578 = vsel %vm303, %v292, 0
      %v581 = vsel %vm303, %v293, 0
      %v584 = vsel %vm303, %v294, 0
      %v587 = vsel %vm303, %v295, 0
      %v590 = vsel %vm303, %v296, 0
      %v593 = vsel %vm303, %v297, 0
      %v596 = vsel %vm303, %v298, 0
      %v599 = vsel %vm303, %v299, 0
      %v602 = vsel %vm303, %v300, 0
      %vm604 = vcmask 1040384
      %v606 = vsel %vm604, %v302, 0
      %608 = vmatprep.subr.mxu0 0.0
      %609 = vmatpush1.msra.mxu0 0.0
      %610 = vmatprep.subr.mxu0 0.0
      %611 = vmatpush1.msra.mxu0 0.0
      %612 = vmatprep.subr.mxu0 0.0
      %613 = vmatpush1.msra.mxu0 0.0
      %614 = vmatprep.subr.mxu0 0.0
      %615 = vmatpush1.msra.mxu0 0.0
      %616 = vmatprep.subr.mxu0 0.0
      %617 = vmatpush1.msra.mxu0 0.0
      %618 = vmatprep.subr.mxu0 0.0
      %619 = vmatpush1.msra.mxu0 0.0
      %620 = vmatprep.subr.mxu0 0.0
      %621 = vmatpush1.msra.mxu0 0.0
      %622 = vmatprep.subr.mxu0 0.0
      %623 = vmatpush1.msra.mxu0 0.0
      %624 = vmatprep.subr.mxu0 0.0
      %625 = vmatpush1.msra.mxu0 0.0
      %626 = vmatprep.subr.mxu0 0.0
      %627 = vmatpush1.msra.mxu0 0.0
      %628 = vmatprep.subr.mxu0 0.0
      %629 = vmatpush1.msra.mxu0 0.0
      %630 = vmatprep.subr.mxu0 0.0
      %631 = vmatpush1.msra.mxu0 0.0
      %632 = vmatprep.subr.mxu0 0.0
      %633 = vmatpush1.msra.mxu0 0.0
      %634 = vmatprep.subr.mxu0 0.0
      %635 = vmatpush1.msra.mxu0 0.0
      %636 = vmatprep.subr.mxu0 0.0
      %637 = vmatpush1.msra.mxu0 %v606
      %638 = vmatprep.subr.mxu0 0.0
      %639 = vmatpush1.msra.mxu0 %v301
      %640 = vmatprep.subr.mxu0 0.0
      %641 = vmatpush2.msra.mxu0 0.0
      %642 = vmatprep.subr.mxu0 0.0
      %643 = vmatpush2.msra.mxu0 0.0
      %644 = vmatprep.subr.mxu0 0.0
      %645 = vmatpush2.msra.mxu0 0.0
      %646 = vmatprep.subr.mxu0 0.0
      %647 = vmatpush2.msra.mxu0 0.0
      %648 = vmatprep.subr.mxu0 0.0
      %649 = vmatpush2.msra.mxu0 0.0
      %650 = vmatprep.subr.mxu0 0.0
      %651 = vmatpush2.msra.mxu0 0.0
      %652 = vmatprep.subr.mxu0 0.0
      %653 = vmatpush2.msra.mxu0 0.0
      %654 = vmatprep.subr.mxu0 0.0
      %655 = vmatpush2.msra.mxu0 0.0
      %656 = vmatprep.subr.mxu0 0.0
      %657 = vmatpush2.msra.mxu0 0.0
      %658 = vmatprep.subr.mxu0 0.0
      %659 = vmatpush2.msra.mxu0 0.0
      %660 = vmatprep.subr.mxu0 0.0
      %661 = vmatpush2.msra.mxu0 0.0
      %662 = vmatprep.subr.mxu0 0.0
      %663 = vmatpush2.msra.mxu0 0.0
      %664 = vmatprep.subr.mxu0 0.0
      %665 = vmatpush2.msra.mxu0 0.0
      %666 = vmatprep.subr.mxu0 0.0
      %667 = vmatpush2.msra.mxu0 0.0
      %668 = vmatprep.subr.mxu0 0.0
      %669 = vmatpush2.msra.mxu0 0.0
      %670 = vmatprep.subr.mxu0 0.0
      %671 = vmatpush2.msra.mxu0 0.0
      %672 = vmatprep.mubr.f32.mxu0 0.0
      %673 = vmatmul.mubr.f32.gmra.mxu0 %v305
      %v674 = vpop.f32.mrf.mxu0
      %v675 = vadd.f32 0.0, %v674
      %v676 = vpop.f32.mrf.mxu0
      %677 = vmatprep.mubr.f32.mxu0 0.0
      %678 = vmatmul.mubr.f32.gmra.mxu0 %v308
      %v679 = vpop.f32.mrf.mxu0
      %v680 = vadd.f32 0.0, %v679
      %v681 = vpop.f32.mrf.mxu0
      %682 = vmatprep.mubr.f32.mxu0 0.0
      %683 = vmatmul.mubr.f32.gmra.mxu0 %v311
      %v684 = vpop.f32.mrf.mxu0
      %v685 = vadd.f32 0.0, %v684
      %v686 = vpop.f32.mrf.mxu0
      %687 = vmatprep.mubr.f32.mxu0 0.0
      %688 = vmatmul.mubr.f32.gmra.mxu0 %v314
      %v689 = vpop.f32.mrf.mxu0
      %v690 = vadd.f32 0.0, %v689
      %v691 = vpop.f32.mrf.mxu0
      %692 = vmatprep.mubr.f32.mxu0 0.0
      %693 = vmatmul.mubr.f32.gmra.mxu0 %v317
      %v694 = vpop.f32.mrf.mxu0
      %v695 = vadd.f32 0.0, %v694
      %v696 = vpop.f32.mrf.mxu0
      %697 = vmatprep.mubr.f32.mxu0 0.0
      %698 = vmatmul.mubr.f32.gmra.mxu0 %v320
      %v699 = vpop.f32.mrf.mxu0
      %v700 = vadd.f32 0.0, %v699
      %v701 = vpop.f32.mrf.mxu0
      %702 = vmatprep.mubr.f32.mxu0 0.0
      %703 = vmatmul.mubr.f32.gmra.mxu0 %v323
      %v704 = vpop.f32.mrf.mxu0
      %v705 = vadd.f32 0.0, %v704
      %v706 = vpop.f32.mrf.mxu0
      %707 = vmatprep.mubr.f32.mxu0 0.0
      %708 = vmatmul.mubr.f32.gmra.mxu0 %v326
      %v709 = vpop.f32.mrf.mxu0
      %v710 = vadd.f32 0.0, %v709
      %v711 = vpop.f32.mrf.mxu0
      %712 = vmatprep.mubr.f32.mxu0 0.0
      %713 = vmatmul.mubr.f32.gmra.mxu0 %v329
      %v714 = vpop.f32.mrf.mxu0
      %v715 = vadd.f32 0.0, %v714
      %v716 = vpop.f32.mrf.mxu0
      %717 = vmatprep.mubr.f32.mxu0 0.0
      %718 = vmatmul.mubr.f32.gmra.mxu0 %v332
      %v719 = vpop.f32.mrf.mxu0
      %v720 = vadd.f32 0.0, %v719
      %v721 = vpop.f32.mrf.mxu0
      %722 = vmatprep.mubr.f32.mxu0 0.0
      %723 = vmatmul.mubr.f32.gmra.mxu0 %v335
      %v724 = vpop.f32.mrf.mxu0
      %v725 = vadd.f32 0.0, %v724
      %v726 = vpop.f32.mrf.mxu0
      %727 = vmatprep.mubr.f32.mxu0 0.0
      %728 = vmatmul.mubr.f32.gmra.mxu0 %v338
      %v729 = vpop.f32.mrf.mxu0
      %v730 = vadd.f32 0.0, %v729
      %v731 = vpop.f32.mrf.mxu0
      %732 = vmatprep.mubr.f32.mxu0 0.0
      %733 = vmatmul.mubr.f32.gmra.mxu0 %v341
      %v734 = vpop.f32.mrf.mxu0
      %v735 = vadd.f32 0.0, %v734
      %v736 = vpop.f32.mrf.mxu0
      %737 = vmatprep.mubr.f32.mxu0 0.0
      %738 = vmatmul.mubr.f32.gmra.mxu0 %v344
      %v739 = vpop.f32.mrf.mxu0
      %v740 = vadd.f32 0.0, %v739
      %v741 = vpop.f32.mrf.mxu0
      %742 = vmatprep.mubr.f32.mxu0 0.0
      %743 = vmatmul.mubr.f32.gmra.mxu0 %v347
      %v744 = vpop.f32.mrf.mxu0
      %v745 = vadd.f32 0.0, %v744
      %v746 = vpop.f32.mrf.mxu0
      %747 = vmatprep.mubr.f32.mxu0 0.0
      %748 = vmatmul.mubr.f32.gmra.mxu0 %v350
      %v749 = vpop.f32.mrf.mxu0
      %v750 = vadd.f32 0.0, %v749
      %v751 = vpop.f32.mrf.mxu0
      %752 = vmatprep.mubr.f32.mxu0 0.0
      %753 = vmatmul.mubr.f32.gmra.mxu0 %v353
      %v754 = vpop.f32.mrf.mxu0
      %v755 = vadd.f32 0.0, %v754
      %v756 = vpop.f32.mrf.mxu0
      %757 = vmatprep.mubr.f32.mxu0 0.0
      %758 = vmatmul.mubr.f32.gmra.mxu0 %v356
      %v759 = vpop.f32.mrf.mxu0
      %v760 = vadd.f32 0.0, %v759
      %v761 = vpop.f32.mrf.mxu0
      %762 = vmatprep.mubr.f32.mxu0 0.0
      %763 = vmatmul.mubr.f32.gmra.mxu0 %v359
      %v764 = vpop.f32.mrf.mxu0
      %v765 = vadd.f32 0.0, %v764
      %v766 = vpop.f32.mrf.mxu0
      %767 = vmatprep.mubr.f32.mxu0 0.0
      %768 = vmatmul.mubr.f32.gmra.mxu0 %v362
      %v769 = vpop.f32.mrf.mxu0
      %v770 = vadd.f32 0.0, %v769
      %v771 = vpop.f32.mrf.mxu0
      %772 = vmatprep.mubr.f32.mxu0 0.0
      %773 = vmatmul.mubr.f32.gmra.mxu0 %v365
      %v774 = vpop.f32.mrf.mxu0
      %v775 = vadd.f32 0.0, %v774
      %v776 = vpop.f32.mrf.mxu0
      %777 = vmatprep.mubr.f32.mxu0 0.0
      %778 = vmatmul.mubr.f32.gmra.mxu0 %v368
      %v779 = vpop.f32.mrf.mxu0
      %v780 = vadd.f32 0.0, %v779
      %v781 = vpop.f32.mrf.mxu0
      %782 = vmatprep.mubr.f32.mxu0 0.0
      %783 = vmatmul.mubr.f32.gmra.mxu0 %v371
      %v784 = vpop.f32.mrf.mxu0
      %v785 = vadd.f32 0.0, %v784
      %v786 = vpop.f32.mrf.mxu0
      %787 = vmatprep.mubr.f32.mxu0 0.0
      %788 = vmatmul.mubr.f32.gmra.mxu0 %v374
      %v789 = vpop.f32.mrf.mxu0
      %v790 = vadd.f32 0.0, %v789
      %v791 = vpop.f32.mrf.mxu0
      %792 = vmatprep.mubr.f32.mxu0 0.0
      %793 = vmatmul.mubr.f32.gmra.mxu0 %v377
      %v794 = vpop.f32.mrf.mxu0
      %v795 = vadd.f32 0.0, %v794
      %v796 = vpop.f32.mrf.mxu0
      %797 = vmatprep.mubr.f32.mxu0 0.0
      %798 = vmatmul.mubr.f32.gmra.mxu0 %v380
      %v799 = vpop.f32.mrf.mxu0
      %v800 = vadd.f32 0.0, %v799
      %v801 = vpop.f32.mrf.mxu0
      %802 = vmatprep.mubr.f32.mxu0 0.0
      %803 = vmatmul.mubr.f32.gmra.mxu0 %v383
      %v804 = vpop.f32.mrf.mxu0
      %v805 = vadd.f32 0.0, %v804
      %v806 = vpop.f32.mrf.mxu0
      %807 = vmatprep.mubr.f32.mxu0 0.0
      %808 = vmatmul.mubr.f32.gmra.mxu0 %v386
      %v809 = vpop.f32.mrf.mxu0
      %v810 = vadd.f32 0.0, %v809
      %v811 = vpop.f32.mrf.mxu0
      %812 = vmatprep.mubr.f32.mxu0 0.0
      %813 = vmatmul.mubr.f32.gmra.mxu0 %v389
      %v814 = vpop.f32.mrf.mxu0
      %v815 = vadd.f32 0.0, %v814
      %v816 = vpop.f32.mrf.mxu0
      %817 = vmatprep.mubr.f32.mxu0 0.0
      %818 = vmatmul.mubr.f32.gmra.mxu0 %v392
      %v819 = vpop.f32.mrf.mxu0
      %v820 = vadd.f32 0.0, %v819
      %v821 = vpop.f32.mrf.mxu0
      %822 = vmatprep.mubr.f32.mxu0 0.0
      %823 = vmatmul.mubr.f32.gmra.mxu0 %v395
      %v824 = vpop.f32.mrf.mxu0
      %v825 = vadd.f32 0.0, %v824
      %v826 = vpop.f32.mrf.mxu0
      %827 = vmatprep.mubr.f32.mxu0 0.0
      %828 = vmatmul.mubr.f32.gmra.mxu0 %v398
      %v829 = vpop.f32.mrf.mxu0
      %v830 = vadd.f32 0.0, %v829
      %v831 = vpop.f32.mrf.mxu0
      %832 = vmatprep.mubr.f32.mxu0 0.0
      %833 = vmatmul.mubr.f32.gmra.mxu0 %v401
      %v834 = vpop.f32.mrf.mxu0
      %v835 = vadd.f32 0.0, %v834
      %v836 = vpop.f32.mrf.mxu0
      %837 = vmatprep.mubr.f32.mxu0 0.0
      %838 = vmatmul.mubr.f32.gmra.mxu0 %v404
      %v839 = vpop.f32.mrf.mxu0
      %v840 = vadd.f32 0.0, %v839
      %v841 = vpop.f32.mrf.mxu0
      %842 = vmatprep.mubr.f32.mxu0 0.0
      %843 = vmatmul.mubr.f32.gmra.mxu0 %v407
      %v844 = vpop.f32.mrf.mxu0
      %v845 = vadd.f32 0.0, %v844
      %v846 = vpop.f32.mrf.mxu0
      %847 = vmatprep.mubr.f32.mxu0 0.0
      %848 = vmatmul.mubr.f32.gmra.mxu0 %v410
      %v849 = vpop.f32.mrf.mxu0
      %v850 = vadd.f32 0.0, %v849
      %v851 = vpop.f32.mrf.mxu0
      %852 = vmatprep.mubr.f32.mxu0 0.0
      %853 = vmatmul.mubr.f32.gmra.mxu0 %v413
      %v854 = vpop.f32.mrf.mxu0
      %v855 = vadd.f32 0.0, %v854
      %v856 = vpop.f32.mrf.mxu0
      %857 = vmatprep.mubr.f32.mxu0 0.0
      %858 = vmatmul.mubr.f32.gmra.mxu0 %v416
      %v859 = vpop.f32.mrf.mxu0
      %v860 = vadd.f32 0.0, %v859
      %v861 = vpop.f32.mrf.mxu0
      %862 = vmatprep.mubr.f32.mxu0 0.0
      %863 = vmatmul.mubr.f32.gmra.mxu0 %v419
      %v864 = vpop.f32.mrf.mxu0
      %v865 = vadd.f32 0.0, %v864
      %v866 = vpop.f32.mrf.mxu0
      %867 = vmatprep.mubr.f32.mxu0 0.0
      %868 = vmatmul.mubr.f32.gmra.mxu0 %v422
      %v869 = vpop.f32.mrf.mxu0
      %v870 = vadd.f32 0.0, %v869
      %v871 = vpop.f32.mrf.mxu0
      %872 = vmatprep.mubr.f32.mxu0 0.0
      %873 = vmatmul.mubr.f32.gmra.mxu0 %v425
      %v874 = vpop.f32.mrf.mxu0
      %v875 = vadd.f32 0.0, %v874
      %v876 = vpop.f32.mrf.mxu0
      %877 = vmatprep.mubr.f32.mxu0 0.0
      %878 = vmatmul.mubr.f32.gmra.mxu0 %v428
      %v879 = vpop.f32.mrf.mxu0
      %v880 = vadd.f32 0.0, %v879
      %v881 = vpop.f32.mrf.mxu0
      %882 = vmatprep.mubr.f32.mxu0 0.0
      %883 = vmatmul.mubr.f32.gmra.mxu0 %v431
      %v884 = vpop.f32.mrf.mxu0
      %v885 = vadd.f32 0.0, %v884
      %v886 = vpop.f32.mrf.mxu0
      %887 = vmatprep.mubr.f32.mxu0 0.0
      %888 = vmatmul.mubr.f32.gmra.mxu0 %v434
      %v889 = vpop.f32.mrf.mxu0
      %v890 = vadd.f32 0.0, %v889
      %v891 = vpop.f32.mrf.mxu0
      %892 = vmatprep.mubr.f32.mxu0 0.0
      %893 = vmatmul.mubr.f32.gmra.mxu0 %v437
      %v894 = vpop.f32.mrf.mxu0
      %v895 = vadd.f32 0.0, %v894
      %v896 = vpop.f32.mrf.mxu0
      %897 = vmatprep.mubr.f32.mxu0 0.0
      %898 = vmatmul.mubr.f32.gmra.mxu0 %v440
      %v899 = vpop.f32.mrf.mxu0
      %v900 = vadd.f32 0.0, %v899
      %v901 = vpop.f32.mrf.mxu0
      %902 = vmatprep.mubr.f32.mxu0 0.0
      %903 = vmatmul.mubr.f32.gmra.mxu0 %v443
      %v904 = vpop.f32.mrf.mxu0
      %v905 = vadd.f32 0.0, %v904
      %v906 = vpop.f32.mrf.mxu0
      %907 = vmatprep.mubr.f32.mxu0 0.0
      %908 = vmatmul.mubr.f32.gmra.mxu0 %v446
      %v909 = vpop.f32.mrf.mxu0
      %v910 = vadd.f32 0.0, %v909
      %v911 = vpop.f32.mrf.mxu0
      %912 = vmatprep.mubr.f32.mxu0 0.0
      %913 = vmatmul.mubr.f32.gmra.mxu0 %v449
      %v914 = vpop.f32.mrf.mxu0
      %v915 = vadd.f32 0.0, %v914
      %v916 = vpop.f32.mrf.mxu0
      %917 = vmatprep.mubr.f32.mxu0 0.0
      %918 = vmatmul.mubr.f32.gmra.mxu0 %v452
      %v919 = vpop.f32.mrf.mxu0
      %v920 = vadd.f32 0.0, %v919
      %v921 = vpop.f32.mrf.mxu0
      %922 = vmatprep.mubr.f32.mxu0 0.0
      %923 = vmatmul.mubr.f32.gmra.mxu0 %v455
      %v924 = vpop.f32.mrf.mxu0
      %v925 = vadd.f32 0.0, %v924
      %v926 = vpop.f32.mrf.mxu0
      %927 = vmatprep.mubr.f32.mxu0 0.0
      %928 = vmatmul.mubr.f32.gmra.mxu0 %v458
      %v929 = vpop.f32.mrf.mxu0
      %v930 = vadd.f32 0.0, %v929
      %v931 = vpop.f32.mrf.mxu0
      %932 = vmatprep.mubr.f32.mxu0 0.0
      %933 = vmatmul.mubr.f32.gmra.mxu0 %v461
      %v934 = vpop.f32.mrf.mxu0
      %v935 = vadd.f32 0.0, %v934
      %v936 = vpop.f32.mrf.mxu0
      %937 = vmatprep.mubr.f32.mxu0 0.0
      %938 = vmatmul.mubr.f32.gmra.mxu0 %v464
      %v939 = vpop.f32.mrf.mxu0
      %v940 = vadd.f32 0.0, %v939
      %v941 = vpop.f32.mrf.mxu0
      %942 = vmatprep.mubr.f32.mxu0 0.0
      %943 = vmatmul.mubr.f32.gmra.mxu0 %v467
      %v944 = vpop.f32.mrf.mxu0
      %v945 = vadd.f32 0.0, %v944
      %v946 = vpop.f32.mrf.mxu0
      %947 = vmatprep.mubr.f32.mxu0 0.0
      %948 = vmatmul.mubr.f32.gmra.mxu0 %v470
      %v949 = vpop.f32.mrf.mxu0
      %v950 = vadd.f32 0.0, %v949
      %v951 = vpop.f32.mrf.mxu0
      %952 = vmatprep.mubr.f32.mxu0 0.0
      %953 = vmatmul.mubr.f32.gmra.mxu0 %v473
      %v954 = vpop.f32.mrf.mxu0
      %v955 = vadd.f32 0.0, %v954
      %v956 = vpop.f32.mrf.mxu0
      %957 = vmatprep.mubr.f32.mxu0 0.0
      %958 = vmatmul.mubr.f32.gmra.mxu0 %v476
      %v959 = vpop.f32.mrf.mxu0
      %v960 = vadd.f32 0.0, %v959
      %v961 = vpop.f32.mrf.mxu0
      %962 = vmatprep.mubr.f32.mxu0 0.0
      %963 = vmatmul.mubr.f32.gmra.mxu0 %v479
      %v964 = vpop.f32.mrf.mxu0
      %v965 = vadd.f32 0.0, %v964
      %v966 = vpop.f32.mrf.mxu0
      %967 = vmatprep.mubr.f32.mxu0 0.0
      %968 = vmatmul.mubr.f32.gmra.mxu0 %v482
      %v969 = vpop.f32.mrf.mxu0
      %v970 = vadd.f32 0.0, %v969
      %v971 = vpop.f32.mrf.mxu0
      %972 = vmatprep.mubr.f32.mxu0 0.0
      %973 = vmatmul.mubr.f32.gmra.mxu0 %v485
      %v974 = vpop.f32.mrf.mxu0
      %v975 = vadd.f32 0.0, %v974
      %v976 = vpop.f32.mrf.mxu0
      %977 = vmatprep.mubr.f32.mxu0 0.0
      %978 = vmatmul.mubr.f32.gmra.mxu0 %v488
      %v979 = vpop.f32.mrf.mxu0
      %v980 = vadd.f32 0.0, %v979
      %v981 = vpop.f32.mrf.mxu0
      %982 = vmatprep.mubr.f32.mxu0 0.0
      %983 = vmatmul.mubr.f32.gmra.mxu0 %v491
      %v984 = vpop.f32.mrf.mxu0
      %v985 = vadd.f32 0.0, %v984
      %v986 = vpop.f32.mrf.mxu0
      %987 = vmatprep.mubr.f32.mxu0 0.0
      %988 = vmatmul.mubr.f32.gmra.mxu0 %v494
      %v989 = vpop.f32.mrf.mxu0
      %v990 = vadd.f32 0.0, %v989
      %v991 = vpop.f32.mrf.mxu0
      %992 = vmatprep.mubr.f32.mxu0 0.0
      %993 = vmatmul.mubr.f32.gmra.mxu0 %v497
      %v994 = vpop.f32.mrf.mxu0
      %v995 = vadd.f32 0.0, %v994
      %v996 = vpop.f32.mrf.mxu0
      %997 = vmatprep.mubr.f32.mxu0 0.0
      %998 = vmatmul.mubr.f32.gmra.mxu0 %v500
      %v999 = vpop.f32.mrf.mxu0
      %v1000 = vadd.f32 0.0, %v999
      %v1001 = vpop.f32.mrf.mxu0
      %1002 = vmatprep.mubr.f32.mxu0 0.0
      %1003 = vmatmul.mubr.f32.gmra.mxu0 %v503
      %v1004 = vpop.f32.mrf.mxu0
      %v1005 = vadd.f32 0.0, %v1004
      %v1006 = vpop.f32.mrf.mxu0
      %1007 = vmatprep.mubr.f32.mxu0 0.0
      %1008 = vmatmul.mubr.f32.gmra.mxu0 %v506
      %v1009 = vpop.f32.mrf.mxu0
      %v1010 = vadd.f32 0.0, %v1009
      %v1011 = vpop.f32.mrf.mxu0
      %1012 = vmatprep.mubr.f32.mxu0 0.0
      %1013 = vmatmul.mubr.f32.gmra.mxu0 %v509
      %v1014 = vpop.f32.mrf.mxu0
      %v1015 = vadd.f32 0.0, %v1014
      %v1016 = vpop.f32.mrf.mxu0
      %1017 = vmatprep.mubr.f32.mxu0 0.0
      %1018 = vmatmul.mubr.f32.gmra.mxu0 %v512
      %v1019 = vpop.f32.mrf.mxu0
      %v1020 = vadd.f32 0.0, %v1019
      %v1021 = vpop.f32.mrf.mxu0
      %1022 = vmatprep.mubr.f32.mxu0 0.0
      %1023 = vmatmul.mubr.f32.gmra.mxu0 %v515
      %v1024 = vpop.f32.mrf.mxu0
      %v1025 = vadd.f32 0.0, %v1024
      %v1026 = vpop.f32.mrf.mxu0
      %1027 = vmatprep.mubr.f32.mxu0 0.0
      %1028 = vmatmul.mubr.f32.gmra.mxu0 %v518
      %v1029 = vpop.f32.mrf.mxu0
      %v1030 = vadd.f32 0.0, %v1029
      %v1031 = vpop.f32.mrf.mxu0
      %1032 = vmatprep.mubr.f32.mxu0 0.0
      %1033 = vmatmul.mubr.f32.gmra.mxu0 %v521
      %v1034 = vpop.f32.mrf.mxu0
      %v1035 = vadd.f32 0.0, %v1034
      %v1036 = vpop.f32.mrf.mxu0
      %1037 = vmatprep.mubr.f32.mxu0 0.0
      %1038 = vmatmul.mubr.f32.gmra.mxu0 %v524
      %v1039 = vpop.f32.mrf.mxu0
      %v1040 = vadd.f32 0.0, %v1039
      %v1041 = vpop.f32.mrf.mxu0
      %1042 = vmatprep.mubr.f32.mxu0 0.0
      %1043 = vmatmul.mubr.f32.gmra.mxu0 %v527
      %v1044 = vpop.f32.mrf.mxu0
      %v1045 = vadd.f32 0.0, %v1044
      %v1046 = vpop.f32.mrf.mxu0
      %1047 = vmatprep.mubr.f32.mxu0 0.0
      %1048 = vmatmul.mubr.f32.gmra.mxu0 %v530
      %v1049 = vpop.f32.mrf.mxu0
      %v1050 = vadd.f32 0.0, %v1049
      %v1051 = vpop.f32.mrf.mxu0
      %1052 = vmatprep.mubr.f32.mxu0 0.0
      %1053 = vmatmul.mubr.f32.gmra.mxu0 %v533
      %v1054 = vpop.f32.mrf.mxu0
      %v1055 = vadd.f32 0.0, %v1054
      %v1056 = vpop.f32.mrf.mxu0
      %1057 = vmatprep.mubr.f32.mxu0 0.0
      %1058 = vmatmul.mubr.f32.gmra.mxu0 %v536
      %v1059 = vpop.f32.mrf.mxu0
      %v1060 = vadd.f32 0.0, %v1059
      %v1061 = vpop.f32.mrf.mxu0
      %1062 = vmatprep.mubr.f32.mxu0 0.0
      %1063 = vmatmul.mubr.f32.gmra.mxu0 %v539
      %v1064 = vpop.f32.mrf.mxu0
      %v1065 = vadd.f32 0.0, %v1064
      %v1066 = vpop.f32.mrf.mxu0
      %1067 = vmatprep.mubr.f32.mxu0 0.0
      %1068 = vmatmul.mubr.f32.gmra.mxu0 %v542
      %v1069 = vpop.f32.mrf.mxu0
      %v1070 = vadd.f32 0.0, %v1069
      %v1071 = vpop.f32.mrf.mxu0
      %1072 = vmatprep.mubr.f32.mxu0 0.0
      %1073 = vmatmul.mubr.f32.gmra.mxu0 %v545
      %v1074 = vpop.f32.mrf.mxu0
      %v1075 = vadd.f32 0.0, %v1074
      %v1076 = vpop.f32.mrf.mxu0
      %1077 = vmatprep.mubr.f32.mxu0 0.0
      %1078 = vmatmul.mubr.f32.gmra.mxu0 %v548
      %v1079 = vpop.f32.mrf.mxu0
      %v1080 = vadd.f32 0.0, %v1079
      %v1081 = vpop.f32.mrf.mxu0
      %1082 = vmatprep.mubr.f32.mxu0 0.0
      %1083 = vmatmul.mubr.f32.gmra.mxu0 %v551
      %v1084 = vpop.f32.mrf.mxu0
      %v1085 = vadd.f32 0.0, %v1084
      %v1086 = vpop.f32.mrf.mxu0
      %1087 = vmatprep.mubr.f32.mxu0 0.0
      %1088 = vmatmul.mubr.f32.gmra.mxu0 %v554
      %v1089 = vpop.f32.mrf.mxu0
      %v1090 = vadd.f32 0.0, %v1089
      %v1091 = vpop.f32.mrf.mxu0
      %1092 = vmatprep.mubr.f32.mxu0 0.0
      %1093 = vmatmul.mubr.f32.gmra.mxu0 %v557
      %v1094 = vpop.f32.mrf.mxu0
      %v1095 = vadd.f32 0.0, %v1094
      %v1096 = vpop.f32.mrf.mxu0
      %1097 = vmatprep.mubr.f32.mxu0 0.0
      %1098 = vmatmul.mubr.f32.gmra.mxu0 %v560
      %v1099 = vpop.f32.mrf.mxu0
      %v1100 = vadd.f32 0.0, %v1099
      %v1101 = vpop.f32.mrf.mxu0
      %1102 = vmatprep.mubr.f32.mxu0 0.0
      %1103 = vmatmul.mubr.f32.gmra.mxu0 %v563
      %v1104 = vpop.f32.mrf.mxu0
      %v1105 = vadd.f32 0.0, %v1104
      %v1106 = vpop.f32.mrf.mxu0
      %1107 = vmatprep.mubr.f32.mxu0 0.0
      %1108 = vmatmul.mubr.f32.gmra.mxu0 %v566
      %v1109 = vpop.f32.mrf.mxu0
      %v1110 = vadd.f32 0.0, %v1109
      %v1111 = vpop.f32.mrf.mxu0
      %1112 = vmatprep.mubr.f32.mxu0 0.0
      %1113 = vmatmul.mubr.f32.gmra.mxu0 %v569
      %v1114 = vpop.f32.mrf.mxu0
      %v1115 = vadd.f32 0.0, %v1114
      %v1116 = vpop.f32.mrf.mxu0
      %1117 = vmatprep.mubr.f32.mxu0 0.0
      %1118 = vmatmul.mubr.f32.gmra.mxu0 %v572
      %v1119 = vpop.f32.mrf.mxu0
      %v1120 = vadd.f32 0.0, %v1119
      %v1121 = vpop.f32.mrf.mxu0
      %1122 = vmatprep.mubr.f32.mxu0 0.0
      %1123 = vmatmul.mubr.f32.gmra.mxu0 %v575
      %v1124 = vpop.f32.mrf.mxu0
      %v1125 = vadd.f32 0.0, %v1124
      %v1126 = vpop.f32.mrf.mxu0
      %1127 = vmatprep.mubr.f32.mxu0 0.0
      %1128 = vmatmul.mubr.f32.gmra.mxu0 %v578
      %v1129 = vpop.f32.mrf.mxu0
      %v1130 = vadd.f32 0.0, %v1129
      %v1131 = vpop.f32.mrf.mxu0
      %1132 = vmatprep.mubr.f32.mxu0 0.0
      %1133 = vmatmul.mubr.f32.gmra.mxu0 %v581
      %v1134 = vpop.f32.mrf.mxu0
      %v1135 = vadd.f32 0.0, %v1134
      %v1136 = vpop.f32.mrf.mxu0
      %1137 = vmatprep.mubr.f32.mxu0 0.0
      %1138 = vmatmul.mubr.f32.gmra.mxu0 %v584
      %v1139 = vpop.f32.mrf.mxu0
      %v1140 = vadd.f32 0.0, %v1139
      %v1141 = vpop.f32.mrf.mxu0
      %1142 = vmatprep.mubr.f32.mxu0 0.0
      %1143 = vmatmul.mubr.f32.gmra.mxu0 %v587
      %v1144 = vpop.f32.mrf.mxu0
      %v1145 = vadd.f32 0.0, %v1144
      %v1146 = vpop.f32.mrf.mxu0
      %1147 = vmatprep.mubr.f32.mxu0 0.0
      %1148 = vmatmul.mubr.f32.gmra.mxu0 %v590
      %v1149 = vpop.f32.mrf.mxu0
      %v1150 = vadd.f32 0.0, %v1149
      %v1151 = vpop.f32.mrf.mxu0
      %1152 = vmatprep.mubr.f32.mxu0 0.0
      %1153 = vmatmul.mubr.f32.gmra.mxu0 %v593
      %v1154 = vpop.f32.mrf.mxu0
      %v1155 = vadd.f32 0.0, %v1154
      %v1156 = vpop.f32.mrf.mxu0
      %1157 = vmatprep.mubr.f32.mxu0 0.0
      %1158 = vmatmul.mubr.f32.gmra.mxu0 %v596
      %v1159 = vpop.f32.mrf.mxu0
      %v1160 = vadd.f32 0.0, %v1159
      %v1161 = vpop.f32.mrf.mxu0
      %1162 = vmatprep.mubr.f32.mxu0 0.0
      %1163 = vmatmul.mubr.f32.gmra.mxu0 %v599
      %v1164 = vpop.f32.mrf.mxu0
      %v1165 = vadd.f32 0.0, %v1164
      %v1166 = vpop.f32.mrf.mxu0
      %1167 = vmatprep.mubr.f32.mxu0 0.0
      %1168 = vmatmul.mubr.f32.gmra.mxu0 %v602
      %v1169 = vpop.f32.mrf.mxu0
      %v1170 = vadd.f32 0.0, %v1169
      %v1171 = vpop.f32.mrf.mxu0
      %1172 = vdwg.mxu0
      %v1173 = vld [vmem:[%s2] sm:$0x1]
      %v1175 = vlaneseq
      %v1176 = vshrl.u32 %v1175, 7
      %v1177 = vsub.s32 0, %v1176
      %v1178 = vrot.slane %v1173, %v1177
      %v1180 = vmul.f32 %v675, %v1178
      %v1181 = vmul.f32 %v680, %v1178
      %v1182 = vmul.f32 %v685, %v1178
      %v1183 = vmul.f32 %v690, %v1178
      %v1184 = vmul.f32 %v695, %v1178
      %v1185 = vmul.f32 %v700, %v1178
      %v1186 = vmul.f32 %v705, %v1178
      %v1187 = vmul.f32 %v710, %v1178
      %v1188 = vmul.f32 %v715, %v1178
      %v1189 = vmul.f32 %v720, %v1178
      %v1190 = vmul.f32 %v725, %v1178
      %v1191 = vmul.f32 %v730, %v1178
      %v1192 = vmul.f32 %v735, %v1178
      %v1193 = vmul.f32 %v740, %v1178
      %v1194 = vmul.f32 %v745, %v1178
      %v1195 = vmul.f32 %v750, %v1178
      %v1196 = vmul.f32 %v755, %v1178
      %v1197 = vmul.f32 %v760, %v1178
      %v1198 = vmul.f32 %v765, %v1178
      %v1199 = vmul.f32 %v770, %v1178
      %v1200 = vmul.f32 %v775, %v1178
      %v1201 = vmul.f32 %v780, %v1178
      %v1202 = vmul.f32 %v785, %v1178
      %v1203 = vmul.f32 %v790, %v1178
      %v1204 = vmul.f32 %v795, %v1178
      %v1205 = vmul.f32 %v800, %v1178
      %v1206 = vmul.f32 %v805, %v1178
      %v1207 = vmul.f32 %v810, %v1178
      %v1208 = vmul.f32 %v815, %v1178
      %v1209 = vmul.f32 %v820, %v1178
      %v1210 = vmul.f32 %v825, %v1178
      %v1211 = vmul.f32 %v830, %v1178
      %v1212 = vmul.f32 %v835, %v1178
      %v1213 = vmul.f32 %v840, %v1178
      %v1214 = vmul.f32 %v845, %v1178
      %v1215 = vmul.f32 %v850, %v1178
      %v1216 = vmul.f32 %v855, %v1178
      %v1217 = vmul.f32 %v860, %v1178
      %v1218 = vmul.f32 %v865, %v1178
      %v1219 = vmul.f32 %v870, %v1178
      %v1220 = vmul.f32 %v875, %v1178
      %v1221 = vmul.f32 %v880, %v1178
      %v1222 = vmul.f32 %v885, %v1178
      %v1223 = vmul.f32 %v890, %v1178
      %v1224 = vmul.f32 %v895, %v1178
      %v1225 = vmul.f32 %v900, %v1178
      %v1226 = vmul.f32 %v905, %v1178
      %v1227 = vmul.f32 %v910, %v1178
      %v1228 = vmul.f32 %v915, %v1178
      %v1229 = vmul.f32 %v920, %v1178
      %v1230 = vmul.f32 %v925, %v1178
      %v1231 = vmul.f32 %v930, %v1178
      %v1232 = vmul.f32 %v935, %v1178
      %v1233 = vmul.f32 %v940, %v1178
      %v1234 = vmul.f32 %v945, %v1178
      %v1235 = vmul.f32 %v950, %v1178
      %v1236 = vmul.f32 %v955, %v1178
      %v1237 = vmul.f32 %v960, %v1178
      %v1238 = vmul.f32 %v965, %v1178
      %v1239 = vmul.f32 %v970, %v1178
      %v1240 = vmul.f32 %v975, %v1178
      %v1241 = vmul.f32 %v980, %v1178
      %v1242 = vmul.f32 %v985, %v1178
      %v1243 = vmul.f32 %v990, %v1178
      %v1244 = vmul.f32 %v995, %v1178
      %v1245 = vmul.f32 %v1000, %v1178
      %v1246 = vmul.f32 %v1005, %v1178
      %v1247 = vmul.f32 %v1010, %v1178
      %v1248 = vmul.f32 %v1015, %v1178
      %v1249 = vmul.f32 %v1020, %v1178
      %v1250 = vmul.f32 %v1025, %v1178
      %v1251 = vmul.f32 %v1030, %v1178
      %v1252 = vmul.f32 %v1035, %v1178
      %v1253 = vmul.f32 %v1040, %v1178
      %v1254 = vmul.f32 %v1045, %v1178
      %v1255 = vmul.f32 %v1050, %v1178
      %v1256 = vmul.f32 %v1055, %v1178
      %v1257 = vmul.f32 %v1060, %v1178
      %v1258 = vmul.f32 %v1065, %v1178
      %v1259 = vmul.f32 %v1070, %v1178
      %v1260 = vmul.f32 %v1075, %v1178
      %v1261 = vmul.f32 %v1080, %v1178
      %v1262 = vmul.f32 %v1085, %v1178
      %v1263 = vmul.f32 %v1090, %v1178
      %v1264 = vmul.f32 %v1095, %v1178
      %v1265 = vmul.f32 %v1100, %v1178
      %v1266 = vmul.f32 %v1105, %v1178
      %v1267 = vmul.f32 %v1110, %v1178
      %v1268 = vmul.f32 %v1115, %v1178
      %v1269 = vmul.f32 %v1120, %v1178
      %v1270 = vmul.f32 %v1125, %v1178
      %v1271 = vmul.f32 %v1130, %v1178
      %v1272 = vmul.f32 %v1135, %v1178
      %v1273 = vmul.f32 %v1140, %v1178
      %v1274 = vmul.f32 %v1145, %v1178
      %v1275 = vmul.f32 %v1150, %v1178
      %v1276 = vmul.f32 %v1155, %v1178
      %v1277 = vmul.f32 %v1160, %v1178
      %v1278 = vmul.f32 %v1165, %v1178
      %v1279 = vmul.f32 %v1170, %v1178
      %v1280 = vld [vmem:[%s3] sm:$0x1]
      %v1282 = vlaneseq
      %v1283 = vshrl.u32 %v1282, 7
      %v1284 = vsub.s32 0, %v1283
      %v1285 = vrot.slane %v1280, %v1284
      %v1287 = vadd.f32 %v1180, %v1285
      %v1288 = vadd.f32 %v1181, %v1285
      %v1289 = vadd.f32 %v1182, %v1285
      %v1290 = vadd.f32 %v1183, %v1285
      %v1291 = vadd.f32 %v1184, %v1285
      %v1292 = vadd.f32 %v1185, %v1285
      %v1293 = vadd.f32 %v1186, %v1285
      %v1294 = vadd.f32 %v1187, %v1285
      %v1295 = vadd.f32 %v1188, %v1285
      %v1296 = vadd.f32 %v1189, %v1285
      %v1297 = vadd.f32 %v1190, %v1285
      %v1298 = vadd.f32 %v1191, %v1285
      %v1299 = vadd.f32 %v1192, %v1285
      %v1300 = vadd.f32 %v1193, %v1285
      %v1301 = vadd.f32 %v1194, %v1285
      %v1302 = vadd.f32 %v1195, %v1285
      %v1303 = vadd.f32 %v1196, %v1285
      %v1304 = vadd.f32 %v1197, %v1285
      %v1305 = vadd.f32 %v1198, %v1285
      %v1306 = vadd.f32 %v1199, %v1285
      %v1307 = vadd.f32 %v1200, %v1285
      %v1308 = vadd.f32 %v1201, %v1285
      %v1309 = vadd.f32 %v1202, %v1285
      %v1310 = vadd.f32 %v1203, %v1285
      %v1311 = vadd.f32 %v1204, %v1285
      %v1312 = vadd.f32 %v1205, %v1285
      %v1313 = vadd.f32 %v1206, %v1285
      %v1314 = vadd.f32 %v1207, %v1285
      %v1315 = vadd.f32 %v1208, %v1285
      %v1316 = vadd.f32 %v1209, %v1285
      %v1317 = vadd.f32 %v1210, %v1285
      %v1318 = vadd.f32 %v1211, %v1285
      %v1319 = vadd.f32 %v1212, %v1285
      %v1320 = vadd.f32 %v1213, %v1285
      %v1321 = vadd.f32 %v1214, %v1285
      %v1322 = vadd.f32 %v1215, %v1285
      %v1323 = vadd.f32 %v1216, %v1285
      %v1324 = vadd.f32 %v1217, %v1285
      %v1325 = vadd.f32 %v1218, %v1285
      %v1326 = vadd.f32 %v1219, %v1285
      %v1327 = vadd.f32 %v1220, %v1285
      %v1328 = vadd.f32 %v1221, %v1285
      %v1329 = vadd.f32 %v1222, %v1285
      %v1330 = vadd.f32 %v1223, %v1285
      %v1331 = vadd.f32 %v1224, %v1285
      %v1332 = vadd.f32 %v1225, %v1285
      %v1333 = vadd.f32 %v1226, %v1285
      %v1334 = vadd.f32 %v1227, %v1285
      %v1335 = vadd.f32 %v1228, %v1285
      %v1336 = vadd.f32 %v1229, %v1285
      %v1337 = vadd.f32 %v1230, %v1285
      %v1338 = vadd.f32 %v1231, %v1285
      %v1339 = vadd.f32 %v1232, %v1285
      %v1340 = vadd.f32 %v1233, %v1285
      %v1341 = vadd.f32 %v1234, %v1285
      %v1342 = vadd.f32 %v1235, %v1285
      %v1343 = vadd.f32 %v1236, %v1285
      %v1344 = vadd.f32 %v1237, %v1285
      %v1345 = vadd.f32 %v1238, %v1285
      %v1346 = vadd.f32 %v1239, %v1285
      %v1347 = vadd.f32 %v1240, %v1285
      %v1348 = vadd.f32 %v1241, %v1285
      %v1349 = vadd.f32 %v1242, %v1285
      %v1350 = vadd.f32 %v1243, %v1285
      %v1351 = vadd.f32 %v1244, %v1285
      %v1352 = vadd.f32 %v1245, %v1285
      %v1353 = vadd.f32 %v1246, %v1285
      %v1354 = vadd.f32 %v1247, %v1285
      %v1355 = vadd.f32 %v1248, %v1285
      %v1356 = vadd.f32 %v1249, %v1285
      %v1357 = vadd.f32 %v1250, %v1285
      %v1358 = vadd.f32 %v1251, %v1285
      %v1359 = vadd.f32 %v1252, %v1285
      %v1360 = vadd.f32 %v1253, %v1285
      %v1361 = vadd.f32 %v1254, %v1285
      %v1362 = vadd.f32 %v1255, %v1285
      %v1363 = vadd.f32 %v1256, %v1285
      %v1364 = vadd.f32 %v1257, %v1285
      %v1365 = vadd.f32 %v1258, %v1285
      %v1366 = vadd.f32 %v1259, %v1285
      %v1367 = vadd.f32 %v1260, %v1285
      %v1368 = vadd.f32 %v1261, %v1285
      %v1369 = vadd.f32 %v1262, %v1285
      %v1370 = vadd.f32 %v1263, %v1285
      %v1371 = vadd.f32 %v1264, %v1285
      %v1372 = vadd.f32 %v1265, %v1285
      %v1373 = vadd.f32 %v1266, %v1285
      %v1374 = vadd.f32 %v1267, %v1285
      %v1375 = vadd.f32 %v1268, %v1285
      %v1376 = vadd.f32 %v1269, %v1285
      %v1377 = vadd.f32 %v1270, %v1285
      %v1378 = vadd.f32 %v1271, %v1285
      %v1379 = vadd.f32 %v1272, %v1285
      %v1380 = vadd.f32 %v1273, %v1285
      %v1381 = vadd.f32 %v1274, %v1285
      %v1382 = vadd.f32 %v1275, %v1285
      %v1383 = vadd.f32 %v1276, %v1285
      %v1384 = vadd.f32 %v1277, %v1285
      %v1385 = vadd.f32 %v1278, %v1285
      %v1386 = vadd.f32 %v1279, %v1285
      %v1387 = vmax.f32 %v1287, 0.0
      %v1388 = vmax.f32 %v1288, 0.0
      %v1389 = vmax.f32 %v1289, 0.0
      %v1390 = vmax.f32 %v1290, 0.0
      %v1391 = vmax.f32 %v1291, 0.0
      %v1392 = vmax.f32 %v1292, 0.0
      %v1393 = vmax.f32 %v1293, 0.0
      %v1394 = vmax.f32 %v1294, 0.0
      %v1395 = vmax.f32 %v1295, 0.0
      %v1396 = vmax.f32 %v1296, 0.0
      %v1397 = vmax.f32 %v1297, 0.0
      %v1398 = vmax.f32 %v1298, 0.0
      %v1399 = vmax.f32 %v1299, 0.0
      %v1400 = vmax.f32 %v1300, 0.0
      %v1401 = vmax.f32 %v1301, 0.0
      %v1402 = vmax.f32 %v1302, 0.0
      %v1403 = vmax.f32 %v1303, 0.0
      %v1404 = vmax.f32 %v1304, 0.0
      %v1405 = vmax.f32 %v1305, 0.0
      %v1406 = vmax.f32 %v1306, 0.0
      %v1407 = vmax.f32 %v1307, 0.0
      %v1408 = vmax.f32 %v1308, 0.0
      %v1409 = vmax.f32 %v1309, 0.0
      %v1410 = vmax.f32 %v1310, 0.0
      %v1411 = vmax.f32 %v1311, 0.0
      %v1412 = vmax.f32 %v1312, 0.0
      %v1413 = vmax.f32 %v1313, 0.0
      %v1414 = vmax.f32 %v1314, 0.0
      %v1415 = vmax.f32 %v1315, 0.0
      %v1416 = vmax.f32 %v1316, 0.0
      %v1417 = vmax.f32 %v1317, 0.0
      %v1418 = vmax.f32 %v1318, 0.0
      %v1419 = vmax.f32 %v1319, 0.0
      %v1420 = vmax.f32 %v1320, 0.0
      %v1421 = vmax.f32 %v1321, 0.0
      %v1422 = vmax.f32 %v1322, 0.0
      %v1423 = vmax.f32 %v1323, 0.0
      %v1424 = vmax.f32 %v1324, 0.0
      %v1425 = vmax.f32 %v1325, 0.0
      %v1426 = vmax.f32 %v1326, 0.0
      %v1427 = vmax.f32 %v1327, 0.0
      %v1428 = vmax.f32 %v1328, 0.0
      %v1429 = vmax.f32 %v1329, 0.0
      %v1430 = vmax.f32 %v1330, 0.0
      %v1431 = vmax.f32 %v1331, 0.0
      %v1432 = vmax.f32 %v1332, 0.0
      %v1433 = vmax.f32 %v1333, 0.0
      %v1434 = vmax.f32 %v1334, 0.0
      %v1435 = vmax.f32 %v1335, 0.0
      %v1436 = vmax.f32 %v1336, 0.0
      %v1437 = vmax.f32 %v1337, 0.0
      %v1438 = vmax.f32 %v1338, 0.0
      %v1439 = vmax.f32 %v1339, 0.0
      %v1440 = vmax.f32 %v1340, 0.0
      %v1441 = vmax.f32 %v1341, 0.0
      %v1442 = vmax.f32 %v1342, 0.0
      %v1443 = vmax.f32 %v1343, 0.0
      %v1444 = vmax.f32 %v1344, 0.0
      %v1445 = vmax.f32 %v1345, 0.0
      %v1446 = vmax.f32 %v1346, 0.0
      %v1447 = vmax.f32 %v1347, 0.0
      %v1448 = vmax.f32 %v1348, 0.0
      %v1449 = vmax.f32 %v1349, 0.0
      %v1450 = vmax.f32 %v1350, 0.0
      %v1451 = vmax.f32 %v1351, 0.0
      %v1452 = vmax.f32 %v1352, 0.0
      %v1453 = vmax.f32 %v1353, 0.0
      %v1454 = vmax.f32 %v1354, 0.0
      %v1455 = vmax.f32 %v1355, 0.0
      %v1456 = vmax.f32 %v1356, 0.0
      %v1457 = vmax.f32 %v1357, 0.0
      %v1458 = vmax.f32 %v1358, 0.0
      %v1459 = vmax.f32 %v1359, 0.0
      %v1460 = vmax.f32 %v1360, 0.0
      %v1461 = vmax.f32 %v1361, 0.0
      %v1462 = vmax.f32 %v1362, 0.0
      %v1463 = vmax.f32 %v1363, 0.0
      %v1464 = vmax.f32 %v1364, 0.0
      %v1465 = vmax.f32 %v1365, 0.0
      %v1466 = vmax.f32 %v1366, 0.0
      %v1467 = vmax.f32 %v1367, 0.0
      %v1468 = vmax.f32 %v1368, 0.0
      %v1469 = vmax.f32 %v1369, 0.0
      %v1470 = vmax.f32 %v1370, 0.0
      %v1471 = vmax.f32 %v1371, 0.0
      %v1472 = vmax.f32 %v1372, 0.0
      %v1473 = vmax.f32 %v1373, 0.0
      %v1474 = vmax.f32 %v1374, 0.0
      %v1475 = vmax.f32 %v1375, 0.0
      %v1476 = vmax.f32 %v1376, 0.0
      %v1477 = vmax.f32 %v1377, 0.0
      %v1478 = vmax.f32 %v1378, 0.0
      %v1479 = vmax.f32 %v1379, 0.0
      %v1480 = vmax.f32 %v1380, 0.0
      %v1481 = vmax.f32 %v1381, 0.0
      %v1482 = vmax.f32 %v1382, 0.0
      %v1483 = vmax.f32 %v1383, 0.0
      %v1484 = vmax.f32 %v1384, 0.0
      %v1485 = vmax.f32 %v1385, 0.0
      %v1486 = vmax.f32 %v1386, 0.0
      %v1487 = vmax.f32 %v1387, %v1412
      %v1488 = vmax.f32 %v1388, %v1413
      %v1489 = vmax.f32 %v1389, %v1414
      %v1490 = vmax.f32 %v1390, %v1415
      %v1491 = vmax.f32 %v1391, %v1416
      %v1492 = vmax.f32 %v1392, %v1417
      %v1493 = vmax.f32 %v1393, %v1418
      %v1494 = vmax.f32 %v1394, %v1419
      %v1495 = vmax.f32 %v1395, %v1420
      %v1496 = vmax.f32 %v1396, %v1421
      %v1497 = vmax.f32 %v1397, %v1422
      %v1498 = vmax.f32 %v1398, %v1423
      %v1499 = vmax.f32 %v1399, %v1424
      %v1500 = vmax.f32 %v1400, %v1425
      %v1501 = vmax.f32 %v1401, %v1426
      %v1502 = vmax.f32 %v1402, %v1427
      %v1503 = vmax.f32 %v1403, %v1428
      %v1504 = vmax.f32 %v1404, %v1429
      %v1505 = vmax.f32 %v1405, %v1430
      %v1506 = vmax.f32 %v1406, %v1431
      %v1507 = vmax.f32 %v1407, %v1432
      %v1508 = vmax.f32 %v1408, %v1433
      %v1509 = vmax.f32 %v1409, %v1434
      %v1510 = vmax.f32 %v1410, %v1435
      %v1511 = vmax.f32 %v1411, %v1436
      %v1512 = vmax.f32 %v1437, %v1462
      %v1513 = vmax.f32 %v1438, %v1463
      %v1514 = vmax.f32 %v1439, %v1464
      %v1515 = vmax.f32 %v1440, %v1465
      %v1516 = vmax.f32 %v1441, %v1466
      %v1517 = vmax.f32 %v1442, %v1467
      %v1518 = vmax.f32 %v1443, %v1468
      %v1519 = vmax.f32 %v1444, %v1469
      %v1520 = vmax.f32 %v1445, %v1470
      %v1521 = vmax.f32 %v1446, %v1471
      %v1522 = vmax.f32 %v1447, %v1472
      %v1523 = vmax.f32 %v1448, %v1473
      %v1524 = vmax.f32 %v1449, %v1474
      %v1525 = vmax.f32 %v1450, %v1475
      %v1526 = vmax.f32 %v1451, %v1476
      %v1527 = vmax.f32 %v1452, %v1477
      %v1528 = vmax.f32 %v1453, %v1478
      %v1529 = vmax.f32 %v1454, %v1479
      %v1530 = vmax.f32 %v1455, %v1480
      %v1531 = vmax.f32 %v1456, %v1481
      %v1532 = vmax.f32 %v1457, %v1482
      %v1533 = vmax.f32 %v1458, %v1483
      %v1534 = vmax.f32 %v1459, %v1484
      %v1535 = vmax.f32 %v1460, %v1485
      %v1536 = vmax.f32 %v1461, %v1486
      %v1537 = vmax.f32 %v1487, %v1512
      %v1538 = vmax.f32 %v1488, %v1513
      %v1539 = vmax.f32 %v1489, %v1514
      %v1540 = vmax.f32 %v1490, %v1515
      %v1541 = vmax.f32 %v1491, %v1516
      %v1542 = vmax.f32 %v1492, %v1517
      %v1543 = vmax.f32 %v1493, %v1518
      %v1544 = vmax.f32 %v1494, %v1519
      %v1545 = vmax.f32 %v1495, %v1520
      %v1546 = vmax.f32 %v1496, %v1521
      %v1547 = vmax.f32 %v1497, %v1522
      %v1548 = vmax.f32 %v1498, %v1523
      %v1549 = vmax.f32 %v1499, %v1524
      %v1550 = vmax.f32 %v1500, %v1525
      %v1551 = vmax.f32 %v1501, %v1526
      %v1552 = vmax.f32 %v1502, %v1527
      %v1553 = vmax.f32 %v1503, %v1528
      %v1554 = vmax.f32 %v1504, %v1529
      %v1555 = vmax.f32 %v1505, %v1530
      %v1556 = vmax.f32 %v1506, %v1531
      %v1557 = vmax.f32 %v1507, %v1532
      %v1558 = vmax.f32 %v1508, %v1533
      %v1559 = vmax.f32 %v1509, %v1534
      %v1560 = vmax.f32 %v1510, %v1535
      %v1561 = vmax.f32 %v1511, %v1536
      %1562 = vst [vmem:[%s199] sm:$0xff] %v1537
      %1563 = vst [vmem:[%s199 + $0x8] sm:$0xff] %v1538
      %1564 = vst [vmem:[%s199 + $0x10] sm:$0xff] %v1539
      %1565 = vst [vmem:[%s199 + $0x18] sm:$0xff] %v1540
      %1566 = vst [vmem:[%s199 + $0x20] sm:$0xff] %v1541
      %1567 = vst [vmem:[%s199 + $0x28] sm:$0xff] %v1542
      %1568 = vst [vmem:[%s199 + $0x30] sm:$0xff] %v1543
      %1569 = vst [vmem:[%s199 + $0x38] sm:$0xff] %v1544
      %1570 = vst [vmem:[%s199 + $0x40] sm:$0xff] %v1545
      %1571 = vst [vmem:[%s199 + $0x48] sm:$0xff] %v1546
      %1572 = vst [vmem:[%s199 + $0x50] sm:$0xff] %v1547
      %1573 = vst [vmem:[%s199 + $0x58] sm:$0xff] %v1548
      %1574 = vst [vmem:[%s199 + $0x60] sm:$0xff] %v1549
      %1575 = vst [vmem:[%s199 + $0x68] sm:$0xff] %v1550
      %1576 = vst [vmem:[%s199 + $0x70] sm:$0xff] %v1551
      %1577 = vst [vmem:[%s199 + $0x78] sm:$0xff] %v1552
      %1578 = vst [vmem:[%s199 + $0x80] sm:$0xff] %v1553
      %1579 = vst [vmem:[%s199 + $0x88] sm:$0xff] %v1554
      %1580 = vst [vmem:[%s199 + $0x90] sm:$0xff] %v1555
      %1581 = vst [vmem:[%s199 + $0x98] sm:$0xff] %v1556
      %1582 = vst [vmem:[%s199 + $0xa0] sm:$0xff] %v1557
      %1583 = vst [vmem:[%s199 + $0xa8] sm:$0xff] %v1558
      %1584 = vst [vmem:[%s199 + $0xb0] sm:$0xff] %v1559
      %1585 = vst [vmem:[%s199 + $0xb8] sm:$0xff] %v1560
      %1586 = vst [vmem:[%s199 + $0xc0] sm:$0xff] %v1561
      %s1587 = smul.u32 25, %s15
      %p1588 = scmp.lt.s32.totalorder %s1587, 49
      %s1589 = scalar_select %p1588, %s1587, 49
      %s1590 = smul.addr %s1589, 8
      %s1591 = scalar_lea.vmem %s4, %s1590
      // Predicated region
      $region37: #{fashion_cnn3_forward.3} parent=35 // pred_check
        %p1592 = pneg %p122
      $region38: #{fashion_cnn3_forward.3} parent=35 // pred_check_branch
        %1594 = sbr.rel (%p1592) target = $region40
      $region39: #{fashion_cnn3_forward.3} parent=35 // pred_region
        %s1595 = smul.u32 25, %s15
      $region40: #{fashion_cnn3_forward.3} parent=35 // pred_fallthru
        _
    $region36: #{fashion_cnn3_forward.3} parent=5 // pred_fallthru
      _
    %p1596 = scmp.le.s32.totalorder 2, %s10
    // Predicated region
    $region41: #{fashion_cnn3_forward.3} parent=5 // pred_check
      %p1597 = pneg %p1596
    $region42: #{fashion_cnn3_forward.3} parent=5 // pred_check_branch
      %1599 = sbr.rel (%p1597) target = $region44
    $region43: #{fashion_cnn3_forward.3} parent=5 // pred_region
      %s1600 = ssub.s32 %s10, 2
      // Predicated region
      $region45: #{fashion_cnn3_forward.3} parent=43 // pred_check
        %p1601 = pneg %p128
      $region46: #{fashion_cnn3_forward.3} parent=43 // pred_check_branch
        %1603 = sbr.rel (%p1601) target = $region48
      $region47: #{fashion_cnn3_forward.3} parent=43 // pred_region
        %s1604 = smul.u32 25, %s16
        %p1605 = scmp.lt.s32.totalorder %s1604, 49
        %s1606 = scalar_select %p1605, %s1604, 49
        %s1607 = smul.addr %s1606, 8
        %s1608 = scalar_lea.vmem %s4, %s1607
      $region48: #{fashion_cnn3_forward.3} parent=43 // pred_fallthru
        _
    $region44: #{fashion_cnn3_forward.3} parent=5 // pred_fallthru
      _
  $region6: #{fashion_cnn3_forward.3} parent=0 // loop_footer
    %s14 = sadd.s32 1, %s10
  $region7: #{fashion_cnn3_forward.3} parent=0 // loop_footer_branch
    %9 = sbr.rel target = $region3
  $region8: #{fashion_cnn3_forward.3} parent=0 // loop_exit
    _

// kernel: fashion_cnn3_forward.4
$region0: #{fashion_cnn3_forward.4}
  #allocation0 [shape = 'u32[]', space=smem, size = 0x4, offset = 0x4, fixed_abs, tag = 'smem constant byte address 0x4 - core index']
  #allocation1 [shape = 'u32[144,128]{1,0:T(1,128)}', space=vmem, size = 0x12000, scoped, tag = 'internal scratch']
  %s0 = inlined_call_operand.vmem [shape: f32[320,288], index: 0, kind: input, shape index: {}]
  %s1 = inlined_call_operand.vmem [shape: f32[288,128], index: 1, kind: input, shape index: {}]
  %s2 = inlined_call_operand.vmem [shape: f32[1,128], index: 2, kind: input, shape index: {}]
  %s3 = inlined_call_operand.vmem [shape: f32[1,128], index: 3, kind: input, shape index: {}]
  %s4 = inlined_call_operand.vmem [shape: f32[80,128], index: 4, kind: output, shape index: {}]
  %s5 = sld [smem:[#allocation0]]
  $region49: #{fashion_cnn3_forward.4} parent=0
    _
  %s7 = ssub.s32 1, %s5
  %s8 = scalar_select 0, %s7, %s5
  loop: start=0, step=1, limit=4
  $region2: #{fashion_cnn3_forward.4} parent=0 // loop_pre_header
    _
  $region3: #{fashion_cnn3_forward.4} parent=0 // loop_header
    %s10 = sphi 0, %s14
    %p11 = scmp.ge.s32.totalorder %s10, 4
    %s20 = sphi 0, %s22
    %s23 = sphi 0, %s20
    %s24 = sphi 0, %s23
    %s40 = sphi 0, %s24
    %s44 = sphi 0, %s44
    %s46 = sphi 0, %s44
    %s47 = sphi 0, %s46
    %s61 = sphi 0, %s47
    %s65 = sphi 0, %s65
    %s67 = sphi 0, %s65
    %s68 = sphi 0, %s67
    %s82 = sphi 0, %s68
    %s86 = sphi 0, %s86
    %s88 = sphi 0, %s86
    %s89 = sphi 0, %s88
    %s103 = sphi 0, %s89
    %s109 = sphi 0, %s111
    %s112 = sphi 0, %s109
    %s113 = sphi 0, %s112
    %s129 = sphi 0, %s113
  $region4: #{fashion_cnn3_forward.4} parent=0 // loop_header_branch
    %13 = sbr.rel (%p11) target = $region8
  $region5: #{fashion_cnn3_forward.4} parent=0 // loop_body
    %s15 = ssub.s32 %s10, 1
    %s16 = ssub.s32 %s10, 2
    %s17 = sadd.s32 %s10, 1
    %s18 = ssub.s32 %s10, %s17
    %p19 = scmp.eq.s32.totalorder %s18, 0
    %s21 = sadd.s32 %s20, 1
    %s22 = scalar_select %p19, %s20, %s21
    %p25 = pneg %p19
    %p26 = scmp.eq.s32.totalorder %s10, 1
    %p27 = por %p25, %p26
    %p28 = scmp.ne.s32.totalorder %s20, %s23
    %p29 = scmp.eq.s32.totalorder %s10, 0
    %p30 = por %p28, %p29
    %p31 = scmp.ne.s32.totalorder %s20, %s23
    %p32 = scmp.eq.s32.totalorder %s15, 1
    %p33 = por %p31, %p32
    %p34 = scmp.ne.s32.totalorder %s23, %s24
    %p35 = scmp.eq.s32.totalorder %s15, 0
    %p36 = por %p34, %p35
    %p37 = scmp.ne.s32.totalorder %s23, %s24
    %p38 = scmp.eq.s32.totalorder %s16, 1
    %p39 = por %p37, %p38
    %p41 = scmp.ne.s32.totalorder %s24, %s40
    %p42 = scmp.eq.s32.totalorder %s16, 0
    %p43 = por %p41, %p42
    %s45 = sadd.s32 %s44, 1
    %p48 = scmp.eq.s32.totalorder %s10, 1
    %p49 = scmp.ne.s32.totalorder %s44, %s46
    %p50 = scmp.eq.s32.totalorder %s10, 0
    %p51 = por %p49, %p50
    %p52 = scmp.ne.s32.totalorder %s44, %s46
    %p53 = scmp.eq.s32.totalorder %s15, 1
    %p54 = por %p52, %p53
    %p55 = scmp.ne.s32.totalorder %s46, %s47
    %p56 = scmp.eq.s32.totalorder %s15, 0
    %p57 = por %p55, %p56
    %p58 = scmp.ne.s32.totalorder %s46, %s47
    %p59 = scmp.eq.s32.totalorder %s16, 1
    %p60 = por %p58, %p59
    %p62 = scmp.ne.s32.totalorder %s47, %s61
    %p63 = scmp.eq.s32.totalorder %s16, 0
    %p64 = por %p62, %p63
    %s66 = sadd.s32 %s65, 1
    %p69 = scmp.eq.s32.totalorder %s10, 1
    %p70 = scmp.ne.s32.totalorder %s65, %s67
    %p71 = scmp.eq.s32.totalorder %s10, 0
    %p72 = por %p70, %p71
    %p73 = scmp.ne.s32.totalorder %s65, %s67
    %p74 = scmp.eq.s32.totalorder %s15, 1
    %p75 = por %p73, %p74
    %p76 = scmp.ne.s32.totalorder %s67, %s68
    %p77 = scmp.eq.s32.totalorder %s15, 0
    %p78 = por %p76, %p77
    %p79 = scmp.ne.s32.totalorder %s67, %s68
    %p80 = scmp.eq.s32.totalorder %s16, 1
    %p81 = por %p79, %p80
    %p83 = scmp.ne.s32.totalorder %s68, %s82
    %p84 = scmp.eq.s32.totalorder %s16, 0
    %p85 = por %p83, %p84
    %s87 = sadd.s32 %s86, 1
    %p90 = scmp.eq.s32.totalorder %s10, 1
    %p91 = scmp.ne.s32.totalorder %s86, %s88
    %p92 = scmp.eq.s32.totalorder %s10, 0
    %p93 = por %p91, %p92
    %p94 = scmp.ne.s32.totalorder %s86, %s88
    %p95 = scmp.eq.s32.totalorder %s15, 1
    %p96 = por %p94, %p95
    %p97 = scmp.ne.s32.totalorder %s88, %s89
    %p98 = scmp.eq.s32.totalorder %s15, 0
    %p99 = por %p97, %p98
    %p100 = scmp.ne.s32.totalorder %s88, %s89
    %p101 = scmp.eq.s32.totalorder %s16, 1
    %p102 = por %p100, %p101
    %p104 = scmp.ne.s32.totalorder %s89, %s103
    %p105 = scmp.eq.s32.totalorder %s16, 0
    %p106 = por %p104, %p105
    %s107 = ssub.s32 %s10, %s17
    %p108 = scmp.eq.s32.totalorder %s107, 0
    %s110 = sadd.s32 %s109, 1
    %s111 = scalar_select %p108, %s109, %s110
    %p114 = pneg %p108
    %p115 = scmp.eq.s32.totalorder %s10, 1
    %p116 = por %p114, %p115
    %p117 = scmp.ne.s32.totalorder %s109, %s112
    %p118 = scmp.eq.s32.totalorder %s10, 0
    %p119 = por %p117, %p118
    %p120 = scmp.ne.s32.totalorder %s109, %s112
    %p121 = scmp.eq.s32.totalorder %s15, 1
    %p122 = por %p120, %p121
    %p123 = scmp.ne.s32.totalorder %s112, %s113
    %p124 = scmp.eq.s32.totalorder %s15, 0
    %p125 = por %p123, %p124
    %p126 = scmp.ne.s32.totalorder %s112, %s113
    %p127 = scmp.eq.s32.totalorder %s16, 1
    %p128 = por %p126, %p127
    %p130 = scmp.ne.s32.totalorder %s113, %s129
    %p131 = scmp.eq.s32.totalorder %s16, 0
    %p132 = por %p130, %p131
    %p133 = scmp.le.s32.totalorder 1, %s10
    %p134 = scmp.lt.s32.totalorder %s10, 3
    %p135 = pnand %p133, %p134
    %p136 = pneg %p135
    // Predicated region
    $region9: #{fashion_cnn3_forward.4} parent=5 // pred_check
      _
    $region10: #{fashion_cnn3_forward.4} parent=5 // pred_check_branch
      %138 = sbr.rel (%p135) target = $region12
    $region11: #{fashion_cnn3_forward.4} parent=5 // pred_region
      %s139 = ssub.s32 %s10, 1
      // Predicated region
      $region13: #{fashion_cnn3_forward.4} parent=11 // pred_check
        %p140 = pneg %p57
      $region14: #{fashion_cnn3_forward.4} parent=11 // pred_check_branch
        %142 = sbr.rel (%p140) target = $region16
      $region15: #{fashion_cnn3_forward.4} parent=11 // pred_region
        _
      $region16: #{fashion_cnn3_forward.4} parent=11 // pred_fallthru
        _
      // Predicated region
      $region17: #{fashion_cnn3_forward.4} parent=11 // pred_check
        %p143 = pneg %p78
      $region18: #{fashion_cnn3_forward.4} parent=11 // pred_check_branch
        %145 = sbr.rel (%p143) target = $region20
      $region19: #{fashion_cnn3_forward.4} parent=11 // pred_region
        _
      $region20: #{fashion_cnn3_forward.4} parent=11 // pred_fallthru
        _
      // Predicated region
      $region21: #{fashion_cnn3_forward.4} parent=11 // pred_check
        %p146 = pneg %p99
      $region22: #{fashion_cnn3_forward.4} parent=11 // pred_check_branch
        %148 = sbr.rel (%p146) target = $region24
      $region23: #{fashion_cnn3_forward.4} parent=11 // pred_region
        _
      $region24: #{fashion_cnn3_forward.4} parent=11 // pred_fallthru
        _
    $region12: #{fashion_cnn3_forward.4} parent=5 // pred_fallthru
      _
    %p149 = scmp.lt.s32.totalorder %s10, 2
    // Predicated region
    $region25: #{fashion_cnn3_forward.4} parent=5 // pred_check
      %p150 = pneg %p149
    $region26: #{fashion_cnn3_forward.4} parent=5 // pred_check_branch
      %152 = sbr.rel (%p150) target = $region28
    $region27: #{fashion_cnn3_forward.4} parent=5 // pred_region
      // Predicated region
      $region29: #{fashion_cnn3_forward.4} parent=27 // pred_check
        %p153 = pneg %p30
      $region30: #{fashion_cnn3_forward.4} parent=27 // pred_check_branch
        %155 = sbr.rel (%p153) target = $region32
      $region31: #{fashion_cnn3_forward.4} parent=27 // pred_region
        %s156 = smul.u32 20, %s10
        %p157 = scmp.lt.s32.totalorder %s156, 39
        %s158 = scalar_select %p157, %s156, 39
        %s159 = smul.addr %s158, 3
        %s160 = smul.addr %s159, 8
        %s161 = scalar_lea.vmem %s0, %s160
        %s162 = smul.u32 20, %s10
      $region32: #{fashion_cnn3_forward.4} parent=27 // pred_fallthru
        _
    $region28: #{fashion_cnn3_forward.4} parent=5 // pred_fallthru
      _
    %p163 = scmp.le.s32.totalorder 1, %s10
    %p164 = scmp.lt.s32.totalorder %s10, 3
    %p165 = pnand %p163, %p164
    %p166 = pneg %p165
    // Predicated region
    $region33: #{fashion_cnn3_forward.4} parent=5 // pred_check
      _
    $region34: #{fashion_cnn3_forward.4} parent=5 // pred_check_branch
      %168 = sbr.rel (%p165) target = $region36
    $region35: #{fashion_cnn3_forward.4} parent=5 // pred_region
      %s169 = ssub.s32 %s10, 1
      %s170 = smul.u32 20, %s15
      %p171 = scmp.lt.s32.totalorder %s170, 39
      %s172 = scalar_select %p171, %s170, 39
      %s173 = smul.addr %s172, 3
      %s174 = smul.addr %s173, 8
      %s175 = scalar_lea.vmem %s0, %s174
      %p176 = pneg %p36
      %p177 = pneg %p33
      %p178 = pneg %p57
      %p179 = pneg %p54
      %p180 = pneg %p78
      %p181 = pneg %p75
      %p182 = pneg %p99
      %p183 = pneg %p96
      %p184 = pneg %p125
      %p185 = pneg %p122
      %s186 = smul.u32 5, %s15
      %p187 = scmp.lt.s32.totalorder %s186, 9
      %s188 = scalar_select %p187, %s186, 9
      %s189 = smul.addr %s188, 8
      %s190 = scalar_lea.vmem %s4, %s189
      %s191 = smul.u32 20, %s15
      %p192 = scmp.lt.s32.totalorder %s191, 39
      %s193 = scalar_select %p192, %s191, 39
      %s194 = smul.addr %s193, 3
      %s195 = smul.addr %s194, 8
      %s196 = scalar_lea.vmem %s0, %s195
      %s197 = smul.u32 20, %s15
      %s198 = smul.u32 5, %s15
      %p199 = scmp.lt.s32.totalorder %s198, 9
      %s200 = scalar_select %p199, %s198, 9
      %s201 = smul.addr %s200, 8
      %s202 = scalar_lea.vmem %s4, %s201
      %s203 = smul.u32 5, %s15
      %v204 = vld [vmem:[%s196] sm:$0xff]
      %v205 = vld [vmem:[%s196 + $0x8] sm:$0xff]
      %v206 = vld [vmem:[%s196 + $0x10] sm:$0xff]
      %v207 = vld [vmem:[%s196 + $0x18] sm:$0xff]
      %v208 = vld [vmem:[%s196 + $0x20] sm:$0xff]
      %v209 = vld [vmem:[%s196 + $0x28] sm:$0xff]
      %v210 = vld [vmem:[%s196 + $0x30] sm:$0xff]
      %v211 = vld [vmem:[%s196 + $0x38] sm:$0xff]
      %v212 = vld [vmem:[%s196 + $0x40] sm:$0xff]
      %v213 = vld [vmem:[%s196 + $0x48] sm:$0xff]
      %v214 = vld [vmem:[%s196 + $0x50] sm:$0xff]
      %v215 = vld [vmem:[%s196 + $0x58] sm:$0xff]
      %v216 = vld [vmem:[%s196 + $0x60] sm:$0xff]
      %v217 = vld [vmem:[%s196 + $0x68] sm:$0xff]
      %v218 = vld [vmem:[%s196 + $0x70] sm:$0xff]
      %v219 = vld [vmem:[%s196 + $0x78] sm:$0xff]
      %v220 = vld [vmem:[%s196 + $0x80] sm:$0xff]
      %v221 = vld [vmem:[%s196 + $0x88] sm:$0xff]
      %v222 = vld [vmem:[%s196 + $0x90] sm:$0xff]
      %v223 = vld [vmem:[%s196 + $0x98] sm:$0xff]
      %v224 = vld [vmem:[%s196 + $0xa0] sm:$0xff]
      %v225 = vld [vmem:[%s196 + $0xa8] sm:$0xff]
      %v226 = vld [vmem:[%s196 + $0xb0] sm:$0xff]
      %v227 = vld [vmem:[%s196 + $0xb8] sm:$0xff]
      %v228 = vld [vmem:[%s196 + $0xc0] sm:$0xff]
      %v229 = vld [vmem:[%s196 + $0xc8] sm:$0xff]
      %v230 = vld [vmem:[%s196 + $0xd0] sm:$0xff]
      %v231 = vld [vmem:[%s196 + $0xd8] sm:$0xff]
      %v232 = vld [vmem:[%s196 + $0xe0] sm:$0xff]
      %v233 = vld [vmem:[%s196 + $0xe8] sm:$0xff]
      %v234 = vld [vmem:[%s196 + $0xf0] sm:$0xff]
      %v235 = vld [vmem:[%s196 + $0xf8] sm:$0xff]
      %v236 = vld [vmem:[%s196 + $0x100] sm:$0xff]
      %v237 = vld [vmem:[%s196 + $0x108] sm:$0xff]
      %v238 = vld [vmem:[%s196 + $0x110] sm:$0xff]
      %v239 = vld [vmem:[%s196 + $0x118] sm:$0xff]
      %v240 = vld [vmem:[%s196 + $0x120] sm:$0xff]
      %v241 = vld [vmem:[%s196 + $0x128] sm:$0xff]
      %v242 = vld [vmem:[%s196 + $0x130] sm:$0xff]
      %v243 = vld [vmem:[%s196 + $0x138] sm:$0xff]
      %v244 = vld [vmem:[%s196 + $0x140] sm:$0xff]
      %v245 = vld [vmem:[%s196 + $0x148] sm:$0xff]
      %v246 = vld [vmem:[%s196 + $0x150] sm:$0xff]
      %v247 = vld [vmem:[%s196 + $0x158] sm:$0xff]
      %v248 = vld [vmem:[%s196 + $0x160] sm:$0xff]
      %v249 = vld [vmem:[%s196 + $0x168] sm:$0xff]
      %v250 = vld [vmem:[%s196 + $0x170] sm:$0xff]
      %v251 = vld [vmem:[%s196 + $0x178] sm:$0xff]
      %v252 = vld [vmem:[%s196 + $0x180] sm:$0xff]
      %v253 = vld [vmem:[%s196 + $0x188] sm:$0xff]
      %v254 = vld [vmem:[%s196 + $0x190] sm:$0xff]
      %v255 = vld [vmem:[%s196 + $0x198] sm:$0xff]
      %v256 = vld [vmem:[%s196 + $0x1a0] sm:$0xff]
      %v257 = vld [vmem:[%s196 + $0x1a8] sm:$0xff]
      %v258 = vld [vmem:[%s196 + $0x1b0] sm:$0xff]
      %v259 = vld [vmem:[%s196 + $0x1b8] sm:$0xff]
      %v260 = vld [vmem:[%s196 + $0x1c0] sm:$0xff]
      %v261 = vld [vmem:[%s196 + $0x1c8] sm:$0xff]
      %v262 = vld [vmem:[%s196 + $0x1d0] sm:$0xff]
      %v263 = vld [vmem:[%s196 + $0x1d8] sm:$0xff]
      %v264 = vld [vmem:[%s1] sm:$0xff]
      %v265 = vld [vmem:[%s1 + $0x8] sm:$0xff]
      %v266 = vld [vmem:[%s1 + $0x10] sm:$0xff]
      %v267 = vld [vmem:[%s1 + $0x18] sm:$0xff]
      %v268 = vld [vmem:[%s1 + $0x20] sm:$0xff]
      %v269 = vld [vmem:[%s1 + $0x28] sm:$0xff]
      %v270 = vld [vmem:[%s1 + $0x30] sm:$0xff]
      %v271 = vld [vmem:[%s1 + $0x38] sm:$0xff]
      %v272 = vld [vmem:[%s1 + $0x40] sm:$0xff]
      %v273 = vld [vmem:[%s1 + $0x48] sm:$0xff]
      %v274 = vld [vmem:[%s1 + $0x50] sm:$0xff]
      %v275 = vld [vmem:[%s1 + $0x58] sm:$0xff]
      %v276 = vld [vmem:[%s1 + $0x60] sm:$0xff]
      %v277 = vld [vmem:[%s1 + $0x68] sm:$0xff]
      %v278 = vld [vmem:[%s1 + $0x70] sm:$0xff]
      %v279 = vld [vmem:[%s1 + $0x78] sm:$0xff]
      %v280 = vld [vmem:[%s1 + $0x80] sm:$0xff]
      %v281 = vld [vmem:[%s1 + $0x88] sm:$0xff]
      %v282 = vld [vmem:[%s1 + $0x90] sm:$0xff]
      %v283 = vld [vmem:[%s1 + $0x98] sm:$0xff]
      %v284 = vld [vmem:[%s1 + $0xa0] sm:$0xff]
      %v285 = vld [vmem:[%s1 + $0xa8] sm:$0xff]
      %v286 = vld [vmem:[%s1 + $0xb0] sm:$0xff]
      %v287 = vld [vmem:[%s1 + $0xb8] sm:$0xff]
      %v288 = vld [vmem:[%s1 + $0xc0] sm:$0xff]
      %v289 = vld [vmem:[%s1 + $0xc8] sm:$0xff]
      %v290 = vld [vmem:[%s1 + $0xd0] sm:$0xff]
      %v291 = vld [vmem:[%s1 + $0xd8] sm:$0xff]
      %v292 = vld [vmem:[%s1 + $0xe0] sm:$0xff]
      %v293 = vld [vmem:[%s1 + $0xe8] sm:$0xff]
      %v294 = vld [vmem:[%s1 + $0xf0] sm:$0xff]
      %v295 = vld [vmem:[%s1 + $0xf8] sm:$0xff]
      %v296 = vld [vmem:[%s1 + $0x100] sm:$0xff]
      %v297 = vld [vmem:[%s1 + $0x108] sm:$0xff]
      %v298 = vld [vmem:[%s1 + $0x110] sm:$0xff]
      %v299 = vld [vmem:[%s1 + $0x118] sm:$0xff]
      %vm300 = vcmask 261120
      %v302 = vsel %vm300, %v206, 0
      %v305 = vsel %vm300, %v209, 0
      %v308 = vsel %vm300, %v212, 0
      %v311 = vsel %vm300, %v215, 0
      %v314 = vsel %vm300, %v218, 0
      %v317 = vsel %vm300, %v221, 0
      %v320 = vsel %vm300, %v224, 0
      %v323 = vsel %vm300, %v227, 0
      %v326 = vsel %vm300, %v230, 0
      %v329 = vsel %vm300, %v233, 0
      %v332 = vsel %vm300, %v236, 0
      %v335 = vsel %vm300, %v239, 0
      %v338 = vsel %vm300, %v242, 0
      %v341 = vsel %vm300, %v245, 0
      %v344 = vsel %vm300, %v248, 0
      %v347 = vsel %vm300, %v251, 0
      %v350 = vsel %vm300, %v254, 0
      %v353 = vsel %vm300, %v257, 0
      %v356 = vsel %vm300, %v260, 0
      %v359 = vsel %vm300, %v263, 0
      %361 = vmatprep.subr.mxu0 0.0
      %362 = vmatpush1.msra.mxu0 %v279
      %363 = vmatprep.subr.mxu0 0.0
      %364 = vmatpush1.msra.mxu0 %v278
      %365 = vmatprep.subr.mxu0 0.0
      %366 = vmatpush1.msra.mxu0 %v277
      %367 = vmatprep.subr.mxu0 0.0
      %368 = vmatpush1.msra.mxu0 %v276
      %369 = vmatprep.subr.mxu0 0.0
      %370 = vmatpush1.msra.mxu0 %v275
      %371 = vmatprep.subr.mxu0 0.0
      %372 = vmatpush1.msra.mxu0 %v274
      %373 = vmatprep.subr.mxu0 0.0
      %374 = vmatpush1.msra.mxu0 %v273
      %375 = vmatprep.subr.mxu0 0.0
      %376 = vmatpush1.msra.mxu0 %v272
      %377 = vmatprep.subr.mxu0 0.0
      %378 = vmatpush1.msra.mxu0 %v271
      %379 = vmatprep.subr.mxu0 0.0
      %380 = vmatpush1.msra.mxu0 %v270
      %381 = vmatprep.subr.mxu0 0.0
      %382 = vmatpush1.msra.mxu0 %v269
      %383 = vmatprep.subr.mxu0 0.0
      %384 = vmatpush1.msra.mxu0 %v268
      %385 = vmatprep.subr.mxu0 0.0
      %386 = vmatpush1.msra.mxu0 %v267
      %387 = vmatprep.subr.mxu0 0.0
      %388 = vmatpush1.msra.mxu0 %v266
      %389 = vmatprep.subr.mxu0 0.0
      %390 = vmatpush1.msra.mxu0 %v265
      %391 = vmatprep.subr.mxu0 0.0
      %392 = vmatpush1.msra.mxu0 %v264
      %393 = vmatprep.subr.mxu0 0.0
      %394 = vmatpush2.msra.mxu0 %v295
      %395 = vmatprep.subr.mxu0 0.0
      %396 = vmatpush2.msra.mxu0 %v294
      %397 = vmatprep.subr.mxu0 0.0
      %398 = vmatpush2.msra.mxu0 %v293
      %399 = vmatprep.subr.mxu0 0.0
      %400 = vmatpush2.msra.mxu0 %v292
      %401 = vmatprep.subr.mxu0 0.0
      %402 = vmatpush2.msra.mxu0 %v291
      %403 = vmatprep.subr.mxu0 0.0
      %404 = vmatpush2.msra.mxu0 %v290
      %405 = vmatprep.subr.mxu0 0.0
      %406 = vmatpush2.msra.mxu0 %v289
      %407 = vmatprep.subr.mxu0 0.0
      %408 = vmatpush2.msra.mxu0 %v288
      %409 = vmatprep.subr.mxu0 0.0
      %410 = vmatpush2.msra.mxu0 %v287
      %411 = vmatprep.subr.mxu0 0.0
      %412 = vmatpush2.msra.mxu0 %v286
      %413 = vmatprep.subr.mxu0 0.0
      %414 = vmatpush2.msra.mxu0 %v285
      %415 = vmatprep.subr.mxu0 0.0
      %416 = vmatpush2.msra.mxu0 %v284
      %417 = vmatprep.subr.mxu0 0.0
      %418 = vmatpush2.msra.mxu0 %v283
      %419 = vmatprep.subr.mxu0 0.0
      %420 = vmatpush2.msra.mxu0 %v282
      %421 = vmatprep.subr.mxu0 0.0
      %422 = vmatpush2.msra.mxu0 %v281
      %423 = vmatprep.subr.mxu0 0.0
      %424 = vmatpush2.msra.mxu0 %v280
      %425 = vmatprep.mubr.f32.mxu0 %v205
      %426 = vmatmul.mubr.f32.gmra.mxu0 %v204
      %v427 = vpop.f32.mrf.mxu0
      %v428 = vadd.f32 0.0, %v427
      %v429 = vpop.f32.mrf.mxu0
      %430 = vmatprep.mubr.f32.mxu0 %v208
      %431 = vmatmul.mubr.f32.gmra.mxu0 %v207
      %v432 = vpop.f32.mrf.mxu0
      %v433 = vadd.f32 0.0, %v432
      %v434 = vpop.f32.mrf.mxu0
      %435 = vmatprep.mubr.f32.mxu0 %v211
      %436 = vmatmul.mubr.f32.gmra.mxu0 %v210
      %v437 = vpop.f32.mrf.mxu0
      %v438 = vadd.f32 0.0, %v437
      %v439 = vpop.f32.mrf.mxu0
      %440 = vmatprep.mubr.f32.mxu0 %v214
      %441 = vmatmul.mubr.f32.gmra.mxu0 %v213
      %v442 = vpop.f32.mrf.mxu0
      %v443 = vadd.f32 0.0, %v442
      %v444 = vpop.f32.mrf.mxu0
      %445 = vmatprep.mubr.f32.mxu0 %v217
      %446 = vmatmul.mubr.f32.gmra.mxu0 %v216
      %v447 = vpop.f32.mrf.mxu0
      %v448 = vadd.f32 0.0, %v447
      %v449 = vpop.f32.mrf.mxu0
      %450 = vmatprep.mubr.f32.mxu0 %v220
      %451 = vmatmul.mubr.f32.gmra.mxu0 %v219
      %v452 = vpop.f32.mrf.mxu0
      %v453 = vadd.f32 0.0, %v452
      %v454 = vpop.f32.mrf.mxu0
      %455 = vmatprep.mubr.f32.mxu0 %v223
      %456 = vmatmul.mubr.f32.gmra.mxu0 %v222
      %v457 = vpop.f32.mrf.mxu0
      %v458 = vadd.f32 0.0, %v457
      %v459 = vpop.f32.mrf.mxu0
      %460 = vmatprep.mubr.f32.mxu0 %v226
      %461 = vmatmul.mubr.f32.gmra.mxu0 %v225
      %v462 = vpop.f32.mrf.mxu0
      %v463 = vadd.f32 0.0, %v462
      %v464 = vpop.f32.mrf.mxu0
      %465 = vmatprep.mubr.f32.mxu0 %v229
      %466 = vmatmul.mubr.f32.gmra.mxu0 %v228
      %v467 = vpop.f32.mrf.mxu0
      %v468 = vadd.f32 0.0, %v467
      %v469 = vpop.f32.mrf.mxu0
      %470 = vmatprep.mubr.f32.mxu0 %v232
      %471 = vmatmul.mubr.f32.gmra.mxu0 %v231
      %v472 = vpop.f32.mrf.mxu0
      %v473 = vadd.f32 0.0, %v472
      %v474 = vpop.f32.mrf.mxu0
      %475 = vmatprep.mubr.f32.mxu0 %v235
      %476 = vmatmul.mubr.f32.gmra.mxu0 %v234
      %v477 = vpop.f32.mrf.mxu0
      %v478 = vadd.f32 0.0, %v477
      %v479 = vpop.f32.mrf.mxu0
      %480 = vmatprep.mubr.f32.mxu0 %v238
      %481 = vmatmul.mubr.f32.gmra.mxu0 %v237
      %v482 = vpop.f32.mrf.mxu0
      %v483 = vadd.f32 0.0, %v482
      %v484 = vpop.f32.mrf.mxu0
      %485 = vmatprep.mubr.f32.mxu0 %v241
      %486 = vmatmul.mubr.f32.gmra.mxu0 %v240
      %v487 = vpop.f32.mrf.mxu0
      %v488 = vadd.f32 0.0, %v487
      %v489 = vpop.f32.mrf.mxu0
      %490 = vmatprep.mubr.f32.mxu0 %v244
      %491 = vmatmul.mubr.f32.gmra.mxu0 %v243
      %v492 = vpop.f32.mrf.mxu0
      %v493 = vadd.f32 0.0, %v492
      %v494 = vpop.f32.mrf.mxu0
      %495 = vmatprep.mubr.f32.mxu0 %v247
      %496 = vmatmul.mubr.f32.gmra.mxu0 %v246
      %v497 = vpop.f32.mrf.mxu0
      %v498 = vadd.f32 0.0, %v497
      %v499 = vpop.f32.mrf.mxu0
      %500 = vmatprep.mubr.f32.mxu0 %v250
      %501 = vmatmul.mubr.f32.gmra.mxu0 %v249
      %v502 = vpop.f32.mrf.mxu0
      %v503 = vadd.f32 0.0, %v502
      %v504 = vpop.f32.mrf.mxu0
      %505 = vmatprep.mubr.f32.mxu0 %v253
      %506 = vmatmul.mubr.f32.gmra.mxu0 %v252
      %v507 = vpop.f32.mrf.mxu0
      %v508 = vadd.f32 0.0, %v507
      %v509 = vpop.f32.mrf.mxu0
      %510 = vmatprep.mubr.f32.mxu0 %v256
      %511 = vmatmul.mubr.f32.gmra.mxu0 %v255
      %v512 = vpop.f32.mrf.mxu0
      %v513 = vadd.f32 0.0, %v512
      %v514 = vpop.f32.mrf.mxu0
      %515 = vmatprep.mubr.f32.mxu0 %v259
      %516 = vmatmul.mubr.f32.gmra.mxu0 %v258
      %v517 = vpop.f32.mrf.mxu0
      %v518 = vadd.f32 0.0, %v517
      %v519 = vpop.f32.mrf.mxu0
      %520 = vmatprep.mubr.f32.mxu0 %v262
      %521 = vmatmul.mubr.f32.gmra.mxu0 %v261
      %v522 = vpop.f32.mrf.mxu0
      %v523 = vadd.f32 0.0, %v522
      %v524 = vpop.f32.mrf.mxu0
      %525 = vdwg.mxu0
      %526 = vmatprep.subr.mxu0 0.0
      %527 = vmatpush1.msra.mxu0 0.0
      %528 = vmatprep.subr.mxu0 0.0
      %529 = vmatpush1.msra.mxu0 0.0
      %530 = vmatprep.subr.mxu0 0.0
      %531 = vmatpush1.msra.mxu0 0.0
      %532 = vmatprep.subr.mxu0 0.0
      %533 = vmatpush1.msra.mxu0 0.0
      %534 = vmatprep.subr.mxu0 0.0
      %535 = vmatpush1.msra.mxu0 0.0
      %536 = vmatprep.subr.mxu0 0.0
      %537 = vmatpush1.msra.mxu0 0.0
      %538 = vmatprep.subr.mxu0 0.0
      %539 = vmatpush1.msra.mxu0 0.0
      %540 = vmatprep.subr.mxu0 0.0
      %541 = vmatpush1.msra.mxu0 0.0
      %542 = vmatprep.subr.mxu0 0.0
      %543 = vmatpush1.msra.mxu0 0.0
      %544 = vmatprep.subr.mxu0 0.0
      %545 = vmatpush1.msra.mxu0 0.0
      %546 = vmatprep.subr.mxu0 0.0
      %547 = vmatpush1.msra.mxu0 0.0
      %548 = vmatprep.subr.mxu0 0.0
      %549 = vmatpush1.msra.mxu0 0.0
      %550 = vmatprep.subr.mxu0 0.0
      %551 = vmatpush1.msra.mxu0 %v299
      %552 = vmatprep.subr.mxu0 0.0
      %553 = vmatpush1.msra.mxu0 %v298
      %554 = vmatprep.subr.mxu0 0.0
      %555 = vmatpush1.msra.mxu0 %v297
      %556 = vmatprep.subr.mxu0 0.0
      %557 = vmatpush1.msra.mxu0 %v296
      %558 = vmatprep.subr.mxu0 0.0
      %559 = vmatpush2.msra.mxu0 0.0
      %560 = vmatprep.subr.mxu0 0.0
      %561 = vmatpush2.msra.mxu0 0.0
      %562 = vmatprep.subr.mxu0 0.0
      %563 = vmatpush2.msra.mxu0 0.0
      %564 = vmatprep.subr.mxu0 0.0
      %565 = vmatpush2.msra.mxu0 0.0
      %566 = vmatprep.subr.mxu0 0.0
      %567 = vmatpush2.msra.mxu0 0.0
      %568 = vmatprep.subr.mxu0 0.0
      %569 = vmatpush2.msra.mxu0 0.0
      %570 = vmatprep.subr.mxu0 0.0
      %571 = vmatpush2.msra.mxu0 0.0
      %572 = vmatprep.subr.mxu0 0.0
      %573 = vmatpush2.msra.mxu0 0.0
      %574 = vmatprep.subr.mxu0 0.0
      %575 = vmatpush2.msra.mxu0 0.0
      %576 = vmatprep.subr.mxu0 0.0
      %577 = vmatpush2.msra.mxu0 0.0
      %578 = vmatprep.subr.mxu0 0.0
      %579 = vmatpush2.msra.mxu0 0.0
      %580 = vmatprep.subr.mxu0 0.0
      %581 = vmatpush2.msra.mxu0 0.0
      %582 = vmatprep.subr.mxu0 0.0
      %583 = vmatpush2.msra.mxu0 0.0
      %584 = vmatprep.subr.mxu0 0.0
      %585 = vmatpush2.msra.mxu0 0.0
      %586 = vmatprep.subr.mxu0 0.0
      %587 = vmatpush2.msra.mxu0 0.0
      %588 = vmatprep.subr.mxu0 0.0
      %589 = vmatpush2.msra.mxu0 0.0
      %590 = vmatprep.mubr.f32.mxu0 0.0
      %591 = vmatmul.mubr.f32.gmra.mxu0 %v302
      %v592 = vpop.f32.mrf.mxu0
      %v593 = vadd.f32 %v428, %v592
      %v594 = vpop.f32.mrf.mxu0
      %595 = vmatprep.mubr.f32.mxu0 0.0
      %596 = vmatmul.mubr.f32.gmra.mxu0 %v305
      %v597 = vpop.f32.mrf.mxu0
      %v598 = vadd.f32 %v433, %v597
      %v599 = vpop.f32.mrf.mxu0
      %600 = vmatprep.mubr.f32.mxu0 0.0
      %601 = vmatmul.mubr.f32.gmra.mxu0 %v308
      %v602 = vpop.f32.mrf.mxu0
      %v603 = vadd.f32 %v438, %v602
      %v604 = vpop.f32.mrf.mxu0
      %605 = vmatprep.mubr.f32.mxu0 0.0
      %606 = vmatmul.mubr.f32.gmra.mxu0 %v311
      %v607 = vpop.f32.mrf.mxu0
      %v608 = vadd.f32 %v443, %v607
      %v609 = vpop.f32.mrf.mxu0
      %610 = vmatprep.mubr.f32.mxu0 0.0
      %611 = vmatmul.mubr.f32.gmra.mxu0 %v314
      %v612 = vpop.f32.mrf.mxu0
      %v613 = vadd.f32 %v448, %v612
      %v614 = vpop.f32.mrf.mxu0
      %615 = vmatprep.mubr.f32.mxu0 0.0
      %616 = vmatmul.mubr.f32.gmra.mxu0 %v317
      %v617 = vpop.f32.mrf.mxu0
      %v618 = vadd.f32 %v453, %v617
      %v619 = vpop.f32.mrf.mxu0
      %620 = vmatprep.mubr.f32.mxu0 0.0
      %621 = vmatmul.mubr.f32.gmra.mxu0 %v320
      %v622 = vpop.f32.mrf.mxu0
      %v623 = vadd.f32 %v458, %v622
      %v624 = vpop.f32.mrf.mxu0
      %625 = vmatprep.mubr.f32.mxu0 0.0
      %626 = vmatmul.mubr.f32.gmra.mxu0 %v323
      %v627 = vpop.f32.mrf.mxu0
      %v628 = vadd.f32 %v463, %v627
      %v629 = vpop.f32.mrf.mxu0
      %630 = vmatprep.mubr.f32.mxu0 0.0
      %631 = vmatmul.mubr.f32.gmra.mxu0 %v326
      %v632 = vpop.f32.mrf.mxu0
      %v633 = vadd.f32 %v468, %v632
      %v634 = vpop.f32.mrf.mxu0
      %635 = vmatprep.mubr.f32.mxu0 0.0
      %636 = vmatmul.mubr.f32.gmra.mxu0 %v329
      %v637 = vpop.f32.mrf.mxu0
      %v638 = vadd.f32 %v473, %v637
      %v639 = vpop.f32.mrf.mxu0
      %640 = vmatprep.mubr.f32.mxu0 0.0
      %641 = vmatmul.mubr.f32.gmra.mxu0 %v332
      %v642 = vpop.f32.mrf.mxu0
      %v643 = vadd.f32 %v478, %v642
      %v644 = vpop.f32.mrf.mxu0
      %645 = vmatprep.mubr.f32.mxu0 0.0
      %646 = vmatmul.mubr.f32.gmra.mxu0 %v335
      %v647 = vpop.f32.mrf.mxu0
      %v648 = vadd.f32 %v483, %v647
      %v649 = vpop.f32.mrf.mxu0
      %650 = vmatprep.mubr.f32.mxu0 0.0
      %651 = vmatmul.mubr.f32.gmra.mxu0 %v338
      %v652 = vpop.f32.mrf.mxu0
      %v653 = vadd.f32 %v488, %v652
      %v654 = vpop.f32.mrf.mxu0
      %655 = vmatprep.mubr.f32.mxu0 0.0
      %656 = vmatmul.mubr.f32.gmra.mxu0 %v341
      %v657 = vpop.f32.mrf.mxu0
      %v658 = vadd.f32 %v493, %v657
      %v659 = vpop.f32.mrf.mxu0
      %660 = vmatprep.mubr.f32.mxu0 0.0
      %661 = vmatmul.mubr.f32.gmra.mxu0 %v344
      %v662 = vpop.f32.mrf.mxu0
      %v663 = vadd.f32 %v498, %v662
      %v664 = vpop.f32.mrf.mxu0
      %665 = vmatprep.mubr.f32.mxu0 0.0
      %666 = vmatmul.mubr.f32.gmra.mxu0 %v347
      %v667 = vpop.f32.mrf.mxu0
      %v668 = vadd.f32 %v503, %v667
      %v669 = vpop.f32.mrf.mxu0
      %670 = vmatprep.mubr.f32.mxu0 0.0
      %671 = vmatmul.mubr.f32.gmra.mxu0 %v350
      %v672 = vpop.f32.mrf.mxu0
      %v673 = vadd.f32 %v508, %v672
      %v674 = vpop.f32.mrf.mxu0
      %675 = vmatprep.mubr.f32.mxu0 0.0
      %676 = vmatmul.mubr.f32.gmra.mxu0 %v353
      %v677 = vpop.f32.mrf.mxu0
      %v678 = vadd.f32 %v513, %v677
      %v679 = vpop.f32.mrf.mxu0
      %680 = vmatprep.mubr.f32.mxu0 0.0
      %681 = vmatmul.mubr.f32.gmra.mxu0 %v356
      %v682 = vpop.f32.mrf.mxu0
      %v683 = vadd.f32 %v518, %v682
      %v684 = vpop.f32.mrf.mxu0
      %685 = vmatprep.mubr.f32.mxu0 0.0
      %686 = vmatmul.mubr.f32.gmra.mxu0 %v359
      %v687 = vpop.f32.mrf.mxu0
      %v688 = vadd.f32 %v523, %v687
      %v689 = vpop.f32.mrf.mxu0
      %690 = vdwg.mxu0
      %v691 = vld [vmem:[%s2] sm:$0x1]
      %v693 = vlaneseq
      %v694 = vshrl.u32 %v693, 7
      %v695 = vsub.s32 0, %v694
      %v696 = vrot.slane %v691, %v695
      %v698 = vmul.f32 %v593, %v696
      %v699 = vmul.f32 %v598, %v696
      %v700 = vmul.f32 %v603, %v696
      %v701 = vmul.f32 %v608, %v696
      %v702 = vmul.f32 %v613, %v696
      %v703 = vmul.f32 %v618, %v696
      %v704 = vmul.f32 %v623, %v696
      %v705 = vmul.f32 %v628, %v696
      %v706 = vmul.f32 %v633, %v696
      %v707 = vmul.f32 %v638, %v696
      %v708 = vmul.f32 %v643, %v696
      %v709 = vmul.f32 %v648, %v696
      %v710 = vmul.f32 %v653, %v696
      %v711 = vmul.f32 %v658, %v696
      %v712 = vmul.f32 %v663, %v696
      %v713 = vmul.f32 %v668, %v696
      %v714 = vmul.f32 %v673, %v696
      %v715 = vmul.f32 %v678, %v696
      %v716 = vmul.f32 %v683, %v696
      %v717 = vmul.f32 %v688, %v696
      %v718 = vld [vmem:[%s3] sm:$0x1]
      %v720 = vlaneseq
      %v721 = vshrl.u32 %v720, 7
      %v722 = vsub.s32 0, %v721
      %v723 = vrot.slane %v718, %v722
      %v725 = vadd.f32 %v698, %v723
      %v726 = vadd.f32 %v699, %v723
      %v727 = vadd.f32 %v700, %v723
      %v728 = vadd.f32 %v701, %v723
      %v729 = vadd.f32 %v702, %v723
      %v730 = vadd.f32 %v703, %v723
      %v731 = vadd.f32 %v704, %v723
      %v732 = vadd.f32 %v705, %v723
      %v733 = vadd.f32 %v706, %v723
      %v734 = vadd.f32 %v707, %v723
      %v735 = vadd.f32 %v708, %v723
      %v736 = vadd.f32 %v709, %v723
      %v737 = vadd.f32 %v710, %v723
      %v738 = vadd.f32 %v711, %v723
      %v739 = vadd.f32 %v712, %v723
      %v740 = vadd.f32 %v713, %v723
      %v741 = vadd.f32 %v714, %v723
      %v742 = vadd.f32 %v715, %v723
      %v743 = vadd.f32 %v716, %v723
      %v744 = vadd.f32 %v717, %v723
      %v745 = vmax.f32 %v725, 0.0
      %v746 = vmax.f32 %v726, 0.0
      %v747 = vmax.f32 %v727, 0.0
      %v748 = vmax.f32 %v728, 0.0
      %v749 = vmax.f32 %v729, 0.0
      %v750 = vmax.f32 %v730, 0.0
      %v751 = vmax.f32 %v731, 0.0
      %v752 = vmax.f32 %v732, 0.0
      %v753 = vmax.f32 %v733, 0.0
      %v754 = vmax.f32 %v734, 0.0
      %v755 = vmax.f32 %v735, 0.0
      %v756 = vmax.f32 %v736, 0.0
      %v757 = vmax.f32 %v737, 0.0
      %v758 = vmax.f32 %v738, 0.0
      %v759 = vmax.f32 %v739, 0.0
      %v760 = vmax.f32 %v740, 0.0
      %v761 = vmax.f32 %v741, 0.0
      %v762 = vmax.f32 %v742, 0.0
      %v763 = vmax.f32 %v743, 0.0
      %v764 = vmax.f32 %v744, 0.0
      %v765 = vmax.f32 %v745, %v750
      %v766 = vmax.f32 %v746, %v751
      %v767 = vmax.f32 %v747, %v752
      %v768 = vmax.f32 %v748, %v753
      %v769 = vmax.f32 %v749, %v754
      %v770 = vmax.f32 %v755, %v760
      %v771 = vmax.f32 %v756, %v761
      %v772 = vmax.f32 %v757, %v762
      %v773 = vmax.f32 %v758, %v763
      %v774 = vmax.f32 %v759, %v764
      %v775 = vmax.f32 %v765, %v770
      %v776 = vmax.f32 %v766, %v771
      %v777 = vmax.f32 %v767, %v772
      %v778 = vmax.f32 %v768, %v773
      %v779 = vmax.f32 %v769, %v774
      %780 = vst [vmem:[%s202] sm:$0xff] %v775
      %781 = vst [vmem:[%s202 + $0x8] sm:$0xff] %v776
      %782 = vst [vmem:[%s202 + $0x10] sm:$0xff] %v777
      %783 = vst [vmem:[%s202 + $0x18] sm:$0xff] %v778
      %784 = vst [vmem:[%s202 + $0x20] sm:$0xff] %v779
      %s785 = smul.u32 5, %s15
      %p786 = scmp.lt.s32.totalorder %s785, 9
      %s787 = scalar_select %p786, %s785, 9
      %s788 = smul.addr %s787, 8
      %s789 = scalar_lea.vmem %s4, %s788
      // Predicated region
      $region37: #{fashion_cnn3_forward.4} parent=35 // pred_check
        %p790 = pneg %p122
      $region38: #{fashion_cnn3_forward.4} parent=35 // pred_check_branch
        %792 = sbr.rel (%p790) target = $region40
      $region39: #{fashion_cnn3_forward.4} parent=35 // pred_region
        %s793 = smul.u32 5, %s15
      $region40: #{fashion_cnn3_forward.4} parent=35 // pred_fallthru
        _
    $region36: #{fashion_cnn3_forward.4} parent=5 // pred_fallthru
      _
    %p794 = scmp.le.s32.totalorder 2, %s10
    // Predicated region
    $region41: #{fashion_cnn3_forward.4} parent=5 // pred_check
      %p795 = pneg %p794
    $region42: #{fashion_cnn3_forward.4} parent=5 // pred_check_branch
      %797 = sbr.rel (%p795) target = $region44
    $region43: #{fashion_cnn3_forward.4} parent=5 // pred_region
      %s798 = ssub.s32 %s10, 2
      // Predicated region
      $region45: #{fashion_cnn3_forward.4} parent=43 // pred_check
        %p799 = pneg %p128
      $region46: #{fashion_cnn3_forward.4} parent=43 // pred_check_branch
        %801 = sbr.rel (%p799) target = $region48
      $region47: #{fashion_cnn3_forward.4} parent=43 // pred_region
        %s802 = smul.u32 5, %s16
        %p803 = scmp.lt.s32.totalorder %s802, 9
        %s804 = scalar_select %p803, %s802, 9
        %s805 = smul.addr %s804, 8
        %s806 = scalar_lea.vmem %s4, %s805
      $region48: #{fashion_cnn3_forward.4} parent=43 // pred_fallthru
        _
    $region44: #{fashion_cnn3_forward.4} parent=5 // pred_fallthru
      _
  $region6: #{fashion_cnn3_forward.4} parent=0 // loop_footer
    %s14 = sadd.s32 1, %s10
  $region7: #{fashion_cnn3_forward.4} parent=0 // loop_footer_branch
    %9 = sbr.rel target = $region3
  $region8: #{fashion_cnn3_forward.4} parent=0 // loop_exit
    _

// kernel: fashion_cnn3_forward.5
$region0: #{fashion_cnn3_forward.5}
  #allocation0 [shape = 'u32[]', space=smem, size = 0x4, offset = 0x4, fixed_abs, tag = 'smem constant byte address 0x4 - core index']
  #allocation1 [shape = 'u32[144,128]{1,0:T(1,128)}', space=vmem, size = 0x12000, scoped, tag = 'internal scratch']
  %s0 = inlined_call_operand.vmem [shape: bf16[2,2304], index: 0, kind: input, shape index: {}]
  %s1 = inlined_call_operand.vmem [shape: bf16[2304,600], index: 1, kind: input, shape index: {}]
  %s2 = inlined_call_operand.vmem [shape: f32[1,600], index: 2, kind: input, shape index: {}]
  %s3 = inlined_call_operand.vmem [shape: bf16[600,120], index: 3, kind: input, shape index: {}]
  %s4 = inlined_call_operand.vmem [shape: f32[1,120], index: 4, kind: input, shape index: {}]
  %s5 = inlined_call_operand.vmem [shape: bf16[120,10], index: 5, kind: input, shape index: {}]
  %s6 = inlined_call_operand.vmem [shape: f32[1,10], index: 6, kind: input, shape index: {}]
  %s7 = inlined_call_operand.hbm [shape: f32[2,10], index: 7, kind: output, shape index: {}]
  %s8 = sld [smem:[#allocation0]]
  $region38: #{fashion_cnn3_forward.5} parent=0
    _
  %s10 = ssub.s32 1, %s8
  %s11 = scalar_select 0, %s10, %s8
  $region1: #{fashion_cnn3_forward.5} parent=0
    #allocation2 [shape = 'u8[1024]{0}', space=vmem, size = 0x400, scoped, tag = 'output window, operand 0, single buffered']
    #allocation3 [shape = 's32[1]{0}', space=sflag, size = 0x4, scoped, tag = 'scoped memory for fashion_cnn3_forward.5']
    %12 = vsyncpa [#allocation3], 0
    // Predicated region
    $region2: #{fashion_cnn3_forward.5} parent=1 // pred_check
      _
    $region3: #{fashion_cnn3_forward.5} parent=1 // pred_check_branch
      %14 = sbr.rel (0) target = $region5
    $region4: #{fashion_cnn3_forward.5} parent=1 // pred_region
      _
    $region5: #{fashion_cnn3_forward.5} parent=1 // pred_fallthru
      _
    // Predicated region
    $region6: #{fashion_cnn3_forward.5} parent=1 // pred_check
      _
    $region7: #{fashion_cnn3_forward.5} parent=1 // pred_check_branch
      %16 = sbr.rel (0) target = $region9
    $region8: #{fashion_cnn3_forward.5} parent=1 // pred_region
      _
    $region9: #{fashion_cnn3_forward.5} parent=1 // pred_fallthru
      _
    // Predicated region
    $region10: #{fashion_cnn3_forward.5} parent=1 // pred_check
      _
    $region11: #{fashion_cnn3_forward.5} parent=1 // pred_check_branch
      %18 = sbr.rel (0) target = $region13
    $region12: #{fashion_cnn3_forward.5} parent=1 // pred_region
      _
    $region13: #{fashion_cnn3_forward.5} parent=1 // pred_fallthru
      _
    // Predicated region
    $region14: #{fashion_cnn3_forward.5} parent=1 // pred_check
      _
    $region15: #{fashion_cnn3_forward.5} parent=1 // pred_check_branch
      %20 = sbr.rel (0) target = $region17
    $region16: #{fashion_cnn3_forward.5} parent=1 // pred_region
      _
    $region17: #{fashion_cnn3_forward.5} parent=1 // pred_fallthru
      _
    // Predicated region
    $region18: #{fashion_cnn3_forward.5} parent=1 // pred_check
      _
    $region19: #{fashion_cnn3_forward.5} parent=1 // pred_check_branch
      %22 = sbr.rel (0) target = $region21
    $region20: #{fashion_cnn3_forward.5} parent=1 // pred_region
      _
    $region21: #{fashion_cnn3_forward.5} parent=1 // pred_fallthru
      _
    // Predicated region
    $region22: #{fashion_cnn3_forward.5} parent=1 // pred_check
      _
    $region23: #{fashion_cnn3_forward.5} parent=1 // pred_check_branch
      %24 = sbr.rel (0) target = $region25
    $region24: #{fashion_cnn3_forward.5} parent=1 // pred_region
      _
    $region25: #{fashion_cnn3_forward.5} parent=1 // pred_fallthru
      _
    // Predicated region
    $region26: #{fashion_cnn3_forward.5} parent=1 // pred_check
      _
    $region27: #{fashion_cnn3_forward.5} parent=1 // pred_check_branch
      %26 = sbr.rel (0) target = $region29
    $region28: #{fashion_cnn3_forward.5} parent=1 // pred_region
      _
    $region29: #{fashion_cnn3_forward.5} parent=1 // pred_fallthru
      _
    %v28 = vld [vmem:[%s0] sm:$0xff]
    %v29 = vld [vmem:[%s0 + $0x8] sm:$0xff]
    %v30 = vld [vmem:[%s0 + $0x10] sm:$0x3]
    %v31 = vld [vmem:[%s1] sm:$0xff]
    %v32 = vld [vmem:[%s1 + $0x8] sm:$0xff]
    %v33 = vld [vmem:[%s1 + $0x10] sm:$0xf]
    %v34 = vld [vmem:[%s1 + $0x14] sm:$0xff]
    %v35 = vld [vmem:[%s1 + $0x1c] sm:$0xff]
    %v36 = vld [vmem:[%s1 + $0x24] sm:$0xf]
    %v37 = vld [vmem:[%s1 + $0x28] sm:$0xff]
    %v38 = vld [vmem:[%s1 + $0x30] sm:$0xff]
    %v39 = vld [vmem:[%s1 + $0x38] sm:$0xf]
    %v40 = vld [vmem:[%s1 + $0x3c] sm:$0xff]
    %v41 = vld [vmem:[%s1 + $0x44] sm:$0xff]
    %v42 = vld [vmem:[%s1 + $0x4c] sm:$0xf]
    %v43 = vld [vmem:[%s1 + $0x50] sm:$0xff]
    %v44 = vld [vmem:[%s1 + $0x58] sm:$0xff]
    %v45 = vld [vmem:[%s1 + $0x60] sm:$0xf]
    %v46 = vld [vmem:[%s1 + $0x64] sm:$0xff]
    %v47 = vld [vmem:[%s1 + $0x6c] sm:$0xff]
    %v48 = vld [vmem:[%s1 + $0x74] sm:$0xf]
    %v49 = vld [vmem:[%s1 + $0x78] sm:$0xff]
    %v50 = vld [vmem:[%s1 + $0x80] sm:$0xff]
    %v51 = vld [vmem:[%s1 + $0x88] sm:$0xf]
    %v52 = vld [vmem:[%s1 + $0x8c] sm:$0xff]
    %v53 = vld [vmem:[%s1 + $0x94] sm:$0xff]
    %v54 = vld [vmem:[%s1 + $0x9c] sm:$0xf]
    %v55 = vld [vmem:[%s1 + $0xa0] sm:$0xff]
    %v56 = vld [vmem:[%s1 + $0xa8] sm:$0xff]
    %v57 = vld [vmem:[%s1 + $0xb0] sm:$0xf]
    %v58 = vld [vmem:[%s1 + $0xb4] sm:$0xff]
    %v59 = vld [vmem:[%s1 + $0xbc] sm:$0xff]
    %v60 = vld [vmem:[%s1 + $0xc4] sm:$0xf]
    %v61 = vld [vmem:[%s1 + $0xc8] sm:$0xff]
    %v62 = vld [vmem:[%s1 + $0xd0] sm:$0xff]
    %v63 = vld [vmem:[%s1 + $0xd8] sm:$0xf]
    %v64 = vld [vmem:[%s1 + $0xdc] sm:$0xff]
    %v65 = vld [vmem:[%s1 + $0xe4] sm:$0xff]
    %v66 = vld [vmem:[%s1 + $0xec] sm:$0xf]
    %v67 = vld [vmem:[%s1 + $0xf0] sm:$0xff]
    %v68 = vld [vmem:[%s1 + $0xf8] sm:$0xff]
    %v69 = vld [vmem:[%s1 + $0x100] sm:$0xf]
    %v70 = vld [vmem:[%s1 + $0x104] sm:$0xff]
    %v71 = vld [vmem:[%s1 + $0x10c] sm:$0xff]
    %v72 = vld [vmem:[%s1 + $0x114] sm:$0xf]
    %v73 = vld [vmem:[%s1 + $0x118] sm:$0xff]
    %v74 = vld [vmem:[%s1 + $0x120] sm:$0xff]
    %v75 = vld [vmem:[%s1 + $0x128] sm:$0xf]
    %v76 = vld [vmem:[%s1 + $0x12c] sm:$0xff]
    %v77 = vld [vmem:[%s1 + $0x134] sm:$0xff]
    %v78 = vld [vmem:[%s1 + $0x13c] sm:$0xf]
    %v79 = vld [vmem:[%s1 + $0x140] sm:$0xff]
    %v80 = vld [vmem:[%s1 + $0x148] sm:$0xff]
    %v81 = vld [vmem:[%s1 + $0x150] sm:$0xf]
    %v82 = vld [vmem:[%s1 + $0x154] sm:$0xff]
    %v83 = vld [vmem:[%s1 + $0x15c] sm:$0xff]
    %v84 = vld [vmem:[%s1 + $0x164] sm:$0xf]
    %v85 = vld [vmem:[%s1 + $0x168] sm:$0xff]
    %v86 = vld [vmem:[%s1 + $0x170] sm:$0xff]
    %v87 = vld [vmem:[%s1 + $0x178] sm:$0xf]
    %v88 = vld [vmem:[%s1 + $0x17c] sm:$0xff]
    %v89 = vld [vmem:[%s1 + $0x184] sm:$0xff]
    %v90 = vld [vmem:[%s1 + $0x18c] sm:$0xf]
    %v91 = vld [vmem:[%s1 + $0x190] sm:$0xff]
    %v92 = vld [vmem:[%s1 + $0x198] sm:$0xff]
    %v93 = vld [vmem:[%s1 + $0x1a0] sm:$0xf]
    %v94 = vld [vmem:[%s1 + $0x1a4] sm:$0xff]
    %v95 = vld [vmem:[%s1 + $0x1ac] sm:$0xff]
    %v96 = vld [vmem:[%s1 + $0x1b4] sm:$0xf]
    %v97 = vld [vmem:[%s1 + $0x1b8] sm:$0xff]
    %v98 = vld [vmem:[%s1 + $0x1c0] sm:$0xff]
    %v99 = vld [vmem:[%s1 + $0x1c8] sm:$0xf]
    %v100 = vld [vmem:[%s1 + $0x1cc] sm:$0xff]
    %v101 = vld [vmem:[%s1 + $0x1d4] sm:$0xff]
    %v102 = vld [vmem:[%s1 + $0x1dc] sm:$0xf]
    %v103 = vld [vmem:[%s1 + $0x1e0] sm:$0xff]
    %v104 = vld [vmem:[%s1 + $0x1e8] sm:$0xff]
    %v105 = vld [vmem:[%s1 + $0x1f0] sm:$0xf]
    %v106 = vld [vmem:[%s1 + $0x1f4] sm:$0xff]
    %v107 = vld [vmem:[%s1 + $0x1fc] sm:$0xff]
    %v108 = vld [vmem:[%s1 + $0x204] sm:$0xf]
    %v109 = vld [vmem:[%s1 + $0x208] sm:$0xff]
    %v110 = vld [vmem:[%s1 + $0x210] sm:$0xff]
    %v111 = vld [vmem:[%s1 + $0x218] sm:$0xf]
    %v112 = vld [vmem:[%s1 + $0x21c] sm:$0xff]
    %v113 = vld [vmem:[%s1 + $0x224] sm:$0xff]
    %v114 = vld [vmem:[%s1 + $0x22c] sm:$0xf]
    %v115 = vld [vmem:[%s1 + $0x230] sm:$0xff]
    %v116 = vld [vmem:[%s1 + $0x238] sm:$0xff]
    %v117 = vld [vmem:[%s1 + $0x240] sm:$0xf]
    %v118 = vld [vmem:[%s1 + $0x244] sm:$0xff]
    %v119 = vld [vmem:[%s1 + $0x24c] sm:$0xff]
    %v120 = vld [vmem:[%s1 + $0x254] sm:$0xf]
    %v121 = vld [vmem:[%s1 + $0x258] sm:$0xff]
    %v122 = vld [vmem:[%s1 + $0x260] sm:$0xff]
    %v123 = vld [vmem:[%s1 + $0x268] sm:$0xf]
    %v124 = vld [vmem:[%s1 + $0x26c] sm:$0xff]
    %v125 = vld [vmem:[%s1 + $0x274] sm:$0xff]
    %v126 = vld [vmem:[%s1 + $0x27c] sm:$0xf]
    %v127 = vld [vmem:[%s1 + $0x280] sm:$0xff]
    %v128 = vld [vmem:[%s1 + $0x288] sm:$0xff]
    %v129 = vld [vmem:[%s1 + $0x290] sm:$0xf]
    %v130 = vld [vmem:[%s1 + $0x294] sm:$0xff]
    %v131 = vld [vmem:[%s1 + $0x29c] sm:$0xff]
    %v132 = vld [vmem:[%s1 + $0x2a4] sm:$0xf]
    %v133 = vld [vmem:[%s1 + $0x2a8] sm:$0xff]
    %v134 = vld [vmem:[%s1 + $0x2b0] sm:$0xff]
    %v135 = vld [vmem:[%s1 + $0x2b8] sm:$0xf]
    %v136 = vld [vmem:[%s1 + $0x2bc] sm:$0xff]
    %v137 = vld [vmem:[%s1 + $0x2c4] sm:$0xff]
    %v138 = vld [vmem:[%s1 + $0x2cc] sm:$0xf]
    %v139 = vld [vmem:[%s1 + $0x2d0] sm:$0xff]
    %v140 = vld [vmem:[%s1 + $0x2d8] sm:$0xff]
    %v141 = vld [vmem:[%s1 + $0x2e0] sm:$0xf]
    %v142 = vld [vmem:[%s1 + $0x2e4] sm:$0xff]
    %v143 = vld [vmem:[%s1 + $0x2ec] sm:$0xff]
    %v144 = vld [vmem:[%s1 + $0x2f4] sm:$0xf]
    %v145 = vld [vmem:[%s1 + $0x2f8] sm:$0xff]
    %v146 = vld [vmem:[%s1 + $0x300] sm:$0xff]
    %v147 = vld [vmem:[%s1 + $0x308] sm:$0xf]
    %v148 = vld [vmem:[%s1 + $0x30c] sm:$0xff]
    %v149 = vld [vmem:[%s1 + $0x314] sm:$0xff]
    %v150 = vld [vmem:[%s1 + $0x31c] sm:$0xf]
    %v151 = vld [vmem:[%s1 + $0x320] sm:$0xff]
    %v152 = vld [vmem:[%s1 + $0x328] sm:$0xff]
    %v153 = vld [vmem:[%s1 + $0x330] sm:$0xf]
    %v154 = vld [vmem:[%s1 + $0x334] sm:$0xff]
    %v155 = vld [vmem:[%s1 + $0x33c] sm:$0xff]
    %v156 = vld [vmem:[%s1 + $0x344] sm:$0xf]
    %v157 = vld [vmem:[%s1 + $0x348] sm:$0xff]
    %v158 = vld [vmem:[%s1 + $0x350] sm:$0xff]
    %v159 = vld [vmem:[%s1 + $0x358] sm:$0xf]
    %v160 = vld [vmem:[%s1 + $0x35c] sm:$0xff]
    %v161 = vld [vmem:[%s1 + $0x364] sm:$0xff]
    %v162 = vld [vmem:[%s1 + $0x36c] sm:$0xf]
    %v163 = vld [vmem:[%s1 + $0x370] sm:$0xff]
    %v164 = vld [vmem:[%s1 + $0x378] sm:$0xff]
    %v165 = vld [vmem:[%s1 + $0x380] sm:$0xf]
    %v166 = vld [vmem:[%s1 + $0x384] sm:$0xff]
    %v167 = vld [vmem:[%s1 + $0x38c] sm:$0xff]
    %v168 = vld [vmem:[%s1 + $0x394] sm:$0xf]
    %v169 = vld [vmem:[%s1 + $0x398] sm:$0xff]
    %v170 = vld [vmem:[%s1 + $0x3a0] sm:$0xff]
    %v171 = vld [vmem:[%s1 + $0x3a8] sm:$0xf]
    %v172 = vld [vmem:[%s1 + $0x3ac] sm:$0xff]
    %v173 = vld [vmem:[%s1 + $0x3b4] sm:$0xff]
    %v174 = vld [vmem:[%s1 + $0x3bc] sm:$0xf]
    %v175 = vld [vmem:[%s1 + $0x3c0] sm:$0xff]
    %v176 = vld [vmem:[%s1 + $0x3c8] sm:$0xff]
    %v177 = vld [vmem:[%s1 + $0x3d0] sm:$0xf]
    %v178 = vld [vmem:[%s1 + $0x3d4] sm:$0xff]
    %v179 = vld [vmem:[%s1 + $0x3dc] sm:$0xff]
    %v180 = vld [vmem:[%s1 + $0x3e4] sm:$0xf]
    %v181 = vld [vmem:[%s1 + $0x3e8] sm:$0xff]
    %v182 = vld [vmem:[%s1 + $0x3f0] sm:$0xff]
    %v183 = vld [vmem:[%s1 + $0x3f8] sm:$0xf]
    %v184 = vld [vmem:[%s1 + $0x3fc] sm:$0xff]
    %v185 = vld [vmem:[%s1 + $0x404] sm:$0xff]
    %v186 = vld [vmem:[%s1 + $0x40c] sm:$0xf]
    %v187 = vld [vmem:[%s1 + $0x410] sm:$0xff]
    %v188 = vld [vmem:[%s1 + $0x418] sm:$0xff]
    %v189 = vld [vmem:[%s1 + $0x420] sm:$0xf]
    %v190 = vld [vmem:[%s1 + $0x424] sm:$0xff]
    %v191 = vld [vmem:[%s1 + $0x42c] sm:$0xff]
    %v192 = vld [vmem:[%s1 + $0x434] sm:$0xf]
    %v193 = vld [vmem:[%s1 + $0x438] sm:$0xff]
    %v194 = vld [vmem:[%s1 + $0x440] sm:$0xff]
    %v195 = vld [vmem:[%s1 + $0x448] sm:$0xf]
    %v196 = vld [vmem:[%s1 + $0x44c] sm:$0xff]
    %v197 = vld [vmem:[%s1 + $0x454] sm:$0xff]
    %v198 = vld [vmem:[%s1 + $0x45c] sm:$0xf]
    %v199 = vld [vmem:[%s1 + $0x460] sm:$0xff]
    %v200 = vld [vmem:[%s1 + $0x468] sm:$0xff]
    %v201 = vld [vmem:[%s1 + $0x470] sm:$0xf]
    %v202 = vld [vmem:[%s1 + $0x474] sm:$0xff]
    %v203 = vld [vmem:[%s1 + $0x47c] sm:$0xff]
    %v204 = vld [vmem:[%s1 + $0x484] sm:$0xf]
    %v205 = vld [vmem:[%s1 + $0x488] sm:$0xff]
    %v206 = vld [vmem:[%s1 + $0x490] sm:$0xff]
    %v207 = vld [vmem:[%s1 + $0x498] sm:$0xf]
    %v208 = vld [vmem:[%s1 + $0x49c] sm:$0xff]
    %v209 = vld [vmem:[%s1 + $0x4a4] sm:$0xff]
    %v210 = vld [vmem:[%s1 + $0x4ac] sm:$0xf]
    %v211 = vld [vmem:[%s1 + $0x4b0] sm:$0xff]
    %v212 = vld [vmem:[%s1 + $0x4b8] sm:$0xff]
    %v213 = vld [vmem:[%s1 + $0x4c0] sm:$0xf]
    %v214 = vld [vmem:[%s1 + $0x4c4] sm:$0xff]
    %v215 = vld [vmem:[%s1 + $0x4cc] sm:$0xff]
    %v216 = vld [vmem:[%s1 + $0x4d4] sm:$0xf]
    %v217 = vld [vmem:[%s1 + $0x4d8] sm:$0xff]
    %v218 = vld [vmem:[%s1 + $0x4e0] sm:$0xff]
    %v219 = vld [vmem:[%s1 + $0x4e8] sm:$0xf]
    %v220 = vld [vmem:[%s1 + $0x4ec] sm:$0xff]
    %v221 = vld [vmem:[%s1 + $0x4f4] sm:$0xff]
    %v222 = vld [vmem:[%s1 + $0x4fc] sm:$0xf]
    %v223 = vld [vmem:[%s1 + $0x500] sm:$0xff]
    %v224 = vld [vmem:[%s1 + $0x508] sm:$0xff]
    %v225 = vld [vmem:[%s1 + $0x510] sm:$0xf]
    %v226 = vld [vmem:[%s1 + $0x514] sm:$0xff]
    %v227 = vld [vmem:[%s1 + $0x51c] sm:$0xff]
    %v228 = vld [vmem:[%s1 + $0x524] sm:$0xf]
    %v229 = vld [vmem:[%s1 + $0x528] sm:$0xff]
    %v230 = vld [vmem:[%s1 + $0x530] sm:$0xff]
    %v231 = vld [vmem:[%s1 + $0x538] sm:$0xf]
    %v232 = vld [vmem:[%s1 + $0x53c] sm:$0xff]
    %v233 = vld [vmem:[%s1 + $0x544] sm:$0xff]
    %v234 = vld [vmem:[%s1 + $0x54c] sm:$0xf]
    %v235 = vld [vmem:[%s1 + $0x550] sm:$0xff]
    %v236 = vld [vmem:[%s1 + $0x558] sm:$0xff]
    %v237 = vld [vmem:[%s1 + $0x560] sm:$0xf]
    %v238 = vld [vmem:[%s1 + $0x564] sm:$0xff]
    %v239 = vld [vmem:[%s1 + $0x56c] sm:$0xff]
    %v240 = vld [vmem:[%s1 + $0x574] sm:$0xf]
    %v241 = vld [vmem:[%s1 + $0x578] sm:$0xff]
    %v242 = vld [vmem:[%s1 + $0x580] sm:$0xff]
    %v243 = vld [vmem:[%s1 + $0x588] sm:$0xf]
    %v244 = vld [vmem:[%s1 + $0x58c] sm:$0xff]
    %v245 = vld [vmem:[%s1 + $0x594] sm:$0xff]
    %v246 = vld [vmem:[%s1 + $0x59c] sm:$0xf]
    %v247 = vld [vmem:[%s1 + $0x5a0] sm:$0xff]
    %v248 = vld [vmem:[%s1 + $0x5a8] sm:$0xff]
    %v249 = vld [vmem:[%s1 + $0x5b0] sm:$0xf]
    %v250 = vld [vmem:[%s1 + $0x5b4] sm:$0xff]
    %v251 = vld [vmem:[%s1 + $0x5bc] sm:$0xff]
    %v252 = vld [vmem:[%s1 + $0x5c4] sm:$0xf]
    %v253 = vld [vmem:[%s1 + $0x5c8] sm:$0xff]
    %v254 = vld [vmem:[%s1 + $0x5d0] sm:$0xff]
    %v255 = vld [vmem:[%s1 + $0x5d8] sm:$0xf]
    %v256 = vld [vmem:[%s1 + $0x5dc] sm:$0xff]
    %v257 = vld [vmem:[%s1 + $0x5e4] sm:$0xff]
    %v258 = vld [vmem:[%s1 + $0x5ec] sm:$0xf]
    %v259 = vld [vmem:[%s1 + $0x5f0] sm:$0xff]
    %v260 = vld [vmem:[%s1 + $0x5f8] sm:$0xff]
    %v261 = vld [vmem:[%s1 + $0x600] sm:$0xf]
    %v262 = vld [vmem:[%s1 + $0x604] sm:$0xff]
    %v263 = vld [vmem:[%s1 + $0x60c] sm:$0xff]
    %v264 = vld [vmem:[%s1 + $0x614] sm:$0xf]
    %v265 = vld [vmem:[%s1 + $0x618] sm:$0xff]
    %v266 = vld [vmem:[%s1 + $0x620] sm:$0xff]
    %v267 = vld [vmem:[%s1 + $0x628] sm:$0xf]
    %v268 = vld [vmem:[%s1 + $0x62c] sm:$0xff]
    %v269 = vld [vmem:[%s1 + $0x634] sm:$0xff]
    %v270 = vld [vmem:[%s1 + $0x63c] sm:$0xf]
    %v271 = vld [vmem:[%s1 + $0x640] sm:$0xff]
    %v272 = vld [vmem:[%s1 + $0x648] sm:$0xff]
    %v273 = vld [vmem:[%s1 + $0x650] sm:$0xf]
    %v274 = vld [vmem:[%s1 + $0x654] sm:$0xff]
    %v275 = vld [vmem:[%s1 + $0x65c] sm:$0xff]
    %v276 = vld [vmem:[%s1 + $0x664] sm:$0xf]
    %v277 = vld [vmem:[%s1 + $0x668] sm:$0xff]
    %v278 = vld [vmem:[%s1 + $0x670] sm:$0xff]
    %v279 = vld [vmem:[%s1 + $0x678] sm:$0xf]
    %v280 = vld [vmem:[%s1 + $0x67c] sm:$0xff]
    %v281 = vld [vmem:[%s1 + $0x684] sm:$0xff]
    %v282 = vld [vmem:[%s1 + $0x68c] sm:$0xf]
    %v283 = vld [vmem:[%s1 + $0x690] sm:$0xff]
    %v284 = vld [vmem:[%s1 + $0x698] sm:$0xff]
    %v285 = vld [vmem:[%s1 + $0x6a0] sm:$0xf]
    %v286 = vld [vmem:[%s1 + $0x6a4] sm:$0xff]
    %v287 = vld [vmem:[%s1 + $0x6ac] sm:$0xff]
    %v288 = vld [vmem:[%s1 + $0x6b4] sm:$0xf]
    %v289 = vld [vmem:[%s1 + $0x6b8] sm:$0xff]
    %v290 = vld [vmem:[%s1 + $0x6c0] sm:$0xff]
    %v291 = vld [vmem:[%s1 + $0x6c8] sm:$0xf]
    %v292 = vld [vmem:[%s1 + $0x6cc] sm:$0xff]
    %v293 = vld [vmem:[%s1 + $0x6d4] sm:$0xff]
    %v294 = vld [vmem:[%s1 + $0x6dc] sm:$0xf]
    %v295 = vld [vmem:[%s1 + $0x6e0] sm:$0xff]
    %v296 = vld [vmem:[%s1 + $0x6e8] sm:$0xff]
    %v297 = vld [vmem:[%s1 + $0x6f0] sm:$0xf]
    %v298 = vld [vmem:[%s1 + $0x6f4] sm:$0xff]
    %v299 = vld [vmem:[%s1 + $0x6fc] sm:$0xff]
    %v300 = vld [vmem:[%s1 + $0x704] sm:$0xf]
    %v301 = vld [vmem:[%s1 + $0x708] sm:$0xff]
    %v302 = vld [vmem:[%s1 + $0x710] sm:$0xff]
    %v303 = vld [vmem:[%s1 + $0x718] sm:$0xf]
    %v304 = vld [vmem:[%s1 + $0x71c] sm:$0xff]
    %v305 = vld [vmem:[%s1 + $0x724] sm:$0xff]
    %v306 = vld [vmem:[%s1 + $0x72c] sm:$0xf]
    %v307 = vld [vmem:[%s1 + $0x730] sm:$0xff]
    %v308 = vld [vmem:[%s1 + $0x738] sm:$0xff]
    %v309 = vld [vmem:[%s1 + $0x740] sm:$0xf]
    %v310 = vld [vmem:[%s1 + $0x744] sm:$0xff]
    %v311 = vld [vmem:[%s1 + $0x74c] sm:$0xff]
    %v312 = vld [vmem:[%s1 + $0x754] sm:$0xf]
    %v313 = vld [vmem:[%s1 + $0x758] sm:$0xff]
    %v314 = vld [vmem:[%s1 + $0x760] sm:$0xff]
    %v315 = vld [vmem:[%s1 + $0x768] sm:$0xf]
    %v316 = vld [vmem:[%s1 + $0x76c] sm:$0xff]
    %v317 = vld [vmem:[%s1 + $0x774] sm:$0xff]
    %v318 = vld [vmem:[%s1 + $0x77c] sm:$0xf]
    %v319 = vld [vmem:[%s1 + $0x780] sm:$0xff]
    %v320 = vld [vmem:[%s1 + $0x788] sm:$0xff]
    %v321 = vld [vmem:[%s1 + $0x790] sm:$0xf]
    %v322 = vld [vmem:[%s1 + $0x794] sm:$0xff]
    %v323 = vld [vmem:[%s1 + $0x79c] sm:$0xff]
    %v324 = vld [vmem:[%s1 + $0x7a4] sm:$0xf]
    %v325 = vld [vmem:[%s1 + $0x7a8] sm:$0xff]
    %v326 = vld [vmem:[%s1 + $0x7b0] sm:$0xff]
    %v327 = vld [vmem:[%s1 + $0x7b8] sm:$0xf]
    %v328 = vld [vmem:[%s1 + $0x7bc] sm:$0xff]
    %v329 = vld [vmem:[%s1 + $0x7c4] sm:$0xff]
    %v330 = vld [vmem:[%s1 + $0x7cc] sm:$0xf]
    %v331 = vld [vmem:[%s1 + $0x7d0] sm:$0xff]
    %v332 = vld [vmem:[%s1 + $0x7d8] sm:$0xff]
    %v333 = vld [vmem:[%s1 + $0x7e0] sm:$0xf]
    %v334 = vld [vmem:[%s1 + $0x7e4] sm:$0xff]
    %v335 = vld [vmem:[%s1 + $0x7ec] sm:$0xff]
    %v336 = vld [vmem:[%s1 + $0x7f4] sm:$0xf]
    %v337 = vld [vmem:[%s1 + $0x7f8] sm:$0xff]
    %v338 = vld [vmem:[%s1 + $0x800] sm:$0xff]
    %v339 = vld [vmem:[%s1 + $0x808] sm:$0xf]
    %v340 = vld [vmem:[%s1 + $0x80c] sm:$0xff]
    %v341 = vld [vmem:[%s1 + $0x814] sm:$0xff]
    %v342 = vld [vmem:[%s1 + $0x81c] sm:$0xf]
    %v343 = vld [vmem:[%s1 + $0x820] sm:$0xff]
    %v344 = vld [vmem:[%s1 + $0x828] sm:$0xff]
    %v345 = vld [vmem:[%s1 + $0x830] sm:$0xf]
    %v346 = vld [vmem:[%s1 + $0x834] sm:$0xff]
    %v347 = vld [vmem:[%s1 + $0x83c] sm:$0xff]
    %v348 = vld [vmem:[%s1 + $0x844] sm:$0xf]
    %v349 = vld [vmem:[%s1 + $0x848] sm:$0xff]
    %v350 = vld [vmem:[%s1 + $0x850] sm:$0xff]
    %v351 = vld [vmem:[%s1 + $0x858] sm:$0xf]
    %v352 = vld [vmem:[%s1 + $0x85c] sm:$0xff]
    %v353 = vld [vmem:[%s1 + $0x864] sm:$0xff]
    %v354 = vld [vmem:[%s1 + $0x86c] sm:$0xf]
    %v355 = vld [vmem:[%s1 + $0x870] sm:$0xff]
    %v356 = vld [vmem:[%s1 + $0x878] sm:$0xff]
    %v357 = vld [vmem:[%s1 + $0x880] sm:$0xf]
    %v358 = vld [vmem:[%s1 + $0x884] sm:$0xff]
    %v359 = vld [vmem:[%s1 + $0x88c] sm:$0xff]
    %v360 = vld [vmem:[%s1 + $0x894] sm:$0xf]
    %v361 = vld [vmem:[%s1 + $0x898] sm:$0xff]
    %v362 = vld [vmem:[%s1 + $0x8a0] sm:$0xff]
    %v363 = vld [vmem:[%s1 + $0x8a8] sm:$0xf]
    %v364 = vld [vmem:[%s1 + $0x8ac] sm:$0xff]
    %v365 = vld [vmem:[%s1 + $0x8b4] sm:$0xff]
    %v366 = vld [vmem:[%s1 + $0x8bc] sm:$0xf]
    %v367 = vld [vmem:[%s1 + $0x8c0] sm:$0xff]
    %v368 = vld [vmem:[%s1 + $0x8c8] sm:$0xff]
    %v369 = vld [vmem:[%s1 + $0x8d0] sm:$0xf]
    %v370 = vld [vmem:[%s1 + $0x8d4] sm:$0xff]
    %v371 = vld [vmem:[%s1 + $0x8dc] sm:$0xff]
    %v372 = vld [vmem:[%s1 + $0x8e4] sm:$0xf]
    %v373 = vld [vmem:[%s1 + $0x8e8] sm:$0xff]
    %v374 = vld [vmem:[%s1 + $0x8f0] sm:$0xff]
    %v375 = vld [vmem:[%s1 + $0x8f8] sm:$0xf]
    %v376 = vld [vmem:[%s1 + $0x8fc] sm:$0xff]
    %v377 = vld [vmem:[%s1 + $0x904] sm:$0xff]
    %v378 = vld [vmem:[%s1 + $0x90c] sm:$0xf]
    %v379 = vld [vmem:[%s1 + $0x910] sm:$0xff]
    %v380 = vld [vmem:[%s1 + $0x918] sm:$0xff]
    %v381 = vld [vmem:[%s1 + $0x920] sm:$0xf]
    %v382 = vld [vmem:[%s1 + $0x924] sm:$0xff]
    %v383 = vld [vmem:[%s1 + $0x92c] sm:$0xff]
    %v384 = vld [vmem:[%s1 + $0x934] sm:$0xf]
    %v385 = vld [vmem:[%s1 + $0x938] sm:$0xff]
    %v386 = vld [vmem:[%s1 + $0x940] sm:$0xff]
    %v387 = vld [vmem:[%s1 + $0x948] sm:$0xf]
    %v388 = vld [vmem:[%s1 + $0x94c] sm:$0xff]
    %v389 = vld [vmem:[%s1 + $0x954] sm:$0xff]
    %v390 = vld [vmem:[%s1 + $0x95c] sm:$0xf]
    %v391 = vld [vmem:[%s1 + $0x960] sm:$0xff]
    %v392 = vld [vmem:[%s1 + $0x968] sm:$0xff]
    %v393 = vld [vmem:[%s1 + $0x970] sm:$0xf]
    %v394 = vld [vmem:[%s1 + $0x974] sm:$0xff]
    %v395 = vld [vmem:[%s1 + $0x97c] sm:$0xff]
    %v396 = vld [vmem:[%s1 + $0x984] sm:$0xf]
    %v397 = vld [vmem:[%s1 + $0x988] sm:$0xff]
    %v398 = vld [vmem:[%s1 + $0x990] sm:$0xff]
    %v399 = vld [vmem:[%s1 + $0x998] sm:$0xf]
    %v400 = vld [vmem:[%s1 + $0x99c] sm:$0xff]
    %v401 = vld [vmem:[%s1 + $0x9a4] sm:$0xff]
    %v402 = vld [vmem:[%s1 + $0x9ac] sm:$0xf]
    %v403 = vld [vmem:[%s1 + $0x9b0] sm:$0xff]
    %v404 = vld [vmem:[%s1 + $0x9b8] sm:$0xff]
    %v405 = vld [vmem:[%s1 + $0x9c0] sm:$0xf]
    %v406 = vld [vmem:[%s1 + $0x9c4] sm:$0xff]
    %v407 = vld [vmem:[%s1 + $0x9cc] sm:$0xff]
    %v408 = vld [vmem:[%s1 + $0x9d4] sm:$0xf]
    %v409 = vld [vmem:[%s1 + $0x9d8] sm:$0xff]
    %v410 = vld [vmem:[%s1 + $0x9e0] sm:$0xff]
    %v411 = vld [vmem:[%s1 + $0x9e8] sm:$0xf]
    %v412 = vld [vmem:[%s1 + $0x9ec] sm:$0xff]
    %v413 = vld [vmem:[%s1 + $0x9f4] sm:$0xff]
    %v414 = vld [vmem:[%s1 + $0x9fc] sm:$0xf]
    %v415 = vld [vmem:[%s1 + $0xa00] sm:$0xff]
    %v416 = vld [vmem:[%s1 + $0xa08] sm:$0xff]
    %v417 = vld [vmem:[%s1 + $0xa10] sm:$0xf]
    %v418 = vld [vmem:[%s1 + $0xa14] sm:$0xff]
    %v419 = vld [vmem:[%s1 + $0xa1c] sm:$0xff]
    %v420 = vld [vmem:[%s1 + $0xa24] sm:$0xf]
    %v421 = vld [vmem:[%s1 + $0xa28] sm:$0xff]
    %v422 = vld [vmem:[%s1 + $0xa30] sm:$0xff]
    %v423 = vld [vmem:[%s1 + $0xa38] sm:$0xf]
    %v424 = vld [vmem:[%s1 + $0xa3c] sm:$0xff]
    %v425 = vld [vmem:[%s1 + $0xa44] sm:$0xff]
    %v426 = vld [vmem:[%s1 + $0xa4c] sm:$0xf]
    %v427 = vld [vmem:[%s1 + $0xa50] sm:$0xff]
    %v428 = vld [vmem:[%s1 + $0xa58] sm:$0xff]
    %v429 = vld [vmem:[%s1 + $0xa60] sm:$0xf]
    %v430 = vld [vmem:[%s1 + $0xa64] sm:$0xff]
    %v431 = vld [vmem:[%s1 + $0xa6c] sm:$0xff]
    %v432 = vld [vmem:[%s1 + $0xa74] sm:$0xf]
    %v433 = vld [vmem:[%s1 + $0xa78] sm:$0xff]
    %v434 = vld [vmem:[%s1 + $0xa80] sm:$0xff]
    %v435 = vld [vmem:[%s1 + $0xa88] sm:$0xf]
    %v436 = vld [vmem:[%s1 + $0xa8c] sm:$0xff]
    %v437 = vld [vmem:[%s1 + $0xa94] sm:$0xff]
    %v438 = vld [vmem:[%s1 + $0xa9c] sm:$0xf]
    %v439 = vld [vmem:[%s1 + $0xaa0] sm:$0xff]
    %v440 = vld [vmem:[%s1 + $0xaa8] sm:$0xff]
    %v441 = vld [vmem:[%s1 + $0xab0] sm:$0xf]
    %v442 = vld [vmem:[%s1 + $0xab4] sm:$0xff]
    %v443 = vld [vmem:[%s1 + $0xabc] sm:$0xff]
    %v444 = vld [vmem:[%s1 + $0xac4] sm:$0xf]
    %v445 = vld [vmem:[%s1 + $0xac8] sm:$0xff]
    %v446 = vld [vmem:[%s1 + $0xad0] sm:$0xff]
    %v447 = vld [vmem:[%s1 + $0xad8] sm:$0xf]
    %v448 = vld [vmem:[%s1 + $0xadc] sm:$0xff]
    %v449 = vld [vmem:[%s1 + $0xae4] sm:$0xff]
    %v450 = vld [vmem:[%s1 + $0xaec] sm:$0xf]
    %v451 = vld [vmem:[%s1 + $0xaf0] sm:$0xff]
    %v452 = vld [vmem:[%s1 + $0xaf8] sm:$0xff]
    %v453 = vld [vmem:[%s1 + $0xb00] sm:$0xf]
    %v454 = vld [vmem:[%s1 + $0xb04] sm:$0xff]
    %v455 = vld [vmem:[%s1 + $0xb0c] sm:$0xff]
    %v456 = vld [vmem:[%s1 + $0xb14] sm:$0xf]
    %v457 = vld [vmem:[%s1 + $0xb18] sm:$0xff]
    %v458 = vld [vmem:[%s1 + $0xb20] sm:$0xff]
    %v459 = vld [vmem:[%s1 + $0xb28] sm:$0xf]
    %v460 = vld [vmem:[%s1 + $0xb2c] sm:$0xff]
    %v461 = vld [vmem:[%s1 + $0xb34] sm:$0xff]
    %v462 = vld [vmem:[%s1 + $0xb3c] sm:$0xf]
    %v463 = vld [vmem:[%s1 + $0xb40] sm:$0xff]
    %v464 = vld [vmem:[%s1 + $0xb48] sm:$0xff]
    %v465 = vld [vmem:[%s1 + $0xb50] sm:$0xf]
    %v466 = vld [vmem:[%s1 + $0xb54] sm:$0xff]
    %v467 = vld [vmem:[%s1 + $0xb5c] sm:$0xff]
    %v468 = vld [vmem:[%s1 + $0xb64] sm:$0xf]
    %v469 = vld [vmem:[%s1 + $0xb68] sm:$0xff]
    %v470 = vld [vmem:[%s1 + $0xb70] sm:$0xff]
    %v471 = vld [vmem:[%s1 + $0xb78] sm:$0xf]
    %v472 = vld [vmem:[%s1 + $0xb7c] sm:$0xff]
    %v473 = vld [vmem:[%s1 + $0xb84] sm:$0xff]
    %v474 = vld [vmem:[%s1 + $0xb8c] sm:$0xf]
    %v475 = vld [vmem:[%s1 + $0xb90] sm:$0xff]
    %v476 = vld [vmem:[%s1 + $0xb98] sm:$0xff]
    %v477 = vld [vmem:[%s1 + $0xba0] sm:$0xf]
    %v478 = vld [vmem:[%s1 + $0xba4] sm:$0xff]
    %v479 = vld [vmem:[%s1 + $0xbac] sm:$0xff]
    %v480 = vld [vmem:[%s1 + $0xbb4] sm:$0xf]
    %v481 = vld [vmem:[%s1 + $0xbb8] sm:$0xff]
    %v482 = vld [vmem:[%s1 + $0xbc0] sm:$0xff]
    %v483 = vld [vmem:[%s1 + $0xbc8] sm:$0xf]
    %v484 = vld [vmem:[%s1 + $0xbcc] sm:$0xff]
    %v485 = vld [vmem:[%s1 + $0xbd4] sm:$0xff]
    %v486 = vld [vmem:[%s1 + $0xbdc] sm:$0xf]
    %v487 = vld [vmem:[%s1 + $0xbe0] sm:$0xff]
    %v488 = vld [vmem:[%s1 + $0xbe8] sm:$0xff]
    %v489 = vld [vmem:[%s1 + $0xbf0] sm:$0xf]
    %v490 = vld [vmem:[%s1 + $0xbf4] sm:$0xff]
    %v491 = vld [vmem:[%s1 + $0xbfc] sm:$0xff]
    %v492 = vld [vmem:[%s1 + $0xc04] sm:$0xf]
    %v493 = vld [vmem:[%s1 + $0xc08] sm:$0xff]
    %v494 = vld [vmem:[%s1 + $0xc10] sm:$0xff]
    %v495 = vld [vmem:[%s1 + $0xc18] sm:$0xf]
    %v496 = vld [vmem:[%s1 + $0xc1c] sm:$0xff]
    %v497 = vld [vmem:[%s1 + $0xc24] sm:$0xff]
    %v498 = vld [vmem:[%s1 + $0xc2c] sm:$0xf]
    %v499 = vld [vmem:[%s1 + $0xc30] sm:$0xff]
    %v500 = vld [vmem:[%s1 + $0xc38] sm:$0xff]
    %v501 = vld [vmem:[%s1 + $0xc40] sm:$0xf]
    %v502 = vld [vmem:[%s1 + $0xc44] sm:$0xff]
    %v503 = vld [vmem:[%s1 + $0xc4c] sm:$0xff]
    %v504 = vld [vmem:[%s1 + $0xc54] sm:$0xf]
    %v505 = vld [vmem:[%s1 + $0xc58] sm:$0xff]
    %v506 = vld [vmem:[%s1 + $0xc60] sm:$0xff]
    %v507 = vld [vmem:[%s1 + $0xc68] sm:$0xf]
    %v508 = vld [vmem:[%s1 + $0xc6c] sm:$0xff]
    %v509 = vld [vmem:[%s1 + $0xc74] sm:$0xff]
    %v510 = vld [vmem:[%s1 + $0xc7c] sm:$0xf]
    %v511 = vld [vmem:[%s1 + $0xc80] sm:$0xff]
    %v512 = vld [vmem:[%s1 + $0xc88] sm:$0xff]
    %v513 = vld [vmem:[%s1 + $0xc90] sm:$0xf]
    %v514 = vld [vmem:[%s1 + $0xc94] sm:$0xff]
    %v515 = vld [vmem:[%s1 + $0xc9c] sm:$0xff]
    %v516 = vld [vmem:[%s1 + $0xca4] sm:$0xf]
    %v517 = vld [vmem:[%s1 + $0xca8] sm:$0xff]
    %v518 = vld [vmem:[%s1 + $0xcb0] sm:$0xff]
    %v519 = vld [vmem:[%s1 + $0xcb8] sm:$0xf]
    %v520 = vld [vmem:[%s1 + $0xcbc] sm:$0xff]
    %v521 = vld [vmem:[%s1 + $0xcc4] sm:$0xff]
    %v522 = vld [vmem:[%s1 + $0xccc] sm:$0xf]
    %v523 = vld [vmem:[%s1 + $0xcd0] sm:$0xff]
    %v524 = vld [vmem:[%s1 + $0xcd8] sm:$0xff]
    %v525 = vld [vmem:[%s1 + $0xce0] sm:$0xf]
    %v526 = vld [vmem:[%s1 + $0xce4] sm:$0xff]
    %v527 = vld [vmem:[%s1 + $0xcec] sm:$0xff]
    %v528 = vld [vmem:[%s1 + $0xcf4] sm:$0xf]
    %v529 = vld [vmem:[%s1 + $0xcf8] sm:$0xff]
    %v530 = vld [vmem:[%s1 + $0xd00] sm:$0xff]
    %v531 = vld [vmem:[%s1 + $0xd08] sm:$0xf]
    %v532 = vld [vmem:[%s1 + $0xd0c] sm:$0xff]
    %v533 = vld [vmem:[%s1 + $0xd14] sm:$0xff]
    %v534 = vld [vmem:[%s1 + $0xd1c] sm:$0xf]
    %v535 = vld [vmem:[%s1 + $0xd20] sm:$0xff]
    %v536 = vld [vmem:[%s1 + $0xd28] sm:$0xff]
    %v537 = vld [vmem:[%s1 + $0xd30] sm:$0xf]
    %v538 = vld [vmem:[%s1 + $0xd34] sm:$0xff]
    %v539 = vld [vmem:[%s1 + $0xd3c] sm:$0xff]
    %v540 = vld [vmem:[%s1 + $0xd44] sm:$0xf]
    %v541 = vld [vmem:[%s1 + $0xd48] sm:$0xff]
    %v542 = vld [vmem:[%s1 + $0xd50] sm:$0xff]
    %v543 = vld [vmem:[%s1 + $0xd58] sm:$0xf]
    %v544 = vld [vmem:[%s1 + $0xd5c] sm:$0xff]
    %v545 = vld [vmem:[%s1 + $0xd64] sm:$0xff]
    %v546 = vld [vmem:[%s1 + $0xd6c] sm:$0xf]
    %v547 = vld [vmem:[%s1 + $0xd70] sm:$0xff]
    %v548 = vld [vmem:[%s1 + $0xd78] sm:$0xff]
    %v549 = vld [vmem:[%s1 + $0xd80] sm:$0xf]
    %v550 = vld [vmem:[%s1 + $0xd84] sm:$0xff]
    %v551 = vld [vmem:[%s1 + $0xd8c] sm:$0xff]
    %v552 = vld [vmem:[%s1 + $0xd94] sm:$0xf]
    %v553 = vld [vmem:[%s1 + $0xd98] sm:$0xff]
    %v554 = vld [vmem:[%s1 + $0xda0] sm:$0xff]
    %v555 = vld [vmem:[%s1 + $0xda8] sm:$0xf]
    %v556 = vld [vmem:[%s1 + $0xdac] sm:$0xff]
    %v557 = vld [vmem:[%s1 + $0xdb4] sm:$0xff]
    %v558 = vld [vmem:[%s1 + $0xdbc] sm:$0xf]
    %v559 = vld [vmem:[%s1 + $0xdc0] sm:$0xff]
    %v560 = vld [vmem:[%s1 + $0xdc8] sm:$0xff]
    %v561 = vld [vmem:[%s1 + $0xdd0] sm:$0xf]
    %v562 = vld [vmem:[%s1 + $0xdd4] sm:$0xff]
    %v563 = vld [vmem:[%s1 + $0xddc] sm:$0xff]
    %v564 = vld [vmem:[%s1 + $0xde4] sm:$0xf]
    %v565 = vld [vmem:[%s1 + $0xde8] sm:$0xff]
    %v566 = vld [vmem:[%s1 + $0xdf0] sm:$0xff]
    %v567 = vld [vmem:[%s1 + $0xdf8] sm:$0xf]
    %v568 = vld [vmem:[%s1 + $0xdfc] sm:$0xff]
    %v569 = vld [vmem:[%s1 + $0xe04] sm:$0xff]
    %v570 = vld [vmem:[%s1 + $0xe0c] sm:$0xf]
    %v571 = vld [vmem:[%s1 + $0xe10] sm:$0xff]
    %v572 = vld [vmem:[%s1 + $0xe18] sm:$0xff]
    %v573 = vld [vmem:[%s1 + $0xe20] sm:$0xf]
    %v574 = vld [vmem:[%s1 + $0xe24] sm:$0xff]
    %v575 = vld [vmem:[%s1 + $0xe2c] sm:$0xff]
    %v576 = vld [vmem:[%s1 + $0xe34] sm:$0xf]
    %v577 = vld [vmem:[%s1 + $0xe38] sm:$0xff]
    %v578 = vld [vmem:[%s1 + $0xe40] sm:$0xff]
    %v579 = vld [vmem:[%s1 + $0xe48] sm:$0xf]
    %v580 = vld [vmem:[%s1 + $0xe4c] sm:$0xff]
    %v581 = vld [vmem:[%s1 + $0xe54] sm:$0xff]
    %v582 = vld [vmem:[%s1 + $0xe5c] sm:$0xf]
    %v583 = vld [vmem:[%s1 + $0xe60] sm:$0xff]
    %v584 = vld [vmem:[%s1 + $0xe68] sm:$0xff]
    %v585 = vld [vmem:[%s1 + $0xe70] sm:$0xf]
    %v586 = vld [vmem:[%s1 + $0xe74] sm:$0xff]
    %v587 = vld [vmem:[%s1 + $0xe7c] sm:$0xff]
    %v588 = vld [vmem:[%s1 + $0xe84] sm:$0xf]
    %v589 = vld [vmem:[%s1 + $0xe88] sm:$0xff]
    %v590 = vld [vmem:[%s1 + $0xe90] sm:$0xff]
    %v591 = vld [vmem:[%s1 + $0xe98] sm:$0xf]
    %v592 = vld [vmem:[%s1 + $0xe9c] sm:$0xff]
    %v593 = vld [vmem:[%s1 + $0xea4] sm:$0xff]
    %v594 = vld [vmem:[%s1 + $0xeac] sm:$0xf]
    %v595 = vld [vmem:[%s1 + $0xeb0] sm:$0xff]
    %v596 = vld [vmem:[%s1 + $0xeb8] sm:$0xff]
    %v597 = vld [vmem:[%s1 + $0xec0] sm:$0xf]
    %v598 = vld [vmem:[%s1 + $0xec4] sm:$0xff]
    %v599 = vld [vmem:[%s1 + $0xecc] sm:$0xff]
    %v600 = vld [vmem:[%s1 + $0xed4] sm:$0xf]
    %v601 = vld [vmem:[%s1 + $0xed8] sm:$0xff]
    %v602 = vld [vmem:[%s1 + $0xee0] sm:$0xff]
    %v603 = vld [vmem:[%s1 + $0xee8] sm:$0xf]
    %v604 = vld [vmem:[%s1 + $0xeec] sm:$0xff]
    %v605 = vld [vmem:[%s1 + $0xef4] sm:$0xff]
    %v606 = vld [vmem:[%s1 + $0xefc] sm:$0xf]
    %v607 = vld [vmem:[%s1 + $0xf00] sm:$0xff]
    %v608 = vld [vmem:[%s1 + $0xf08] sm:$0xff]
    %v609 = vld [vmem:[%s1 + $0xf10] sm:$0xf]
    %v610 = vld [vmem:[%s1 + $0xf14] sm:$0xff]
    %v611 = vld [vmem:[%s1 + $0xf1c] sm:$0xff]
    %v612 = vld [vmem:[%s1 + $0xf24] sm:$0xf]
    %v613 = vld [vmem:[%s1 + $0xf28] sm:$0xff]
    %v614 = vld [vmem:[%s1 + $0xf30] sm:$0xff]
    %v615 = vld [vmem:[%s1 + $0xf38] sm:$0xf]
    %v616 = vld [vmem:[%s1 + $0xf3c] sm:$0xff]
    %v617 = vld [vmem:[%s1 + $0xf44] sm:$0xff]
    %v618 = vld [vmem:[%s1 + $0xf4c] sm:$0xf]
    %v619 = vld [vmem:[%s1 + $0xf50] sm:$0xff]
    %v620 = vld [vmem:[%s1 + $0xf58] sm:$0xff]
    %v621 = vld [vmem:[%s1 + $0xf60] sm:$0xf]
    %v622 = vld [vmem:[%s1 + $0xf64] sm:$0xff]
    %v623 = vld [vmem:[%s1 + $0xf6c] sm:$0xff]
    %v624 = vld [vmem:[%s1 + $0xf74] sm:$0xf]
    %v625 = vld [vmem:[%s1 + $0xf78] sm:$0xff]
    %v626 = vld [vmem:[%s1 + $0xf80] sm:$0xff]
    %v627 = vld [vmem:[%s1 + $0xf88] sm:$0xf]
    %v628 = vld [vmem:[%s1 + $0xf8c] sm:$0xff]
    %v629 = vld [vmem:[%s1 + $0xf94] sm:$0xff]
    %v630 = vld [vmem:[%s1 + $0xf9c] sm:$0xf]
    %v631 = vld [vmem:[%s1 + $0xfa0] sm:$0xff]
    %v632 = vld [vmem:[%s1 + $0xfa8] sm:$0xff]
    %v633 = vld [vmem:[%s1 + $0xfb0] sm:$0xf]
    %v634 = vld [vmem:[%s1 + $0xfb4] sm:$0xff]
    %v635 = vld [vmem:[%s1 + $0xfbc] sm:$0xff]
    %v636 = vld [vmem:[%s1 + $0xfc4] sm:$0xf]
    %v637 = vld [vmem:[%s1 + $0xfc8] sm:$0xff]
    %v638 = vld [vmem:[%s1 + $0xfd0] sm:$0xff]
    %v639 = vld [vmem:[%s1 + $0xfd8] sm:$0xf]
    %v640 = vld [vmem:[%s1 + $0xfdc] sm:$0xff]
    %v641 = vld [vmem:[%s1 + $0xfe4] sm:$0xff]
    %v642 = vld [vmem:[%s1 + $0xfec] sm:$0xf]
    %v643 = vld [vmem:[%s1 + $0xff0] sm:$0xff]
    %v644 = vld [vmem:[%s1 + $0xff8] sm:$0xff]
    %v645 = vld [vmem:[%s1 + $0x1000] sm:$0xf]
    %v646 = vld [vmem:[%s1 + $0x1004] sm:$0xff]
    %v647 = vld [vmem:[%s1 + $0x100c] sm:$0xff]
    %v648 = vld [vmem:[%s1 + $0x1014] sm:$0xf]
    %v649 = vld [vmem:[%s1 + $0x1018] sm:$0xff]
    %v650 = vld [vmem:[%s1 + $0x1020] sm:$0xff]
    %v651 = vld [vmem:[%s1 + $0x1028] sm:$0xf]
    %v652 = vld [vmem:[%s1 + $0x102c] sm:$0xff]
    %v653 = vld [vmem:[%s1 + $0x1034] sm:$0xff]
    %v654 = vld [vmem:[%s1 + $0x103c] sm:$0xf]
    %v655 = vld [vmem:[%s1 + $0x1040] sm:$0xff]
    %v656 = vld [vmem:[%s1 + $0x1048] sm:$0xff]
    %v657 = vld [vmem:[%s1 + $0x1050] sm:$0xf]
    %v658 = vld [vmem:[%s1 + $0x1054] sm:$0xff]
    %v659 = vld [vmem:[%s1 + $0x105c] sm:$0xff]
    %v660 = vld [vmem:[%s1 + $0x1064] sm:$0xf]
    %v661 = vld [vmem:[%s1 + $0x1068] sm:$0xff]
    %v662 = vld [vmem:[%s1 + $0x1070] sm:$0xff]
    %v663 = vld [vmem:[%s1 + $0x1078] sm:$0xf]
    %v664 = vld [vmem:[%s1 + $0x107c] sm:$0xff]
    %v665 = vld [vmem:[%s1 + $0x1084] sm:$0xff]
    %v666 = vld [vmem:[%s1 + $0x108c] sm:$0xf]
    %v667 = vld [vmem:[%s1 + $0x1090] sm:$0xff]
    %v668 = vld [vmem:[%s1 + $0x1098] sm:$0xff]
    %v669 = vld [vmem:[%s1 + $0x10a0] sm:$0xf]
    %v670 = vld [vmem:[%s1 + $0x10a4] sm:$0xff]
    %v671 = vld [vmem:[%s1 + $0x10ac] sm:$0xff]
    %v672 = vld [vmem:[%s1 + $0x10b4] sm:$0xf]
    %v673 = vld [vmem:[%s1 + $0x10b8] sm:$0xff]
    %v674 = vld [vmem:[%s1 + $0x10c0] sm:$0xff]
    %v675 = vld [vmem:[%s1 + $0x10c8] sm:$0xf]
    %v676 = vld [vmem:[%s1 + $0x10cc] sm:$0xff]
    %v677 = vld [vmem:[%s1 + $0x10d4] sm:$0xff]
    %v678 = vld [vmem:[%s1 + $0x10dc] sm:$0xf]
    %v679 = vld [vmem:[%s1 + $0x10e0] sm:$0xff]
    %v680 = vld [vmem:[%s1 + $0x10e8] sm:$0xff]
    %v681 = vld [vmem:[%s1 + $0x10f0] sm:$0xf]
    %v682 = vld [vmem:[%s1 + $0x10f4] sm:$0xff]
    %v683 = vld [vmem:[%s1 + $0x10fc] sm:$0xff]
    %v684 = vld [vmem:[%s1 + $0x1104] sm:$0xf]
    %v685 = vld [vmem:[%s1 + $0x1108] sm:$0xff]
    %v686 = vld [vmem:[%s1 + $0x1110] sm:$0xff]
    %v687 = vld [vmem:[%s1 + $0x1118] sm:$0xf]
    %v688 = vld [vmem:[%s1 + $0x111c] sm:$0xff]
    %v689 = vld [vmem:[%s1 + $0x1124] sm:$0xff]
    %v690 = vld [vmem:[%s1 + $0x112c] sm:$0xf]
    %v691 = vld [vmem:[%s1 + $0x1130] sm:$0xff]
    %v692 = vld [vmem:[%s1 + $0x1138] sm:$0xff]
    %v693 = vld [vmem:[%s1 + $0x1140] sm:$0xf]
    %v694 = vld [vmem:[%s1 + $0x1144] sm:$0xff]
    %v695 = vld [vmem:[%s1 + $0x114c] sm:$0xff]
    %v696 = vld [vmem:[%s1 + $0x1154] sm:$0xf]
    %v697 = vld [vmem:[%s1 + $0x1158] sm:$0xff]
    %v698 = vld [vmem:[%s1 + $0x1160] sm:$0xff]
    %v699 = vld [vmem:[%s1 + $0x1168] sm:$0xf]
    %v700 = vld [vmem:[%s1 + $0x116c] sm:$0xff]
    %v701 = vld [vmem:[%s1 + $0x1174] sm:$0xff]
    %v702 = vld [vmem:[%s1 + $0x117c] sm:$0xf]
    %v703 = vld [vmem:[%s1 + $0x1180] sm:$0xff]
    %v704 = vld [vmem:[%s1 + $0x1188] sm:$0xff]
    %v705 = vld [vmem:[%s1 + $0x1190] sm:$0xf]
    %v706 = vld [vmem:[%s1 + $0x1194] sm:$0xff]
    %v707 = vld [vmem:[%s1 + $0x119c] sm:$0xff]
    %v708 = vld [vmem:[%s1 + $0x11a4] sm:$0xf]
    %v709 = vld [vmem:[%s1 + $0x11a8] sm:$0xff]
    %v710 = vld [vmem:[%s1 + $0x11b0] sm:$0xff]
    %v711 = vld [vmem:[%s1 + $0x11b8] sm:$0xf]
    %v712 = vld [vmem:[%s1 + $0x11bc] sm:$0xff]
    %v713 = vld [vmem:[%s1 + $0x11c4] sm:$0xff]
    %v714 = vld [vmem:[%s1 + $0x11cc] sm:$0xf]
    %v715 = vld [vmem:[%s1 + $0x11d0] sm:$0xff]
    %v716 = vld [vmem:[%s1 + $0x11d8] sm:$0xff]
    %v717 = vld [vmem:[%s1 + $0x11e0] sm:$0xf]
    %v718 = vld [vmem:[%s1 + $0x11e4] sm:$0xff]
    %v719 = vld [vmem:[%s1 + $0x11ec] sm:$0xff]
    %v720 = vld [vmem:[%s1 + $0x11f4] sm:$0xf]
    %v721 = vld [vmem:[%s1 + $0x11f8] sm:$0xff]
    %v722 = vld [vmem:[%s1 + $0x1200] sm:$0xff]
    %v723 = vld [vmem:[%s1 + $0x1208] sm:$0xf]
    %v724 = vld [vmem:[%s1 + $0x120c] sm:$0xff]
    %v725 = vld [vmem:[%s1 + $0x1214] sm:$0xff]
    %v726 = vld [vmem:[%s1 + $0x121c] sm:$0xf]
    %v727 = vld [vmem:[%s1 + $0x1220] sm:$0xff]
    %v728 = vld [vmem:[%s1 + $0x1228] sm:$0xff]
    %v729 = vld [vmem:[%s1 + $0x1230] sm:$0xf]
    %v730 = vld [vmem:[%s1 + $0x1234] sm:$0xff]
    %v731 = vld [vmem:[%s1 + $0x123c] sm:$0xff]
    %v732 = vld [vmem:[%s1 + $0x1244] sm:$0xf]
    %v733 = vld [vmem:[%s1 + $0x1248] sm:$0xff]
    %v734 = vld [vmem:[%s1 + $0x1250] sm:$0xff]
    %v735 = vld [vmem:[%s1 + $0x1258] sm:$0xf]
    %v736 = vld [vmem:[%s1 + $0x125c] sm:$0xff]
    %v737 = vld [vmem:[%s1 + $0x1264] sm:$0xff]
    %v738 = vld [vmem:[%s1 + $0x126c] sm:$0xf]
    %v739 = vld [vmem:[%s1 + $0x1270] sm:$0xff]
    %v740 = vld [vmem:[%s1 + $0x1278] sm:$0xff]
    %v741 = vld [vmem:[%s1 + $0x1280] sm:$0xf]
    %v742 = vld [vmem:[%s1 + $0x1284] sm:$0xff]
    %v743 = vld [vmem:[%s1 + $0x128c] sm:$0xff]
    %v744 = vld [vmem:[%s1 + $0x1294] sm:$0xf]
    %v745 = vld [vmem:[%s1 + $0x1298] sm:$0xff]
    %v746 = vld [vmem:[%s1 + $0x12a0] sm:$0xff]
    %v747 = vld [vmem:[%s1 + $0x12a8] sm:$0xf]
    %v748 = vld [vmem:[%s1 + $0x12ac] sm:$0xff]
    %v749 = vld [vmem:[%s1 + $0x12b4] sm:$0xff]
    %v750 = vld [vmem:[%s1 + $0x12bc] sm:$0xf]
    %v751 = vld [vmem:[%s1 + $0x12c0] sm:$0xff]
    %v752 = vld [vmem:[%s1 + $0x12c8] sm:$0xff]
    %v753 = vld [vmem:[%s1 + $0x12d0] sm:$0xf]
    %v754 = vld [vmem:[%s1 + $0x12d4] sm:$0xff]
    %v755 = vld [vmem:[%s1 + $0x12dc] sm:$0xff]
    %v756 = vld [vmem:[%s1 + $0x12e4] sm:$0xf]
    %v757 = vld [vmem:[%s1 + $0x12e8] sm:$0xff]
    %v758 = vld [vmem:[%s1 + $0x12f0] sm:$0xff]
    %v759 = vld [vmem:[%s1 + $0x12f8] sm:$0xf]
    %v760 = vld [vmem:[%s1 + $0x12fc] sm:$0xff]
    %v761 = vld [vmem:[%s1 + $0x1304] sm:$0xff]
    %v762 = vld [vmem:[%s1 + $0x130c] sm:$0xf]
    %v763 = vld [vmem:[%s1 + $0x1310] sm:$0xff]
    %v764 = vld [vmem:[%s1 + $0x1318] sm:$0xff]
    %v765 = vld [vmem:[%s1 + $0x1320] sm:$0xf]
    %v766 = vld [vmem:[%s1 + $0x1324] sm:$0xff]
    %v767 = vld [vmem:[%s1 + $0x132c] sm:$0xff]
    %v768 = vld [vmem:[%s1 + $0x1334] sm:$0xf]
    %v769 = vld [vmem:[%s1 + $0x1338] sm:$0xff]
    %v770 = vld [vmem:[%s1 + $0x1340] sm:$0xff]
    %v771 = vld [vmem:[%s1 + $0x1348] sm:$0xf]
    %v772 = vld [vmem:[%s1 + $0x134c] sm:$0xff]
    %v773 = vld [vmem:[%s1 + $0x1354] sm:$0xff]
    %v774 = vld [vmem:[%s1 + $0x135c] sm:$0xf]
    %v775 = vld [vmem:[%s1 + $0x1360] sm:$0xff]
    %v776 = vld [vmem:[%s1 + $0x1368] sm:$0xff]
    %v777 = vld [vmem:[%s1 + $0x1370] sm:$0xf]
    %v778 = vld [vmem:[%s1 + $0x1374] sm:$0xff]
    %v779 = vld [vmem:[%s1 + $0x137c] sm:$0xff]
    %v780 = vld [vmem:[%s1 + $0x1384] sm:$0xf]
    %v781 = vld [vmem:[%s1 + $0x1388] sm:$0xff]
    %v782 = vld [vmem:[%s1 + $0x1390] sm:$0xff]
    %v783 = vld [vmem:[%s1 + $0x1398] sm:$0xf]
    %v784 = vld [vmem:[%s1 + $0x139c] sm:$0xff]
    %v785 = vld [vmem:[%s1 + $0x13a4] sm:$0xff]
    %v786 = vld [vmem:[%s1 + $0x13ac] sm:$0xf]
    %v787 = vld [vmem:[%s1 + $0x13b0] sm:$0xff]
    %v788 = vld [vmem:[%s1 + $0x13b8] sm:$0xff]
    %v789 = vld [vmem:[%s1 + $0x13c0] sm:$0xf]
    %v790 = vld [vmem:[%s1 + $0x13c4] sm:$0xff]
    %v791 = vld [vmem:[%s1 + $0x13cc] sm:$0xff]
    %v792 = vld [vmem:[%s1 + $0x13d4] sm:$0xf]
    %v793 = vld [vmem:[%s1 + $0x13d8] sm:$0xff]
    %v794 = vld [vmem:[%s1 + $0x13e0] sm:$0xff]
    %v795 = vld [vmem:[%s1 + $0x13e8] sm:$0xf]
    %v796 = vld [vmem:[%s1 + $0x13ec] sm:$0xff]
    %v797 = vld [vmem:[%s1 + $0x13f4] sm:$0xff]
    %v798 = vld [vmem:[%s1 + $0x13fc] sm:$0xf]
    %v799 = vld [vmem:[%s1 + $0x1400] sm:$0xff]
    %v800 = vld [vmem:[%s1 + $0x1408] sm:$0xff]
    %v801 = vld [vmem:[%s1 + $0x1410] sm:$0xf]
    %v802 = vld [vmem:[%s1 + $0x1414] sm:$0xff]
    %v803 = vld [vmem:[%s1 + $0x141c] sm:$0xff]
    %v804 = vld [vmem:[%s1 + $0x1424] sm:$0xf]
    %v805 = vld [vmem:[%s1 + $0x1428] sm:$0xff]
    %v806 = vld [vmem:[%s1 + $0x1430] sm:$0xff]
    %v807 = vld [vmem:[%s1 + $0x1438] sm:$0xf]
    %v808 = vld [vmem:[%s1 + $0x143c] sm:$0xff]
    %v809 = vld [vmem:[%s1 + $0x1444] sm:$0xff]
    %v810 = vld [vmem:[%s1 + $0x144c] sm:$0xf]
    %v811 = vld [vmem:[%s1 + $0x1450] sm:$0xff]
    %v812 = vld [vmem:[%s1 + $0x1458] sm:$0xff]
    %v813 = vld [vmem:[%s1 + $0x1460] sm:$0xf]
    %v814 = vld [vmem:[%s1 + $0x1464] sm:$0xff]
    %v815 = vld [vmem:[%s1 + $0x146c] sm:$0xff]
    %v816 = vld [vmem:[%s1 + $0x1474] sm:$0xf]
    %v817 = vld [vmem:[%s1 + $0x1478] sm:$0xff]
    %v818 = vld [vmem:[%s1 + $0x1480] sm:$0xff]
    %v819 = vld [vmem:[%s1 + $0x1488] sm:$0xf]
    %v820 = vld [vmem:[%s1 + $0x148c] sm:$0xff]
    %v821 = vld [vmem:[%s1 + $0x1494] sm:$0xff]
    %v822 = vld [vmem:[%s1 + $0x149c] sm:$0xf]
    %v823 = vld [vmem:[%s1 + $0x14a0] sm:$0xff]
    %v824 = vld [vmem:[%s1 + $0x14a8] sm:$0xff]
    %v825 = vld [vmem:[%s1 + $0x14b0] sm:$0xf]
    %v826 = vld [vmem:[%s1 + $0x14b4] sm:$0xff]
    %v827 = vld [vmem:[%s1 + $0x14bc] sm:$0xff]
    %v828 = vld [vmem:[%s1 + $0x14c4] sm:$0xf]
    %v829 = vld [vmem:[%s1 + $0x14c8] sm:$0xff]
    %v830 = vld [vmem:[%s1 + $0x14d0] sm:$0xff]
    %v831 = vld [vmem:[%s1 + $0x14d8] sm:$0xf]
    %v832 = vld [vmem:[%s1 + $0x14dc] sm:$0xff]
    %v833 = vld [vmem:[%s1 + $0x14e4] sm:$0xff]
    %v834 = vld [vmem:[%s1 + $0x14ec] sm:$0xf]
    %v835 = vld [vmem:[%s1 + $0x14f0] sm:$0xff]
    %v836 = vld [vmem:[%s1 + $0x14f8] sm:$0xff]
    %v837 = vld [vmem:[%s1 + $0x1500] sm:$0xf]
    %v838 = vld [vmem:[%s1 + $0x1504] sm:$0xff]
    %v839 = vld [vmem:[%s1 + $0x150c] sm:$0xff]
    %v840 = vld [vmem:[%s1 + $0x1514] sm:$0xf]
    %v841 = vld [vmem:[%s1 + $0x1518] sm:$0xff]
    %v842 = vld [vmem:[%s1 + $0x1520] sm:$0xff]
    %v843 = vld [vmem:[%s1 + $0x1528] sm:$0xf]
    %v844 = vld [vmem:[%s1 + $0x152c] sm:$0xff]
    %v845 = vld [vmem:[%s1 + $0x1534] sm:$0xff]
    %v846 = vld [vmem:[%s1 + $0x153c] sm:$0xf]
    %v847 = vld [vmem:[%s1 + $0x1540] sm:$0xff]
    %v848 = vld [vmem:[%s1 + $0x1548] sm:$0xff]
    %v849 = vld [vmem:[%s1 + $0x1550] sm:$0xf]
    %v850 = vld [vmem:[%s1 + $0x1554] sm:$0xff]
    %v851 = vld [vmem:[%s1 + $0x155c] sm:$0xff]
    %v852 = vld [vmem:[%s1 + $0x1564] sm:$0xf]
    %v853 = vld [vmem:[%s1 + $0x1568] sm:$0xff]
    %v854 = vld [vmem:[%s1 + $0x1570] sm:$0xff]
    %v855 = vld [vmem:[%s1 + $0x1578] sm:$0xf]
    %v856 = vld [vmem:[%s1 + $0x157c] sm:$0xff]
    %v857 = vld [vmem:[%s1 + $0x1584] sm:$0xff]
    %v858 = vld [vmem:[%s1 + $0x158c] sm:$0xf]
    %v859 = vld [vmem:[%s1 + $0x1590] sm:$0xff]
    %v860 = vld [vmem:[%s1 + $0x1598] sm:$0xff]
    %v861 = vld [vmem:[%s1 + $0x15a0] sm:$0xf]
    %v862 = vld [vmem:[%s1 + $0x15a4] sm:$0xff]
    %v863 = vld [vmem:[%s1 + $0x15ac] sm:$0xff]
    %v864 = vld [vmem:[%s1 + $0x15b4] sm:$0xf]
    %v865 = vld [vmem:[%s1 + $0x15b8] sm:$0xff]
    %v866 = vld [vmem:[%s1 + $0x15c0] sm:$0xff]
    %v867 = vld [vmem:[%s1 + $0x15c8] sm:$0xf]
    %v868 = vld [vmem:[%s1 + $0x15cc] sm:$0xff]
    %v869 = vld [vmem:[%s1 + $0x15d4] sm:$0xff]
    %v870 = vld [vmem:[%s1 + $0x15dc] sm:$0xf]
    %v871 = vld [vmem:[%s1 + $0x15e0] sm:$0xff]
    %v872 = vld [vmem:[%s1 + $0x15e8] sm:$0xff]
    %v873 = vld [vmem:[%s1 + $0x15f0] sm:$0xf]
    %v874 = vld [vmem:[%s1 + $0x15f4] sm:$0xff]
    %v875 = vld [vmem:[%s1 + $0x15fc] sm:$0xff]
    %v876 = vld [vmem:[%s1 + $0x1604] sm:$0xf]
    %v877 = vld [vmem:[%s1 + $0x1608] sm:$0xff]
    %v878 = vld [vmem:[%s1 + $0x1610] sm:$0xff]
    %v879 = vld [vmem:[%s1 + $0x1618] sm:$0xf]
    %v880 = vld [vmem:[%s1 + $0x161c] sm:$0xff]
    %v881 = vld [vmem:[%s1 + $0x1624] sm:$0xff]
    %v882 = vld [vmem:[%s1 + $0x162c] sm:$0xf]
    %v883 = vld [vmem:[%s1 + $0x1630] sm:$0xff]
    %v884 = vld [vmem:[%s1 + $0x1638] sm:$0xff]
    %v885 = vld [vmem:[%s1 + $0x1640] sm:$0xf]
    %v886 = vld [vmem:[%s1 + $0x1644] sm:$0xff]
    %v887 = vld [vmem:[%s1 + $0x164c] sm:$0xff]
    %v888 = vld [vmem:[%s1 + $0x1654] sm:$0xf]
    %v889 = vld [vmem:[%s1 + $0x1658] sm:$0xff]
    %v890 = vld [vmem:[%s1 + $0x1660] sm:$0xff]
    %v891 = vld [vmem:[%s1 + $0x1668] sm:$0xf]
    %v892 = vld [vmem:[%s1 + $0x166c] sm:$0xff]
    %v893 = vld [vmem:[%s1 + $0x1674] sm:$0xff]
    %v894 = vld [vmem:[%s1 + $0x167c] sm:$0xf]
    %v895 = vld [vmem:[%s2] sm:$0x1f]
    %v897 = vlaneseq
    %v898 = vshrl.u32 %v897, 7
    %v899 = vsub.s32 0, %v898
    %v900 = vrot.slane %v895, %v899
    %v901 = vlaneseq
    %v902 = vshrl.u32 %v901, 7
    %v903 = vsub.s32 1, %v902
    %v904 = vrot.slane %v895, %v903
    %v905 = vlaneseq
    %v906 = vshrl.u32 %v905, 7
    %v907 = vsub.s32 2, %v906
    %v908 = vrot.slane %v895, %v907
    %v909 = vlaneseq
    %v910 = vshrl.u32 %v909, 7
    %v911 = vsub.s32 3, %v910
    %v912 = vrot.slane %v895, %v911
    %v913 = vlaneseq
    %v914 = vshrl.u32 %v913, 7
    %v915 = vsub.s32 4, %v914
    %v916 = vrot.slane %v895, %v915
    %v925 = vcombine.high %v28, %v28
    %v927 = vunpack.c.l.s4 1966171168
    %v928 = vunpack.c.0.s8 %v927
    %v929 = vlaneseq
    %v930 = vshrl.u32 %v929, 7
    %v931 = vsub.s32 %v928, %v930
    %v932 = vrot.slane %v28, %v931
    %v934 = vunpack.c.l.s4 1966171168
    %v935 = vunpack.c.0.s8 %v934
    %v936 = vlaneseq
    %v937 = vshrl.u32 %v936, 7
    %v938 = vsub.s32 %v935, %v937
    %v939 = vrot.slane %v925, %v938
    %v940 = vcombine.high %v932, %v932
    %v941 = vcombine.high %v939, %v939
    %v943 = vunpack.c.l.s4 1966171168
    %v944 = vunpack.c.0.s8 %v943
    %v945 = vlaneseq
    %v946 = vshrl.u32 %v945, 7
    %v947 = vsub.s32 %v944, %v946
    %v948 = vrot.slane %v932, %v947
    %v950 = vunpack.c.l.s4 1966171168
    %v951 = vunpack.c.0.s8 %v950
    %v952 = vlaneseq
    %v953 = vshrl.u32 %v952, 7
    %v954 = vsub.s32 %v951, %v953
    %v955 = vrot.slane %v939, %v954
    %v957 = vunpack.c.l.s4 1966171168
    %v958 = vunpack.c.0.s8 %v957
    %v959 = vlaneseq
    %v960 = vshrl.u32 %v959, 7
    %v961 = vsub.s32 %v958, %v960
    %v962 = vrot.slane %v940, %v961
    %v964 = vunpack.c.l.s4 1966171168
    %v965 = vunpack.c.0.s8 %v964
    %v966 = vlaneseq
    %v967 = vshrl.u32 %v966, 7
    %v968 = vsub.s32 %v965, %v967
    %v969 = vrot.slane %v941, %v968
    %v970 = vcombine.high %v948, %v948
    %v971 = vcombine.high %v955, %v955
    %v972 = vcombine.high %v962, %v962
    %v973 = vcombine.high %v969, %v969
    %v974 = vcombine.high %v29, %v29
    %v976 = vunpack.c.l.s4 1966171168
    %v977 = vunpack.c.0.s8 %v976
    %v978 = vlaneseq
    %v979 = vshrl.u32 %v978, 7
    %v980 = vsub.s32 %v977, %v979
    %v981 = vrot.slane %v29, %v980
    %v983 = vunpack.c.l.s4 1966171168
    %v984 = vunpack.c.0.s8 %v983
    %v985 = vlaneseq
    %v986 = vshrl.u32 %v985, 7
    %v987 = vsub.s32 %v984, %v986
    %v988 = vrot.slane %v974, %v987
    %v989 = vcombine.high %v981, %v981
    %v990 = vcombine.high %v988, %v988
    %v992 = vunpack.c.l.s4 1966171168
    %v993 = vunpack.c.0.s8 %v992
    %v994 = vlaneseq
    %v995 = vshrl.u32 %v994, 7
    %v996 = vsub.s32 %v993, %v995
    %v997 = vrot.slane %v981, %v996
    %v999 = vunpack.c.l.s4 1966171168
    %v1000 = vunpack.c.0.s8 %v999
    %v1001 = vlaneseq
    %v1002 = vshrl.u32 %v1001, 7
    %v1003 = vsub.s32 %v1000, %v1002
    %v1004 = vrot.slane %v988, %v1003
    %v1006 = vunpack.c.l.s4 1966171168
    %v1007 = vunpack.c.0.s8 %v1006
    %v1008 = vlaneseq
    %v1009 = vshrl.u32 %v1008, 7
    %v1010 = vsub.s32 %v1007, %v1009
    %v1011 = vrot.slane %v989, %v1010
    %v1013 = vunpack.c.l.s4 1966171168
    %v1014 = vunpack.c.0.s8 %v1013
    %v1015 = vlaneseq
    %v1016 = vshrl.u32 %v1015, 7
    %v1017 = vsub.s32 %v1014, %v1016
    %v1018 = vrot.slane %v990, %v1017
    %v1019 = vcombine.high %v997, %v997
    %v1020 = vcombine.high %v1004, %v1004
    %v1021 = vcombine.high %v1011, %v1011
    %v1022 = vcombine.high %v1018, %v1018
    %v1024 = vunpack.c.l.s4 1966171168
    %v1025 = vunpack.c.0.s8 %v1024
    %v1026 = vlaneseq
    %v1027 = vshrl.u32 %v1026, 7
    %v1028 = vsub.s32 %v1025, %v1027
    %v1029 = vrot.slane %v30, %v1028
    %v1030 = vcombine.high %v1029, %v1029
    %v1032 = vunpack.c.l.s4 1966171168
    %v1033 = vunpack.c.0.s8 %v1032
    %v1034 = vlaneseq
    %v1035 = vshrl.u32 %v1034, 7
    %v1036 = vsub.s32 %v1033, %v1035
    %v1037 = vrot.slane %v1029, %v1036
    %v1039 = vunpack.c.l.s4 1966171168
    %v1040 = vunpack.c.0.s8 %v1039
    %v1041 = vlaneseq
    %v1042 = vshrl.u32 %v1041, 7
    %v1043 = vsub.s32 %v1040, %v1042
    %v1044 = vrot.slane %v1030, %v1043
    %v1927 = vunpack.c.l.b16 %v31
    %v1928 = vunpack.c.h.b16 %v31
    %v1929 = vunpack.c.l.b16 %v32
    %v1930 = vunpack.c.h.b16 %v32
    %v1931 = vunpack.c.l.b16 %v33
    %v1932 = vunpack.c.l.b16 %v34
    %v1933 = vunpack.c.h.b16 %v34
    %v1934 = vunpack.c.l.b16 %v35
    %v1935 = vunpack.c.h.b16 %v35
    %v1936 = vunpack.c.l.b16 %v36
    %v1937 = vunpack.c.l.b16 %v37
    %v1938 = vunpack.c.h.b16 %v37
    %v1939 = vunpack.c.l.b16 %v38
    %v1940 = vunpack.c.h.b16 %v38
    %v1941 = vunpack.c.l.b16 %v39
    %v1942 = vunpack.c.l.b16 %v40
    %v1943 = vunpack.c.h.b16 %v40
    %v1944 = vunpack.c.l.b16 %v41
    %v1945 = vunpack.c.h.b16 %v41
    %v1946 = vunpack.c.l.b16 %v42
    %v1947 = vunpack.c.l.b16 %v43
    %v1948 = vunpack.c.h.b16 %v43
    %v1949 = vunpack.c.l.b16 %v44
    %v1950 = vunpack.c.h.b16 %v44
    %v1951 = vunpack.c.l.b16 %v45
    %v1952 = vunpack.c.l.b16 %v46
    %v1953 = vunpack.c.h.b16 %v46
    %v1954 = vunpack.c.l.b16 %v47
    %v1955 = vunpack.c.h.b16 %v47
    %v1956 = vunpack.c.l.b16 %v48
    %v1957 = vunpack.c.l.b16 %v49
    %v1958 = vunpack.c.h.b16 %v49
    %v1959 = vunpack.c.l.b16 %v50
    %v1960 = vunpack.c.h.b16 %v50
    %v1961 = vunpack.c.l.b16 %v51
    %v1962 = vunpack.c.l.b16 %v52
    %v1963 = vunpack.c.h.b16 %v52
    %v1964 = vunpack.c.l.b16 %v53
    %v1965 = vunpack.c.h.b16 %v53
    %v1966 = vunpack.c.l.b16 %v54
    %v1967 = vunpack.c.l.b16 %v55
    %v1968 = vunpack.c.h.b16 %v55
    %v1969 = vunpack.c.l.b16 %v56
    %v1970 = vunpack.c.h.b16 %v56
    %v1971 = vunpack.c.l.b16 %v57
    %v1972 = vunpack.c.l.b16 %v58
    %v1973 = vunpack.c.h.b16 %v58
    %v1974 = vunpack.c.l.b16 %v59
    %v1975 = vunpack.c.h.b16 %v59
    %v1976 = vunpack.c.l.b16 %v60
    %v1977 = vunpack.c.l.b16 %v61
    %v1978 = vunpack.c.h.b16 %v61
    %v1979 = vunpack.c.l.b16 %v62
    %v1980 = vunpack.c.h.b16 %v62
    %v1981 = vunpack.c.l.b16 %v63
    %v1982 = vunpack.c.l.b16 %v64
    %v1983 = vunpack.c.h.b16 %v64
    %v1984 = vunpack.c.l.b16 %v65
    %v1985 = vunpack.c.h.b16 %v65
    %v1986 = vunpack.c.l.b16 %v66
    %v1987 = vunpack.c.l.b16 %v67
    %v1988 = vunpack.c.h.b16 %v67
    %v1989 = vunpack.c.l.b16 %v68
    %v1990 = vunpack.c.h.b16 %v68
    %v1991 = vunpack.c.l.b16 %v69
    %v1992 = vunpack.c.l.b16 %v70
    %v1993 = vunpack.c.h.b16 %v70
    %v1994 = vunpack.c.l.b16 %v71
    %v1995 = vunpack.c.h.b16 %v71
    %v1996 = vunpack.c.l.b16 %v72
    %v1997 = vunpack.c.l.b16 %v73
    %v1998 = vunpack.c.h.b16 %v73
    %v1999 = vunpack.c.l.b16 %v74
    %v2000 = vunpack.c.h.b16 %v74
    %v2001 = vunpack.c.l.b16 %v75
    %v2002 = vunpack.c.l.b16 %v76
    %v2003 = vunpack.c.h.b16 %v76
    %v2004 = vunpack.c.l.b16 %v77
    %v2005 = vunpack.c.h.b16 %v77
    %v2006 = vunpack.c.l.b16 %v78
    %v2007 = vunpack.c.l.b16 %v79
    %v2008 = vunpack.c.h.b16 %v79
    %v2009 = vunpack.c.l.b16 %v80
    %v2010 = vunpack.c.h.b16 %v80
    %v2011 = vunpack.c.l.b16 %v81
    %v2012 = vunpack.c.l.b16 %v82
    %v2013 = vunpack.c.h.b16 %v82
    %v2014 = vunpack.c.l.b16 %v83
    %v2015 = vunpack.c.h.b16 %v83
    %v2016 = vunpack.c.l.b16 %v84
    %v2017 = vunpack.c.l.b16 %v85
    %v2018 = vunpack.c.h.b16 %v85
    %v2019 = vunpack.c.l.b16 %v86
    %v2020 = vunpack.c.h.b16 %v86
    %v2021 = vunpack.c.l.b16 %v87
    %v2022 = vunpack.c.l.b16 %v88
    %v2023 = vunpack.c.h.b16 %v88
    %v2024 = vunpack.c.l.b16 %v89
    %v2025 = vunpack.c.h.b16 %v89
    %v2026 = vunpack.c.l.b16 %v90
    %v2027 = vunpack.c.l.b16 %v91
    %v2028 = vunpack.c.h.b16 %v91
    %v2029 = vunpack.c.l.b16 %v92
    %v2030 = vunpack.c.h.b16 %v92
    %v2031 = vunpack.c.l.b16 %v93
    %v2032 = vunpack.c.l.b16 %v94
    %v2033 = vunpack.c.h.b16 %v94
    %v2034 = vunpack.c.l.b16 %v95
    %v2035 = vunpack.c.h.b16 %v95
    %v2036 = vunpack.c.l.b16 %v96
    %v2037 = vunpack.c.l.b16 %v97
    %v2038 = vunpack.c.h.b16 %v97
    %v2039 = vunpack.c.l.b16 %v98
    %v2040 = vunpack.c.h.b16 %v98
    %v2041 = vunpack.c.l.b16 %v99
    %v2042 = vunpack.c.l.b16 %v100
    %v2043 = vunpack.c.h.b16 %v100
    %v2044 = vunpack.c.l.b16 %v101
    %v2045 = vunpack.c.h.b16 %v101
    %v2046 = vunpack.c.l.b16 %v102
    %v2047 = vunpack.c.l.b16 %v103
    %v2048 = vunpack.c.h.b16 %v103
    %v2049 = vunpack.c.l.b16 %v104
    %v2050 = vunpack.c.h.b16 %v104
    %v2051 = vunpack.c.l.b16 %v105
    %v2052 = vunpack.c.l.b16 %v106
    %v2053 = vunpack.c.h.b16 %v106
    %v2054 = vunpack.c.l.b16 %v107
    %v2055 = vunpack.c.h.b16 %v107
    %v2056 = vunpack.c.l.b16 %v108
    %v2057 = vunpack.c.l.b16 %v109
    %v2058 = vunpack.c.h.b16 %v109
    %v2059 = vunpack.c.l.b16 %v110
    %v2060 = vunpack.c.h.b16 %v110
    %v2061 = vunpack.c.l.b16 %v111
    %v2062 = vunpack.c.l.b16 %v112
    %v2063 = vunpack.c.h.b16 %v112
    %v2064 = vunpack.c.l.b16 %v113
    %v2065 = vunpack.c.h.b16 %v113
    %v2066 = vunpack.c.l.b16 %v114
    %v2067 = vunpack.c.l.b16 %v115
    %v2068 = vunpack.c.h.b16 %v115
    %v2069 = vunpack.c.l.b16 %v116
    %v2070 = vunpack.c.h.b16 %v116
    %v2071 = vunpack.c.l.b16 %v117
    %v2072 = vunpack.c.l.b16 %v118
    %v2073 = vunpack.c.h.b16 %v118
    %v2074 = vunpack.c.l.b16 %v119
    %v2075 = vunpack.c.h.b16 %v119
    %v2076 = vunpack.c.l.b16 %v120
    %v2077 = vunpack.c.l.b16 %v121
    %v2078 = vunpack.c.h.b16 %v121
    %v2079 = vunpack.c.l.b16 %v122
    %v2080 = vunpack.c.h.b16 %v122
    %v2081 = vunpack.c.l.b16 %v123
    %v2082 = vunpack.c.l.b16 %v124
    %v2083 = vunpack.c.h.b16 %v124
    %v2084 = vunpack.c.l.b16 %v125
    %v2085 = vunpack.c.h.b16 %v125
    %v2086 = vunpack.c.l.b16 %v126
    %v2087 = vunpack.c.l.b16 %v127
    %v2088 = vunpack.c.h.b16 %v127
    %v2089 = vunpack.c.l.b16 %v128
    %v2090 = vunpack.c.h.b16 %v128
    %v2091 = vunpack.c.l.b16 %v129
    %v2092 = vunpack.c.l.b16 %v130
    %v2093 = vunpack.c.h.b16 %v130
    %v2094 = vunpack.c.l.b16 %v131
    %v2095 = vunpack.c.h.b16 %v131
    %v2096 = vunpack.c.l.b16 %v132
    %v2097 = vunpack.c.l.b16 %v133
    %v2098 = vunpack.c.h.b16 %v133
    %v2099 = vunpack.c.l.b16 %v134
    %v2100 = vunpack.c.h.b16 %v134
    %v2101 = vunpack.c.l.b16 %v135
    %v2102 = vunpack.c.l.b16 %v136
    %v2103 = vunpack.c.h.b16 %v136
    %v2104 = vunpack.c.l.b16 %v137
    %v2105 = vunpack.c.h.b16 %v137
    %v2106 = vunpack.c.l.b16 %v138
    %v2107 = vunpack.c.l.b16 %v139
    %v2108 = vunpack.c.h.b16 %v139
    %v2109 = vunpack.c.l.b16 %v140
    %v2110 = vunpack.c.h.b16 %v140
    %v2111 = vunpack.c.l.b16 %v141
    %v2112 = vunpack.c.l.b16 %v142
    %v2113 = vunpack.c.h.b16 %v142
    %v2114 = vunpack.c.l.b16 %v143
    %v2115 = vunpack.c.h.b16 %v143
    %v2116 = vunpack.c.l.b16 %v144
    %v2117 = vunpack.c.l.b16 %v145
    %v2118 = vunpack.c.h.b16 %v145
    %v2119 = vunpack.c.l.b16 %v146
    %v2120 = vunpack.c.h.b16 %v146
    %v2121 = vunpack.c.l.b16 %v147
    %v2122 = vunpack.c.l.b16 %v148
    %v2123 = vunpack.c.h.b16 %v148
    %v2124 = vunpack.c.l.b16 %v149
    %v2125 = vunpack.c.h.b16 %v149
    %v2126 = vunpack.c.l.b16 %v150
    %v2127 = vunpack.c.l.b16 %v151
    %v2128 = vunpack.c.h.b16 %v151
    %v2129 = vunpack.c.l.b16 %v152
    %v2130 = vunpack.c.h.b16 %v152
    %v2131 = vunpack.c.l.b16 %v153
    %v2132 = vunpack.c.l.b16 %v154
    %v2133 = vunpack.c.h.b16 %v154
    %v2134 = vunpack.c.l.b16 %v155
    %v2135 = vunpack.c.h.b16 %v155
    %v2136 = vunpack.c.l.b16 %v156
    %v2137 = vunpack.c.l.b16 %v157
    %v2138 = vunpack.c.h.b16 %v157
    %v2139 = vunpack.c.l.b16 %v158
    %v2140 = vunpack.c.h.b16 %v158
    %v2141 = vunpack.c.l.b16 %v159
    %v2142 = vunpack.c.l.b16 %v160
    %v2143 = vunpack.c.h.b16 %v160
    %v2144 = vunpack.c.l.b16 %v161
    %v2145 = vunpack.c.h.b16 %v161
    %v2146 = vunpack.c.l.b16 %v162
    %v2147 = vunpack.c.l.b16 %v163
    %v2148 = vunpack.c.h.b16 %v163
    %v2149 = vunpack.c.l.b16 %v164
    %v2150 = vunpack.c.h.b16 %v164
    %v2151 = vunpack.c.l.b16 %v165
    %v2152 = vunpack.c.l.b16 %v166
    %v2153 = vunpack.c.h.b16 %v166
    %v2154 = vunpack.c.l.b16 %v167
    %v2155 = vunpack.c.h.b16 %v167
    %v2156 = vunpack.c.l.b16 %v168
    %v2157 = vunpack.c.l.b16 %v169
    %v2158 = vunpack.c.h.b16 %v169
    %v2159 = vunpack.c.l.b16 %v170
    %v2160 = vunpack.c.h.b16 %v170
    %v2161 = vunpack.c.l.b16 %v171
    %v2162 = vunpack.c.l.b16 %v172
    %v2163 = vunpack.c.h.b16 %v172
    %v2164 = vunpack.c.l.b16 %v173
    %v2165 = vunpack.c.h.b16 %v173
    %v2166 = vunpack.c.l.b16 %v174
    %v2167 = vunpack.c.l.b16 %v175
    %v2168 = vunpack.c.h.b16 %v175
    %v2169 = vunpack.c.l.b16 %v176
    %v2170 = vunpack.c.h.b16 %v176
    %v2171 = vunpack.c.l.b16 %v177
    %v2172 = vunpack.c.l.b16 %v178
    %v2173 = vunpack.c.h.b16 %v178
    %v2174 = vunpack.c.l.b16 %v179
    %v2175 = vunpack.c.h.b16 %v179
    %v2176 = vunpack.c.l.b16 %v180
    %v2177 = vunpack.c.l.b16 %v181
    %v2178 = vunpack.c.h.b16 %v181
    %v2179 = vunpack.c.l.b16 %v182
    %v2180 = vunpack.c.h.b16 %v182
    %v2181 = vunpack.c.l.b16 %v183
    %v2182 = vunpack.c.l.b16 %v184
    %v2183 = vunpack.c.h.b16 %v184
    %v2184 = vunpack.c.l.b16 %v185
    %v2185 = vunpack.c.h.b16 %v185
    %v2186 = vunpack.c.l.b16 %v186
    %v2187 = vunpack.c.l.b16 %v187
    %v2188 = vunpack.c.h.b16 %v187
    %v2189 = vunpack.c.l.b16 %v188
    %v2190 = vunpack.c.h.b16 %v188
    %v2191 = vunpack.c.l.b16 %v189
    %v2192 = vunpack.c.l.b16 %v190
    %v2193 = vunpack.c.h.b16 %v190
    %v2194 = vunpack.c.l.b16 %v191
    %v2195 = vunpack.c.h.b16 %v191
    %v2196 = vunpack.c.l.b16 %v192
    %v2197 = vunpack.c.l.b16 %v193
    %v2198 = vunpack.c.h.b16 %v193
    %v2199 = vunpack.c.l.b16 %v194
    %v2200 = vunpack.c.h.b16 %v194
    %v2201 = vunpack.c.l.b16 %v195
    %v2202 = vunpack.c.l.b16 %v196
    %v2203 = vunpack.c.h.b16 %v196
    %v2204 = vunpack.c.l.b16 %v197
    %v2205 = vunpack.c.h.b16 %v197
    %v2206 = vunpack.c.l.b16 %v198
    %v2207 = vunpack.c.l.b16 %v199
    %v2208 = vunpack.c.h.b16 %v199
    %v2209 = vunpack.c.l.b16 %v200
    %v2210 = vunpack.c.h.b16 %v200
    %v2211 = vunpack.c.l.b16 %v201
    %v2212 = vunpack.c.l.b16 %v202
    %v2213 = vunpack.c.h.b16 %v202
    %v2214 = vunpack.c.l.b16 %v203
    %v2215 = vunpack.c.h.b16 %v203
    %v2216 = vunpack.c.l.b16 %v204
    %v2217 = vunpack.c.l.b16 %v205
    %v2218 = vunpack.c.h.b16 %v205
    %v2219 = vunpack.c.l.b16 %v206
    %v2220 = vunpack.c.h.b16 %v206
    %v2221 = vunpack.c.l.b16 %v207
    %v2222 = vunpack.c.l.b16 %v208
    %v2223 = vunpack.c.h.b16 %v208
    %v2224 = vunpack.c.l.b16 %v209
    %v2225 = vunpack.c.h.b16 %v209
    %v2226 = vunpack.c.l.b16 %v210
    %v2227 = vunpack.c.l.b16 %v211
    %v2228 = vunpack.c.h.b16 %v211
    %v2229 = vunpack.c.l.b16 %v212
    %v2230 = vunpack.c.h.b16 %v212
    %v2231 = vunpack.c.l.b16 %v213
    %v2232 = vunpack.c.l.b16 %v214
    %v2233 = vunpack.c.h.b16 %v214
    %v2234 = vunpack.c.l.b16 %v215
    %v2235 = vunpack.c.h.b16 %v215
    %v2236 = vunpack.c.l.b16 %v216
    %v2237 = vunpack.c.l.b16 %v217
    %v2238 = vunpack.c.h.b16 %v217
    %v2239 = vunpack.c.l.b16 %v218
    %v2240 = vunpack.c.h.b16 %v218
    %v2241 = vunpack.c.l.b16 %v219
    %v2242 = vunpack.c.l.b16 %v220
    %v2243 = vunpack.c.h.b16 %v220
    %v2244 = vunpack.c.l.b16 %v221
    %v2245 = vunpack.c.h.b16 %v221
    %v2246 = vunpack.c.l.b16 %v222
    %v2247 = vunpack.c.l.b16 %v223
    %v2248 = vunpack.c.h.b16 %v223
    %v2249 = vunpack.c.l.b16 %v224
    %v2250 = vunpack.c.h.b16 %v224
    %v2251 = vunpack.c.l.b16 %v225
    %v2252 = vunpack.c.l.b16 %v226
    %v2253 = vunpack.c.h.b16 %v226
    %v2254 = vunpack.c.l.b16 %v227
    %v2255 = vunpack.c.h.b16 %v227
    %v2256 = vunpack.c.l.b16 %v228
    %v2257 = vunpack.c.l.b16 %v229
    %v2258 = vunpack.c.h.b16 %v229
    %v2259 = vunpack.c.l.b16 %v230
    %v2260 = vunpack.c.h.b16 %v230
    %v2261 = vunpack.c.l.b16 %v231
    %v2262 = vunpack.c.l.b16 %v232
    %v2263 = vunpack.c.h.b16 %v232
    %v2264 = vunpack.c.l.b16 %v233
    %v2265 = vunpack.c.h.b16 %v233
    %v2266 = vunpack.c.l.b16 %v234
    %v2267 = vunpack.c.l.b16 %v235
    %v2268 = vunpack.c.h.b16 %v235
    %v2269 = vunpack.c.l.b16 %v236
    %v2270 = vunpack.c.h.b16 %v236
    %v2271 = vunpack.c.l.b16 %v237
    %v2272 = vunpack.c.l.b16 %v238
    %v2273 = vunpack.c.h.b16 %v238
    %v2274 = vunpack.c.l.b16 %v239
    %v2275 = vunpack.c.h.b16 %v239
    %v2276 = vunpack.c.l.b16 %v240
    %v2277 = vunpack.c.l.b16 %v241
    %v2278 = vunpack.c.h.b16 %v241
    %v2279 = vunpack.c.l.b16 %v242
    %v2280 = vunpack.c.h.b16 %v242
    %v2281 = vunpack.c.l.b16 %v243
    %v2282 = vunpack.c.l.b16 %v244
    %v2283 = vunpack.c.h.b16 %v244
    %v2284 = vunpack.c.l.b16 %v245
    %v2285 = vunpack.c.h.b16 %v245
    %v2286 = vunpack.c.l.b16 %v246
    %v2287 = vunpack.c.l.b16 %v247
    %v2288 = vunpack.c.h.b16 %v247
    %v2289 = vunpack.c.l.b16 %v248
    %v2290 = vunpack.c.h.b16 %v248
    %v2291 = vunpack.c.l.b16 %v249
    %v2292 = vunpack.c.l.b16 %v250
    %v2293 = vunpack.c.h.b16 %v250
    %v2294 = vunpack.c.l.b16 %v251
    %v2295 = vunpack.c.h.b16 %v251
    %v2296 = vunpack.c.l.b16 %v252
    %v2297 = vunpack.c.l.b16 %v253
    %v2298 = vunpack.c.h.b16 %v253
    %v2299 = vunpack.c.l.b16 %v254
    %v2300 = vunpack.c.h.b16 %v254
    %v2301 = vunpack.c.l.b16 %v255
    %v2302 = vunpack.c.l.b16 %v256
    %v2303 = vunpack.c.h.b16 %v256
    %v2304 = vunpack.c.l.b16 %v257
    %v2305 = vunpack.c.h.b16 %v257
    %v2306 = vunpack.c.l.b16 %v258
    %v2307 = vunpack.c.l.b16 %v259
    %v2308 = vunpack.c.h.b16 %v259
    %v2309 = vunpack.c.l.b16 %v260
    %v2310 = vunpack.c.h.b16 %v260
    %v2311 = vunpack.c.l.b16 %v261
    %v2312 = vunpack.c.l.b16 %v262
    %v2313 = vunpack.c.h.b16 %v262
    %v2314 = vunpack.c.l.b16 %v263
    %v2315 = vunpack.c.h.b16 %v263
    %v2316 = vunpack.c.l.b16 %v264
    %v2317 = vunpack.c.l.b16 %v265
    %v2318 = vunpack.c.h.b16 %v265
    %v2319 = vunpack.c.l.b16 %v266
    %v2320 = vunpack.c.h.b16 %v266
    %v2321 = vunpack.c.l.b16 %v267
    %v2322 = vunpack.c.l.b16 %v268
    %v2323 = vunpack.c.h.b16 %v268
    %v2324 = vunpack.c.l.b16 %v269
    %v2325 = vunpack.c.h.b16 %v269
    %v2326 = vunpack.c.l.b16 %v270
    %v2327 = vunpack.c.l.b16 %v271
    %v2328 = vunpack.c.h.b16 %v271
    %v2329 = vunpack.c.l.b16 %v272
    %v2330 = vunpack.c.h.b16 %v272
    %v2331 = vunpack.c.l.b16 %v273
    %v2332 = vunpack.c.l.b16 %v274
    %v2333 = vunpack.c.h.b16 %v274
    %v2334 = vunpack.c.l.b16 %v275
    %v2335 = vunpack.c.h.b16 %v275
    %v2336 = vunpack.c.l.b16 %v276
    %v2337 = vunpack.c.l.b16 %v277
    %v2338 = vunpack.c.h.b16 %v277
    %v2339 = vunpack.c.l.b16 %v278
    %v2340 = vunpack.c.h.b16 %v278
    %v2341 = vunpack.c.l.b16 %v279
    %v2342 = vunpack.c.l.b16 %v280
    %v2343 = vunpack.c.h.b16 %v280
    %v2344 = vunpack.c.l.b16 %v281
    %v2345 = vunpack.c.h.b16 %v281
    %v2346 = vunpack.c.l.b16 %v282
    %v2347 = vunpack.c.l.b16 %v283
    %v2348 = vunpack.c.h.b16 %v283
    %v2349 = vunpack.c.l.b16 %v284
    %v2350 = vunpack.c.h.b16 %v284
    %v2351 = vunpack.c.l.b16 %v285
    %v2352 = vunpack.c.l.b16 %v286
    %v2353 = vunpack.c.h.b16 %v286
    %v2354 = vunpack.c.l.b16 %v287
    %v2355 = vunpack.c.h.b16 %v287
    %v2356 = vunpack.c.l.b16 %v288
    %v2357 = vunpack.c.l.b16 %v289
    %v2358 = vunpack.c.h.b16 %v289
    %v2359 = vunpack.c.l.b16 %v290
    %v2360 = vunpack.c.h.b16 %v290
    %v2361 = vunpack.c.l.b16 %v291
    %v2362 = vunpack.c.l.b16 %v292
    %v2363 = vunpack.c.h.b16 %v292
    %v2364 = vunpack.c.l.b16 %v293
    %v2365 = vunpack.c.h.b16 %v293
    %v2366 = vunpack.c.l.b16 %v294
    %v2367 = vunpack.c.l.b16 %v295
    %v2368 = vunpack.c.h.b16 %v295
    %v2369 = vunpack.c.l.b16 %v296
    %v2370 = vunpack.c.h.b16 %v296
    %v2371 = vunpack.c.l.b16 %v297
    %v2372 = vunpack.c.l.b16 %v298
    %v2373 = vunpack.c.h.b16 %v298
    %v2374 = vunpack.c.l.b16 %v299
    %v2375 = vunpack.c.h.b16 %v299
    %v2376 = vunpack.c.l.b16 %v300
    %v2377 = vunpack.c.l.b16 %v301
    %v2378 = vunpack.c.h.b16 %v301
    %v2379 = vunpack.c.l.b16 %v302
    %v2380 = vunpack.c.h.b16 %v302
    %v2381 = vunpack.c.l.b16 %v303
    %v2382 = vunpack.c.l.b16 %v304
    %v2383 = vunpack.c.h.b16 %v304
    %v2384 = vunpack.c.l.b16 %v305
    %v2385 = vunpack.c.h.b16 %v305
    %v2386 = vunpack.c.l.b16 %v306
    %v2387 = vunpack.c.l.b16 %v307
    %v2388 = vunpack.c.h.b16 %v307
    %v2389 = vunpack.c.l.b16 %v308
    %v2390 = vunpack.c.h.b16 %v308
    %v2391 = vunpack.c.l.b16 %v309
    %v2392 = vunpack.c.l.b16 %v310
    %v2393 = vunpack.c.h.b16 %v310
    %v2394 = vunpack.c.l.b16 %v311
    %v2395 = vunpack.c.h.b16 %v311
    %v2396 = vunpack.c.l.b16 %v312
    %v2397 = vunpack.c.l.b16 %v313
    %v2398 = vunpack.c.h.b16 %v313
    %v2399 = vunpack.c.l.b16 %v314
    %v2400 = vunpack.c.h.b16 %v314
    %v2401 = vunpack.c.l.b16 %v315
    %v2402 = vunpack.c.l.b16 %v316
    %v2403 = vunpack.c.h.b16 %v316
    %v2404 = vunpack.c.l.b16 %v317
    %v2405 = vunpack.c.h.b16 %v317
    %v2406 = vunpack.c.l.b16 %v318
    %v2407 = vunpack.c.l.b16 %v319
    %v2408 = vunpack.c.h.b16 %v319
    %v2409 = vunpack.c.l.b16 %v320
    %v2410 = vunpack.c.h.b16 %v320
    %v2411 = vunpack.c.l.b16 %v321
    %v2412 = vunpack.c.l.b16 %v322
    %v2413 = vunpack.c.h.b16 %v322
    %v2414 = vunpack.c.l.b16 %v323
    %v2415 = vunpack.c.h.b16 %v323
    %v2416 = vunpack.c.l.b16 %v324
    %v2417 = vunpack.c.l.b16 %v325
    %v2418 = vunpack.c.h.b16 %v325
    %v2419 = vunpack.c.l.b16 %v326
    %v2420 = vunpack.c.h.b16 %v326
    %v2421 = vunpack.c.l.b16 %v327
    %v2422 = vunpack.c.l.b16 %v328
    %v2423 = vunpack.c.h.b16 %v328
    %v2424 = vunpack.c.l.b16 %v329
    %v2425 = vunpack.c.h.b16 %v329
    %v2426 = vunpack.c.l.b16 %v330
    %v2427 = vunpack.c.l.b16 %v331
    %v2428 = vunpack.c.h.b16 %v331
    %v2429 = vunpack.c.l.b16 %v332
    %v2430 = vunpack.c.h.b16 %v332
    %v2431 = vunpack.c.l.b16 %v333
    %v2432 = vunpack.c.l.b16 %v334
    %v2433 = vunpack.c.h.b16 %v334
    %v2434 = vunpack.c.l.b16 %v335
    %v2435 = vunpack.c.h.b16 %v335
    %v2436 = vunpack.c.l.b16 %v336
    %v2437 = vunpack.c.l.b16 %v337
    %v2438 = vunpack.c.h.b16 %v337
    %v2439 = vunpack.c.l.b16 %v338
    %v2440 = vunpack.c.h.b16 %v338
    %v2441 = vunpack.c.l.b16 %v339
    %v2442 = vunpack.c.l.b16 %v340
    %v2443 = vunpack.c.h.b16 %v340
    %v2444 = vunpack.c.l.b16 %v341
    %v2445 = vunpack.c.h.b16 %v341
    %v2446 = vunpack.c.l.b16 %v342
    %v2447 = vunpack.c.l.b16 %v343
    %v2448 = vunpack.c.h.b16 %v343
    %v2449 = vunpack.c.l.b16 %v344
    %v2450 = vunpack.c.h.b16 %v344
    %v2451 = vunpack.c.l.b16 %v345
    %v2452 = vunpack.c.l.b16 %v346
    %v2453 = vunpack.c.h.b16 %v346
    %v2454 = vunpack.c.l.b16 %v347
    %v2455 = vunpack.c.h.b16 %v347
    %v2456 = vunpack.c.l.b16 %v348
    %v2457 = vunpack.c.l.b16 %v349
    %v2458 = vunpack.c.h.b16 %v349
    %v2459 = vunpack.c.l.b16 %v350
    %v2460 = vunpack.c.h.b16 %v350
    %v2461 = vunpack.c.l.b16 %v351
    %v2462 = vunpack.c.l.b16 %v352
    %v2463 = vunpack.c.h.b16 %v352
    %v2464 = vunpack.c.l.b16 %v353
    %v2465 = vunpack.c.h.b16 %v353
    %v2466 = vunpack.c.l.b16 %v354
    %v2467 = vunpack.c.l.b16 %v355
    %v2468 = vunpack.c.h.b16 %v355
    %v2469 = vunpack.c.l.b16 %v356
    %v2470 = vunpack.c.h.b16 %v356
    %v2471 = vunpack.c.l.b16 %v357
    %v2472 = vunpack.c.l.b16 %v358
    %v2473 = vunpack.c.h.b16 %v358
    %v2474 = vunpack.c.l.b16 %v359
    %v2475 = vunpack.c.h.b16 %v359
    %v2476 = vunpack.c.l.b16 %v360
    %v2477 = vunpack.c.l.b16 %v361
    %v2478 = vunpack.c.h.b16 %v361
    %v2479 = vunpack.c.l.b16 %v362
    %v2480 = vunpack.c.h.b16 %v362
    %v2481 = vunpack.c.l.b16 %v363
    %v2482 = vunpack.c.l.b16 %v364
    %v2483 = vunpack.c.h.b16 %v364
    %v2484 = vunpack.c.l.b16 %v365
    %v2485 = vunpack.c.h.b16 %v365
    %v2486 = vunpack.c.l.b16 %v366
    %v2487 = vunpack.c.l.b16 %v367
    %v2488 = vunpack.c.h.b16 %v367
    %v2489 = vunpack.c.l.b16 %v368
    %v2490 = vunpack.c.h.b16 %v368
    %v2491 = vunpack.c.l.b16 %v369
    %v2492 = vunpack.c.l.b16 %v370
    %v2493 = vunpack.c.h.b16 %v370
    %v2494 = vunpack.c.l.b16 %v371
    %v2495 = vunpack.c.h.b16 %v371
    %v2496 = vunpack.c.l.b16 %v372
    %v2497 = vunpack.c.l.b16 %v373
    %v2498 = vunpack.c.h.b16 %v373
    %v2499 = vunpack.c.l.b16 %v374
    %v2500 = vunpack.c.h.b16 %v374
    %v2501 = vunpack.c.l.b16 %v375
    %v2502 = vunpack.c.l.b16 %v376
    %v2503 = vunpack.c.h.b16 %v376
    %v2504 = vunpack.c.l.b16 %v377
    %v2505 = vunpack.c.h.b16 %v377
    %v2506 = vunpack.c.l.b16 %v378
    %v2507 = vunpack.c.l.b16 %v379
    %v2508 = vunpack.c.h.b16 %v379
    %v2509 = vunpack.c.l.b16 %v380
    %v2510 = vunpack.c.h.b16 %v380
    %v2511 = vunpack.c.l.b16 %v381
    %v2512 = vunpack.c.l.b16 %v382
    %v2513 = vunpack.c.h.b16 %v382
    %v2514 = vunpack.c.l.b16 %v383
    %v2515 = vunpack.c.h.b16 %v383
    %v2516 = vunpack.c.l.b16 %v384
    %v2517 = vunpack.c.l.b16 %v385
    %v2518 = vunpack.c.h.b16 %v385
    %v2519 = vunpack.c.l.b16 %v386
    %v2520 = vunpack.c.h.b16 %v386
    %v2521 = vunpack.c.l.b16 %v387
    %v2522 = vunpack.c.l.b16 %v388
    %v2523 = vunpack.c.h.b16 %v388
    %v2524 = vunpack.c.l.b16 %v389
    %v2525 = vunpack.c.h.b16 %v389
    %v2526 = vunpack.c.l.b16 %v390
    %v2527 = vunpack.c.l.b16 %v391
    %v2528 = vunpack.c.h.b16 %v391
    %v2529 = vunpack.c.l.b16 %v392
    %v2530 = vunpack.c.h.b16 %v392
    %v2531 = vunpack.c.l.b16 %v393
    %v2532 = vunpack.c.l.b16 %v394
    %v2533 = vunpack.c.h.b16 %v394
    %v2534 = vunpack.c.l.b16 %v395
    %v2535 = vunpack.c.h.b16 %v395
    %v2536 = vunpack.c.l.b16 %v396
    %v2537 = vunpack.c.l.b16 %v397
    %v2538 = vunpack.c.h.b16 %v397
    %v2539 = vunpack.c.l.b16 %v398
    %v2540 = vunpack.c.h.b16 %v398
    %v2541 = vunpack.c.l.b16 %v399
    %v2542 = vunpack.c.l.b16 %v400
    %v2543 = vunpack.c.h.b16 %v400
    %v2544 = vunpack.c.l.b16 %v401
    %v2545 = vunpack.c.h.b16 %v401
    %v2546 = vunpack.c.l.b16 %v402
    %v2547 = vunpack.c.l.b16 %v403
    %v2548 = vunpack.c.h.b16 %v403
    %v2549 = vunpack.c.l.b16 %v404
    %v2550 = vunpack.c.h.b16 %v404
    %v2551 = vunpack.c.l.b16 %v405
    %v2552 = vunpack.c.l.b16 %v406
    %v2553 = vunpack.c.h.b16 %v406
    %v2554 = vunpack.c.l.b16 %v407
    %v2555 = vunpack.c.h.b16 %v407
    %v2556 = vunpack.c.l.b16 %v408
    %v2557 = vunpack.c.l.b16 %v409
    %v2558 = vunpack.c.h.b16 %v409
    %v2559 = vunpack.c.l.b16 %v410
    %v2560 = vunpack.c.h.b16 %v410
    %v2561 = vunpack.c.l.b16 %v411
    %v2562 = vunpack.c.l.b16 %v412
    %v2563 = vunpack.c.h.b16 %v412
    %v2564 = vunpack.c.l.b16 %v413
    %v2565 = vunpack.c.h.b16 %v413
    %v2566 = vunpack.c.l.b16 %v414
    %v2567 = vunpack.c.l.b16 %v415
    %v2568 = vunpack.c.h.b16 %v415
    %v2569 = vunpack.c.l.b16 %v416
    %v2570 = vunpack.c.h.b16 %v416
    %v2571 = vunpack.c.l.b16 %v417
    %v2572 = vunpack.c.l.b16 %v418
    %v2573 = vunpack.c.h.b16 %v418
    %v2574 = vunpack.c.l.b16 %v419
    %v2575 = vunpack.c.h.b16 %v419
    %v2576 = vunpack.c.l.b16 %v420
    %v2577 = vunpack.c.l.b16 %v421
    %v2578 = vunpack.c.h.b16 %v421
    %v2579 = vunpack.c.l.b16 %v422
    %v2580 = vunpack.c.h.b16 %v422
    %v2581 = vunpack.c.l.b16 %v423
    %v2582 = vunpack.c.l.b16 %v424
    %v2583 = vunpack.c.h.b16 %v424
    %v2584 = vunpack.c.l.b16 %v425
    %v2585 = vunpack.c.h.b16 %v425
    %v2586 = vunpack.c.l.b16 %v426
    %v2587 = vunpack.c.l.b16 %v427
    %v2588 = vunpack.c.h.b16 %v427
    %v2589 = vunpack.c.l.b16 %v428
    %v2590 = vunpack.c.h.b16 %v428
    %v2591 = vunpack.c.l.b16 %v429
    %v2592 = vunpack.c.l.b16 %v430
    %v2593 = vunpack.c.h.b16 %v430
    %v2594 = vunpack.c.l.b16 %v431
    %v2595 = vunpack.c.h.b16 %v431
    %v2596 = vunpack.c.l.b16 %v432
    %v2597 = vunpack.c.l.b16 %v433
    %v2598 = vunpack.c.h.b16 %v433
    %v2599 = vunpack.c.l.b16 %v434
    %v2600 = vunpack.c.h.b16 %v434
    %v2601 = vunpack.c.l.b16 %v435
    %v2602 = vunpack.c.l.b16 %v436
    %v2603 = vunpack.c.h.b16 %v436
    %v2604 = vunpack.c.l.b16 %v437
    %v2605 = vunpack.c.h.b16 %v437
    %v2606 = vunpack.c.l.b16 %v438
    %v2607 = vunpack.c.l.b16 %v439
    %v2608 = vunpack.c.h.b16 %v439
    %v2609 = vunpack.c.l.b16 %v440
    %v2610 = vunpack.c.h.b16 %v440
    %v2611 = vunpack.c.l.b16 %v441
    %v2612 = vunpack.c.l.b16 %v442
    %v2613 = vunpack.c.h.b16 %v442
    %v2614 = vunpack.c.l.b16 %v443
    %v2615 = vunpack.c.h.b16 %v443
    %v2616 = vunpack.c.l.b16 %v444
    %v2617 = vunpack.c.l.b16 %v445
    %v2618 = vunpack.c.h.b16 %v445
    %v2619 = vunpack.c.l.b16 %v446
    %v2620 = vunpack.c.h.b16 %v446
    %v2621 = vunpack.c.l.b16 %v447
    %v2622 = vunpack.c.l.b16 %v448
    %v2623 = vunpack.c.h.b16 %v448
    %v2624 = vunpack.c.l.b16 %v449
    %v2625 = vunpack.c.h.b16 %v449
    %v2626 = vunpack.c.l.b16 %v450
    %v2627 = vunpack.c.l.b16 %v451
    %v2628 = vunpack.c.h.b16 %v451
    %v2629 = vunpack.c.l.b16 %v452
    %v2630 = vunpack.c.h.b16 %v452
    %v2631 = vunpack.c.l.b16 %v453
    %v2632 = vunpack.c.l.b16 %v454
    %v2633 = vunpack.c.h.b16 %v454
    %v2634 = vunpack.c.l.b16 %v455
    %v2635 = vunpack.c.h.b16 %v455
    %v2636 = vunpack.c.l.b16 %v456
    %v2637 = vunpack.c.l.b16 %v457
    %v2638 = vunpack.c.h.b16 %v457
    %v2639 = vunpack.c.l.b16 %v458
    %v2640 = vunpack.c.h.b16 %v458
    %v2641 = vunpack.c.l.b16 %v459
    %v2642 = vunpack.c.l.b16 %v460
    %v2643 = vunpack.c.h.b16 %v460
    %v2644 = vunpack.c.l.b16 %v461
    %v2645 = vunpack.c.h.b16 %v461
    %v2646 = vunpack.c.l.b16 %v462
    %v2647 = vunpack.c.l.b16 %v463
    %v2648 = vunpack.c.h.b16 %v463
    %v2649 = vunpack.c.l.b16 %v464
    %v2650 = vunpack.c.h.b16 %v464
    %v2651 = vunpack.c.l.b16 %v465
    %v2652 = vunpack.c.l.b16 %v466
    %v2653 = vunpack.c.h.b16 %v466
    %v2654 = vunpack.c.l.b16 %v467
    %v2655 = vunpack.c.h.b16 %v467
    %v2656 = vunpack.c.l.b16 %v468
    %v2657 = vunpack.c.l.b16 %v469
    %v2658 = vunpack.c.h.b16 %v469
    %v2659 = vunpack.c.l.b16 %v470
    %v2660 = vunpack.c.h.b16 %v470
    %v2661 = vunpack.c.l.b16 %v471
    %v2662 = vunpack.c.l.b16 %v472
    %v2663 = vunpack.c.h.b16 %v472
    %v2664 = vunpack.c.l.b16 %v473
    %v2665 = vunpack.c.h.b16 %v473
    %v2666 = vunpack.c.l.b16 %v474
    %v2667 = vunpack.c.l.b16 %v475
    %v2668 = vunpack.c.h.b16 %v475
    %v2669 = vunpack.c.l.b16 %v476
    %v2670 = vunpack.c.h.b16 %v476
    %v2671 = vunpack.c.l.b16 %v477
    %v2672 = vunpack.c.l.b16 %v478
    %v2673 = vunpack.c.h.b16 %v478
    %v2674 = vunpack.c.l.b16 %v479
    %v2675 = vunpack.c.h.b16 %v479
    %v2676 = vunpack.c.l.b16 %v480
    %v2677 = vunpack.c.l.b16 %v481
    %v2678 = vunpack.c.h.b16 %v481
    %v2679 = vunpack.c.l.b16 %v482
    %v2680 = vunpack.c.h.b16 %v482
    %v2681 = vunpack.c.l.b16 %v483
    %v2682 = vunpack.c.l.b16 %v484
    %v2683 = vunpack.c.h.b16 %v484
    %v2684 = vunpack.c.l.b16 %v485
    %v2685 = vunpack.c.h.b16 %v485
    %v2686 = vunpack.c.l.b16 %v486
    %v2687 = vunpack.c.l.b16 %v487
    %v2688 = vunpack.c.h.b16 %v487
    %v2689 = vunpack.c.l.b16 %v488
    %v2690 = vunpack.c.h.b16 %v488
    %v2691 = vunpack.c.l.b16 %v489
    %v2692 = vunpack.c.l.b16 %v490
    %v2693 = vunpack.c.h.b16 %v490
    %v2694 = vunpack.c.l.b16 %v491
    %v2695 = vunpack.c.h.b16 %v491
    %v2696 = vunpack.c.l.b16 %v492
    %v2697 = vunpack.c.l.b16 %v493
    %v2698 = vunpack.c.h.b16 %v493
    %v2699 = vunpack.c.l.b16 %v494
    %v2700 = vunpack.c.h.b16 %v494
    %v2701 = vunpack.c.l.b16 %v495
    %v2702 = vunpack.c.l.b16 %v496
    %v2703 = vunpack.c.h.b16 %v496
    %v2704 = vunpack.c.l.b16 %v497
    %v2705 = vunpack.c.h.b16 %v497
    %v2706 = vunpack.c.l.b16 %v498
    %v2707 = vunpack.c.l.b16 %v499
    %v2708 = vunpack.c.h.b16 %v499
    %v2709 = vunpack.c.l.b16 %v500
    %v2710 = vunpack.c.h.b16 %v500
    %v2711 = vunpack.c.l.b16 %v501
    %v2712 = vunpack.c.l.b16 %v502
    %v2713 = vunpack.c.h.b16 %v502
    %v2714 = vunpack.c.l.b16 %v503
    %v2715 = vunpack.c.h.b16 %v503
    %v2716 = vunpack.c.l.b16 %v504
    %v2717 = vunpack.c.l.b16 %v505
    %v2718 = vunpack.c.h.b16 %v505
    %v2719 = vunpack.c.l.b16 %v506
    %v2720 = vunpack.c.h.b16 %v506
    %v2721 = vunpack.c.l.b16 %v507
    %v2722 = vunpack.c.l.b16 %v508
    %v2723 = vunpack.c.h.b16 %v508
    %v2724 = vunpack.c.l.b16 %v509
    %v2725 = vunpack.c.h.b16 %v509
    %v2726 = vunpack.c.l.b16 %v510
    %v2727 = vunpack.c.l.b16 %v511
    %v2728 = vunpack.c.h.b16 %v511
    %v2729 = vunpack.c.l.b16 %v512
    %v2730 = vunpack.c.h.b16 %v512
    %v2731 = vunpack.c.l.b16 %v513
    %v2732 = vunpack.c.l.b16 %v514
    %v2733 = vunpack.c.h.b16 %v514
    %v2734 = vunpack.c.l.b16 %v515
    %v2735 = vunpack.c.h.b16 %v515
    %v2736 = vunpack.c.l.b16 %v516
    %v2737 = vunpack.c.l.b16 %v517
    %v2738 = vunpack.c.h.b16 %v517
    %v2739 = vunpack.c.l.b16 %v518
    %v2740 = vunpack.c.h.b16 %v518
    %v2741 = vunpack.c.l.b16 %v519
    %v2742 = vunpack.c.l.b16 %v520
    %v2743 = vunpack.c.h.b16 %v520
    %v2744 = vunpack.c.l.b16 %v521
    %v2745 = vunpack.c.h.b16 %v521
    %v2746 = vunpack.c.l.b16 %v522
    %v2747 = vunpack.c.l.b16 %v523
    %v2748 = vunpack.c.h.b16 %v523
    %v2749 = vunpack.c.l.b16 %v524
    %v2750 = vunpack.c.h.b16 %v524
    %v2751 = vunpack.c.l.b16 %v525
    %v2752 = vunpack.c.l.b16 %v526
    %v2753 = vunpack.c.h.b16 %v526
    %v2754 = vunpack.c.l.b16 %v527
    %v2755 = vunpack.c.h.b16 %v527
    %v2756 = vunpack.c.l.b16 %v528
    %v2757 = vunpack.c.l.b16 %v529
    %v2758 = vunpack.c.h.b16 %v529
    %v2759 = vunpack.c.l.b16 %v530
    %v2760 = vunpack.c.h.b16 %v530
    %v2761 = vunpack.c.l.b16 %v531
    %v2762 = vunpack.c.l.b16 %v532
    %v2763 = vunpack.c.h.b16 %v532
    %v2764 = vunpack.c.l.b16 %v533
    %v2765 = vunpack.c.h.b16 %v533
    %v2766 = vunpack.c.l.b16 %v534
    %v2767 = vunpack.c.l.b16 %v535
    %v2768 = vunpack.c.h.b16 %v535
    %v2769 = vunpack.c.l.b16 %v536
    %v2770 = vunpack.c.h.b16 %v536
    %v2771 = vunpack.c.l.b16 %v537
    %v2772 = vunpack.c.l.b16 %v538
    %v2773 = vunpack.c.h.b16 %v538
    %v2774 = vunpack.c.l.b16 %v539
    %v2775 = vunpack.c.h.b16 %v539
    %v2776 = vunpack.c.l.b16 %v540
    %v2777 = vunpack.c.l.b16 %v541
    %v2778 = vunpack.c.h.b16 %v541
    %v2779 = vunpack.c.l.b16 %v542
    %v2780 = vunpack.c.h.b16 %v542
    %v2781 = vunpack.c.l.b16 %v543
    %v2782 = vunpack.c.l.b16 %v544
    %v2783 = vunpack.c.h.b16 %v544
    %v2784 = vunpack.c.l.b16 %v545
    %v2785 = vunpack.c.h.b16 %v545
    %v2786 = vunpack.c.l.b16 %v546
    %v2787 = vunpack.c.l.b16 %v547
    %v2788 = vunpack.c.h.b16 %v547
    %v2789 = vunpack.c.l.b16 %v548
    %v2790 = vunpack.c.h.b16 %v548
    %v2791 = vunpack.c.l.b16 %v549
    %v2792 = vunpack.c.l.b16 %v550
    %v2793 = vunpack.c.h.b16 %v550
    %v2794 = vunpack.c.l.b16 %v551
    %v2795 = vunpack.c.h.b16 %v551
    %v2796 = vunpack.c.l.b16 %v552
    %v2797 = vunpack.c.l.b16 %v553
    %v2798 = vunpack.c.h.b16 %v553
    %v2799 = vunpack.c.l.b16 %v554
    %v2800 = vunpack.c.h.b16 %v554
    %v2801 = vunpack.c.l.b16 %v555
    %v2802 = vunpack.c.l.b16 %v556
    %v2803 = vunpack.c.h.b16 %v556
    %v2804 = vunpack.c.l.b16 %v557
    %v2805 = vunpack.c.h.b16 %v557
    %v2806 = vunpack.c.l.b16 %v558
    %v2807 = vunpack.c.l.b16 %v559
    %v2808 = vunpack.c.h.b16 %v559
    %v2809 = vunpack.c.l.b16 %v560
    %v2810 = vunpack.c.h.b16 %v560
    %v2811 = vunpack.c.l.b16 %v561
    %v2812 = vunpack.c.l.b16 %v562
    %v2813 = vunpack.c.h.b16 %v562
    %v2814 = vunpack.c.l.b16 %v563
    %v2815 = vunpack.c.h.b16 %v563
    %v2816 = vunpack.c.l.b16 %v564
    %v2817 = vunpack.c.l.b16 %v565
    %v2818 = vunpack.c.h.b16 %v565
    %v2819 = vunpack.c.l.b16 %v566
    %v2820 = vunpack.c.h.b16 %v566
    %v2821 = vunpack.c.l.b16 %v567
    %v2822 = vunpack.c.l.b16 %v568
    %v2823 = vunpack.c.h.b16 %v568
    %v2824 = vunpack.c.l.b16 %v569
    %v2825 = vunpack.c.h.b16 %v569
    %v2826 = vunpack.c.l.b16 %v570
    %v2827 = vunpack.c.l.b16 %v571
    %v2828 = vunpack.c.h.b16 %v571
    %v2829 = vunpack.c.l.b16 %v572
    %v2830 = vunpack.c.h.b16 %v572
    %v2831 = vunpack.c.l.b16 %v573
    %v2832 = vunpack.c.l.b16 %v574
    %v2833 = vunpack.c.h.b16 %v574
    %v2834 = vunpack.c.l.b16 %v575
    %v2835 = vunpack.c.h.b16 %v575
    %v2836 = vunpack.c.l.b16 %v576
    %v2837 = vunpack.c.l.b16 %v577
    %v2838 = vunpack.c.h.b16 %v577
    %v2839 = vunpack.c.l.b16 %v578
    %v2840 = vunpack.c.h.b16 %v578
    %v2841 = vunpack.c.l.b16 %v579
    %v2842 = vunpack.c.l.b16 %v580
    %v2843 = vunpack.c.h.b16 %v580
    %v2844 = vunpack.c.l.b16 %v581
    %v2845 = vunpack.c.h.b16 %v581
    %v2846 = vunpack.c.l.b16 %v582
    %v2847 = vunpack.c.l.b16 %v583
    %v2848 = vunpack.c.h.b16 %v583
    %v2849 = vunpack.c.l.b16 %v584
    %v2850 = vunpack.c.h.b16 %v584
    %v2851 = vunpack.c.l.b16 %v585
    %v2852 = vunpack.c.l.b16 %v586
    %v2853 = vunpack.c.h.b16 %v586
    %v2854 = vunpack.c.l.b16 %v587
    %v2855 = vunpack.c.h.b16 %v587
    %v2856 = vunpack.c.l.b16 %v588
    %v2857 = vunpack.c.l.b16 %v589
    %v2858 = vunpack.c.h.b16 %v589
    %v2859 = vunpack.c.l.b16 %v590
    %v2860 = vunpack.c.h.b16 %v590
    %v2861 = vunpack.c.l.b16 %v591
    %v2862 = vunpack.c.l.b16 %v592
    %v2863 = vunpack.c.h.b16 %v592
    %v2864 = vunpack.c.l.b16 %v593
    %v2865 = vunpack.c.h.b16 %v593
    %v2866 = vunpack.c.l.b16 %v594
    %v2867 = vunpack.c.l.b16 %v595
    %v2868 = vunpack.c.h.b16 %v595
    %v2869 = vunpack.c.l.b16 %v596
    %v2870 = vunpack.c.h.b16 %v596
    %v2871 = vunpack.c.l.b16 %v597
    %v2872 = vunpack.c.l.b16 %v598
    %v2873 = vunpack.c.h.b16 %v598
    %v2874 = vunpack.c.l.b16 %v599
    %v2875 = vunpack.c.h.b16 %v599
    %v2876 = vunpack.c.l.b16 %v600
    %v2877 = vunpack.c.l.b16 %v601
    %v2878 = vunpack.c.h.b16 %v601
    %v2879 = vunpack.c.l.b16 %v602
    %v2880 = vunpack.c.h.b16 %v602
    %v2881 = vunpack.c.l.b16 %v603
    %v2882 = vunpack.c.l.b16 %v604
    %v2883 = vunpack.c.h.b16 %v604
    %v2884 = vunpack.c.l.b16 %v605
    %v2885 = vunpack.c.h.b16 %v605
    %v2886 = vunpack.c.l.b16 %v606
    %v2887 = vunpack.c.l.b16 %v607
    %v2888 = vunpack.c.h.b16 %v607
    %v2889 = vunpack.c.l.b16 %v608
    %v2890 = vunpack.c.h.b16 %v608
    %v2891 = vunpack.c.l.b16 %v609
    %v2892 = vunpack.c.l.b16 %v610
    %v2893 = vunpack.c.h.b16 %v610
    %v2894 = vunpack.c.l.b16 %v611
    %v2895 = vunpack.c.h.b16 %v611
    %v2896 = vunpack.c.l.b16 %v612
    %v2897 = vunpack.c.l.b16 %v613
    %v2898 = vunpack.c.h.b16 %v613
    %v2899 = vunpack.c.l.b16 %v614
    %v2900 = vunpack.c.h.b16 %v614
    %v2901 = vunpack.c.l.b16 %v615
    %v2902 = vunpack.c.l.b16 %v616
    %v2903 = vunpack.c.h.b16 %v616
    %v2904 = vunpack.c.l.b16 %v617
    %v2905 = vunpack.c.h.b16 %v617
    %v2906 = vunpack.c.l.b16 %v618
    %v2907 = vunpack.c.l.b16 %v619
    %v2908 = vunpack.c.h.b16 %v619
    %v2909 = vunpack.c.l.b16 %v620
    %v2910 = vunpack.c.h.b16 %v620
    %v2911 = vunpack.c.l.b16 %v621
    %v2912 = vunpack.c.l.b16 %v622
    %v2913 = vunpack.c.h.b16 %v622
    %v2914 = vunpack.c.l.b16 %v623
    %v2915 = vunpack.c.h.b16 %v623
    %v2916 = vunpack.c.l.b16 %v624
    %v2917 = vunpack.c.l.b16 %v625
    %v2918 = vunpack.c.h.b16 %v625
    %v2919 = vunpack.c.l.b16 %v626
    %v2920 = vunpack.c.h.b16 %v626
    %v2921 = vunpack.c.l.b16 %v627
    %v2922 = vunpack.c.l.b16 %v628
    %v2923 = vunpack.c.h.b16 %v628
    %v2924 = vunpack.c.l.b16 %v629
    %v2925 = vunpack.c.h.b16 %v629
    %v2926 = vunpack.c.l.b16 %v630
    %v2927 = vunpack.c.l.b16 %v631
    %v2928 = vunpack.c.h.b16 %v631
    %v2929 = vunpack.c.l.b16 %v632
    %v2930 = vunpack.c.h.b16 %v632
    %v2931 = vunpack.c.l.b16 %v633
    %v2932 = vunpack.c.l.b16 %v634
    %v2933 = vunpack.c.h.b16 %v634
    %v2934 = vunpack.c.l.b16 %v635
    %v2935 = vunpack.c.h.b16 %v635
    %v2936 = vunpack.c.l.b16 %v636
    %v2937 = vunpack.c.l.b16 %v637
    %v2938 = vunpack.c.h.b16 %v637
    %v2939 = vunpack.c.l.b16 %v638
    %v2940 = vunpack.c.h.b16 %v638
    %v2941 = vunpack.c.l.b16 %v639
    %v2942 = vunpack.c.l.b16 %v640
    %v2943 = vunpack.c.h.b16 %v640
    %v2944 = vunpack.c.l.b16 %v641
    %v2945 = vunpack.c.h.b16 %v641
    %v2946 = vunpack.c.l.b16 %v642
    %v2947 = vunpack.c.l.b16 %v643
    %v2948 = vunpack.c.h.b16 %v643
    %v2949 = vunpack.c.l.b16 %v644
    %v2950 = vunpack.c.h.b16 %v644
    %v2951 = vunpack.c.l.b16 %v645
    %v2952 = vunpack.c.l.b16 %v646
    %v2953 = vunpack.c.h.b16 %v646
    %v2954 = vunpack.c.l.b16 %v647
    %v2955 = vunpack.c.h.b16 %v647
    %v2956 = vunpack.c.l.b16 %v648
    %v2957 = vunpack.c.l.b16 %v649
    %v2958 = vunpack.c.h.b16 %v649
    %v2959 = vunpack.c.l.b16 %v650
    %v2960 = vunpack.c.h.b16 %v650
    %v2961 = vunpack.c.l.b16 %v651
    %v2962 = vunpack.c.l.b16 %v652
    %v2963 = vunpack.c.h.b16 %v652
    %v2964 = vunpack.c.l.b16 %v653
    %v2965 = vunpack.c.h.b16 %v653
    %v2966 = vunpack.c.l.b16 %v654
    %v2967 = vunpack.c.l.b16 %v655
    %v2968 = vunpack.c.h.b16 %v655
    %v2969 = vunpack.c.l.b16 %v656
    %v2970 = vunpack.c.h.b16 %v656
    %v2971 = vunpack.c.l.b16 %v657
    %v2972 = vunpack.c.l.b16 %v658
    %v2973 = vunpack.c.h.b16 %v658
    %v2974 = vunpack.c.l.b16 %v659
    %v2975 = vunpack.c.h.b16 %v659
    %v2976 = vunpack.c.l.b16 %v660
    %v2977 = vunpack.c.l.b16 %v661
    %v2978 = vunpack.c.h.b16 %v661
    %v2979 = vunpack.c.l.b16 %v662
    %v2980 = vunpack.c.h.b16 %v662
    %v2981 = vunpack.c.l.b16 %v663
    %v2982 = vunpack.c.l.b16 %v664
    %v2983 = vunpack.c.h.b16 %v664
    %v2984 = vunpack.c.l.b16 %v665
    %v2985 = vunpack.c.h.b16 %v665
    %v2986 = vunpack.c.l.b16 %v666
    %v2987 = vunpack.c.l.b16 %v667
    %v2988 = vunpack.c.h.b16 %v667
    %v2989 = vunpack.c.l.b16 %v668
    %v2990 = vunpack.c.h.b16 %v668
    %v2991 = vunpack.c.l.b16 %v669
    %v2992 = vunpack.c.l.b16 %v670
    %v2993 = vunpack.c.h.b16 %v670
    %v2994 = vunpack.c.l.b16 %v671
    %v2995 = vunpack.c.h.b16 %v671
    %v2996 = vunpack.c.l.b16 %v672
    %v2997 = vunpack.c.l.b16 %v673
    %v2998 = vunpack.c.h.b16 %v673
    %v2999 = vunpack.c.l.b16 %v674
    %v3000 = vunpack.c.h.b16 %v674
    %v3001 = vunpack.c.l.b16 %v675
    %v3002 = vunpack.c.l.b16 %v676
    %v3003 = vunpack.c.h.b16 %v676
    %v3004 = vunpack.c.l.b16 %v677
    %v3005 = vunpack.c.h.b16 %v677
    %v3006 = vunpack.c.l.b16 %v678
    %v3007 = vunpack.c.l.b16 %v679
    %v3008 = vunpack.c.h.b16 %v679
    %v3009 = vunpack.c.l.b16 %v680
    %v3010 = vunpack.c.h.b16 %v680
    %v3011 = vunpack.c.l.b16 %v681
    %v3012 = vunpack.c.l.b16 %v682
    %v3013 = vunpack.c.h.b16 %v682
    %v3014 = vunpack.c.l.b16 %v683
    %v3015 = vunpack.c.h.b16 %v683
    %v3016 = vunpack.c.l.b16 %v684
    %v3017 = vunpack.c.l.b16 %v685
    %v3018 = vunpack.c.h.b16 %v685
    %v3019 = vunpack.c.l.b16 %v686
    %v3020 = vunpack.c.h.b16 %v686
    %v3021 = vunpack.c.l.b16 %v687
    %v3022 = vunpack.c.l.b16 %v688
    %v3023 = vunpack.c.h.b16 %v688
    %v3024 = vunpack.c.l.b16 %v689
    %v3025 = vunpack.c.h.b16 %v689
    %v3026 = vunpack.c.l.b16 %v690
    %v3027 = vunpack.c.l.b16 %v691
    %v3028 = vunpack.c.h.b16 %v691
    %v3029 = vunpack.c.l.b16 %v692
    %v3030 = vunpack.c.h.b16 %v692
    %v3031 = vunpack.c.l.b16 %v693
    %v3032 = vunpack.c.l.b16 %v694
    %v3033 = vunpack.c.h.b16 %v694
    %v3034 = vunpack.c.l.b16 %v695
    %v3035 = vunpack.c.h.b16 %v695
    %v3036 = vunpack.c.l.b16 %v696
    %v3037 = vunpack.c.l.b16 %v697
    %v3038 = vunpack.c.h.b16 %v697
    %v3039 = vunpack.c.l.b16 %v698
    %v3040 = vunpack.c.h.b16 %v698
    %v3041 = vunpack.c.l.b16 %v699
    %v3042 = vunpack.c.l.b16 %v700
    %v3043 = vunpack.c.h.b16 %v700
    %v3044 = vunpack.c.l.b16 %v701
    %v3045 = vunpack.c.h.b16 %v701
    %v3046 = vunpack.c.l.b16 %v702
    %v3047 = vunpack.c.l.b16 %v703
    %v3048 = vunpack.c.h.b16 %v703
    %v3049 = vunpack.c.l.b16 %v704
    %v3050 = vunpack.c.h.b16 %v704
    %v3051 = vunpack.c.l.b16 %v705
    %v3052 = vunpack.c.l.b16 %v706
    %v3053 = vunpack.c.h.b16 %v706
    %v3054 = vunpack.c.l.b16 %v707
    %v3055 = vunpack.c.h.b16 %v707
    %v3056 = vunpack.c.l.b16 %v708
    %v3057 = vunpack.c.l.b16 %v709
    %v3058 = vunpack.c.h.b16 %v709
    %v3059 = vunpack.c.l.b16 %v710
    %v3060 = vunpack.c.h.b16 %v710
    %v3061 = vunpack.c.l.b16 %v711
    %v3062 = vunpack.c.l.b16 %v712
    %v3063 = vunpack.c.h.b16 %v712
    %v3064 = vunpack.c.l.b16 %v713
    %v3065 = vunpack.c.h.b16 %v713
    %v3066 = vunpack.c.l.b16 %v714
    %v3067 = vunpack.c.l.b16 %v715
    %v3068 = vunpack.c.h.b16 %v715
    %v3069 = vunpack.c.l.b16 %v716
    %v3070 = vunpack.c.h.b16 %v716
    %v3071 = vunpack.c.l.b16 %v717
    %v3072 = vunpack.c.l.b16 %v718
    %v3073 = vunpack.c.h.b16 %v718
    %v3074 = vunpack.c.l.b16 %v719
    %v3075 = vunpack.c.h.b16 %v719
    %v3076 = vunpack.c.l.b16 %v720
    %v3077 = vunpack.c.l.b16 %v721
    %v3078 = vunpack.c.h.b16 %v721
    %v3079 = vunpack.c.l.b16 %v722
    %v3080 = vunpack.c.h.b16 %v722
    %v3081 = vunpack.c.l.b16 %v723
    %v3082 = vunpack.c.l.b16 %v724
    %v3083 = vunpack.c.h.b16 %v724
    %v3084 = vunpack.c.l.b16 %v725
    %v3085 = vunpack.c.h.b16 %v725
    %v3086 = vunpack.c.l.b16 %v726
    %v3087 = vunpack.c.l.b16 %v727
    %v3088 = vunpack.c.h.b16 %v727
    %v3089 = vunpack.c.l.b16 %v728
    %v3090 = vunpack.c.h.b16 %v728
    %v3091 = vunpack.c.l.b16 %v729
    %v3092 = vunpack.c.l.b16 %v730
    %v3093 = vunpack.c.h.b16 %v730
    %v3094 = vunpack.c.l.b16 %v731
    %v3095 = vunpack.c.h.b16 %v731
    %v3096 = vunpack.c.l.b16 %v732
    %v3097 = vunpack.c.l.b16 %v733
    %v3098 = vunpack.c.h.b16 %v733
    %v3099 = vunpack.c.l.b16 %v734
    %v3100 = vunpack.c.h.b16 %v734
    %v3101 = vunpack.c.l.b16 %v735
    %v3102 = vunpack.c.l.b16 %v736
    %v3103 = vunpack.c.h.b16 %v736
    %v3104 = vunpack.c.l.b16 %v737
    %v3105 = vunpack.c.h.b16 %v737
    %v3106 = vunpack.c.l.b16 %v738
    %v3107 = vunpack.c.l.b16 %v739
    %v3108 = vunpack.c.h.b16 %v739
    %v3109 = vunpack.c.l.b16 %v740
    %v3110 = vunpack.c.h.b16 %v740
    %v3111 = vunpack.c.l.b16 %v741
    %v3112 = vunpack.c.l.b16 %v742
    %v3113 = vunpack.c.h.b16 %v742
    %v3114 = vunpack.c.l.b16 %v743
    %v3115 = vunpack.c.h.b16 %v743
    %v3116 = vunpack.c.l.b16 %v744
    %v3117 = vunpack.c.l.b16 %v745
    %v3118 = vunpack.c.h.b16 %v745
    %v3119 = vunpack.c.l.b16 %v746
    %v3120 = vunpack.c.h.b16 %v746
    %v3121 = vunpack.c.l.b16 %v747
    %v3122 = vunpack.c.l.b16 %v748
    %v3123 = vunpack.c.h.b16 %v748
    %v3124 = vunpack.c.l.b16 %v749
    %v3125 = vunpack.c.h.b16 %v749
    %v3126 = vunpack.c.l.b16 %v750
    %v3127 = vunpack.c.l.b16 %v751
    %v3128 = vunpack.c.h.b16 %v751
    %v3129 = vunpack.c.l.b16 %v752
    %v3130 = vunpack.c.h.b16 %v752
    %v3131 = vunpack.c.l.b16 %v753
    %v3132 = vunpack.c.l.b16 %v754
    %v3133 = vunpack.c.h.b16 %v754
    %v3134 = vunpack.c.l.b16 %v755
    %v3135 = vunpack.c.h.b16 %v755
    %v3136 = vunpack.c.l.b16 %v756
    %v3137 = vunpack.c.l.b16 %v757
    %v3138 = vunpack.c.h.b16 %v757
    %v3139 = vunpack.c.l.b16 %v758
    %v3140 = vunpack.c.h.b16 %v758
    %v3141 = vunpack.c.l.b16 %v759
    %v3142 = vunpack.c.l.b16 %v760
    %v3143 = vunpack.c.h.b16 %v760
    %v3144 = vunpack.c.l.b16 %v761
    %v3145 = vunpack.c.h.b16 %v761
    %v3146 = vunpack.c.l.b16 %v762
    %v3147 = vunpack.c.l.b16 %v763
    %v3148 = vunpack.c.h.b16 %v763
    %v3149 = vunpack.c.l.b16 %v764
    %v3150 = vunpack.c.h.b16 %v764
    %v3151 = vunpack.c.l.b16 %v765
    %v3152 = vunpack.c.l.b16 %v766
    %v3153 = vunpack.c.h.b16 %v766
    %v3154 = vunpack.c.l.b16 %v767
    %v3155 = vunpack.c.h.b16 %v767
    %v3156 = vunpack.c.l.b16 %v768
    %v3157 = vunpack.c.l.b16 %v769
    %v3158 = vunpack.c.h.b16 %v769
    %v3159 = vunpack.c.l.b16 %v770
    %v3160 = vunpack.c.h.b16 %v770
    %v3161 = vunpack.c.l.b16 %v771
    %v3162 = vunpack.c.l.b16 %v772
    %v3163 = vunpack.c.h.b16 %v772
    %v3164 = vunpack.c.l.b16 %v773
    %v3165 = vunpack.c.h.b16 %v773
    %v3166 = vunpack.c.l.b16 %v774
    %v3167 = vunpack.c.l.b16 %v775
    %v3168 = vunpack.c.h.b16 %v775
    %v3169 = vunpack.c.l.b16 %v776
    %v3170 = vunpack.c.h.b16 %v776
    %v3171 = vunpack.c.l.b16 %v777
    %v3172 = vunpack.c.l.b16 %v778
    %v3173 = vunpack.c.h.b16 %v778
    %v3174 = vunpack.c.l.b16 %v779
    %v3175 = vunpack.c.h.b16 %v779
    %v3176 = vunpack.c.l.b16 %v780
    %v3177 = vunpack.c.l.b16 %v781
    %v3178 = vunpack.c.h.b16 %v781
    %v3179 = vunpack.c.l.b16 %v782
    %v3180 = vunpack.c.h.b16 %v782
    %v3181 = vunpack.c.l.b16 %v783
    %v3182 = vunpack.c.l.b16 %v784
    %v3183 = vunpack.c.h.b16 %v784
    %v3184 = vunpack.c.l.b16 %v785
    %v3185 = vunpack.c.h.b16 %v785
    %v3186 = vunpack.c.l.b16 %v786
    %v3187 = vunpack.c.l.b16 %v787
    %v3188 = vunpack.c.h.b16 %v787
    %v3189 = vunpack.c.l.b16 %v788
    %v3190 = vunpack.c.h.b16 %v788
    %v3191 = vunpack.c.l.b16 %v789
    %v3192 = vunpack.c.l.b16 %v790
    %v3193 = vunpack.c.h.b16 %v790
    %v3194 = vunpack.c.l.b16 %v791
    %v3195 = vunpack.c.h.b16 %v791
    %v3196 = vunpack.c.l.b16 %v792
    %v3197 = vunpack.c.l.b16 %v793
    %v3198 = vunpack.c.h.b16 %v793
    %v3199 = vunpack.c.l.b16 %v794
    %v3200 = vunpack.c.h.b16 %v794
    %v3201 = vunpack.c.l.b16 %v795
    %v3202 = vunpack.c.l.b16 %v796
    %v3203 = vunpack.c.h.b16 %v796
    %v3204 = vunpack.c.l.b16 %v797
    %v3205 = vunpack.c.h.b16 %v797
    %v3206 = vunpack.c.l.b16 %v798
    %v3207 = vunpack.c.l.b16 %v799
    %v3208 = vunpack.c.h.b16 %v799
    %v3209 = vunpack.c.l.b16 %v800
    %v3210 = vunpack.c.h.b16 %v800
    %v3211 = vunpack.c.l.b16 %v801
    %v3212 = vunpack.c.l.b16 %v802
    %v3213 = vunpack.c.h.b16 %v802
    %v3214 = vunpack.c.l.b16 %v803
    %v3215 = vunpack.c.h.b16 %v803
    %v3216 = vunpack.c.l.b16 %v804
    %v3217 = vunpack.c.l.b16 %v805
    %v3218 = vunpack.c.h.b16 %v805
    %v3219 = vunpack.c.l.b16 %v806
    %v3220 = vunpack.c.h.b16 %v806
    %v3221 = vunpack.c.l.b16 %v807
    %v3222 = vunpack.c.l.b16 %v808
    %v3223 = vunpack.c.h.b16 %v808
    %v3224 = vunpack.c.l.b16 %v809
    %v3225 = vunpack.c.h.b16 %v809
    %v3226 = vunpack.c.l.b16 %v810
    %v3227 = vunpack.c.l.b16 %v811
    %v3228 = vunpack.c.h.b16 %v811
    %v3229 = vunpack.c.l.b16 %v812
    %v3230 = vunpack.c.h.b16 %v812
    %v3231 = vunpack.c.l.b16 %v813
    %v3232 = vunpack.c.l.b16 %v814
    %v3233 = vunpack.c.h.b16 %v814
    %v3234 = vunpack.c.l.b16 %v815
    %v3235 = vunpack.c.h.b16 %v815
    %v3236 = vunpack.c.l.b16 %v816
    %v3237 = vunpack.c.l.b16 %v817
    %v3238 = vunpack.c.h.b16 %v817
    %v3239 = vunpack.c.l.b16 %v818
    %v3240 = vunpack.c.h.b16 %v818
    %v3241 = vunpack.c.l.b16 %v819
    %v3242 = vunpack.c.l.b16 %v820
    %v3243 = vunpack.c.h.b16 %v820
    %v3244 = vunpack.c.l.b16 %v821
    %v3245 = vunpack.c.h.b16 %v821
    %v3246 = vunpack.c.l.b16 %v822
    %v3247 = vunpack.c.l.b16 %v823
    %v3248 = vunpack.c.h.b16 %v823
    %v3249 = vunpack.c.l.b16 %v824
    %v3250 = vunpack.c.h.b16 %v824
    %v3251 = vunpack.c.l.b16 %v825
    %v3252 = vunpack.c.l.b16 %v826
    %v3253 = vunpack.c.h.b16 %v826
    %v3254 = vunpack.c.l.b16 %v827
    %v3255 = vunpack.c.h.b16 %v827
    %v3256 = vunpack.c.l.b16 %v828
    %v3257 = vunpack.c.l.b16 %v829
    %v3258 = vunpack.c.h.b16 %v829
    %v3259 = vunpack.c.l.b16 %v830
    %v3260 = vunpack.c.h.b16 %v830
    %v3261 = vunpack.c.l.b16 %v831
    %v3262 = vunpack.c.l.b16 %v832
    %v3263 = vunpack.c.h.b16 %v832
    %v3264 = vunpack.c.l.b16 %v833
    %v3265 = vunpack.c.h.b16 %v833
    %v3266 = vunpack.c.l.b16 %v834
    %v3267 = vunpack.c.l.b16 %v835
    %v3268 = vunpack.c.h.b16 %v835
    %v3269 = vunpack.c.l.b16 %v836
    %v3270 = vunpack.c.h.b16 %v836
    %v3271 = vunpack.c.l.b16 %v837
    %v3272 = vunpack.c.l.b16 %v838
    %v3273 = vunpack.c.h.b16 %v838
    %v3274 = vunpack.c.l.b16 %v839
    %v3275 = vunpack.c.h.b16 %v839
    %v3276 = vunpack.c.l.b16 %v840
    %v3277 = vunpack.c.l.b16 %v841
    %v3278 = vunpack.c.h.b16 %v841
    %v3279 = vunpack.c.l.b16 %v842
    %v3280 = vunpack.c.h.b16 %v842
    %v3281 = vunpack.c.l.b16 %v843
    %v3282 = vunpack.c.l.b16 %v844
    %v3283 = vunpack.c.h.b16 %v844
    %v3284 = vunpack.c.l.b16 %v845
    %v3285 = vunpack.c.h.b16 %v845
    %v3286 = vunpack.c.l.b16 %v846
    %v3287 = vunpack.c.l.b16 %v847
    %v3288 = vunpack.c.h.b16 %v847
    %v3289 = vunpack.c.l.b16 %v848
    %v3290 = vunpack.c.h.b16 %v848
    %v3291 = vunpack.c.l.b16 %v849
    %v3292 = vunpack.c.l.b16 %v850
    %v3293 = vunpack.c.h.b16 %v850
    %v3294 = vunpack.c.l.b16 %v851
    %v3295 = vunpack.c.h.b16 %v851
    %v3296 = vunpack.c.l.b16 %v852
    %v3297 = vunpack.c.l.b16 %v853
    %v3298 = vunpack.c.h.b16 %v853
    %v3299 = vunpack.c.l.b16 %v854
    %v3300 = vunpack.c.h.b16 %v854
    %v3301 = vunpack.c.l.b16 %v855
    %v3302 = vunpack.c.l.b16 %v856
    %v3303 = vunpack.c.h.b16 %v856
    %v3304 = vunpack.c.l.b16 %v857
    %v3305 = vunpack.c.h.b16 %v857
    %v3306 = vunpack.c.l.b16 %v858
    %v3307 = vunpack.c.l.b16 %v859
    %v3308 = vunpack.c.h.b16 %v859
    %v3309 = vunpack.c.l.b16 %v860
    %v3310 = vunpack.c.h.b16 %v860
    %v3311 = vunpack.c.l.b16 %v861
    %v3312 = vunpack.c.l.b16 %v862
    %v3313 = vunpack.c.h.b16 %v862
    %v3314 = vunpack.c.l.b16 %v863
    %v3315 = vunpack.c.h.b16 %v863
    %v3316 = vunpack.c.l.b16 %v864
    %v3317 = vunpack.c.l.b16 %v865
    %v3318 = vunpack.c.h.b16 %v865
    %v3319 = vunpack.c.l.b16 %v866
    %v3320 = vunpack.c.h.b16 %v866
    %v3321 = vunpack.c.l.b16 %v867
    %v3322 = vunpack.c.l.b16 %v868
    %v3323 = vunpack.c.h.b16 %v868
    %v3324 = vunpack.c.l.b16 %v869
    %v3325 = vunpack.c.h.b16 %v869
    %v3326 = vunpack.c.l.b16 %v870
    %v3327 = vunpack.c.l.b16 %v871
    %v3328 = vunpack.c.h.b16 %v871
    %v3329 = vunpack.c.l.b16 %v872
    %v3330 = vunpack.c.h.b16 %v872
    %v3331 = vunpack.c.l.b16 %v873
    %v3332 = vunpack.c.l.b16 %v874
    %v3333 = vunpack.c.h.b16 %v874
    %v3334 = vunpack.c.l.b16 %v875
    %v3335 = vunpack.c.h.b16 %v875
    %v3336 = vunpack.c.l.b16 %v876
    %v3337 = vunpack.c.l.b16 %v877
    %v3338 = vunpack.c.h.b16 %v877
    %v3339 = vunpack.c.l.b16 %v878
    %v3340 = vunpack.c.h.b16 %v878
    %v3341 = vunpack.c.l.b16 %v879
    %v3342 = vunpack.c.l.b16 %v880
    %v3343 = vunpack.c.h.b16 %v880
    %v3344 = vunpack.c.l.b16 %v881
    %v3345 = vunpack.c.h.b16 %v881
    %v3346 = vunpack.c.l.b16 %v882
    %v3347 = vunpack.c.l.b16 %v883
    %v3348 = vunpack.c.h.b16 %v883
    %v3349 = vunpack.c.l.b16 %v884
    %v3350 = vunpack.c.h.b16 %v884
    %v3351 = vunpack.c.l.b16 %v885
    %v3352 = vunpack.c.l.b16 %v886
    %v3353 = vunpack.c.h.b16 %v886
    %v3354 = vunpack.c.l.b16 %v887
    %v3355 = vunpack.c.h.b16 %v887
    %v3356 = vunpack.c.l.b16 %v888
    %v3357 = vunpack.c.l.b16 %v889
    %v3358 = vunpack.c.h.b16 %v889
    %v3359 = vunpack.c.l.b16 %v890
    %v3360 = vunpack.c.h.b16 %v890
    %v3361 = vunpack.c.l.b16 %v891
    %v3362 = vunpack.c.l.b16 %v892
    %v3363 = vunpack.c.h.b16 %v892
    %v3364 = vunpack.c.l.b16 %v893
    %v3365 = vunpack.c.h.b16 %v893
    %v3366 = vunpack.c.l.b16 %v894
    %v3367 = vpack.c.b16 %v1932, %v1927
    %v3368 = vpack.c.b16 %v1933, %v1928
    %v3369 = vpack.c.b16 %v1934, %v1929
    %v3370 = vpack.c.b16 %v1935, %v1930
    %v3371 = vpack.c.b16 %v1936, %v1931
    %v3372 = vpack.c.b16 %v1942, %v1937
    %v3373 = vpack.c.b16 %v1943, %v1938
    %v3374 = vpack.c.b16 %v1944, %v1939
    %v3375 = vpack.c.b16 %v1945, %v1940
    %v3376 = vpack.c.b16 %v1946, %v1941
    %v3377 = vpack.c.b16 %v1952, %v1947
    %v3378 = vpack.c.b16 %v1953, %v1948
    %v3379 = vpack.c.b16 %v1954, %v1949
    %v3380 = vpack.c.b16 %v1955, %v1950
    %v3381 = vpack.c.b16 %v1956, %v1951
    %v3382 = vpack.c.b16 %v1962, %v1957
    %v3383 = vpack.c.b16 %v1963, %v1958
    %v3384 = vpack.c.b16 %v1964, %v1959
    %v3385 = vpack.c.b16 %v1965, %v1960
    %v3386 = vpack.c.b16 %v1966, %v1961
    %v3387 = vpack.c.b16 %v1972, %v1967
    %v3388 = vpack.c.b16 %v1973, %v1968
    %v3389 = vpack.c.b16 %v1974, %v1969
    %v3390 = vpack.c.b16 %v1975, %v1970
    %v3391 = vpack.c.b16 %v1976, %v1971
    %v3392 = vpack.c.b16 %v1982, %v1977
    %v3393 = vpack.c.b16 %v1983, %v1978
    %v3394 = vpack.c.b16 %v1984, %v1979
    %v3395 = vpack.c.b16 %v1985, %v1980
    %v3396 = vpack.c.b16 %v1986, %v1981
    %v3397 = vpack.c.b16 %v1992, %v1987
    %v3398 = vpack.c.b16 %v1993, %v1988
    %v3399 = vpack.c.b16 %v1994, %v1989
    %v3400 = vpack.c.b16 %v1995, %v1990
    %v3401 = vpack.c.b16 %v1996, %v1991
    %v3402 = vpack.c.b16 %v2002, %v1997
    %v3403 = vpack.c.b16 %v2003, %v1998
    %v3404 = vpack.c.b16 %v2004, %v1999
    %v3405 = vpack.c.b16 %v2005, %v2000
    %v3406 = vpack.c.b16 %v2006, %v2001
    %v3407 = vpack.c.b16 %v2012, %v2007
    %v3408 = vpack.c.b16 %v2013, %v2008
    %v3409 = vpack.c.b16 %v2014, %v2009
    %v3410 = vpack.c.b16 %v2015, %v2010
    %v3411 = vpack.c.b16 %v2016, %v2011
    %v3412 = vpack.c.b16 %v2022, %v2017
    %v3413 = vpack.c.b16 %v2023, %v2018
    %v3414 = vpack.c.b16 %v2024, %v2019
    %v3415 = vpack.c.b16 %v2025, %v2020
    %v3416 = vpack.c.b16 %v2026, %v2021
    %v3417 = vpack.c.b16 %v2032, %v2027
    %v3418 = vpack.c.b16 %v2033, %v2028
    %v3419 = vpack.c.b16 %v2034, %v2029
    %v3420 = vpack.c.b16 %v2035, %v2030
    %v3421 = vpack.c.b16 %v2036, %v2031
    %v3422 = vpack.c.b16 %v2042, %v2037
    %v3423 = vpack.c.b16 %v2043, %v2038
    %v3424 = vpack.c.b16 %v2044, %v2039
    %v3425 = vpack.c.b16 %v2045, %v2040
    %v3426 = vpack.c.b16 %v2046, %v2041
    %v3427 = vpack.c.b16 %v2052, %v2047
    %v3428 = vpack.c.b16 %v2053, %v2048
    %v3429 = vpack.c.b16 %v2054, %v2049
    %v3430 = vpack.c.b16 %v2055, %v2050
    %v3431 = vpack.c.b16 %v2056, %v2051
    %v3432 = vpack.c.b16 %v2062, %v2057
    %v3433 = vpack.c.b16 %v2063, %v2058
    %v3434 = vpack.c.b16 %v2064, %v2059
    %v3435 = vpack.c.b16 %v2065, %v2060
    %v3436 = vpack.c.b16 %v2066, %v2061
    %v3437 = vpack.c.b16 %v2072, %v2067
    %v3438 = vpack.c.b16 %v2073, %v2068
    %v3439 = vpack.c.b16 %v2074, %v2069
    %v3440 = vpack.c.b16 %v2075, %v2070
    %v3441 = vpack.c.b16 %v2076, %v2071
    %v3442 = vpack.c.b16 %v2082, %v2077
    %v3443 = vpack.c.b16 %v2083, %v2078
    %v3444 = vpack.c.b16 %v2084, %v2079
    %v3445 = vpack.c.b16 %v2085, %v2080
    %v3446 = vpack.c.b16 %v2086, %v2081
    %v3447 = vpack.c.b16 %v2092, %v2087
    %v3448 = vpack.c.b16 %v2093, %v2088
    %v3449 = vpack.c.b16 %v2094, %v2089
    %v3450 = vpack.c.b16 %v2095, %v2090
    %v3451 = vpack.c.b16 %v2096, %v2091
    %v3452 = vpack.c.b16 %v2102, %v2097
    %v3453 = vpack.c.b16 %v2103, %v2098
    %v3454 = vpack.c.b16 %v2104, %v2099
    %v3455 = vpack.c.b16 %v2105, %v2100
    %v3456 = vpack.c.b16 %v2106, %v2101
    %v3457 = vpack.c.b16 %v2112, %v2107
    %v3458 = vpack.c.b16 %v2113, %v2108
    %v3459 = vpack.c.b16 %v2114, %v2109
    %v3460 = vpack.c.b16 %v2115, %v2110
    %v3461 = vpack.c.b16 %v2116, %v2111
    %v3462 = vpack.c.b16 %v2122, %v2117
    %v3463 = vpack.c.b16 %v2123, %v2118
    %v3464 = vpack.c.b16 %v2124, %v2119
    %v3465 = vpack.c.b16 %v2125, %v2120
    %v3466 = vpack.c.b16 %v2126, %v2121
    %v3467 = vpack.c.b16 %v2132, %v2127
    %v3468 = vpack.c.b16 %v2133, %v2128
    %v3469 = vpack.c.b16 %v2134, %v2129
    %v3470 = vpack.c.b16 %v2135, %v2130
    %v3471 = vpack.c.b16 %v2136, %v2131
    %v3472 = vpack.c.b16 %v2142, %v2137
    %v3473 = vpack.c.b16 %v2143, %v2138
    %v3474 = vpack.c.b16 %v2144, %v2139
    %v3475 = vpack.c.b16 %v2145, %v2140
    %v3476 = vpack.c.b16 %v2146, %v2141
    %v3477 = vpack.c.b16 %v2152, %v2147
    %v3478 = vpack.c.b16 %v2153, %v2148
    %v3479 = vpack.c.b16 %v2154, %v2149
    %v3480 = vpack.c.b16 %v2155, %v2150
    %v3481 = vpack.c.b16 %v2156, %v2151
    %v3482 = vpack.c.b16 %v2162, %v2157
    %v3483 = vpack.c.b16 %v2163, %v2158
    %v3484 = vpack.c.b16 %v2164, %v2159
    %v3485 = vpack.c.b16 %v2165, %v2160
    %v3486 = vpack.c.b16 %v2166, %v2161
    %v3487 = vpack.c.b16 %v2172, %v2167
    %v3488 = vpack.c.b16 %v2173, %v2168
    %v3489 = vpack.c.b16 %v2174, %v2169
    %v3490 = vpack.c.b16 %v2175, %v2170
    %v3491 = vpack.c.b16 %v2176, %v2171
    %v3492 = vpack.c.b16 %v2182, %v2177
    %v3493 = vpack.c.b16 %v2183, %v2178
    %v3494 = vpack.c.b16 %v2184, %v2179
    %v3495 = vpack.c.b16 %v2185, %v2180
    %v3496 = vpack.c.b16 %v2186, %v2181
    %v3497 = vpack.c.b16 %v2192, %v2187
    %v3498 = vpack.c.b16 %v2193, %v2188
    %v3499 = vpack.c.b16 %v2194, %v2189
    %v3500 = vpack.c.b16 %v2195, %v2190
    %v3501 = vpack.c.b16 %v2196, %v2191
    %v3502 = vpack.c.b16 %v2202, %v2197
    %v3503 = vpack.c.b16 %v2203, %v2198
    %v3504 = vpack.c.b16 %v2204, %v2199
    %v3505 = vpack.c.b16 %v2205, %v2200
    %v3506 = vpack.c.b16 %v2206, %v2201
    %v3507 = vpack.c.b16 %v2212, %v2207
    %v3508 = vpack.c.b16 %v2213, %v2208
    %v3509 = vpack.c.b16 %v2214, %v2209
    %v3510 = vpack.c.b16 %v2215, %v2210
    %v3511 = vpack.c.b16 %v2216, %v2211
    %v3512 = vpack.c.b16 %v2222, %v2217
    %v3513 = vpack.c.b16 %v2223, %v2218
    %v3514 = vpack.c.b16 %v2224, %v2219
    %v3515 = vpack.c.b16 %v2225, %v2220
    %v3516 = vpack.c.b16 %v2226, %v2221
    %v3517 = vpack.c.b16 %v2232, %v2227
    %v3518 = vpack.c.b16 %v2233, %v2228
    %v3519 = vpack.c.b16 %v2234, %v2229
    %v3520 = vpack.c.b16 %v2235, %v2230
    %v3521 = vpack.c.b16 %v2236, %v2231
    %v3522 = vpack.c.b16 %v2242, %v2237
    %v3523 = vpack.c.b16 %v2243, %v2238
    %v3524 = vpack.c.b16 %v2244, %v2239
    %v3525 = vpack.c.b16 %v2245, %v2240
    %v3526 = vpack.c.b16 %v2246, %v2241
    %v3527 = vpack.c.b16 %v2252, %v2247
    %v3528 = vpack.c.b16 %v2253, %v2248
    %v3529 = vpack.c.b16 %v2254, %v2249
    %v3530 = vpack.c.b16 %v2255, %v2250
    %v3531 = vpack.c.b16 %v2256, %v2251
    %v3532 = vpack.c.b16 %v2262, %v2257
    %v3533 = vpack.c.b16 %v2263, %v2258
    %v3534 = vpack.c.b16 %v2264, %v2259
    %v3535 = vpack.c.b16 %v2265, %v2260
    %v3536 = vpack.c.b16 %v2266, %v2261
    %v3537 = vpack.c.b16 %v2272, %v2267
    %v3538 = vpack.c.b16 %v2273, %v2268
    %v3539 = vpack.c.b16 %v2274, %v2269
    %v3540 = vpack.c.b16 %v2275, %v2270
    %v3541 = vpack.c.b16 %v2276, %v2271
    %v3542 = vpack.c.b16 %v2282, %v2277
    %v3543 = vpack.c.b16 %v2283, %v2278
    %v3544 = vpack.c.b16 %v2284, %v2279
    %v3545 = vpack.c.b16 %v2285, %v2280
    %v3546 = vpack.c.b16 %v2286, %v2281
    %v3547 = vpack.c.b16 %v2292, %v2287
    %v3548 = vpack.c.b16 %v2293, %v2288
    %v3549 = vpack.c.b16 %v2294, %v2289
    %v3550 = vpack.c.b16 %v2295, %v2290
    %v3551 = vpack.c.b16 %v2296, %v2291
    %v3552 = vpack.c.b16 %v2302, %v2297
    %v3553 = vpack.c.b16 %v2303, %v2298
    %v3554 = vpack.c.b16 %v2304, %v2299
    %v3555 = vpack.c.b16 %v2305, %v2300
    %v3556 = vpack.c.b16 %v2306, %v2301
    %v3557 = vpack.c.b16 %v2312, %v2307
    %v3558 = vpack.c.b16 %v2313, %v2308
    %v3559 = vpack.c.b16 %v2314, %v2309
    %v3560 = vpack.c.b16 %v2315, %v2310
    %v3561 = vpack.c.b16 %v2316, %v2311
    %v3562 = vpack.c.b16 %v2322, %v2317
    %v3563 = vpack.c.b16 %v2323, %v2318
    %v3564 = vpack.c.b16 %v2324, %v2319
    %v3565 = vpack.c.b16 %v2325, %v2320
    %v3566 = vpack.c.b16 %v2326, %v2321
    %v3567 = vpack.c.b16 %v2332, %v2327
    %v3568 = vpack.c.b16 %v2333, %v2328
    %v3569 = vpack.c.b16 %v2334, %v2329
    %v3570 = vpack.c.b16 %v2335, %v2330
    %v3571 = vpack.c.b16 %v2336, %v2331
    %v3572 = vpack.c.b16 %v2342, %v2337
    %v3573 = vpack.c.b16 %v2343, %v2338
    %v3574 = vpack.c.b16 %v2344, %v2339
    %v3575 = vpack.c.b16 %v2345, %v2340
    %v3576 = vpack.c.b16 %v2346, %v2341
    %v3577 = vpack.c.b16 %v2352, %v2347
    %v3578 = vpack.c.b16 %v2353, %v2348
    %v3579 = vpack.c.b16 %v2354, %v2349
    %v3580 = vpack.c.b16 %v2355, %v2350
    %v3581 = vpack.c.b16 %v2356, %v2351
    %v3582 = vpack.c.b16 %v2362, %v2357
    %v3583 = vpack.c.b16 %v2363, %v2358
    %v3584 = vpack.c.b16 %v2364, %v2359
    %v3585 = vpack.c.b16 %v2365, %v2360
    %v3586 = vpack.c.b16 %v2366, %v2361
    %v3587 = vpack.c.b16 %v2372, %v2367
    %v3588 = vpack.c.b16 %v2373, %v2368
    %v3589 = vpack.c.b16 %v2374, %v2369
    %v3590 = vpack.c.b16 %v2375, %v2370
    %v3591 = vpack.c.b16 %v2376, %v2371
    %v3592 = vpack.c.b16 %v2382, %v2377
    %v3593 = vpack.c.b16 %v2383, %v2378
    %v3594 = vpack.c.b16 %v2384, %v2379
    %v3595 = vpack.c.b16 %v2385, %v2380
    %v3596 = vpack.c.b16 %v2386, %v2381
    %v3597 = vpack.c.b16 %v2392, %v2387
    %v3598 = vpack.c.b16 %v2393, %v2388
    %v3599 = vpack.c.b16 %v2394, %v2389
    %v3600 = vpack.c.b16 %v2395, %v2390
    %v3601 = vpack.c.b16 %v2396, %v2391
    %v3602 = vpack.c.b16 %v2402, %v2397
    %v3603 = vpack.c.b16 %v2403, %v2398
    %v3604 = vpack.c.b16 %v2404, %v2399
    %v3605 = vpack.c.b16 %v2405, %v2400
    %v3606 = vpack.c.b16 %v2406, %v2401
    %v3607 = vpack.c.b16 %v2412, %v2407
    %v3608 = vpack.c.b16 %v2413, %v2408
    %v3609 = vpack.c.b16 %v2414, %v2409
    %v3610 = vpack.c.b16 %v2415, %v2410
    %v3611 = vpack.c.b16 %v2416, %v2411
    %v3612 = vpack.c.b16 %v2422, %v2417
    %v3613 = vpack.c.b16 %v2423, %v2418
    %v3614 = vpack.c.b16 %v2424, %v2419
    %v3615 = vpack.c.b16 %v2425, %v2420
    %v3616 = vpack.c.b16 %v2426, %v2421
    %v3617 = vpack.c.b16 %v2432, %v2427
    %v3618 = vpack.c.b16 %v2433, %v2428
    %v3619 = vpack.c.b16 %v2434, %v2429
    %v3620 = vpack.c.b16 %v2435, %v2430
    %v3621 = vpack.c.b16 %v2436, %v2431
    %v3622 = vpack.c.b16 %v2442, %v2437
    %v3623 = vpack.c.b16 %v2443, %v2438
    %v3624 = vpack.c.b16 %v2444, %v2439
    %v3625 = vpack.c.b16 %v2445, %v2440
    %v3626 = vpack.c.b16 %v2446, %v2441
    %v3627 = vpack.c.b16 %v2452, %v2447
    %v3628 = vpack.c.b16 %v2453, %v2448
    %v3629 = vpack.c.b16 %v2454, %v2449
    %v3630 = vpack.c.b16 %v2455, %v2450
    %v3631 = vpack.c.b16 %v2456, %v2451
    %v3632 = vpack.c.b16 %v2462, %v2457
    %v3633 = vpack.c.b16 %v2463, %v2458
    %v3634 = vpack.c.b16 %v2464, %v2459
    %v3635 = vpack.c.b16 %v2465, %v2460
    %v3636 = vpack.c.b16 %v2466, %v2461
    %v3637 = vpack.c.b16 %v2472, %v2467
    %v3638 = vpack.c.b16 %v2473, %v2468
    %v3639 = vpack.c.b16 %v2474, %v2469
    %v3640 = vpack.c.b16 %v2475, %v2470
    %v3641 = vpack.c.b16 %v2476, %v2471
    %v3642 = vpack.c.b16 %v2482, %v2477
    %v3643 = vpack.c.b16 %v2483, %v2478
    %v3644 = vpack.c.b16 %v2484, %v2479
    %v3645 = vpack.c.b16 %v2485, %v2480
    %v3646 = vpack.c.b16 %v2486, %v2481
    %v3647 = vpack.c.b16 %v2492, %v2487
    %v3648 = vpack.c.b16 %v2493, %v2488
    %v3649 = vpack.c.b16 %v2494, %v2489
    %v3650 = vpack.c.b16 %v2495, %v2490
    %v3651 = vpack.c.b16 %v2496, %v2491
    %v3652 = vpack.c.b16 %v2502, %v2497
    %v3653 = vpack.c.b16 %v2503, %v2498
    %v3654 = vpack.c.b16 %v2504, %v2499
    %v3655 = vpack.c.b16 %v2505, %v2500
    %v3656 = vpack.c.b16 %v2506, %v2501
    %v3657 = vpack.c.b16 %v2512, %v2507
    %v3658 = vpack.c.b16 %v2513, %v2508
    %v3659 = vpack.c.b16 %v2514, %v2509
    %v3660 = vpack.c.b16 %v2515, %v2510
    %v3661 = vpack.c.b16 %v2516, %v2511
    %v3662 = vpack.c.b16 %v2522, %v2517
    %v3663 = vpack.c.b16 %v2523, %v2518
    %v3664 = vpack.c.b16 %v2524, %v2519
    %v3665 = vpack.c.b16 %v2525, %v2520
    %v3666 = vpack.c.b16 %v2526, %v2521
    %v3667 = vpack.c.b16 %v2532, %v2527
    %v3668 = vpack.c.b16 %v2533, %v2528
    %v3669 = vpack.c.b16 %v2534, %v2529
    %v3670 = vpack.c.b16 %v2535, %v2530
    %v3671 = vpack.c.b16 %v2536, %v2531
    %v3672 = vpack.c.b16 %v2542, %v2537
    %v3673 = vpack.c.b16 %v2543, %v2538
    %v3674 = vpack.c.b16 %v2544, %v2539
    %v3675 = vpack.c.b16 %v2545, %v2540
    %v3676 = vpack.c.b16 %v2546, %v2541
    %v3677 = vpack.c.b16 %v2552, %v2547
    %v3678 = vpack.c.b16 %v2553, %v2548
    %v3679 = vpack.c.b16 %v2554, %v2549
    %v3680 = vpack.c.b16 %v2555, %v2550
    %v3681 = vpack.c.b16 %v2556, %v2551
    %v3682 = vpack.c.b16 %v2562, %v2557
    %v3683 = vpack.c.b16 %v2563, %v2558
    %v3684 = vpack.c.b16 %v2564, %v2559
    %v3685 = vpack.c.b16 %v2565, %v2560
    %v3686 = vpack.c.b16 %v2566, %v2561
    %v3687 = vpack.c.b16 %v2572, %v2567
    %v3688 = vpack.c.b16 %v2573, %v2568
    %v3689 = vpack.c.b16 %v2574, %v2569
    %v3690 = vpack.c.b16 %v2575, %v2570
    %v3691 = vpack.c.b16 %v2576, %v2571
    %v3692 = vpack.c.b16 %v2582, %v2577
    %v3693 = vpack.c.b16 %v2583, %v2578
    %v3694 = vpack.c.b16 %v2584, %v2579
    %v3695 = vpack.c.b16 %v2585, %v2580
    %v3696 = vpack.c.b16 %v2586, %v2581
    %v3697 = vpack.c.b16 %v2592, %v2587
    %v3698 = vpack.c.b16 %v2593, %v2588
    %v3699 = vpack.c.b16 %v2594, %v2589
    %v3700 = vpack.c.b16 %v2595, %v2590
    %v3701 = vpack.c.b16 %v2596, %v2591
    %v3702 = vpack.c.b16 %v2602, %v2597
    %v3703 = vpack.c.b16 %v2603, %v2598
    %v3704 = vpack.c.b16 %v2604, %v2599
    %v3705 = vpack.c.b16 %v2605, %v2600
    %v3706 = vpack.c.b16 %v2606, %v2601
    %v3707 = vpack.c.b16 %v2612, %v2607
    %v3708 = vpack.c.b16 %v2613, %v2608
    %v3709 = vpack.c.b16 %v2614, %v2609
    %v3710 = vpack.c.b16 %v2615, %v2610
    %v3711 = vpack.c.b16 %v2616, %v2611
    %v3712 = vpack.c.b16 %v2622, %v2617
    %v3713 = vpack.c.b16 %v2623, %v2618
    %v3714 = vpack.c.b16 %v2624, %v2619
    %v3715 = vpack.c.b16 %v2625, %v2620
    %v3716 = vpack.c.b16 %v2626, %v2621
    %v3717 = vpack.c.b16 %v2632, %v2627
    %v3718 = vpack.c.b16 %v2633, %v2628
    %v3719 = vpack.c.b16 %v2634, %v2629
    %v3720 = vpack.c.b16 %v2635, %v2630
    %v3721 = vpack.c.b16 %v2636, %v2631
    %v3722 = vpack.c.b16 %v2642, %v2637
    %v3723 = vpack.c.b16 %v2643, %v2638
    %v3724 = vpack.c.b16 %v2644, %v2639
    %v3725 = vpack.c.b16 %v2645, %v2640
    %v3726 = vpack.c.b16 %v2646, %v2641
    %v3727 = vpack.c.b16 %v2652, %v2647
    %v3728 = vpack.c.b16 %v2653, %v2648
    %v3729 = vpack.c.b16 %v2654, %v2649
    %v3730 = vpack.c.b16 %v2655, %v2650
    %v3731 = vpack.c.b16 %v2656, %v2651
    %v3732 = vpack.c.b16 %v2662, %v2657
    %v3733 = vpack.c.b16 %v2663, %v2658
    %v3734 = vpack.c.b16 %v2664, %v2659
    %v3735 = vpack.c.b16 %v2665, %v2660
    %v3736 = vpack.c.b16 %v2666, %v2661
    %v3737 = vpack.c.b16 %v2672, %v2667
    %v3738 = vpack.c.b16 %v2673, %v2668
    %v3739 = vpack.c.b16 %v2674, %v2669
    %v3740 = vpack.c.b16 %v2675, %v2670
    %v3741 = vpack.c.b16 %v2676, %v2671
    %v3742 = vpack.c.b16 %v2682, %v2677
    %v3743 = vpack.c.b16 %v2683, %v2678
    %v3744 = vpack.c.b16 %v2684, %v2679
    %v3745 = vpack.c.b16 %v2685, %v2680
    %v3746 = vpack.c.b16 %v2686, %v2681
    %v3747 = vpack.c.b16 %v2692, %v2687
    %v3748 = vpack.c.b16 %v2693, %v2688
    %v3749 = vpack.c.b16 %v2694, %v2689
    %v3750 = vpack.c.b16 %v2695, %v2690
    %v3751 = vpack.c.b16 %v2696, %v2691
    %v3752 = vpack.c.b16 %v2702, %v2697
    %v3753 = vpack.c.b16 %v2703, %v2698
    %v3754 = vpack.c.b16 %v2704, %v2699
    %v3755 = vpack.c.b16 %v2705, %v2700
    %v3756 = vpack.c.b16 %v2706, %v2701
    %v3757 = vpack.c.b16 %v2712, %v2707
    %v3758 = vpack.c.b16 %v2713, %v2708
    %v3759 = vpack.c.b16 %v2714, %v2709
    %v3760 = vpack.c.b16 %v2715, %v2710
    %v3761 = vpack.c.b16 %v2716, %v2711
    %v3762 = vpack.c.b16 %v2722, %v2717
    %v3763 = vpack.c.b16 %v2723, %v2718
    %v3764 = vpack.c.b16 %v2724, %v2719
    %v3765 = vpack.c.b16 %v2725, %v2720
    %v3766 = vpack.c.b16 %v2726, %v2721
    %v3767 = vpack.c.b16 %v2732, %v2727
    %v3768 = vpack.c.b16 %v2733, %v2728
    %v3769 = vpack.c.b16 %v2734, %v2729
    %v3770 = vpack.c.b16 %v2735, %v2730
    %v3771 = vpack.c.b16 %v2736, %v2731
    %v3772 = vpack.c.b16 %v2742, %v2737
    %v3773 = vpack.c.b16 %v2743, %v2738
    %v3774 = vpack.c.b16 %v2744, %v2739
    %v3775 = vpack.c.b16 %v2745, %v2740
    %v3776 = vpack.c.b16 %v2746, %v2741
    %v3777 = vpack.c.b16 %v2752, %v2747
    %v3778 = vpack.c.b16 %v2753, %v2748
    %v3779 = vpack.c.b16 %v2754, %v2749
    %v3780 = vpack.c.b16 %v2755, %v2750
    %v3781 = vpack.c.b16 %v2756, %v2751
    %v3782 = vpack.c.b16 %v2762, %v2757
    %v3783 = vpack.c.b16 %v2763, %v2758
    %v3784 = vpack.c.b16 %v2764, %v2759
    %v3785 = vpack.c.b16 %v2765, %v2760
    %v3786 = vpack.c.b16 %v2766, %v2761
    %v3787 = vpack.c.b16 %v2772, %v2767
    %v3788 = vpack.c.b16 %v2773, %v2768
    %v3789 = vpack.c.b16 %v2774, %v2769
    %v3790 = vpack.c.b16 %v2775, %v2770
    %v3791 = vpack.c.b16 %v2776, %v2771
    %v3792 = vpack.c.b16 %v2782, %v2777
    %v3793 = vpack.c.b16 %v2783, %v2778
    %v3794 = vpack.c.b16 %v2784, %v2779
    %v3795 = vpack.c.b16 %v2785, %v2780
    %v3796 = vpack.c.b16 %v2786, %v2781
    %v3797 = vpack.c.b16 %v2792, %v2787
    %v3798 = vpack.c.b16 %v2793, %v2788
    %v3799 = vpack.c.b16 %v2794, %v2789
    %v3800 = vpack.c.b16 %v2795, %v2790
    %v3801 = vpack.c.b16 %v2796, %v2791
    %v3802 = vpack.c.b16 %v2802, %v2797
    %v3803 = vpack.c.b16 %v2803, %v2798
    %v3804 = vpack.c.b16 %v2804, %v2799
    %v3805 = vpack.c.b16 %v2805, %v2800
    %v3806 = vpack.c.b16 %v2806, %v2801
    %v3807 = vpack.c.b16 %v2812, %v2807
    %v3808 = vpack.c.b16 %v2813, %v2808
    %v3809 = vpack.c.b16 %v2814, %v2809
    %v3810 = vpack.c.b16 %v2815, %v2810
    %v3811 = vpack.c.b16 %v2816, %v2811
    %v3812 = vpack.c.b16 %v2822, %v2817
    %v3813 = vpack.c.b16 %v2823, %v2818
    %v3814 = vpack.c.b16 %v2824, %v2819
    %v3815 = vpack.c.b16 %v2825, %v2820
    %v3816 = vpack.c.b16 %v2826, %v2821
    %v3817 = vpack.c.b16 %v2832, %v2827
    %v3818 = vpack.c.b16 %v2833, %v2828
    %v3819 = vpack.c.b16 %v2834, %v2829
    %v3820 = vpack.c.b16 %v2835, %v2830
    %v3821 = vpack.c.b16 %v2836, %v2831
    %v3822 = vpack.c.b16 %v2842, %v2837
    %v3823 = vpack.c.b16 %v2843, %v2838
    %v3824 = vpack.c.b16 %v2844, %v2839
    %v3825 = vpack.c.b16 %v2845, %v2840
    %v3826 = vpack.c.b16 %v2846, %v2841
    %v3827 = vpack.c.b16 %v2852, %v2847
    %v3828 = vpack.c.b16 %v2853, %v2848
    %v3829 = vpack.c.b16 %v2854, %v2849
    %v3830 = vpack.c.b16 %v2855, %v2850
    %v3831 = vpack.c.b16 %v2856, %v2851
    %v3832 = vpack.c.b16 %v2862, %v2857
    %v3833 = vpack.c.b16 %v2863, %v2858
    %v3834 = vpack.c.b16 %v2864, %v2859
    %v3835 = vpack.c.b16 %v2865, %v2860
    %v3836 = vpack.c.b16 %v2866, %v2861
    %v3837 = vpack.c.b16 %v2872, %v2867
    %v3838 = vpack.c.b16 %v2873, %v2868
    %v3839 = vpack.c.b16 %v2874, %v2869
    %v3840 = vpack.c.b16 %v2875, %v2870
    %v3841 = vpack.c.b16 %v2876, %v2871
    %v3842 = vpack.c.b16 %v2882, %v2877
    %v3843 = vpack.c.b16 %v2883, %v2878
    %v3844 = vpack.c.b16 %v2884, %v2879
    %v3845 = vpack.c.b16 %v2885, %v2880
    %v3846 = vpack.c.b16 %v2886, %v2881
    %v3847 = vpack.c.b16 %v2892, %v2887
    %v3848 = vpack.c.b16 %v2893, %v2888
    %v3849 = vpack.c.b16 %v2894, %v2889
    %v3850 = vpack.c.b16 %v2895, %v2890
    %v3851 = vpack.c.b16 %v2896, %v2891
    %v3852 = vpack.c.b16 %v2902, %v2897
    %v3853 = vpack.c.b16 %v2903, %v2898
    %v3854 = vpack.c.b16 %v2904, %v2899
    %v3855 = vpack.c.b16 %v2905, %v2900
    %v3856 = vpack.c.b16 %v2906, %v2901
    %v3857 = vpack.c.b16 %v2912, %v2907
    %v3858 = vpack.c.b16 %v2913, %v2908
    %v3859 = vpack.c.b16 %v2914, %v2909
    %v3860 = vpack.c.b16 %v2915, %v2910
    %v3861 = vpack.c.b16 %v2916, %v2911
    %v3862 = vpack.c.b16 %v2922, %v2917
    %v3863 = vpack.c.b16 %v2923, %v2918
    %v3864 = vpack.c.b16 %v2924, %v2919
    %v3865 = vpack.c.b16 %v2925, %v2920
    %v3866 = vpack.c.b16 %v2926, %v2921
    %v3867 = vpack.c.b16 %v2932, %v2927
    %v3868 = vpack.c.b16 %v2933, %v2928
    %v3869 = vpack.c.b16 %v2934, %v2929
    %v3870 = vpack.c.b16 %v2935, %v2930
    %v3871 = vpack.c.b16 %v2936, %v2931
    %v3872 = vpack.c.b16 %v2942, %v2937
    %v3873 = vpack.c.b16 %v2943, %v2938
    %v3874 = vpack.c.b16 %v2944, %v2939
    %v3875 = vpack.c.b16 %v2945, %v2940
    %v3876 = vpack.c.b16 %v2946, %v2941
    %v3877 = vpack.c.b16 %v2952, %v2947
    %v3878 = vpack.c.b16 %v2953, %v2948
    %v3879 = vpack.c.b16 %v2954, %v2949
    %v3880 = vpack.c.b16 %v2955, %v2950
    %v3881 = vpack.c.b16 %v2956, %v2951
    %v3882 = vpack.c.b16 %v2962, %v2957
    %v3883 = vpack.c.b16 %v2963, %v2958
    %v3884 = vpack.c.b16 %v2964, %v2959
    %v3885 = vpack.c.b16 %v2965, %v2960
    %v3886 = vpack.c.b16 %v2966, %v2961
    %v3887 = vpack.c.b16 %v2972, %v2967
    %v3888 = vpack.c.b16 %v2973, %v2968
    %v3889 = vpack.c.b16 %v2974, %v2969
    %v3890 = vpack.c.b16 %v2975, %v2970
    %v3891 = vpack.c.b16 %v2976, %v2971
    %v3892 = vpack.c.b16 %v2982, %v2977
    %v3893 = vpack.c.b16 %v2983, %v2978
    %v3894 = vpack.c.b16 %v2984, %v2979
    %v3895 = vpack.c.b16 %v2985, %v2980
    %v3896 = vpack.c.b16 %v2986, %v2981
    %v3897 = vpack.c.b16 %v2992, %v2987
    %v3898 = vpack.c.b16 %v2993, %v2988
    %v3899 = vpack.c.b16 %v2994, %v2989
    %v3900 = vpack.c.b16 %v2995, %v2990
    %v3901 = vpack.c.b16 %v2996, %v2991
    %v3902 = vpack.c.b16 %v3002, %v2997
    %v3903 = vpack.c.b16 %v3003, %v2998
    %v3904 = vpack.c.b16 %v3004, %v2999
    %v3905 = vpack.c.b16 %v3005, %v3000
    %v3906 = vpack.c.b16 %v3006, %v3001
    %v3907 = vpack.c.b16 %v3012, %v3007
    %v3908 = vpack.c.b16 %v3013, %v3008
    %v3909 = vpack.c.b16 %v3014, %v3009
    %v3910 = vpack.c.b16 %v3015, %v3010
    %v3911 = vpack.c.b16 %v3016, %v3011
    %v3912 = vpack.c.b16 %v3022, %v3017
    %v3913 = vpack.c.b16 %v3023, %v3018
    %v3914 = vpack.c.b16 %v3024, %v3019
    %v3915 = vpack.c.b16 %v3025, %v3020
    %v3916 = vpack.c.b16 %v3026, %v3021
    %v3917 = vpack.c.b16 %v3032, %v3027
    %v3918 = vpack.c.b16 %v3033, %v3028
    %v3919 = vpack.c.b16 %v3034, %v3029
    %v3920 = vpack.c.b16 %v3035, %v3030
    %v3921 = vpack.c.b16 %v3036, %v3031
    %v3922 = vpack.c.b16 %v3042, %v3037
    %v3923 = vpack.c.b16 %v3043, %v3038
    %v3924 = vpack.c.b16 %v3044, %v3039
    %v3925 = vpack.c.b16 %v3045, %v3040
    %v3926 = vpack.c.b16 %v3046, %v3041
    %v3927 = vpack.c.b16 %v3052, %v3047
    %v3928 = vpack.c.b16 %v3053, %v3048
    %v3929 = vpack.c.b16 %v3054, %v3049
    %v3930 = vpack.c.b16 %v3055, %v3050
    %v3931 = vpack.c.b16 %v3056, %v3051
    %v3932 = vpack.c.b16 %v3062, %v3057
    %v3933 = vpack.c.b16 %v3063, %v3058
    %v3934 = vpack.c.b16 %v3064, %v3059
    %v3935 = vpack.c.b16 %v3065, %v3060
    %v3936 = vpack.c.b16 %v3066, %v3061
    %v3937 = vpack.c.b16 %v3072, %v3067
    %v3938 = vpack.c.b16 %v3073, %v3068
    %v3939 = vpack.c.b16 %v3074, %v3069
    %v3940 = vpack.c.b16 %v3075, %v3070
    %v3941 = vpack.c.b16 %v3076, %v3071
    %v3942 = vpack.c.b16 %v3082, %v3077
    %v3943 = vpack.c.b16 %v3083, %v3078
    %v3944 = vpack.c.b16 %v3084, %v3079
    %v3945 = vpack.c.b16 %v3085, %v3080
    %v3946 = vpack.c.b16 %v3086, %v3081
    %v3947 = vpack.c.b16 %v3092, %v3087
    %v3948 = vpack.c.b16 %v3093, %v3088
    %v3949 = vpack.c.b16 %v3094, %v3089
    %v3950 = vpack.c.b16 %v3095, %v3090
    %v3951 = vpack.c.b16 %v3096, %v3091
    %v3952 = vpack.c.b16 %v3102, %v3097
    %v3953 = vpack.c.b16 %v3103, %v3098
    %v3954 = vpack.c.b16 %v3104, %v3099
    %v3955 = vpack.c.b16 %v3105, %v3100
    %v3956 = vpack.c.b16 %v3106, %v3101
    %v3957 = vpack.c.b16 %v3112, %v3107
    %v3958 = vpack.c.b16 %v3113, %v3108
    %v3959 = vpack.c.b16 %v3114, %v3109
    %v3960 = vpack.c.b16 %v3115, %v3110
    %v3961 = vpack.c.b16 %v3116, %v3111
    %v3962 = vpack.c.b16 %v3122, %v3117
    %v3963 = vpack.c.b16 %v3123, %v3118
    %v3964 = vpack.c.b16 %v3124, %v3119
    %v3965 = vpack.c.b16 %v3125, %v3120
    %v3966 = vpack.c.b16 %v3126, %v3121
    %v3967 = vpack.c.b16 %v3132, %v3127
    %v3968 = vpack.c.b16 %v3133, %v3128
    %v3969 = vpack.c.b16 %v3134, %v3129
    %v3970 = vpack.c.b16 %v3135, %v3130
    %v3971 = vpack.c.b16 %v3136, %v3131
    %v3972 = vpack.c.b16 %v3142, %v3137
    %v3973 = vpack.c.b16 %v3143, %v3138
    %v3974 = vpack.c.b16 %v3144, %v3139
    %v3975 = vpack.c.b16 %v3145, %v3140
    %v3976 = vpack.c.b16 %v3146, %v3141
    %v3977 = vpack.c.b16 %v3152, %v3147
    %v3978 = vpack.c.b16 %v3153, %v3148
    %v3979 = vpack.c.b16 %v3154, %v3149
    %v3980 = vpack.c.b16 %v3155, %v3150
    %v3981 = vpack.c.b16 %v3156, %v3151
    %v3982 = vpack.c.b16 %v3162, %v3157
    %v3983 = vpack.c.b16 %v3163, %v3158
    %v3984 = vpack.c.b16 %v3164, %v3159
    %v3985 = vpack.c.b16 %v3165, %v3160
    %v3986 = vpack.c.b16 %v3166, %v3161
    %v3987 = vpack.c.b16 %v3172, %v3167
    %v3988 = vpack.c.b16 %v3173, %v3168
    %v3989 = vpack.c.b16 %v3174, %v3169
    %v3990 = vpack.c.b16 %v3175, %v3170
    %v3991 = vpack.c.b16 %v3176, %v3171
    %v3992 = vpack.c.b16 %v3182, %v3177
    %v3993 = vpack.c.b16 %v3183, %v3178
    %v3994 = vpack.c.b16 %v3184, %v3179
    %v3995 = vpack.c.b16 %v3185, %v3180
    %v3996 = vpack.c.b16 %v3186, %v3181
    %v3997 = vpack.c.b16 %v3192, %v3187
    %v3998 = vpack.c.b16 %v3193, %v3188
    %v3999 = vpack.c.b16 %v3194, %v3189
    %v4000 = vpack.c.b16 %v3195, %v3190
    %v4001 = vpack.c.b16 %v3196, %v3191
    %v4002 = vpack.c.b16 %v3202, %v3197
    %v4003 = vpack.c.b16 %v3203, %v3198
    %v4004 = vpack.c.b16 %v3204, %v3199
    %v4005 = vpack.c.b16 %v3205, %v3200
    %v4006 = vpack.c.b16 %v3206, %v3201
    %v4007 = vpack.c.b16 %v3212, %v3207
    %v4008 = vpack.c.b16 %v3213, %v3208
    %v4009 = vpack.c.b16 %v3214, %v3209
    %v4010 = vpack.c.b16 %v3215, %v3210
    %v4011 = vpack.c.b16 %v3216, %v3211
    %v4012 = vpack.c.b16 %v3222, %v3217
    %v4013 = vpack.c.b16 %v3223, %v3218
    %v4014 = vpack.c.b16 %v3224, %v3219
    %v4015 = vpack.c.b16 %v3225, %v3220
    %v4016 = vpack.c.b16 %v3226, %v3221
    %v4017 = vpack.c.b16 %v3232, %v3227
    %v4018 = vpack.c.b16 %v3233, %v3228
    %v4019 = vpack.c.b16 %v3234, %v3229
    %v4020 = vpack.c.b16 %v3235, %v3230
    %v4021 = vpack.c.b16 %v3236, %v3231
    %v4022 = vpack.c.b16 %v3242, %v3237
    %v4023 = vpack.c.b16 %v3243, %v3238
    %v4024 = vpack.c.b16 %v3244, %v3239
    %v4025 = vpack.c.b16 %v3245, %v3240
    %v4026 = vpack.c.b16 %v3246, %v3241
    %v4027 = vpack.c.b16 %v3252, %v3247
    %v4028 = vpack.c.b16 %v3253, %v3248
    %v4029 = vpack.c.b16 %v3254, %v3249
    %v4030 = vpack.c.b16 %v3255, %v3250
    %v4031 = vpack.c.b16 %v3256, %v3251
    %v4032 = vpack.c.b16 %v3262, %v3257
    %v4033 = vpack.c.b16 %v3263, %v3258
    %v4034 = vpack.c.b16 %v3264, %v3259
    %v4035 = vpack.c.b16 %v3265, %v3260
    %v4036 = vpack.c.b16 %v3266, %v3261
    %v4037 = vpack.c.b16 %v3272, %v3267
    %v4038 = vpack.c.b16 %v3273, %v3268
    %v4039 = vpack.c.b16 %v3274, %v3269
    %v4040 = vpack.c.b16 %v3275, %v3270
    %v4041 = vpack.c.b16 %v3276, %v3271
    %v4042 = vpack.c.b16 %v3282, %v3277
    %v4043 = vpack.c.b16 %v3283, %v3278
    %v4044 = vpack.c.b16 %v3284, %v3279
    %v4045 = vpack.c.b16 %v3285, %v3280
    %v4046 = vpack.c.b16 %v3286, %v3281
    %v4047 = vpack.c.b16 %v3292, %v3287
    %v4048 = vpack.c.b16 %v3293, %v3288
    %v4049 = vpack.c.b16 %v3294, %v3289
    %v4050 = vpack.c.b16 %v3295, %v3290
    %v4051 = vpack.c.b16 %v3296, %v3291
    %v4052 = vpack.c.b16 %v3302, %v3297
    %v4053 = vpack.c.b16 %v3303, %v3298
    %v4054 = vpack.c.b16 %v3304, %v3299
    %v4055 = vpack.c.b16 %v3305, %v3300
    %v4056 = vpack.c.b16 %v3306, %v3301
    %v4057 = vpack.c.b16 %v3312, %v3307
    %v4058 = vpack.c.b16 %v3313, %v3308
    %v4059 = vpack.c.b16 %v3314, %v3309
    %v4060 = vpack.c.b16 %v3315, %v3310
    %v4061 = vpack.c.b16 %v3316, %v3311
    %v4062 = vpack.c.b16 %v3322, %v3317
    %v4063 = vpack.c.b16 %v3323, %v3318
    %v4064 = vpack.c.b16 %v3324, %v3319
    %v4065 = vpack.c.b16 %v3325, %v3320
    %v4066 = vpack.c.b16 %v3326, %v3321
    %v4067 = vpack.c.b16 %v3332, %v3327
    %v4068 = vpack.c.b16 %v3333, %v3328
    %v4069 = vpack.c.b16 %v3334, %v3329
    %v4070 = vpack.c.b16 %v3335, %v3330
    %v4071 = vpack.c.b16 %v3336, %v3331
    %v4072 = vpack.c.b16 %v3342, %v3337
    %v4073 = vpack.c.b16 %v3343, %v3338
    %v4074 = vpack.c.b16 %v3344, %v3339
    %v4075 = vpack.c.b16 %v3345, %v3340
    %v4076 = vpack.c.b16 %v3346, %v3341
    %v4077 = vpack.c.b16 %v3352, %v3347
    %v4078 = vpack.c.b16 %v3353, %v3348
    %v4079 = vpack.c.b16 %v3354, %v3349
    %v4080 = vpack.c.b16 %v3355, %v3350
    %v4081 = vpack.c.b16 %v3356, %v3351
    %v4082 = vpack.c.b16 %v3362, %v3357
    %v4083 = vpack.c.b16 %v3363, %v3358
    %v4084 = vpack.c.b16 %v3364, %v3359
    %v4085 = vpack.c.b16 %v3365, %v3360
    %v4086 = vpack.c.b16 %v3366, %v3361
    %4807 = vmatprep.subr.bf16.mxu0 %v3403
    %4808 = vmatpush1.bf16.msra.mxu0 %v3402
    %4809 = vmatprep.subr.bf16.mxu0 %v3398
    %4810 = vmatpush1.bf16.msra.mxu0 %v3397
    %4811 = vmatprep.subr.bf16.mxu0 %v3393
    %4812 = vmatpush1.bf16.msra.mxu0 %v3392
    %4813 = vmatprep.subr.bf16.mxu0 %v3388
    %4814 = vmatpush1.bf16.msra.mxu0 %v3387
    %4815 = vmatprep.subr.bf16.mxu0 %v3383
    %4816 = vmatpush1.bf16.msra.mxu0 %v3382
    %4817 = vmatprep.subr.bf16.mxu0 %v3378
    %4818 = vmatpush1.bf16.msra.mxu0 %v3377
    %4819 = vmatprep.subr.bf16.mxu0 %v3373
    %4820 = vmatpush1.bf16.msra.mxu0 %v3372
    %4821 = vmatprep.subr.bf16.mxu0 %v3368
    %4822 = vmatpush1.bf16.msra.mxu0 %v3367
    %4823 = vmatprep.subr.bf16.mxu0 %v3443
    %4824 = vmatpush2.bf16.msra.mxu0 %v3442
    %4825 = vmatprep.subr.bf16.mxu0 %v3438
    %4826 = vmatpush2.bf16.msra.mxu0 %v3437
    %4827 = vmatprep.subr.bf16.mxu0 %v3433
    %4828 = vmatpush2.bf16.msra.mxu0 %v3432
    %4829 = vmatprep.subr.bf16.mxu0 %v3428
    %4830 = vmatpush2.bf16.msra.mxu0 %v3427
    %4831 = vmatprep.subr.bf16.mxu0 %v3423
    %4832 = vmatpush2.bf16.msra.mxu0 %v3422
    %4833 = vmatprep.subr.bf16.mxu0 %v3418
    %4834 = vmatpush2.bf16.msra.mxu0 %v3417
    %4835 = vmatprep.subr.bf16.mxu0 %v3413
    %4836 = vmatpush2.bf16.msra.mxu0 %v3412
    %4837 = vmatprep.subr.bf16.mxu0 %v3408
    %4838 = vmatpush2.bf16.msra.mxu0 %v3407
    %4839 = vmatprep.mubr.bf16.mxu0 %v962
    %4840 = vmatmul.mubr.bf16.gmra.mxu0 %v948
    %v4841 = vpop.f32.mrf.mxu0
    %v4842 = vadd.f32 %v900, %v4841
    %v4843 = vpop.f32.mrf.mxu0
    %v4844 = vadd.f32 %v904, %v4843
    %v4845 = vpop.f32.mrf.mxu0
    %v4846 = vpop.f32.mrf.mxu0
    %4847 = vdwg.mxu0
    %4848 = vmatprep.subr.bf16.mxu0 %v3483
    %4849 = vmatpush1.bf16.msra.mxu0 %v3482
    %4850 = vmatprep.subr.bf16.mxu0 %v3478
    %4851 = vmatpush1.bf16.msra.mxu0 %v3477
    %4852 = vmatprep.subr.bf16.mxu0 %v3473
    %4853 = vmatpush1.bf16.msra.mxu0 %v3472
    %4854 = vmatprep.subr.bf16.mxu0 %v3468
    %4855 = vmatpush1.bf16.msra.mxu0 %v3467
    %4856 = vmatprep.subr.bf16.mxu0 %v3463
    %4857 = vmatpush1.bf16.msra.mxu0 %v3462
    %4858 = vmatprep.subr.bf16.mxu0 %v3458
    %4859 = vmatpush1.bf16.msra.mxu0 %v3457
    %4860 = vmatprep.subr.bf16.mxu0 %v3453
    %4861 = vmatpush1.bf16.msra.mxu0 %v3452
    %4862 = vmatprep.subr.bf16.mxu0 %v3448
    %4863 = vmatpush1.bf16.msra.mxu0 %v3447
    %4864 = vmatprep.subr.bf16.mxu0 %v3523
    %4865 = vmatpush2.bf16.msra.mxu0 %v3522
    %4866 = vmatprep.subr.bf16.mxu0 %v3518
    %4867 = vmatpush2.bf16.msra.mxu0 %v3517
    %4868 = vmatprep.subr.bf16.mxu0 %v3513
    %4869 = vmatpush2.bf16.msra.mxu0 %v3512
    %4870 = vmatprep.subr.bf16.mxu0 %v3508
    %4871 = vmatpush2.bf16.msra.mxu0 %v3507
    %4872 = vmatprep.subr.bf16.mxu0 %v3503
    %4873 = vmatpush2.bf16.msra.mxu0 %v3502
    %4874 = vmatprep.subr.bf16.mxu0 %v3498
    %4875 = vmatpush2.bf16.msra.mxu0 %v3497
    %4876 = vmatprep.subr.bf16.mxu0 %v3493
    %4877 = vmatpush2.bf16.msra.mxu0 %v3492
    %4878 = vmatprep.subr.bf16.mxu0 %v3488
    %4879 = vmatpush2.bf16.msra.mxu0 %v3487
    %4880 = vmatprep.mubr.bf16.mxu0 %v972
    %4881 = vmatmul.mubr.bf16.gmra.mxu0 %v970
    %v4882 = vpop.f32.mrf.mxu0
    %v4883 = vadd.f32 %v4842, %v4882
    %v4884 = vpop.f32.mrf.mxu0
    %v4885 = vadd.f32 %v4844, %v4884
    %v4886 = vpop.f32.mrf.mxu0
    %v4887 = vpop.f32.mrf.mxu0
    %4888 = vdwg.mxu0
    %4889 = vmatprep.subr.bf16.mxu0 %v3563
    %4890 = vmatpush1.bf16.msra.mxu0 %v3562
    %4891 = vmatprep.subr.bf16.mxu0 %v3558
    %4892 = vmatpush1.bf16.msra.mxu0 %v3557
    %4893 = vmatprep.subr.bf16.mxu0 %v3553
    %4894 = vmatpush1.bf16.msra.mxu0 %v3552
    %4895 = vmatprep.subr.bf16.mxu0 %v3548
    %4896 = vmatpush1.bf16.msra.mxu0 %v3547
    %4897 = vmatprep.subr.bf16.mxu0 %v3543
    %4898 = vmatpush1.bf16.msra.mxu0 %v3542
    %4899 = vmatprep.subr.bf16.mxu0 %v3538
    %4900 = vmatpush1.bf16.msra.mxu0 %v3537
    %4901 = vmatprep.subr.bf16.mxu0 %v3533
    %4902 = vmatpush1.bf16.msra.mxu0 %v3532
    %4903 = vmatprep.subr.bf16.mxu0 %v3528
    %4904 = vmatpush1.bf16.msra.mxu0 %v3527
    %4905 = vmatprep.subr.bf16.mxu0 %v3603
    %4906 = vmatpush2.bf16.msra.mxu0 %v3602
    %4907 = vmatprep.subr.bf16.mxu0 %v3598
    %4908 = vmatpush2.bf16.msra.mxu0 %v3597
    %4909 = vmatprep.subr.bf16.mxu0 %v3593
    %4910 = vmatpush2.bf16.msra.mxu0 %v3592
    %4911 = vmatprep.subr.bf16.mxu0 %v3588
    %4912 = vmatpush2.bf16.msra.mxu0 %v3587
    %4913 = vmatprep.subr.bf16.mxu0 %v3583
    %4914 = vmatpush2.bf16.msra.mxu0 %v3582
    %4915 = vmatprep.subr.bf16.mxu0 %v3578
    %4916 = vmatpush2.bf16.msra.mxu0 %v3577
    %4917 = vmatprep.subr.bf16.mxu0 %v3573
    %4918 = vmatpush2.bf16.msra.mxu0 %v3572
    %4919 = vmatprep.subr.bf16.mxu0 %v3568
    %4920 = vmatpush2.bf16.msra.mxu0 %v3567
    %4921 = vmatprep.mubr.bf16.mxu0 %v969
    %4922 = vmatmul.mubr.bf16.gmra.mxu0 %v955
    %v4923 = vpop.f32.mrf.mxu0
    %v4924 = vadd.f32 %v4883, %v4923
    %v4925 = vpop.f32.mrf.mxu0
    %v4926 = vadd.f32 %v4885, %v4925
    %v4927 = vpop.f32.mrf.mxu0
    %v4928 = vpop.f32.mrf.mxu0
    %4929 = vdwg.mxu0
    %4930 = vmatprep.subr.bf16.mxu0 %v3643
    %4931 = vmatpush1.bf16.msra.mxu0 %v3642
    %4932 = vmatprep.subr.bf16.mxu0 %v3638
    %4933 = vmatpush1.bf16.msra.mxu0 %v3637
    %4934 = vmatprep.subr.bf16.mxu0 %v3633
    %4935 = vmatpush1.bf16.msra.mxu0 %v3632
    %4936 = vmatprep.subr.bf16.mxu0 %v3628
    %4937 = vmatpush1.bf16.msra.mxu0 %v3627
    %4938 = vmatprep.subr.bf16.mxu0 %v3623
    %4939 = vmatpush1.bf16.msra.mxu0 %v3622
    %4940 = vmatprep.subr.bf16.mxu0 %v3618
    %4941 = vmatpush1.bf16.msra.mxu0 %v3617
    %4942 = vmatprep.subr.bf16.mxu0 %v3613
    %4943 = vmatpush1.bf16.msra.mxu0 %v3612
    %4944 = vmatprep.subr.bf16.mxu0 %v3608
    %4945 = vmatpush1.bf16.msra.mxu0 %v3607
    %4946 = vmatprep.subr.bf16.mxu0 %v3683
    %4947 = vmatpush2.bf16.msra.mxu0 %v3682
    %4948 = vmatprep.subr.bf16.mxu0 %v3678
    %4949 = vmatpush2.bf16.msra.mxu0 %v3677
    %4950 = vmatprep.subr.bf16.mxu0 %v3673
    %4951 = vmatpush2.bf16.msra.mxu0 %v3672
    %4952 = vmatprep.subr.bf16.mxu0 %v3668
    %4953 = vmatpush2.bf16.msra.mxu0 %v3667
    %4954 = vmatprep.subr.bf16.mxu0 %v3663
    %4955 = vmatpush2.bf16.msra.mxu0 %v3662
    %4956 = vmatprep.subr.bf16.mxu0 %v3658
    %4957 = vmatpush2.bf16.msra.mxu0 %v3657
    %4958 = vmatprep.subr.bf16.mxu0 %v3653
    %4959 = vmatpush2.bf16.msra.mxu0 %v3652
    %4960 = vmatprep.subr.bf16.mxu0 %v3648
    %4961 = vmatpush2.bf16.msra.mxu0 %v3647
    %4962 = vmatprep.mubr.bf16.mxu0 %v973
    %4963 = vmatmul.mubr.bf16.gmra.mxu0 %v971
    %v4964 = vpop.f32.mrf.mxu0
    %v4965 = vadd.f32 %v4924, %v4964
    %v4966 = vpop.f32.mrf.mxu0
    %v4967 = vadd.f32 %v4926, %v4966
    %v4968 = vpop.f32.mrf.mxu0
    %v4969 = vpop.f32.mrf.mxu0
    %4970 = vdwg.mxu0
    %4971 = vmatprep.subr.bf16.mxu0 %v3723
    %4972 = vmatpush1.bf16.msra.mxu0 %v3722
    %4973 = vmatprep.subr.bf16.mxu0 %v3718
    %4974 = vmatpush1.bf16.msra.mxu0 %v3717
    %4975 = vmatprep.subr.bf16.mxu0 %v3713
    %4976 = vmatpush1.bf16.msra.mxu0 %v3712
    %4977 = vmatprep.subr.bf16.mxu0 %v3708
    %4978 = vmatpush1.bf16.msra.mxu0 %v3707
    %4979 = vmatprep.subr.bf16.mxu0 %v3703
    %4980 = vmatpush1.bf16.msra.mxu0 %v3702
    %4981 = vmatprep.subr.bf16.mxu0 %v3698
    %4982 = vmatpush1.bf16.msra.mxu0 %v3697
    %4983 = vmatprep.subr.bf16.mxu0 %v3693
    %4984 = vmatpush1.bf16.msra.mxu0 %v3692
    %4985 = vmatprep.subr.bf16.mxu0 %v3688
    %4986 = vmatpush1.bf16.msra.mxu0 %v3687
    %4987 = vmatprep.subr.bf16.mxu0 %v3763
    %4988 = vmatpush2.bf16.msra.mxu0 %v3762
    %4989 = vmatprep.subr.bf16.mxu0 %v3758
    %4990 = vmatpush2.bf16.msra.mxu0 %v3757
    %4991 = vmatprep.subr.bf16.mxu0 %v3753
    %4992 = vmatpush2.bf16.msra.mxu0 %v3752
    %4993 = vmatprep.subr.bf16.mxu0 %v3748
    %4994 = vmatpush2.bf16.msra.mxu0 %v3747
    %4995 = vmatprep.subr.bf16.mxu0 %v3743
    %4996 = vmatpush2.bf16.msra.mxu0 %v3742
    %4997 = vmatprep.subr.bf16.mxu0 %v3738
    %4998 = vmatpush2.bf16.msra.mxu0 %v3737
    %4999 = vmatprep.subr.bf16.mxu0 %v3733
    %5000 = vmatpush2.bf16.msra.mxu0 %v3732
    %5001 = vmatprep.subr.bf16.mxu0 %v3728
    %5002 = vmatpush2.bf16.msra.mxu0 %v3727
    %5003 = vmatprep.mubr.bf16.mxu0 %v1011
    %5004 = vmatmul.mubr.bf16.gmra.mxu0 %v997
    %v5005 = vpop.f32.mrf.mxu0
    %v5006 = vadd.f32 %v4965, %v5005
    %v5007 = vpop.f32.mrf.mxu0
    %v5008 = vadd.f32 %v4967, %v5007
    %v5009 = vpop.f32.mrf.mxu0
    %v5010 = vpop.f32.mrf.mxu0
    %5011 = vdwg.mxu0
    %5012 = vmatprep.subr.bf16.mxu0 %v3803
    %5013 = vmatpush1.bf16.msra.mxu0 %v3802
    %5014 = vmatprep.subr.bf16.mxu0 %v3798
    %5015 = vmatpush1.bf16.msra.mxu0 %v3797
    %5016 = vmatprep.subr.bf16.mxu0 %v3793
    %5017 = vmatpush1.bf16.msra.mxu0 %v3792
    %5018 = vmatprep.subr.bf16.mxu0 %v3788
    %5019 = vmatpush1.bf16.msra.mxu0 %v3787
    %5020 = vmatprep.subr.bf16.mxu0 %v3783
    %5021 = vmatpush1.bf16.msra.mxu0 %v3782
    %5022 = vmatprep.subr.bf16.mxu0 %v3778
    %5023 = vmatpush1.bf16.msra.mxu0 %v3777
    %5024 = vmatprep.subr.bf16.mxu0 %v3773
    %5025 = vmatpush1.bf16.msra.mxu0 %v3772
    %5026 = vmatprep.subr.bf16.mxu0 %v3768
    %5027 = vmatpush1.bf16.msra.mxu0 %v3767
    %5028 = vmatprep.subr.bf16.mxu0 %v3843
    %5029 = vmatpush2.bf16.msra.mxu0 %v3842
    %5030 = vmatprep.subr.bf16.mxu0 %v3838
    %5031 = vmatpush2.bf16.msra.mxu0 %v3837
    %5032 = vmatprep.subr.bf16.mxu0 %v3833
    %5033 = vmatpush2.bf16.msra.mxu0 %v3832
    %5034 = vmatprep.subr.bf16.mxu0 %v3828
    %5035 = vmatpush2.bf16.msra.mxu0 %v3827
    %5036 = vmatprep.subr.bf16.mxu0 %v3823
    %5037 = vmatpush2.bf16.msra.mxu0 %v3822
    %5038 = vmatprep.subr.bf16.mxu0 %v3818
    %5039 = vmatpush2.bf16.msra.mxu0 %v3817
    %5040 = vmatprep.subr.bf16.mxu0 %v3813
    %5041 = vmatpush2.bf16.msra.mxu0 %v3812
    %5042 = vmatprep.subr.bf16.mxu0 %v3808
    %5043 = vmatpush2.bf16.msra.mxu0 %v3807
    %5044 = vmatprep.mubr.bf16.mxu0 %v1021
    %5045 = vmatmul.mubr.bf16.gmra.mxu0 %v1019
    %v5046 = vpop.f32.mrf.mxu0
    %v5047 = vadd.f32 %v5006, %v5046
    %v5048 = vpop.f32.mrf.mxu0
    %v5049 = vadd.f32 %v5008, %v5048
    %v5050 = vpop.f32.mrf.mxu0
    %v5051 = vpop.f32.mrf.mxu0
    %5052 = vdwg.mxu0
    %5053 = vmatprep.subr.bf16.mxu0 %v3883
    %5054 = vmatpush1.bf16.msra.mxu0 %v3882
    %5055 = vmatprep.subr.bf16.mxu0 %v3878
    %5056 = vmatpush1.bf16.msra.mxu0 %v3877
    %5057 = vmatprep.subr.bf16.mxu0 %v3873
    %5058 = vmatpush1.bf16.msra.mxu0 %v3872
    %5059 = vmatprep.subr.bf16.mxu0 %v3868
    %5060 = vmatpush1.bf16.msra.mxu0 %v3867
    %5061 = vmatprep.subr.bf16.mxu0 %v3863
    %5062 = vmatpush1.bf16.msra.mxu0 %v3862
    %5063 = vmatprep.subr.bf16.mxu0 %v3858
    %5064 = vmatpush1.bf16.msra.mxu0 %v3857
    %5065 = vmatprep.subr.bf16.mxu0 %v3853
    %5066 = vmatpush1.bf16.msra.mxu0 %v3852
    %5067 = vmatprep.subr.bf16.mxu0 %v3848
    %5068 = vmatpush1.bf16.msra.mxu0 %v3847
    %5069 = vmatprep.subr.bf16.mxu0 %v3923
    %5070 = vmatpush2.bf16.msra.mxu0 %v3922
    %5071 = vmatprep.subr.bf16.mxu0 %v3918
    %5072 = vmatpush2.bf16.msra.mxu0 %v3917
    %5073 = vmatprep.subr.bf16.mxu0 %v3913
    %5074 = vmatpush2.bf16.msra.mxu0 %v3912
    %5075 = vmatprep.subr.bf16.mxu0 %v3908
    %5076 = vmatpush2.bf16.msra.mxu0 %v3907
    %5077 = vmatprep.subr.bf16.mxu0 %v3903
    %5078 = vmatpush2.bf16.msra.mxu0 %v3902
    %5079 = vmatprep.subr.bf16.mxu0 %v3898
    %5080 = vmatpush2.bf16.msra.mxu0 %v3897
    %5081 = vmatprep.subr.bf16.mxu0 %v3893
    %5082 = vmatpush2.bf16.msra.mxu0 %v3892
    %5083 = vmatprep.subr.bf16.mxu0 %v3888
    %5084 = vmatpush2.bf16.msra.mxu0 %v3887
    %5085 = vmatprep.mubr.bf16.mxu0 %v1018
    %5086 = vmatmul.mubr.bf16.gmra.mxu0 %v1004
    %v5087 = vpop.f32.mrf.mxu0
    %v5088 = vadd.f32 %v5047, %v5087
    %v5089 = vpop.f32.mrf.mxu0
    %v5090 = vadd.f32 %v5049, %v5089
    %v5091 = vpop.f32.mrf.mxu0
    %v5092 = vpop.f32.mrf.mxu0
    %5093 = vdwg.mxu0
    %5094 = vmatprep.subr.bf16.mxu0 %v3963
    %5095 = vmatpush1.bf16.msra.mxu0 %v3962
    %5096 = vmatprep.subr.bf16.mxu0 %v3958
    %5097 = vmatpush1.bf16.msra.mxu0 %v3957
    %5098 = vmatprep.subr.bf16.mxu0 %v3953
    %5099 = vmatpush1.bf16.msra.mxu0 %v3952
    %5100 = vmatprep.subr.bf16.mxu0 %v3948
    %5101 = vmatpush1.bf16.msra.mxu0 %v3947
    %5102 = vmatprep.subr.bf16.mxu0 %v3943
    %5103 = vmatpush1.bf16.msra.mxu0 %v3942
    %5104 = vmatprep.subr.bf16.mxu0 %v3938
    %5105 = vmatpush1.bf16.msra.mxu0 %v3937
    %5106 = vmatprep.subr.bf16.mxu0 %v3933
    %5107 = vmatpush1.bf16.msra.mxu0 %v3932
    %5108 = vmatprep.subr.bf16.mxu0 %v3928
    %5109 = vmatpush1.bf16.msra.mxu0 %v3927
    %5110 = vmatprep.subr.bf16.mxu0 %v4003
    %5111 = vmatpush2.bf16.msra.mxu0 %v4002
    %5112 = vmatprep.subr.bf16.mxu0 %v3998
    %5113 = vmatpush2.bf16.msra.mxu0 %v3997
    %5114 = vmatprep.subr.bf16.mxu0 %v3993
    %5115 = vmatpush2.bf16.msra.mxu0 %v3992
    %5116 = vmatprep.subr.bf16.mxu0 %v3988
    %5117 = vmatpush2.bf16.msra.mxu0 %v3987
    %5118 = vmatprep.subr.bf16.mxu0 %v3983
    %5119 = vmatpush2.bf16.msra.mxu0 %v3982
    %5120 = vmatprep.subr.bf16.mxu0 %v3978
    %5121 = vmatpush2.bf16.msra.mxu0 %v3977
    %5122 = vmatprep.subr.bf16.mxu0 %v3973
    %5123 = vmatpush2.bf16.msra.mxu0 %v3972
    %5124 = vmatprep.subr.bf16.mxu0 %v3968
    %5125 = vmatpush2.bf16.msra.mxu0 %v3967
    %5126 = vmatprep.mubr.bf16.mxu0 %v1022
    %5127 = vmatmul.mubr.bf16.gmra.mxu0 %v1020
    %v5128 = vpop.f32.mrf.mxu0
    %v5129 = vadd.f32 %v5088, %v5128
    %v5130 = vpop.f32.mrf.mxu0
    %v5131 = vadd.f32 %v5090, %v5130
    %v5132 = vpop.f32.mrf.mxu0
    %v5133 = vpop.f32.mrf.mxu0
    %5134 = vdwg.mxu0
    %5135 = vmatprep.subr.bf16.mxu0 %v4043
    %5136 = vmatpush1.bf16.msra.mxu0 %v4042
    %5137 = vmatprep.subr.bf16.mxu0 %v4038
    %5138 = vmatpush1.bf16.msra.mxu0 %v4037
    %5139 = vmatprep.subr.bf16.mxu0 %v4033
    %5140 = vmatpush1.bf16.msra.mxu0 %v4032
    %5141 = vmatprep.subr.bf16.mxu0 %v4028
    %5142 = vmatpush1.bf16.msra.mxu0 %v4027
    %5143 = vmatprep.subr.bf16.mxu0 %v4023
    %5144 = vmatpush1.bf16.msra.mxu0 %v4022
    %5145 = vmatprep.subr.bf16.mxu0 %v4018
    %5146 = vmatpush1.bf16.msra.mxu0 %v4017
    %5147 = vmatprep.subr.bf16.mxu0 %v4013
    %5148 = vmatpush1.bf16.msra.mxu0 %v4012
    %5149 = vmatprep.subr.bf16.mxu0 %v4008
    %5150 = vmatpush1.bf16.msra.mxu0 %v4007
    %5151 = vmatprep.subr.bf16.mxu0 %v4083
    %5152 = vmatpush2.bf16.msra.mxu0 %v4082
    %5153 = vmatprep.subr.bf16.mxu0 %v4078
    %5154 = vmatpush2.bf16.msra.mxu0 %v4077
    %5155 = vmatprep.subr.bf16.mxu0 %v4073
    %5156 = vmatpush2.bf16.msra.mxu0 %v4072
    %5157 = vmatprep.subr.bf16.mxu0 %v4068
    %5158 = vmatpush2.bf16.msra.mxu0 %v4067
    %5159 = vmatprep.subr.bf16.mxu0 %v4063
    %5160 = vmatpush2.bf16.msra.mxu0 %v4062
    %5161 = vmatprep.subr.bf16.mxu0 %v4058
    %5162 = vmatpush2.bf16.msra.mxu0 %v4057
    %5163 = vmatprep.subr.bf16.mxu0 %v4053
    %5164 = vmatpush2.bf16.msra.mxu0 %v4052
    %5165 = vmatprep.subr.bf16.mxu0 %v4048
    %5166 = vmatpush2.bf16.msra.mxu0 %v4047
    %5167 = vmatprep.mubr.bf16.mxu0 %v1044
    %5168 = vmatmul.mubr.bf16.gmra.mxu0 %v1037
    %v5169 = vpop.f32.mrf.mxu0
    %v5170 = vadd.f32 %v5129, %v5169
    %v5171 = vpop.f32.mrf.mxu0
    %v5172 = vadd.f32 %v5131, %v5171
    %v5173 = vpop.f32.mrf.mxu0
    %v5174 = vpop.f32.mrf.mxu0
    %5175 = vdwg.mxu0
    %5176 = vmatprep.subr.bf16.mxu0 %v3405
    %5177 = vmatpush1.bf16.msra.mxu0 %v3404
    %5178 = vmatprep.subr.bf16.mxu0 %v3400
    %5179 = vmatpush1.bf16.msra.mxu0 %v3399
    %5180 = vmatprep.subr.bf16.mxu0 %v3395
    %5181 = vmatpush1.bf16.msra.mxu0 %v3394
    %5182 = vmatprep.subr.bf16.mxu0 %v3390
    %5183 = vmatpush1.bf16.msra.mxu0 %v3389
    %5184 = vmatprep.subr.bf16.mxu0 %v3385
    %5185 = vmatpush1.bf16.msra.mxu0 %v3384
    %5186 = vmatprep.subr.bf16.mxu0 %v3380
    %5187 = vmatpush1.bf16.msra.mxu0 %v3379
    %5188 = vmatprep.subr.bf16.mxu0 %v3375
    %5189 = vmatpush1.bf16.msra.mxu0 %v3374
    %5190 = vmatprep.subr.bf16.mxu0 %v3370
    %5191 = vmatpush1.bf16.msra.mxu0 %v3369
    %5192 = vmatprep.subr.bf16.mxu0 %v3445
    %5193 = vmatpush2.bf16.msra.mxu0 %v3444
    %5194 = vmatprep.subr.bf16.mxu0 %v3440
    %5195 = vmatpush2.bf16.msra.mxu0 %v3439
    %5196 = vmatprep.subr.bf16.mxu0 %v3435
    %5197 = vmatpush2.bf16.msra.mxu0 %v3434
    %5198 = vmatprep.subr.bf16.mxu0 %v3430
    %5199 = vmatpush2.bf16.msra.mxu0 %v3429
    %5200 = vmatprep.subr.bf16.mxu0 %v3425
    %5201 = vmatpush2.bf16.msra.mxu0 %v3424
    %5202 = vmatprep.subr.bf16.mxu0 %v3420
    %5203 = vmatpush2.bf16.msra.mxu0 %v3419
    %5204 = vmatprep.subr.bf16.mxu0 %v3415
    %5205 = vmatpush2.bf16.msra.mxu0 %v3414
    %5206 = vmatprep.subr.bf16.mxu0 %v3410
    %5207 = vmatpush2.bf16.msra.mxu0 %v3409
    %5208 = vmatprep.mubr.bf16.mxu0 %v962
    %5209 = vmatmul.mubr.bf16.gmra.mxu0 %v948
    %v5210 = vpop.f32.mrf.mxu0
    %v5211 = vadd.f32 %v908, %v5210
    %v5212 = vpop.f32.mrf.mxu0
    %v5213 = vadd.f32 %v912, %v5212
    %v5214 = vpop.f32.mrf.mxu0
    %v5215 = vpop.f32.mrf.mxu0
    %5216 = vdwg.mxu0
    %5217 = vmatprep.subr.bf16.mxu0 %v3485
    %5218 = vmatpush1.bf16.msra.mxu0 %v3484
    %5219 = vmatprep.subr.bf16.mxu0 %v3480
    %5220 = vmatpush1.bf16.msra.mxu0 %v3479
    %5221 = vmatprep.subr.bf16.mxu0 %v3475
    %5222 = vmatpush1.bf16.msra.mxu0 %v3474
    %5223 = vmatprep.subr.bf16.mxu0 %v3470
    %5224 = vmatpush1.bf16.msra.mxu0 %v3469
    %5225 = vmatprep.subr.bf16.mxu0 %v3465
    %5226 = vmatpush1.bf16.msra.mxu0 %v3464
    %5227 = vmatprep.subr.bf16.mxu0 %v3460
    %5228 = vmatpush1.bf16.msra.mxu0 %v3459
    %5229 = vmatprep.subr.bf16.mxu0 %v3455
    %5230 = vmatpush1.bf16.msra.mxu0 %v3454
    %5231 = vmatprep.subr.bf16.mxu0 %v3450
    %5232 = vmatpush1.bf16.msra.mxu0 %v3449
    %5233 = vmatprep.subr.bf16.mxu0 %v3525
    %5234 = vmatpush2.bf16.msra.mxu0 %v3524
    %5235 = vmatprep.subr.bf16.mxu0 %v3520
    %5236 = vmatpush2.bf16.msra.mxu0 %v3519
    %5237 = vmatprep.subr.bf16.mxu0 %v3515
    %5238 = vmatpush2.bf16.msra.mxu0 %v3514
    %5239 = vmatprep.subr.bf16.mxu0 %v3510
    %5240 = vmatpush2.bf16.msra.mxu0 %v3509
    %5241 = vmatprep.subr.bf16.mxu0 %v3505
    %5242 = vmatpush2.bf16.msra.mxu0 %v3504
    %5243 = vmatprep.subr.bf16.mxu0 %v3500
    %5244 = vmatpush2.bf16.msra.mxu0 %v3499
    %5245 = vmatprep.subr.bf16.mxu0 %v3495
    %5246 = vmatpush2.bf16.msra.mxu0 %v3494
    %5247 = vmatprep.subr.bf16.mxu0 %v3490
    %5248 = vmatpush2.bf16.msra.mxu0 %v3489
    %5249 = vmatprep.mubr.bf16.mxu0 %v972
    %5250 = vmatmul.mubr.bf16.gmra.mxu0 %v970
    %v5251 = vpop.f32.mrf.mxu0
    %v5252 = vadd.f32 %v5211, %v5251
    %v5253 = vpop.f32.mrf.mxu0
    %v5254 = vadd.f32 %v5213, %v5253
    %v5255 = vpop.f32.mrf.mxu0
    %v5256 = vpop.f32.mrf.mxu0
    %5257 = vdwg.mxu0
    %5258 = vmatprep.subr.bf16.mxu0 %v3565
    %5259 = vmatpush1.bf16.msra.mxu0 %v3564
    %5260 = vmatprep.subr.bf16.mxu0 %v3560
    %5261 = vmatpush1.bf16.msra.mxu0 %v3559
    %5262 = vmatprep.subr.bf16.mxu0 %v3555
    %5263 = vmatpush1.bf16.msra.mxu0 %v3554
    %5264 = vmatprep.subr.bf16.mxu0 %v3550
    %5265 = vmatpush1.bf16.msra.mxu0 %v3549
    %5266 = vmatprep.subr.bf16.mxu0 %v3545
    %5267 = vmatpush1.bf16.msra.mxu0 %v3544
    %5268 = vmatprep.subr.bf16.mxu0 %v3540
    %5269 = vmatpush1.bf16.msra.mxu0 %v3539
    %5270 = vmatprep.subr.bf16.mxu0 %v3535
    %5271 = vmatpush1.bf16.msra.mxu0 %v3534
    %5272 = vmatprep.subr.bf16.mxu0 %v3530
    %5273 = vmatpush1.bf16.msra.mxu0 %v3529
    %5274 = vmatprep.subr.bf16.mxu0 %v3605
    %5275 = vmatpush2.bf16.msra.mxu0 %v3604
    %5276 = vmatprep.subr.bf16.mxu0 %v3600
    %5277 = vmatpush2.bf16.msra.mxu0 %v3599
    %5278 = vmatprep.subr.bf16.mxu0 %v3595
    %5279 = vmatpush2.bf16.msra.mxu0 %v3594
    %5280 = vmatprep.subr.bf16.mxu0 %v3590
    %5281 = vmatpush2.bf16.msra.mxu0 %v3589
    %5282 = vmatprep.subr.bf16.mxu0 %v3585
    %5283 = vmatpush2.bf16.msra.mxu0 %v3584
    %5284 = vmatprep.subr.bf16.mxu0 %v3580
    %5285 = vmatpush2.bf16.msra.mxu0 %v3579
    %5286 = vmatprep.subr.bf16.mxu0 %v3575
    %5287 = vmatpush2.bf16.msra.mxu0 %v3574
    %5288 = vmatprep.subr.bf16.mxu0 %v3570
    %5289 = vmatpush2.bf16.msra.mxu0 %v3569
    %5290 = vmatprep.mubr.bf16.mxu0 %v969
    %5291 = vmatmul.mubr.bf16.gmra.mxu0 %v955
    %v5292 = vpop.f32.mrf.mxu0
    %v5293 = vadd.f32 %v5252, %v5292
    %v5294 = vpop.f32.mrf.mxu0
    %v5295 = vadd.f32 %v5254, %v5294
    %v5296 = vpop.f32.mrf.mxu0
    %v5297 = vpop.f32.mrf.mxu0
    %5298 = vdwg.mxu0
    %5299 = vmatprep.subr.bf16.mxu0 %v3645
    %5300 = vmatpush1.bf16.msra.mxu0 %v3644
    %5301 = vmatprep.subr.bf16.mxu0 %v3640
    %5302 = vmatpush1.bf16.msra.mxu0 %v3639
    %5303 = vmatprep.subr.bf16.mxu0 %v3635
    %5304 = vmatpush1.bf16.msra.mxu0 %v3634
    %5305 = vmatprep.subr.bf16.mxu0 %v3630
    %5306 = vmatpush1.bf16.msra.mxu0 %v3629
    %5307 = vmatprep.subr.bf16.mxu0 %v3625
    %5308 = vmatpush1.bf16.msra.mxu0 %v3624
    %5309 = vmatprep.subr.bf16.mxu0 %v3620
    %5310 = vmatpush1.bf16.msra.mxu0 %v3619
    %5311 = vmatprep.subr.bf16.mxu0 %v3615
    %5312 = vmatpush1.bf16.msra.mxu0 %v3614
    %5313 = vmatprep.subr.bf16.mxu0 %v3610
    %5314 = vmatpush1.bf16.msra.mxu0 %v3609
    %5315 = vmatprep.subr.bf16.mxu0 %v3685
    %5316 = vmatpush2.bf16.msra.mxu0 %v3684
    %5317 = vmatprep.subr.bf16.mxu0 %v3680
    %5318 = vmatpush2.bf16.msra.mxu0 %v3679
    %5319 = vmatprep.subr.bf16.mxu0 %v3675
    %5320 = vmatpush2.bf16.msra.mxu0 %v3674
    %5321 = vmatprep.subr.bf16.mxu0 %v3670
    %5322 = vmatpush2.bf16.msra.mxu0 %v3669
    %5323 = vmatprep.subr.bf16.mxu0 %v3665
    %5324 = vmatpush2.bf16.msra.mxu0 %v3664
    %5325 = vmatprep.subr.bf16.mxu0 %v3660
    %5326 = vmatpush2.bf16.msra.mxu0 %v3659
    %5327 = vmatprep.subr.bf16.mxu0 %v3655
    %5328 = vmatpush2.bf16.msra.mxu0 %v3654
    %5329 = vmatprep.subr.bf16.mxu0 %v3650
    %5330 = vmatpush2.bf16.msra.mxu0 %v3649
    %5331 = vmatprep.mubr.bf16.mxu0 %v973
    %5332 = vmatmul.mubr.bf16.gmra.mxu0 %v971
    %v5333 = vpop.f32.mrf.mxu0
    %v5334 = vadd.f32 %v5293, %v5333
    %v5335 = vpop.f32.mrf.mxu0
    %v5336 = vadd.f32 %v5295, %v5335
    %v5337 = vpop.f32.mrf.mxu0
    %v5338 = vpop.f32.mrf.mxu0
    %5339 = vdwg.mxu0
    %5340 = vmatprep.subr.bf16.mxu0 %v3725
    %5341 = vmatpush1.bf16.msra.mxu0 %v3724
    %5342 = vmatprep.subr.bf16.mxu0 %v3720
    %5343 = vmatpush1.bf16.msra.mxu0 %v3719
    %5344 = vmatprep.subr.bf16.mxu0 %v3715
    %5345 = vmatpush1.bf16.msra.mxu0 %v3714
    %5346 = vmatprep.subr.bf16.mxu0 %v3710
    %5347 = vmatpush1.bf16.msra.mxu0 %v3709
    %5348 = vmatprep.subr.bf16.mxu0 %v3705
    %5349 = vmatpush1.bf16.msra.mxu0 %v3704
    %5350 = vmatprep.subr.bf16.mxu0 %v3700
    %5351 = vmatpush1.bf16.msra.mxu0 %v3699
    %5352 = vmatprep.subr.bf16.mxu0 %v3695
    %5353 = vmatpush1.bf16.msra.mxu0 %v3694
    %5354 = vmatprep.subr.bf16.mxu0 %v3690
    %5355 = vmatpush1.bf16.msra.mxu0 %v3689
    %5356 = vmatprep.subr.bf16.mxu0 %v3765
    %5357 = vmatpush2.bf16.msra.mxu0 %v3764
    %5358 = vmatprep.subr.bf16.mxu0 %v3760
    %5359 = vmatpush2.bf16.msra.mxu0 %v3759
    %5360 = vmatprep.subr.bf16.mxu0 %v3755
    %5361 = vmatpush2.bf16.msra.mxu0 %v3754
    %5362 = vmatprep.subr.bf16.mxu0 %v3750
    %5363 = vmatpush2.bf16.msra.mxu0 %v3749
    %5364 = vmatprep.subr.bf16.mxu0 %v3745
    %5365 = vmatpush2.bf16.msra.mxu0 %v3744
    %5366 = vmatprep.subr.bf16.mxu0 %v3740
    %5367 = vmatpush2.bf16.msra.mxu0 %v3739
    %5368 = vmatprep.subr.bf16.mxu0 %v3735
    %5369 = vmatpush2.bf16.msra.mxu0 %v3734
    %5370 = vmatprep.subr.bf16.mxu0 %v3730
    %5371 = vmatpush2.bf16.msra.mxu0 %v3729
    %5372 = vmatprep.mubr.bf16.mxu0 %v1011
    %5373 = vmatmul.mubr.bf16.gmra.mxu0 %v997
    %v5374 = vpop.f32.mrf.mxu0
    %v5375 = vadd.f32 %v5334, %v5374
    %v5376 = vpop.f32.mrf.mxu0
    %v5377 = vadd.f32 %v5336, %v5376
    %v5378 = vpop.f32.mrf.mxu0
    %v5379 = vpop.f32.mrf.mxu0
    %5380 = vdwg.mxu0
    %5381 = vmatprep.subr.bf16.mxu0 %v3805
    %5382 = vmatpush1.bf16.msra.mxu0 %v3804
    %5383 = vmatprep.subr.bf16.mxu0 %v3800
    %5384 = vmatpush1.bf16.msra.mxu0 %v3799
    %5385 = vmatprep.subr.bf16.mxu0 %v3795
    %5386 = vmatpush1.bf16.msra.mxu0 %v3794
    %5387 = vmatprep.subr.bf16.mxu0 %v3790
    %5388 = vmatpush1.bf16.msra.mxu0 %v3789
    %5389 = vmatprep.subr.bf16.mxu0 %v3785
    %5390 = vmatpush1.bf16.msra.mxu0 %v3784
    %5391 = vmatprep.subr.bf16.mxu0 %v3780
    %5392 = vmatpush1.bf16.msra.mxu0 %v3779
    %5393 = vmatprep.subr.bf16.mxu0 %v3775
    %5394 = vmatpush1.bf16.msra.mxu0 %v3774
    %5395 = vmatprep.subr.bf16.mxu0 %v3770
    %5396 = vmatpush1.bf16.msra.mxu0 %v3769
    %5397 = vmatprep.subr.bf16.mxu0 %v3845
    %5398 = vmatpush2.bf16.msra.mxu0 %v3844
    %5399 = vmatprep.subr.bf16.mxu0 %v3840
    %5400 = vmatpush2.bf16.msra.mxu0 %v3839
    %5401 = vmatprep.subr.bf16.mxu0 %v3835
    %5402 = vmatpush2.bf16.msra.mxu0 %v3834
    %5403 = vmatprep.subr.bf16.mxu0 %v3830
    %5404 = vmatpush2.bf16.msra.mxu0 %v3829
    %5405 = vmatprep.subr.bf16.mxu0 %v3825
    %5406 = vmatpush2.bf16.msra.mxu0 %v3824
    %5407 = vmatprep.subr.bf16.mxu0 %v3820
    %5408 = vmatpush2.bf16.msra.mxu0 %v3819
    %5409 = vmatprep.subr.bf16.mxu0 %v3815
    %5410 = vmatpush2.bf16.msra.mxu0 %v3814
    %5411 = vmatprep.subr.bf16.mxu0 %v3810
    %5412 = vmatpush2.bf16.msra.mxu0 %v3809
    %5413 = vmatprep.mubr.bf16.mxu0 %v1021
    %5414 = vmatmul.mubr.bf16.gmra.mxu0 %v1019
    %v5415 = vpop.f32.mrf.mxu0
    %v5416 = vadd.f32 %v5375, %v5415
    %v5417 = vpop.f32.mrf.mxu0
    %v5418 = vadd.f32 %v5377, %v5417
    %v5419 = vpop.f32.mrf.mxu0
    %v5420 = vpop.f32.mrf.mxu0
    %5421 = vdwg.mxu0
    %5422 = vmatprep.subr.bf16.mxu0 %v3885
    %5423 = vmatpush1.bf16.msra.mxu0 %v3884
    %5424 = vmatprep.subr.bf16.mxu0 %v3880
    %5425 = vmatpush1.bf16.msra.mxu0 %v3879
    %5426 = vmatprep.subr.bf16.mxu0 %v3875
    %5427 = vmatpush1.bf16.msra.mxu0 %v3874
    %5428 = vmatprep.subr.bf16.mxu0 %v3870
    %5429 = vmatpush1.bf16.msra.mxu0 %v3869
    %5430 = vmatprep.subr.bf16.mxu0 %v3865
    %5431 = vmatpush1.bf16.msra.mxu0 %v3864
    %5432 = vmatprep.subr.bf16.mxu0 %v3860
    %5433 = vmatpush1.bf16.msra.mxu0 %v3859
    %5434 = vmatprep.subr.bf16.mxu0 %v3855
    %5435 = vmatpush1.bf16.msra.mxu0 %v3854
    %5436 = vmatprep.subr.bf16.mxu0 %v3850
    %5437 = vmatpush1.bf16.msra.mxu0 %v3849
    %5438 = vmatprep.subr.bf16.mxu0 %v3925
    %5439 = vmatpush2.bf16.msra.mxu0 %v3924
    %5440 = vmatprep.subr.bf16.mxu0 %v3920
    %5441 = vmatpush2.bf16.msra.mxu0 %v3919
    %5442 = vmatprep.subr.bf16.mxu0 %v3915
    %5443 = vmatpush2.bf16.msra.mxu0 %v3914
    %5444 = vmatprep.subr.bf16.mxu0 %v3910
    %5445 = vmatpush2.bf16.msra.mxu0 %v3909
    %5446 = vmatprep.subr.bf16.mxu0 %v3905
    %5447 = vmatpush2.bf16.msra.mxu0 %v3904
    %5448 = vmatprep.subr.bf16.mxu0 %v3900
    %5449 = vmatpush2.bf16.msra.mxu0 %v3899
    %5450 = vmatprep.subr.bf16.mxu0 %v3895
    %5451 = vmatpush2.bf16.msra.mxu0 %v3894
    %5452 = vmatprep.subr.bf16.mxu0 %v3890
    %5453 = vmatpush2.bf16.msra.mxu0 %v3889
    %5454 = vmatprep.mubr.bf16.mxu0 %v1018
    %5455 = vmatmul.mubr.bf16.gmra.mxu0 %v1004
    %v5456 = vpop.f32.mrf.mxu0
    %v5457 = vadd.f32 %v5416, %v5456
    %v5458 = vpop.f32.mrf.mxu0
    %v5459 = vadd.f32 %v5418, %v5458
    %v5460 = vpop.f32.mrf.mxu0
    %v5461 = vpop.f32.mrf.mxu0
    %5462 = vdwg.mxu0
    %5463 = vmatprep.subr.bf16.mxu0 %v3965
    %5464 = vmatpush1.bf16.msra.mxu0 %v3964
    %5465 = vmatprep.subr.bf16.mxu0 %v3960
    %5466 = vmatpush1.bf16.msra.mxu0 %v3959
    %5467 = vmatprep.subr.bf16.mxu0 %v3955
    %5468 = vmatpush1.bf16.msra.mxu0 %v3954
    %5469 = vmatprep.subr.bf16.mxu0 %v3950
    %5470 = vmatpush1.bf16.msra.mxu0 %v3949
    %5471 = vmatprep.subr.bf16.mxu0 %v3945
    %5472 = vmatpush1.bf16.msra.mxu0 %v3944
    %5473 = vmatprep.subr.bf16.mxu0 %v3940
    %5474 = vmatpush1.bf16.msra.mxu0 %v3939
    %5475 = vmatprep.subr.bf16.mxu0 %v3935
    %5476 = vmatpush1.bf16.msra.mxu0 %v3934
    %5477 = vmatprep.subr.bf16.mxu0 %v3930
    %5478 = vmatpush1.bf16.msra.mxu0 %v3929
    %5479 = vmatprep.subr.bf16.mxu0 %v4005
    %5480 = vmatpush2.bf16.msra.mxu0 %v4004
    %5481 = vmatprep.subr.bf16.mxu0 %v4000
    %5482 = vmatpush2.bf16.msra.mxu0 %v3999
    %5483 = vmatprep.subr.bf16.mxu0 %v3995
    %5484 = vmatpush2.bf16.msra.mxu0 %v3994
    %5485 = vmatprep.subr.bf16.mxu0 %v3990
    %5486 = vmatpush2.bf16.msra.mxu0 %v3989
    %5487 = vmatprep.subr.bf16.mxu0 %v3985
    %5488 = vmatpush2.bf16.msra.mxu0 %v3984
    %5489 = vmatprep.subr.bf16.mxu0 %v3980
    %5490 = vmatpush2.bf16.msra.mxu0 %v3979
    %5491 = vmatprep.subr.bf16.mxu0 %v3975
    %5492 = vmatpush2.bf16.msra.mxu0 %v3974
    %5493 = vmatprep.subr.bf16.mxu0 %v3970
    %5494 = vmatpush2.bf16.msra.mxu0 %v3969
    %5495 = vmatprep.mubr.bf16.mxu0 %v1022
    %5496 = vmatmul.mubr.bf16.gmra.mxu0 %v1020
    %v5497 = vpop.f32.mrf.mxu0
    %v5498 = vadd.f32 %v5457, %v5497
    %v5499 = vpop.f32.mrf.mxu0
    %v5500 = vadd.f32 %v5459, %v5499
    %v5501 = vpop.f32.mrf.mxu0
    %v5502 = vpop.f32.mrf.mxu0
    %5503 = vdwg.mxu0
    %5504 = vmatprep.subr.bf16.mxu0 %v4045
    %5505 = vmatpush1.bf16.msra.mxu0 %v4044
    %5506 = vmatprep.subr.bf16.mxu0 %v4040
    %5507 = vmatpush1.bf16.msra.mxu0 %v4039
    %5508 = vmatprep.subr.bf16.mxu0 %v4035
    %5509 = vmatpush1.bf16.msra.mxu0 %v4034
    %5510 = vmatprep.subr.bf16.mxu0 %v4030
    %5511 = vmatpush1.bf16.msra.mxu0 %v4029
    %5512 = vmatprep.subr.bf16.mxu0 %v4025
    %5513 = vmatpush1.bf16.msra.mxu0 %v4024
    %5514 = vmatprep.subr.bf16.mxu0 %v4020
    %5515 = vmatpush1.bf16.msra.mxu0 %v4019
    %5516 = vmatprep.subr.bf16.mxu0 %v4015
    %5517 = vmatpush1.bf16.msra.mxu0 %v4014
    %5518 = vmatprep.subr.bf16.mxu0 %v4010
    %5519 = vmatpush1.bf16.msra.mxu0 %v4009
    %5520 = vmatprep.subr.bf16.mxu0 %v4085
    %5521 = vmatpush2.bf16.msra.mxu0 %v4084
    %5522 = vmatprep.subr.bf16.mxu0 %v4080
    %5523 = vmatpush2.bf16.msra.mxu0 %v4079
    %5524 = vmatprep.subr.bf16.mxu0 %v4075
    %5525 = vmatpush2.bf16.msra.mxu0 %v4074
    %5526 = vmatprep.subr.bf16.mxu0 %v4070
    %5527 = vmatpush2.bf16.msra.mxu0 %v4069
    %5528 = vmatprep.subr.bf16.mxu0 %v4065
    %5529 = vmatpush2.bf16.msra.mxu0 %v4064
    %5530 = vmatprep.subr.bf16.mxu0 %v4060
    %5531 = vmatpush2.bf16.msra.mxu0 %v4059
    %5532 = vmatprep.subr.bf16.mxu0 %v4055
    %5533 = vmatpush2.bf16.msra.mxu0 %v4054
    %5534 = vmatprep.subr.bf16.mxu0 %v4050
    %5535 = vmatpush2.bf16.msra.mxu0 %v4049
    %5536 = vmatprep.mubr.bf16.mxu0 %v1044
    %5537 = vmatmul.mubr.bf16.gmra.mxu0 %v1037
    %v5538 = vpop.f32.mrf.mxu0
    %v5539 = vadd.f32 %v5498, %v5538
    %v5540 = vpop.f32.mrf.mxu0
    %v5541 = vadd.f32 %v5500, %v5540
    %v5542 = vpop.f32.mrf.mxu0
    %v5543 = vpop.f32.mrf.mxu0
    %5544 = vdwg.mxu0
    %5545 = vmatprep.subr.bf16.mxu0 0
    %5546 = vmatpush1.bf16.msra.mxu0 %v3406
    %5547 = vmatprep.subr.bf16.mxu0 0
    %5548 = vmatpush1.bf16.msra.mxu0 %v3401
    %5549 = vmatprep.subr.bf16.mxu0 0
    %5550 = vmatpush1.bf16.msra.mxu0 %v3396
    %5551 = vmatprep.subr.bf16.mxu0 0
    %5552 = vmatpush1.bf16.msra.mxu0 %v3391
    %5553 = vmatprep.subr.bf16.mxu0 0
    %5554 = vmatpush1.bf16.msra.mxu0 %v3386
    %5555 = vmatprep.subr.bf16.mxu0 0
    %5556 = vmatpush1.bf16.msra.mxu0 %v3381
    %5557 = vmatprep.subr.bf16.mxu0 0
    %5558 = vmatpush1.bf16.msra.mxu0 %v3376
    %5559 = vmatprep.subr.bf16.mxu0 0
    %5560 = vmatpush1.bf16.msra.mxu0 %v3371
    %5561 = vmatprep.subr.bf16.mxu0 0
    %5562 = vmatpush2.bf16.msra.mxu0 %v3446
    %5563 = vmatprep.subr.bf16.mxu0 0
    %5564 = vmatpush2.bf16.msra.mxu0 %v3441
    %5565 = vmatprep.subr.bf16.mxu0 0
    %5566 = vmatpush2.bf16.msra.mxu0 %v3436
    %5567 = vmatprep.subr.bf16.mxu0 0
    %5568 = vmatpush2.bf16.msra.mxu0 %v3431
    %5569 = vmatprep.subr.bf16.mxu0 0
    %5570 = vmatpush2.bf16.msra.mxu0 %v3426
    %5571 = vmatprep.subr.bf16.mxu0 0
    %5572 = vmatpush2.bf16.msra.mxu0 %v3421
    %5573 = vmatprep.subr.bf16.mxu0 0
    %5574 = vmatpush2.bf16.msra.mxu0 %v3416
    %5575 = vmatprep.subr.bf16.mxu0 0
    %5576 = vmatpush2.bf16.msra.mxu0 %v3411
    %5577 = vmatprep.mubr.bf16.mxu0 %v962
    %5578 = vmatmul.mubr.bf16.gmra.mxu0 %v948
    %v5579 = vpop.f32.mrf.mxu0
    %v5580 = vadd.f32 %v916, %v5579
    %v5581 = vpop.f32.mrf.mxu0
    %v5582 = vpop.f32.mrf.mxu0
    %v5583 = vpop.f32.mrf.mxu0
    %5584 = vdwg.mxu0
    %5585 = vmatprep.subr.bf16.mxu0 0
    %5586 = vmatpush1.bf16.msra.mxu0 %v3486
    %5587 = vmatprep.subr.bf16.mxu0 0
    %5588 = vmatpush1.bf16.msra.mxu0 %v3481
    %5589 = vmatprep.subr.bf16.mxu0 0
    %5590 = vmatpush1.bf16.msra.mxu0 %v3476
    %5591 = vmatprep.subr.bf16.mxu0 0
    %5592 = vmatpush1.bf16.msra.mxu0 %v3471
    %5593 = vmatprep.subr.bf16.mxu0 0
    %5594 = vmatpush1.bf16.msra.mxu0 %v3466
    %5595 = vmatprep.subr.bf16.mxu0 0
    %5596 = vmatpush1.bf16.msra.mxu0 %v3461
    %5597 = vmatprep.subr.bf16.mxu0 0
    %5598 = vmatpush1.bf16.msra.mxu0 %v3456
    %5599 = vmatprep.subr.bf16.mxu0 0
    %5600 = vmatpush1.bf16.msra.mxu0 %v3451
    %5601 = vmatprep.subr.bf16.mxu0 0
    %5602 = vmatpush2.bf16.msra.mxu0 %v3526
    %5603 = vmatprep.subr.bf16.mxu0 0
    %5604 = vmatpush2.bf16.msra.mxu0 %v3521
    %5605 = vmatprep.subr.bf16.mxu0 0
    %5606 = vmatpush2.bf16.msra.mxu0 %v3516
    %5607 = vmatprep.subr.bf16.mxu0 0
    %5608 = vmatpush2.bf16.msra.mxu0 %v3511
    %5609 = vmatprep.subr.bf16.mxu0 0
    %5610 = vmatpush2.bf16.msra.mxu0 %v3506
    %5611 = vmatprep.subr.bf16.mxu0 0
    %5612 = vmatpush2.bf16.msra.mxu0 %v3501
    %5613 = vmatprep.subr.bf16.mxu0 0
    %5614 = vmatpush2.bf16.msra.mxu0 %v3496
    %5615 = vmatprep.subr.bf16.mxu0 0
    %5616 = vmatpush2.bf16.msra.mxu0 %v3491
    %5617 = vmatprep.mubr.bf16.mxu0 %v972
    %5618 = vmatmul.mubr.bf16.gmra.mxu0 %v970
    %v5619 = vpop.f32.mrf.mxu0
    %v5620 = vadd.f32 %v5580, %v5619
    %v5621 = vpop.f32.mrf.mxu0
    %v5622 = vpop.f32.mrf.mxu0
    %v5623 = vpop.f32.mrf.mxu0
    %5624 = vdwg.mxu0
    %5625 = vmatprep.subr.bf16.mxu0 0
    %5626 = vmatpush1.bf16.msra.mxu0 %v3566
    %5627 = vmatprep.subr.bf16.mxu0 0
    %5628 = vmatpush1.bf16.msra.mxu0 %v3561
    %5629 = vmatprep.subr.bf16.mxu0 0
    %5630 = vmatpush1.bf16.msra.mxu0 %v3556
    %5631 = vmatprep.subr.bf16.mxu0 0
    %5632 = vmatpush1.bf16.msra.mxu0 %v3551
    %5633 = vmatprep.subr.bf16.mxu0 0
    %5634 = vmatpush1.bf16.msra.mxu0 %v3546
    %5635 = vmatprep.subr.bf16.mxu0 0
    %5636 = vmatpush1.bf16.msra.mxu0 %v3541
    %5637 = vmatprep.subr.bf16.mxu0 0
    %5638 = vmatpush1.bf16.msra.mxu0 %v3536
    %5639 = vmatprep.subr.bf16.mxu0 0
    %5640 = vmatpush1.bf16.msra.mxu0 %v3531
    %5641 = vmatprep.subr.bf16.mxu0 0
    %5642 = vmatpush2.bf16.msra.mxu0 %v3606
    %5643 = vmatprep.subr.bf16.mxu0 0
    %5644 = vmatpush2.bf16.msra.mxu0 %v3601
    %5645 = vmatprep.subr.bf16.mxu0 0
    %5646 = vmatpush2.bf16.msra.mxu0 %v3596
    %5647 = vmatprep.subr.bf16.mxu0 0
    %5648 = vmatpush2.bf16.msra.mxu0 %v3591
    %5649 = vmatprep.subr.bf16.mxu0 0
    %5650 = vmatpush2.bf16.msra.mxu0 %v3586
    %5651 = vmatprep.subr.bf16.mxu0 0
    %5652 = vmatpush2.bf16.msra.mxu0 %v3581
    %5653 = vmatprep.subr.bf16.mxu0 0
    %5654 = vmatpush2.bf16.msra.mxu0 %v3576
    %5655 = vmatprep.subr.bf16.mxu0 0
    %5656 = vmatpush2.bf16.msra.mxu0 %v3571
    %5657 = vmatprep.mubr.bf16.mxu0 %v969
    %5658 = vmatmul.mubr.bf16.gmra.mxu0 %v955
    %v5659 = vpop.f32.mrf.mxu0
    %v5660 = vadd.f32 %v5620, %v5659
    %v5661 = vpop.f32.mrf.mxu0
    %v5662 = vpop.f32.mrf.mxu0
    %v5663 = vpop.f32.mrf.mxu0
    %5664 = vdwg.mxu0
    %5665 = vmatprep.subr.bf16.mxu0 0
    %5666 = vmatpush1.bf16.msra.mxu0 %v3646
    %5667 = vmatprep.subr.bf16.mxu0 0
    %5668 = vmatpush1.bf16.msra.mxu0 %v3641
    %5669 = vmatprep.subr.bf16.mxu0 0
    %5670 = vmatpush1.bf16.msra.mxu0 %v3636
    %5671 = vmatprep.subr.bf16.mxu0 0
    %5672 = vmatpush1.bf16.msra.mxu0 %v3631
    %5673 = vmatprep.subr.bf16.mxu0 0
    %5674 = vmatpush1.bf16.msra.mxu0 %v3626
    %5675 = vmatprep.subr.bf16.mxu0 0
    %5676 = vmatpush1.bf16.msra.mxu0 %v3621
    %5677 = vmatprep.subr.bf16.mxu0 0
    %5678 = vmatpush1.bf16.msra.mxu0 %v3616
    %5679 = vmatprep.subr.bf16.mxu0 0
    %5680 = vmatpush1.bf16.msra.mxu0 %v3611
    %5681 = vmatprep.subr.bf16.mxu0 0
    %5682 = vmatpush2.bf16.msra.mxu0 %v3686
    %5683 = vmatprep.subr.bf16.mxu0 0
    %5684 = vmatpush2.bf16.msra.mxu0 %v3681
    %5685 = vmatprep.subr.bf16.mxu0 0
    %5686 = vmatpush2.bf16.msra.mxu0 %v3676
    %5687 = vmatprep.subr.bf16.mxu0 0
    %5688 = vmatpush2.bf16.msra.mxu0 %v3671
    %5689 = vmatprep.subr.bf16.mxu0 0
    %5690 = vmatpush2.bf16.msra.mxu0 %v3666
    %5691 = vmatprep.subr.bf16.mxu0 0
    %5692 = vmatpush2.bf16.msra.mxu0 %v3661
    %5693 = vmatprep.subr.bf16.mxu0 0
    %5694 = vmatpush2.bf16.msra.mxu0 %v3656
    %5695 = vmatprep.subr.bf16.mxu0 0
    %5696 = vmatpush2.bf16.msra.mxu0 %v3651
    %5697 = vmatprep.mubr.bf16.mxu0 %v973
    %5698 = vmatmul.mubr.bf16.gmra.mxu0 %v971
    %v5699 = vpop.f32.mrf.mxu0
    %v5700 = vadd.f32 %v5660, %v5699
    %v5701 = vpop.f32.mrf.mxu0
    %v5702 = vpop.f32.mrf.mxu0
    %v5703 = vpop.f32.mrf.mxu0
    %5704 = vdwg.mxu0
    %5705 = vmatprep.subr.bf16.mxu0 0
    %5706 = vmatpush1.bf16.msra.mxu0 %v3726
    %5707 = vmatprep.subr.bf16.mxu0 0
    %5708 = vmatpush1.bf16.msra.mxu0 %v3721
    %5709 = vmatprep.subr.bf16.mxu0 0
    %5710 = vmatpush1.bf16.msra.mxu0 %v3716
    %5711 = vmatprep.subr.bf16.mxu0 0
    %5712 = vmatpush1.bf16.msra.mxu0 %v3711
    %5713 = vmatprep.subr.bf16.mxu0 0
    %5714 = vmatpush1.bf16.msra.mxu0 %v3706
    %5715 = vmatprep.subr.bf16.mxu0 0
    %5716 = vmatpush1.bf16.msra.mxu0 %v3701
    %5717 = vmatprep.subr.bf16.mxu0 0
    %5718 = vmatpush1.bf16.msra.mxu0 %v3696
    %5719 = vmatprep.subr.bf16.mxu0 0
    %5720 = vmatpush1.bf16.msra.mxu0 %v3691
    %5721 = vmatprep.subr.bf16.mxu0 0
    %5722 = vmatpush2.bf16.msra.mxu0 %v3766
    %5723 = vmatprep.subr.bf16.mxu0 0
    %5724 = vmatpush2.bf16.msra.mxu0 %v3761
    %5725 = vmatprep.subr.bf16.mxu0 0
    %5726 = vmatpush2.bf16.msra.mxu0 %v3756
    %5727 = vmatprep.subr.bf16.mxu0 0
    %5728 = vmatpush2.bf16.msra.mxu0 %v3751
    %5729 = vmatprep.subr.bf16.mxu0 0
    %5730 = vmatpush2.bf16.msra.mxu0 %v3746
    %5731 = vmatprep.subr.bf16.mxu0 0
    %5732 = vmatpush2.bf16.msra.mxu0 %v3741
    %5733 = vmatprep.subr.bf16.mxu0 0
    %5734 = vmatpush2.bf16.msra.mxu0 %v3736
    %5735 = vmatprep.subr.bf16.mxu0 0
    %5736 = vmatpush2.bf16.msra.mxu0 %v3731
    %5737 = vmatprep.mubr.bf16.mxu0 %v1011
    %5738 = vmatmul.mubr.bf16.gmra.mxu0 %v997
    %v5739 = vpop.f32.mrf.mxu0
    %v5740 = vadd.f32 %v5700, %v5739
    %v5741 = vpop.f32.mrf.mxu0
    %v5742 = vpop.f32.mrf.mxu0
    %v5743 = vpop.f32.mrf.mxu0
    %5744 = vdwg.mxu0
    %5745 = vmatprep.subr.bf16.mxu0 0
    %5746 = vmatpush1.bf16.msra.mxu0 %v3806
    %5747 = vmatprep.subr.bf16.mxu0 0
    %5748 = vmatpush1.bf16.msra.mxu0 %v3801
    %5749 = vmatprep.subr.bf16.mxu0 0
    %5750 = vmatpush1.bf16.msra.mxu0 %v3796
    %5751 = vmatprep.subr.bf16.mxu0 0
    %5752 = vmatpush1.bf16.msra.mxu0 %v3791
    %5753 = vmatprep.subr.bf16.mxu0 0
    %5754 = vmatpush1.bf16.msra.mxu0 %v3786
    %5755 = vmatprep.subr.bf16.mxu0 0
    %5756 = vmatpush1.bf16.msra.mxu0 %v3781
    %5757 = vmatprep.subr.bf16.mxu0 0
    %5758 = vmatpush1.bf16.msra.mxu0 %v3776
    %5759 = vmatprep.subr.bf16.mxu0 0
    %5760 = vmatpush1.bf16.msra.mxu0 %v3771
    %5761 = vmatprep.subr.bf16.mxu0 0
    %5762 = vmatpush2.bf16.msra.mxu0 %v3846
    %5763 = vmatprep.subr.bf16.mxu0 0
    %5764 = vmatpush2.bf16.msra.mxu0 %v3841
    %5765 = vmatprep.subr.bf16.mxu0 0
    %5766 = vmatpush2.bf16.msra.mxu0 %v3836
    %5767 = vmatprep.subr.bf16.mxu0 0
    %5768 = vmatpush2.bf16.msra.mxu0 %v3831
    %5769 = vmatprep.subr.bf16.mxu0 0
    %5770 = vmatpush2.bf16.msra.mxu0 %v3826
    %5771 = vmatprep.subr.bf16.mxu0 0
    %5772 = vmatpush2.bf16.msra.mxu0 %v3821
    %5773 = vmatprep.subr.bf16.mxu0 0
    %5774 = vmatpush2.bf16.msra.mxu0 %v3816
    %5775 = vmatprep.subr.bf16.mxu0 0
    %5776 = vmatpush2.bf16.msra.mxu0 %v3811
    %5777 = vmatprep.mubr.bf16.mxu0 %v1021
    %5778 = vmatmul.mubr.bf16.gmra.mxu0 %v1019
    %v5779 = vpop.f32.mrf.mxu0
    %v5780 = vadd.f32 %v5740, %v5779
    %v5781 = vpop.f32.mrf.mxu0
    %v5782 = vpop.f32.mrf.mxu0
    %v5783 = vpop.f32.mrf.mxu0
    %5784 = vdwg.mxu0
    %5785 = vmatprep.subr.bf16.mxu0 0
    %5786 = vmatpush1.bf16.msra.mxu0 %v3886
    %5787 = vmatprep.subr.bf16.mxu0 0
    %5788 = vmatpush1.bf16.msra.mxu0 %v3881
    %5789 = vmatprep.subr.bf16.mxu0 0
    %5790 = vmatpush1.bf16.msra.mxu0 %v3876
    %5791 = vmatprep.subr.bf16.mxu0 0
    %5792 = vmatpush1.bf16.msra.mxu0 %v3871
    %5793 = vmatprep.subr.bf16.mxu0 0
    %5794 = vmatpush1.bf16.msra.mxu0 %v3866
    %5795 = vmatprep.subr.bf16.mxu0 0
    %5796 = vmatpush1.bf16.msra.mxu0 %v3861
    %5797 = vmatprep.subr.bf16.mxu0 0
    %5798 = vmatpush1.bf16.msra.mxu0 %v3856
    %5799 = vmatprep.subr.bf16.mxu0 0
    %5800 = vmatpush1.bf16.msra.mxu0 %v3851
    %5801 = vmatprep.subr.bf16.mxu0 0
    %5802 = vmatpush2.bf16.msra.mxu0 %v3926
    %5803 = vmatprep.subr.bf16.mxu0 0
    %5804 = vmatpush2.bf16.msra.mxu0 %v3921
    %5805 = vmatprep.subr.bf16.mxu0 0
    %5806 = vmatpush2.bf16.msra.mxu0 %v3916
    %5807 = vmatprep.subr.bf16.mxu0 0
    %5808 = vmatpush2.bf16.msra.mxu0 %v3911
    %5809 = vmatprep.subr.bf16.mxu0 0
    %5810 = vmatpush2.bf16.msra.mxu0 %v3906
    %5811 = vmatprep.subr.bf16.mxu0 0
    %5812 = vmatpush2.bf16.msra.mxu0 %v3901
    %5813 = vmatprep.subr.bf16.mxu0 0
    %5814 = vmatpush2.bf16.msra.mxu0 %v3896
    %5815 = vmatprep.subr.bf16.mxu0 0
    %5816 = vmatpush2.bf16.msra.mxu0 %v3891
    %5817 = vmatprep.mubr.bf16.mxu0 %v1018
    %5818 = vmatmul.mubr.bf16.gmra.mxu0 %v1004
    %v5819 = vpop.f32.mrf.mxu0
    %v5820 = vadd.f32 %v5780, %v5819
    %v5821 = vpop.f32.mrf.mxu0
    %v5822 = vpop.f32.mrf.mxu0
    %v5823 = vpop.f32.mrf.mxu0
    %5824 = vdwg.mxu0
    %5825 = vmatprep.subr.bf16.mxu0 0
    %5826 = vmatpush1.bf16.msra.mxu0 %v3966
    %5827 = vmatprep.subr.bf16.mxu0 0
    %5828 = vmatpush1.bf16.msra.mxu0 %v3961
    %5829 = vmatprep.subr.bf16.mxu0 0
    %5830 = vmatpush1.bf16.msra.mxu0 %v3956
    %5831 = vmatprep.subr.bf16.mxu0 0
    %5832 = vmatpush1.bf16.msra.mxu0 %v3951
    %5833 = vmatprep.subr.bf16.mxu0 0
    %5834 = vmatpush1.bf16.msra.mxu0 %v3946
    %5835 = vmatprep.subr.bf16.mxu0 0
    %5836 = vmatpush1.bf16.msra.mxu0 %v3941
    %5837 = vmatprep.subr.bf16.mxu0 0
    %5838 = vmatpush1.bf16.msra.mxu0 %v3936
    %5839 = vmatprep.subr.bf16.mxu0 0
    %5840 = vmatpush1.bf16.msra.mxu0 %v3931
    %5841 = vmatprep.subr.bf16.mxu0 0
    %5842 = vmatpush2.bf16.msra.mxu0 %v4006
    %5843 = vmatprep.subr.bf16.mxu0 0
    %5844 = vmatpush2.bf16.msra.mxu0 %v4001
    %5845 = vmatprep.subr.bf16.mxu0 0
    %5846 = vmatpush2.bf16.msra.mxu0 %v3996
    %5847 = vmatprep.subr.bf16.mxu0 0
    %5848 = vmatpush2.bf16.msra.mxu0 %v3991
    %5849 = vmatprep.subr.bf16.mxu0 0
    %5850 = vmatpush2.bf16.msra.mxu0 %v3986
    %5851 = vmatprep.subr.bf16.mxu0 0
    %5852 = vmatpush2.bf16.msra.mxu0 %v3981
    %5853 = vmatprep.subr.bf16.mxu0 0
    %5854 = vmatpush2.bf16.msra.mxu0 %v3976
    %5855 = vmatprep.subr.bf16.mxu0 0
    %5856 = vmatpush2.bf16.msra.mxu0 %v3971
    %5857 = vmatprep.mubr.bf16.mxu0 %v1022
    %5858 = vmatmul.mubr.bf16.gmra.mxu0 %v1020
    %v5859 = vpop.f32.mrf.mxu0
    %v5860 = vadd.f32 %v5820, %v5859
    %v5861 = vpop.f32.mrf.mxu0
    %v5862 = vpop.f32.mrf.mxu0
    %v5863 = vpop.f32.mrf.mxu0
    %5864 = vdwg.mxu0
    %5865 = vmatprep.subr.bf16.mxu0 0
    %5866 = vmatpush1.bf16.msra.mxu0 %v4046
    %5867 = vmatprep.subr.bf16.mxu0 0
    %5868 = vmatpush1.bf16.msra.mxu0 %v4041
    %5869 = vmatprep.subr.bf16.mxu0 0
    %5870 = vmatpush1.bf16.msra.mxu0 %v4036
    %5871 = vmatprep.subr.bf16.mxu0 0
    %5872 = vmatpush1.bf16.msra.mxu0 %v4031
    %5873 = vmatprep.subr.bf16.mxu0 0
    %5874 = vmatpush1.bf16.msra.mxu0 %v4026
    %5875 = vmatprep.subr.bf16.mxu0 0
    %5876 = vmatpush1.bf16.msra.mxu0 %v4021
    %5877 = vmatprep.subr.bf16.mxu0 0
    %5878 = vmatpush1.bf16.msra.mxu0 %v4016
    %5879 = vmatprep.subr.bf16.mxu0 0
    %5880 = vmatpush1.bf16.msra.mxu0 %v4011
    %5881 = vmatprep.subr.bf16.mxu0 0
    %5882 = vmatpush2.bf16.msra.mxu0 %v4086
    %5883 = vmatprep.subr.bf16.mxu0 0
    %5884 = vmatpush2.bf16.msra.mxu0 %v4081
    %5885 = vmatprep.subr.bf16.mxu0 0
    %5886 = vmatpush2.bf16.msra.mxu0 %v4076
    %5887 = vmatprep.subr.bf16.mxu0 0
    %5888 = vmatpush2.bf16.msra.mxu0 %v4071
    %5889 = vmatprep.subr.bf16.mxu0 0
    %5890 = vmatpush2.bf16.msra.mxu0 %v4066
    %5891 = vmatprep.subr.bf16.mxu0 0
    %5892 = vmatpush2.bf16.msra.mxu0 %v4061
    %5893 = vmatprep.subr.bf16.mxu0 0
    %5894 = vmatpush2.bf16.msra.mxu0 %v4056
    %5895 = vmatprep.subr.bf16.mxu0 0
    %5896 = vmatpush2.bf16.msra.mxu0 %v4051
    %5897 = vmatprep.mubr.bf16.mxu0 %v1044
    %5898 = vmatmul.mubr.bf16.gmra.mxu0 %v1037
    %v5899 = vpop.f32.mrf.mxu0
    %v5900 = vadd.f32 %v5860, %v5899
    %v5901 = vpop.f32.mrf.mxu0
    %v5902 = vpop.f32.mrf.mxu0
    %v5903 = vpop.f32.mrf.mxu0
    %5904 = vdwg.mxu0
    %v5905 = vpack.c.bf16 %v5170, %v5170
    %v5906 = vpack.c.bf16 %v5172, %v5172
    %v5907 = vpack.c.bf16 %v5539, %v5539
    %v5908 = vpack.c.bf16 %v5541, %v5541
    %v5909 = vpack.c.bf16 %v5900, %v5900
    %v5910 = vld [vmem:[%s3] sm:$0xf]
    %v5911 = vld [vmem:[%s3 + $0x4] sm:$0xf]
    %v5912 = vld [vmem:[%s3 + $0x8] sm:$0xf]
    %v5913 = vld [vmem:[%s3 + $0xc] sm:$0xf]
    %v5914 = vld [vmem:[%s3 + $0x10] sm:$0xf]
    %v5915 = vld [vmem:[%s3 + $0x14] sm:$0xf]
    %v5916 = vld [vmem:[%s3 + $0x18] sm:$0xf]
    %v5917 = vld [vmem:[%s3 + $0x1c] sm:$0xf]
    %v5918 = vld [vmem:[%s3 + $0x20] sm:$0xf]
    %v5919 = vld [vmem:[%s3 + $0x24] sm:$0xf]
    %v5920 = vld [vmem:[%s3 + $0x28] sm:$0xf]
    %v5921 = vld [vmem:[%s3 + $0x2c] sm:$0xf]
    %v5922 = vld [vmem:[%s3 + $0x30] sm:$0xf]
    %v5923 = vld [vmem:[%s3 + $0x34] sm:$0xf]
    %v5924 = vld [vmem:[%s3 + $0x38] sm:$0xf]
    %v5925 = vld [vmem:[%s3 + $0x3c] sm:$0xf]
    %v5926 = vld [vmem:[%s3 + $0x40] sm:$0xf]
    %v5927 = vld [vmem:[%s3 + $0x44] sm:$0xf]
    %v5928 = vld [vmem:[%s3 + $0x48] sm:$0xf]
    %v5929 = vld [vmem:[%s3 + $0x4c] sm:$0xf]
    %v5930 = vld [vmem:[%s3 + $0x50] sm:$0xf]
    %v5931 = vld [vmem:[%s3 + $0x54] sm:$0xf]
    %v5932 = vld [vmem:[%s3 + $0x58] sm:$0xf]
    %v5933 = vld [vmem:[%s3 + $0x5c] sm:$0xf]
    %v5934 = vld [vmem:[%s3 + $0x60] sm:$0xf]
    %v5935 = vld [vmem:[%s3 + $0x64] sm:$0xf]
    %v5936 = vld [vmem:[%s3 + $0x68] sm:$0xf]
    %v5937 = vld [vmem:[%s3 + $0x6c] sm:$0xf]
    %v5938 = vld [vmem:[%s3 + $0x70] sm:$0xf]
    %v5939 = vld [vmem:[%s3 + $0x74] sm:$0xf]
    %v5940 = vld [vmem:[%s3 + $0x78] sm:$0xf]
    %v5941 = vld [vmem:[%s3 + $0x7c] sm:$0xf]
    %v5942 = vld [vmem:[%s3 + $0x80] sm:$0xf]
    %v5943 = vld [vmem:[%s3 + $0x84] sm:$0xf]
    %v5944 = vld [vmem:[%s3 + $0x88] sm:$0xf]
    %v5945 = vld [vmem:[%s3 + $0x8c] sm:$0xf]
    %v5946 = vld [vmem:[%s3 + $0x90] sm:$0xf]
    %v5947 = vld [vmem:[%s3 + $0x94] sm:$0xf]
    %v5948 = vld [vmem:[%s3 + $0x98] sm:$0xf]
    %v5949 = vld [vmem:[%s3 + $0x9c] sm:$0xf]
    %v5950 = vld [vmem:[%s3 + $0xa0] sm:$0xf]
    %v5951 = vld [vmem:[%s3 + $0xa4] sm:$0xf]
    %v5952 = vld [vmem:[%s3 + $0xa8] sm:$0xf]
    %v5953 = vld [vmem:[%s3 + $0xac] sm:$0xf]
    %v5954 = vld [vmem:[%s3 + $0xb0] sm:$0xf]
    %v5955 = vld [vmem:[%s3 + $0xb4] sm:$0xf]
    %v5956 = vld [vmem:[%s3 + $0xb8] sm:$0xf]
    %v5957 = vld [vmem:[%s3 + $0xbc] sm:$0xf]
    %v5958 = vld [vmem:[%s3 + $0xc0] sm:$0xf]
    %v5959 = vld [vmem:[%s3 + $0xc4] sm:$0xf]
    %v5960 = vld [vmem:[%s3 + $0xc8] sm:$0xf]
    %v5961 = vld [vmem:[%s3 + $0xcc] sm:$0xf]
    %v5962 = vld [vmem:[%s3 + $0xd0] sm:$0xf]
    %v5963 = vld [vmem:[%s3 + $0xd4] sm:$0xf]
    %v5964 = vld [vmem:[%s3 + $0xd8] sm:$0xf]
    %v5965 = vld [vmem:[%s3 + $0xdc] sm:$0xf]
    %v5966 = vld [vmem:[%s3 + $0xe0] sm:$0xf]
    %v5967 = vld [vmem:[%s3 + $0xe4] sm:$0xf]
    %v5968 = vld [vmem:[%s3 + $0xe8] sm:$0xf]
    %v5969 = vld [vmem:[%s3 + $0xec] sm:$0xf]
    %v5970 = vld [vmem:[%s3 + $0xf0] sm:$0xf]
    %v5971 = vld [vmem:[%s3 + $0xf4] sm:$0xf]
    %v5972 = vld [vmem:[%s3 + $0xf8] sm:$0xf]
    %v5973 = vld [vmem:[%s3 + $0xfc] sm:$0xf]
    %v5974 = vld [vmem:[%s3 + $0x100] sm:$0xf]
    %v5975 = vld [vmem:[%s3 + $0x104] sm:$0xf]
    %v5976 = vld [vmem:[%s3 + $0x108] sm:$0xf]
    %v5977 = vld [vmem:[%s3 + $0x10c] sm:$0xf]
    %v5978 = vld [vmem:[%s3 + $0x110] sm:$0xf]
    %v5979 = vld [vmem:[%s3 + $0x114] sm:$0xf]
    %v5980 = vld [vmem:[%s3 + $0x118] sm:$0xf]
    %v5981 = vld [vmem:[%s3 + $0x11c] sm:$0xf]
    %v5982 = vld [vmem:[%s3 + $0x120] sm:$0xf]
    %v5983 = vld [vmem:[%s3 + $0x124] sm:$0xf]
    %v5984 = vld [vmem:[%s3 + $0x128] sm:$0xf]
    %v5985 = vld [vmem:[%s4] sm:$0x1]
    %v5987 = vlaneseq
    %v5988 = vshrl.u32 %v5987, 7
    %v5989 = vsub.s32 0, %v5988
    %v5990 = vrot.slane %v5985, %v5989
    %v6067 = vunpack.c.l.b16 %v5910
    %v6068 = vunpack.c.l.b16 %v5911
    %v6069 = vunpack.c.l.b16 %v5912
    %v6070 = vunpack.c.l.b16 %v5913
    %v6071 = vunpack.c.l.b16 %v5914
    %v6072 = vunpack.c.l.b16 %v5915
    %v6073 = vunpack.c.l.b16 %v5916
    %v6074 = vunpack.c.l.b16 %v5917
    %v6075 = vunpack.c.l.b16 %v5918
    %v6076 = vunpack.c.l.b16 %v5919
    %v6077 = vunpack.c.l.b16 %v5920
    %v6078 = vunpack.c.l.b16 %v5921
    %v6079 = vunpack.c.l.b16 %v5922
    %v6080 = vunpack.c.l.b16 %v5923
    %v6081 = vunpack.c.l.b16 %v5924
    %v6082 = vunpack.c.l.b16 %v5925
    %v6083 = vunpack.c.l.b16 %v5926
    %v6084 = vunpack.c.l.b16 %v5927
    %v6085 = vunpack.c.l.b16 %v5928
    %v6086 = vunpack.c.l.b16 %v5929
    %v6087 = vunpack.c.l.b16 %v5930
    %v6088 = vunpack.c.l.b16 %v5931
    %v6089 = vunpack.c.l.b16 %v5932
    %v6090 = vunpack.c.l.b16 %v5933
    %v6091 = vunpack.c.l.b16 %v5934
    %v6092 = vunpack.c.l.b16 %v5935
    %v6093 = vunpack.c.l.b16 %v5936
    %v6094 = vunpack.c.l.b16 %v5937
    %v6095 = vunpack.c.l.b16 %v5938
    %v6096 = vunpack.c.l.b16 %v5939
    %v6097 = vunpack.c.l.b16 %v5940
    %v6098 = vunpack.c.l.b16 %v5941
    %v6099 = vunpack.c.l.b16 %v5942
    %v6100 = vunpack.c.l.b16 %v5943
    %v6101 = vunpack.c.l.b16 %v5944
    %v6102 = vunpack.c.l.b16 %v5945
    %v6103 = vunpack.c.l.b16 %v5946
    %v6104 = vunpack.c.l.b16 %v5947
    %v6105 = vunpack.c.l.b16 %v5948
    %v6106 = vunpack.c.l.b16 %v5949
    %v6107 = vunpack.c.l.b16 %v5950
    %v6108 = vunpack.c.l.b16 %v5951
    %v6109 = vunpack.c.l.b16 %v5952
    %v6110 = vunpack.c.l.b16 %v5953
    %v6111 = vunpack.c.l.b16 %v5954
    %v6112 = vunpack.c.l.b16 %v5955
    %v6113 = vunpack.c.l.b16 %v5956
    %v6114 = vunpack.c.l.b16 %v5957
    %v6115 = vunpack.c.l.b16 %v5958
    %v6116 = vunpack.c.l.b16 %v5959
    %v6117 = vunpack.c.l.b16 %v5960
    %v6118 = vunpack.c.l.b16 %v5961
    %v6119 = vunpack.c.l.b16 %v5962
    %v6120 = vunpack.c.l.b16 %v5963
    %v6121 = vunpack.c.l.b16 %v5964
    %v6122 = vunpack.c.l.b16 %v5965
    %v6123 = vunpack.c.l.b16 %v5966
    %v6124 = vunpack.c.l.b16 %v5967
    %v6125 = vunpack.c.l.b16 %v5968
    %v6126 = vunpack.c.l.b16 %v5969
    %v6127 = vunpack.c.l.b16 %v5970
    %v6128 = vunpack.c.l.b16 %v5971
    %v6129 = vunpack.c.l.b16 %v5972
    %v6130 = vunpack.c.l.b16 %v5973
    %v6131 = vunpack.c.l.b16 %v5974
    %v6132 = vunpack.c.l.b16 %v5975
    %v6133 = vunpack.c.l.b16 %v5976
    %v6134 = vunpack.c.l.b16 %v5977
    %v6135 = vunpack.c.l.b16 %v5978
    %v6136 = vunpack.c.l.b16 %v5979
    %v6137 = vunpack.c.l.b16 %v5980
    %v6138 = vunpack.c.l.b16 %v5981
    %v6139 = vunpack.c.l.b16 %v5982
    %v6140 = vunpack.c.l.b16 %v5983
    %v6141 = vunpack.c.l.b16 %v5984
    %v6142 = vpack.c.b16 %v6068, %v6067
    %v6143 = vpack.c.b16 %v6070, %v6069
    %v6144 = vpack.c.b16 %v6072, %v6071
    %v6145 = vpack.c.b16 %v6074, %v6073
    %v6146 = vpack.c.b16 %v6076, %v6075
    %v6147 = vpack.c.b16 %v6078, %v6077
    %v6148 = vpack.c.b16 %v6080, %v6079
    %v6149 = vpack.c.b16 %v6082, %v6081
    %v6150 = vpack.c.b16 %v6084, %v6083
    %v6151 = vpack.c.b16 %v6086, %v6085
    %v6152 = vpack.c.b16 %v6088, %v6087
    %v6153 = vpack.c.b16 %v6090, %v6089
    %v6154 = vpack.c.b16 %v6092, %v6091
    %v6155 = vpack.c.b16 %v6094, %v6093
    %v6156 = vpack.c.b16 %v6096, %v6095
    %v6157 = vpack.c.b16 %v6098, %v6097
    %v6158 = vpack.c.b16 %v6100, %v6099
    %v6159 = vpack.c.b16 %v6102, %v6101
    %v6160 = vpack.c.b16 %v6104, %v6103
    %v6161 = vpack.c.b16 %v6106, %v6105
    %v6162 = vpack.c.b16 %v6108, %v6107
    %v6163 = vpack.c.b16 %v6110, %v6109
    %v6164 = vpack.c.b16 %v6112, %v6111
    %v6165 = vpack.c.b16 %v6114, %v6113
    %v6166 = vpack.c.b16 %v6116, %v6115
    %v6167 = vpack.c.b16 %v6118, %v6117
    %v6168 = vpack.c.b16 %v6120, %v6119
    %v6169 = vpack.c.b16 %v6122, %v6121
    %v6170 = vpack.c.b16 %v6124, %v6123
    %v6171 = vpack.c.b16 %v6126, %v6125
    %v6172 = vpack.c.b16 %v6128, %v6127
    %v6173 = vpack.c.b16 %v6130, %v6129
    %v6174 = vpack.c.b16 %v6132, %v6131
    %v6175 = vpack.c.b16 %v6134, %v6133
    %v6176 = vpack.c.b16 %v6136, %v6135
    %v6177 = vpack.c.b16 %v6138, %v6137
    %v6178 = vpack.c.b16 %v6140, %v6139
    %v6179 = vpack.c.b16 %v6141, %v6141
    %vm6217 = vcmask 719872
    %v6219 = vsel %vm6217, %v5909, 0
    %vm6221 = vcmask 1043456
    %v6223 = vsel %vm6221, %v6179, 0
    %6225 = vmatprep.subr.bf16.mxu0 0
    %6226 = vmatpush1.bf16.msra.mxu0 %v6149
    %6227 = vmatprep.subr.bf16.mxu0 0
    %6228 = vmatpush1.bf16.msra.mxu0 %v6148
    %6229 = vmatprep.subr.bf16.mxu0 0
    %6230 = vmatpush1.bf16.msra.mxu0 %v6147
    %6231 = vmatprep.subr.bf16.mxu0 0
    %6232 = vmatpush1.bf16.msra.mxu0 %v6146
    %6233 = vmatprep.subr.bf16.mxu0 0
    %6234 = vmatpush1.bf16.msra.mxu0 %v6145
    %6235 = vmatprep.subr.bf16.mxu0 0
    %6236 = vmatpush1.bf16.msra.mxu0 %v6144
    %6237 = vmatprep.subr.bf16.mxu0 0
    %6238 = vmatpush1.bf16.msra.mxu0 %v6143
    %6239 = vmatprep.subr.bf16.mxu0 0
    %6240 = vmatpush1.bf16.msra.mxu0 %v6142
    %6241 = vmatprep.subr.bf16.mxu0 0
    %6242 = vmatpush2.bf16.msra.mxu0 %v6157
    %6243 = vmatprep.subr.bf16.mxu0 0
    %6244 = vmatpush2.bf16.msra.mxu0 %v6156
    %6245 = vmatprep.subr.bf16.mxu0 0
    %6246 = vmatpush2.bf16.msra.mxu0 %v6155
    %6247 = vmatprep.subr.bf16.mxu0 0
    %6248 = vmatpush2.bf16.msra.mxu0 %v6154
    %6249 = vmatprep.subr.bf16.mxu0 0
    %6250 = vmatpush2.bf16.msra.mxu0 %v6153
    %6251 = vmatprep.subr.bf16.mxu0 0
    %6252 = vmatpush2.bf16.msra.mxu0 %v6152
    %6253 = vmatprep.subr.bf16.mxu0 0
    %6254 = vmatpush2.bf16.msra.mxu0 %v6151
    %6255 = vmatprep.subr.bf16.mxu0 0
    %6256 = vmatpush2.bf16.msra.mxu0 %v6150
    %6257 = vmatprep.mubr.bf16.mxu0 %v5906
    %6258 = vmatmul.mubr.bf16.gmra.mxu0 %v5905
    %v6259 = vpop.f32.mrf.mxu0
    %v6260 = vadd.f32 %v5990, %v6259
    %v6261 = vpop.f32.mrf.mxu0
    %v6262 = vpop.f32.mrf.mxu0
    %v6263 = vpop.f32.mrf.mxu0
    %6264 = vdwg.mxu0
    %6265 = vmatprep.subr.bf16.mxu0 0
    %6266 = vmatpush1.bf16.msra.mxu0 %v6165
    %6267 = vmatprep.subr.bf16.mxu0 0
    %6268 = vmatpush1.bf16.msra.mxu0 %v6164
    %6269 = vmatprep.subr.bf16.mxu0 0
    %6270 = vmatpush1.bf16.msra.mxu0 %v6163
    %6271 = vmatprep.subr.bf16.mxu0 0
    %6272 = vmatpush1.bf16.msra.mxu0 %v6162
    %6273 = vmatprep.subr.bf16.mxu0 0
    %6274 = vmatpush1.bf16.msra.mxu0 %v6161
    %6275 = vmatprep.subr.bf16.mxu0 0
    %6276 = vmatpush1.bf16.msra.mxu0 %v6160
    %6277 = vmatprep.subr.bf16.mxu0 0
    %6278 = vmatpush1.bf16.msra.mxu0 %v6159
    %6279 = vmatprep.subr.bf16.mxu0 0
    %6280 = vmatpush1.bf16.msra.mxu0 %v6158
    %6281 = vmatprep.subr.bf16.mxu0 0
    %6282 = vmatpush2.bf16.msra.mxu0 %v6173
    %6283 = vmatprep.subr.bf16.mxu0 0
    %6284 = vmatpush2.bf16.msra.mxu0 %v6172
    %6285 = vmatprep.subr.bf16.mxu0 0
    %6286 = vmatpush2.bf16.msra.mxu0 %v6171
    %6287 = vmatprep.subr.bf16.mxu0 0
    %6288 = vmatpush2.bf16.msra.mxu0 %v6170
    %6289 = vmatprep.subr.bf16.mxu0 0
    %6290 = vmatpush2.bf16.msra.mxu0 %v6169
    %6291 = vmatprep.subr.bf16.mxu0 0
    %6292 = vmatpush2.bf16.msra.mxu0 %v6168
    %6293 = vmatprep.subr.bf16.mxu0 0
    %6294 = vmatpush2.bf16.msra.mxu0 %v6167
    %6295 = vmatprep.subr.bf16.mxu0 0
    %6296 = vmatpush2.bf16.msra.mxu0 %v6166
    %6297 = vmatprep.mubr.bf16.mxu0 %v5908
    %6298 = vmatmul.mubr.bf16.gmra.mxu0 %v5907
    %v6299 = vpop.f32.mrf.mxu0
    %v6300 = vadd.f32 %v6260, %v6299
    %v6301 = vpop.f32.mrf.mxu0
    %v6302 = vpop.f32.mrf.mxu0
    %v6303 = vpop.f32.mrf.mxu0
    %6304 = vdwg.mxu0
    %6305 = vmatprep.subr.bf16.mxu0 0
    %6306 = vmatpush1.bf16.msra.mxu0 0
    %6307 = vmatprep.subr.bf16.mxu0 0
    %6308 = vmatpush1.bf16.msra.mxu0 0
    %6309 = vmatprep.subr.bf16.mxu0 0
    %6310 = vmatpush1.bf16.msra.mxu0 %v6223
    %6311 = vmatprep.subr.bf16.mxu0 0
    %6312 = vmatpush1.bf16.msra.mxu0 %v6178
    %6313 = vmatprep.subr.bf16.mxu0 0
    %6314 = vmatpush1.bf16.msra.mxu0 %v6177
    %6315 = vmatprep.subr.bf16.mxu0 0
    %6316 = vmatpush1.bf16.msra.mxu0 %v6176
    %6317 = vmatprep.subr.bf16.mxu0 0
    %6318 = vmatpush1.bf16.msra.mxu0 %v6175
    %6319 = vmatprep.subr.bf16.mxu0 0
    %6320 = vmatpush1.bf16.msra.mxu0 %v6174
    %6321 = vmatprep.subr.bf16.mxu0 0
    %6322 = vmatpush2.bf16.msra.mxu0 0
    %6323 = vmatprep.subr.bf16.mxu0 0
    %6324 = vmatpush2.bf16.msra.mxu0 0
    %6325 = vmatprep.subr.bf16.mxu0 0
    %6326 = vmatpush2.bf16.msra.mxu0 0
    %6327 = vmatprep.subr.bf16.mxu0 0
    %6328 = vmatpush2.bf16.msra.mxu0 0
    %6329 = vmatprep.subr.bf16.mxu0 0
    %6330 = vmatpush2.bf16.msra.mxu0 0
    %6331 = vmatprep.subr.bf16.mxu0 0
    %6332 = vmatpush2.bf16.msra.mxu0 0
    %6333 = vmatprep.subr.bf16.mxu0 0
    %6334 = vmatpush2.bf16.msra.mxu0 0
    %6335 = vmatprep.subr.bf16.mxu0 0
    %6336 = vmatpush2.bf16.msra.mxu0 0
    %6337 = vmatprep.mubr.bf16.mxu0 0
    %6338 = vmatmul.mubr.bf16.gmra.mxu0 %v6219
    %v6339 = vpop.f32.mrf.mxu0
    %v6340 = vadd.f32 %v6300, %v6339
    %v6341 = vpop.f32.mrf.mxu0
    %v6342 = vpop.f32.mrf.mxu0
    %v6343 = vpop.f32.mrf.mxu0
    %6344 = vdwg.mxu0
    %v6345 = vpack.c.bf16 %v6340, %v6340
    %v6346 = vld [vmem:[%s5] sm:$0xf]
    %v6347 = vld [vmem:[%s5 + $0x4] sm:$0xf]
    %v6348 = vld [vmem:[%s5 + $0x8] sm:$0xf]
    %v6349 = vld [vmem:[%s5 + $0xc] sm:$0xf]
    %v6350 = vld [vmem:[%s5 + $0x10] sm:$0xf]
    %v6351 = vld [vmem:[%s5 + $0x14] sm:$0xf]
    %v6352 = vld [vmem:[%s5 + $0x18] sm:$0xf]
    %v6353 = vld [vmem:[%s5 + $0x1c] sm:$0xf]
    %v6354 = vld [vmem:[%s5 + $0x20] sm:$0xf]
    %v6355 = vld [vmem:[%s5 + $0x24] sm:$0xf]
    %v6356 = vld [vmem:[%s5 + $0x28] sm:$0xf]
    %v6357 = vld [vmem:[%s5 + $0x2c] sm:$0xf]
    %v6358 = vld [vmem:[%s5 + $0x30] sm:$0xf]
    %v6359 = vld [vmem:[%s5 + $0x34] sm:$0xf]
    %v6360 = vld [vmem:[%s5 + $0x38] sm:$0xf]
    %v6361 = vld [vmem:[%s6] sm:$0x1]
    %v6363 = vlaneseq
    %v6364 = vshrl.u32 %v6363, 7
    %v6365 = vsub.s32 0, %v6364
    %v6366 = vrot.slane %v6361, %v6365
    %v6383 = vunpack.c.l.b16 %v6346
    %v6384 = vunpack.c.l.b16 %v6347
    %v6385 = vunpack.c.l.b16 %v6348
    %v6386 = vunpack.c.l.b16 %v6349
    %v6387 = vunpack.c.l.b16 %v6350
    %v6388 = vunpack.c.l.b16 %v6351
    %v6389 = vunpack.c.l.b16 %v6352
    %v6390 = vunpack.c.l.b16 %v6353
    %v6391 = vunpack.c.l.b16 %v6354
    %v6392 = vunpack.c.l.b16 %v6355
    %v6393 = vunpack.c.l.b16 %v6356
    %v6394 = vunpack.c.l.b16 %v6357
    %v6395 = vunpack.c.l.b16 %v6358
    %v6396 = vunpack.c.l.b16 %v6359
    %v6397 = vunpack.c.l.b16 %v6360
    %v6398 = vpack.c.b16 %v6384, %v6383
    %v6399 = vpack.c.b16 %v6386, %v6385
    %v6400 = vpack.c.b16 %v6388, %v6387
    %v6401 = vpack.c.b16 %v6390, %v6389
    %v6402 = vpack.c.b16 %v6392, %v6391
    %v6403 = vpack.c.b16 %v6394, %v6393
    %v6404 = vpack.c.b16 %v6396, %v6395
    %v6405 = vpack.c.b16 %v6397, %v6397
    %vm6413 = vcmask 982016
    %v6415 = vsel %vm6413, %v6345, 0
    %v6418 = vsel %vm6221, %v6405, 0
    %6420 = vmatprep.subr.bf16.mxu0 0
    %6421 = vmatpush1.bf16.msra.mxu0 %v6418
    %6422 = vmatprep.subr.bf16.mxu0 0
    %6423 = vmatpush1.bf16.msra.mxu0 %v6404
    %6424 = vmatprep.subr.bf16.mxu0 0
    %6425 = vmatpush1.bf16.msra.mxu0 %v6403
    %6426 = vmatprep.subr.bf16.mxu0 0
    %6427 = vmatpush1.bf16.msra.mxu0 %v6402
    %6428 = vmatprep.subr.bf16.mxu0 0
    %6429 = vmatpush1.bf16.msra.mxu0 %v6401
    %6430 = vmatprep.subr.bf16.mxu0 0
    %6431 = vmatpush1.bf16.msra.mxu0 %v6400
    %6432 = vmatprep.subr.bf16.mxu0 0
    %6433 = vmatpush1.bf16.msra.mxu0 %v6399
    %6434 = vmatprep.subr.bf16.mxu0 0
    %6435 = vmatpush1.bf16.msra.mxu0 %v6398
    %6436 = vmatprep.subr.bf16.mxu0 0
    %6437 = vmatpush2.bf16.msra.mxu0 0
    %6438 = vmatprep.subr.bf16.mxu0 0
    %6439 = vmatpush2.bf16.msra.mxu0 0
    %6440 = vmatprep.subr.bf16.mxu0 0
    %6441 = vmatpush2.bf16.msra.mxu0 0
    %6442 = vmatprep.subr.bf16.mxu0 0
    %6443 = vmatpush2.bf16.msra.mxu0 0
    %6444 = vmatprep.subr.bf16.mxu0 0
    %6445 = vmatpush2.bf16.msra.mxu0 0
    %6446 = vmatprep.subr.bf16.mxu0 0
    %6447 = vmatpush2.bf16.msra.mxu0 0
    %6448 = vmatprep.subr.bf16.mxu0 0
    %6449 = vmatpush2.bf16.msra.mxu0 0
    %6450 = vmatprep.subr.bf16.mxu0 0
    %6451 = vmatpush2.bf16.msra.mxu0 0
    %6452 = vmatprep.mubr.bf16.mxu0 0
    %6453 = vmatmul.mubr.bf16.gmra.mxu0 %v6415
    %v6454 = vpop.f32.mrf.mxu0
    %v6455 = vadd.f32 %v6366, %v6454
    %v6456 = vpop.f32.mrf.mxu0
    %v6457 = vpop.f32.mrf.mxu0
    %v6458 = vpop.f32.mrf.mxu0
    %6459 = vdwg.mxu0
    %vm6460 = vcmask 74752
    %6461 = vst.msk [vmem:[#allocation2] sm:$0x3] %vm6460, %v6455
    // Predicated region
    $region30: #{fashion_cnn3_forward.5} parent=1 // pred_check
      _
    $region31: #{fashion_cnn3_forward.5} parent=1 // pred_check_branch
      %6463 = sbr.rel (0) target = $region33
    $region32: #{fashion_cnn3_forward.5} parent=1 // pred_region
      %s6465 = ssub.s32 32, 32
      %6466 = vsyncadd [#allocation3], %s6465
      %s6468 = sshll.u32 [#allocation2], 4
      %s6469 = int_to_ptr.vmem [resolvable:$true] %s6468
      %6471 = dma.vmem_to_hbm [thread:$0]  %s6469, 32, %s7, [#allocation3]
    $region33: #{fashion_cnn3_forward.5} parent=1 // pred_fallthru
      _
    // Predicated region
    $region34: #{fashion_cnn3_forward.5} parent=1 // pred_check
      _
    $region35: #{fashion_cnn3_forward.5} parent=1 // pred_check_branch
      %6473 = sbr.rel (0) target = $region37
    $region36: #{fashion_cnn3_forward.5} parent=1 // pred_region
      %6474 = dma.done [#allocation3], 32
    $region37: #{fashion_cnn3_forward.5} parent=1 // pred_fallthru
      _
    %6475 = vsyncpa [#allocation3], 1

</llo_original>
